<compile_context>
chip_gen: v7x
topology: tpu7x:2x2x1
jax: 0.10.0
libtpu: 0.0.40
codegen_flags: <defaults>
</compile_context>

<pallas_src>
import functools

import numpy as np
import jax
import jax.numpy as jnp
from jax import lax
from jax.experimental import pallas as pl
from jax.experimental.pallas import tpu as pltpu

EPS = 1e-5


def _round_up(x, m):
    return ((x + m - 1) // m) * m


# ---------------------------------------------------------------------------
# In-kernel helpers
# ---------------------------------------------------------------------------
def _edge_masks(P, W, C):
    """Left / right image-column masks for a row-flattened (P, C) tile."""
    col = lax.broadcasted_iota(jnp.int32, (P, C), 0) % W
    return col != 0, col != (W - 1)


def _conv3x3_slab(xp_ref, slab_ref, w_ref, mL, mR, *, P, W, C, pad):
    """3x3 / stride-1 / pad-1 conv of a row-flattened image held zero-haloed in
    `xp_ref` ((P + 2*pad, C), f32).  The 9 taps are stride-1 row shifts, written
    edge-masked + bf16 into the (P, 9*C) slab, then ONE big-K MXU matmul."""
    for t in range(9):
        dy, dx = t // 3 - 1, t % 3 - 1
        s = pad + dy * W + dx
        patch = xp_ref[s:s + P, :]
        if dx == -1:
            patch = jnp.where(mL, patch, 0.0)
        elif dx == 1:
            patch = jnp.where(mR, patch, 0.0)
        slab_ref[:, t * C:(t + 1) * C] = patch.astype(slab_ref.dtype)
    return jnp.dot(slab_ref[...], w_ref[...], preferred_element_type=jnp.float32)


# ---------------------------------------------------------------------------
# Kernel 1: stem  Conv(1->64, 7x7, s2, p3) + BN + ReLU + MaxPool2d(3,2,1)
# The im2col'd patches arrive grouped by output-pixel parity (ee, eo, oe, oo),
# so after one matmul the pooling only needs stride-1 shifted reads (via a
# zero-halo scratch) and jnp.maximum.  ReLU guarantees y >= 0, so zero padding
# in the pool is exact.
# ---------------------------------------------------------------------------
def _stem_kernel(col_ref, w_ref, b_ref, o_ref, sp_ref, *, P, Wo, halo, C):
    y = jnp.dot(col_ref[0], w_ref[...], preferred_element_type=jnp.float32)
    y = jnp.maximum(y + b_ref[...], 0.0)                      # (4*P, C), y >= 0
    ee = y[0:P]
    eo = y[P:2 * P]
    oe = y[2 * P:3 * P]
    oo = y[3 * P:4 * P]
    # planes that need shifted reads, stored with a zero halo on top
    for k in range(3):
        sp_ref[k, 0:halo, :] = jnp.zeros((halo, C), jnp.float32)
    sp_ref[0, halo:halo + P, :] = eo
    sp_ref[1, halo:halo + P, :] = oe
    sp_ref[2, halo:halo + P, :] = oo
    mask, _ = _edge_masks(P, Wo, C)                           # pooled col != 0
    m = jnp.maximum(jnp.maximum(ee, eo), jnp.maximum(oe, oo))
    m = jnp.maximum(m, jnp.where(mask, sp_ref[0, halo - 1:halo - 1 + P, :], 0.0))
    m = jnp.maximum(m, jnp.where(mask, sp_ref[2, halo - 1:halo - 1 + P, :], 0.0))
    m = jnp.maximum(m, sp_ref[1, halo - Wo:halo - Wo + P, :])
    m = jnp.maximum(m, sp_ref[2, halo - Wo:halo - Wo + P, :])
    m = jnp.maximum(m, jnp.where(mask, sp_ref[2, halo - Wo - 1:halo - Wo - 1 + P, :], 0.0))
    o_ref[0] = m.astype(o_ref.dtype)


def stem_conv_pool(col_par, w2d, b2d, Ho, Wo):
    N, M4, K = col_par.shape
    P = M4 // 4
    C = w2d.shape[1]
    halo = _round_up(Wo + 1, 8)
    return pl.pallas_call(
        functools.partial(_stem_kernel, P=P, Wo=Wo, halo=halo, C=C),
        out_shape=jax.ShapeDtypeStruct((N, P, C), jnp.bfloat16),
        grid_spec=pltpu.PrefetchScalarGridSpec(
            num_scalar_prefetch=0,
            grid=(N,),
            in_specs=[pl.BlockSpec((1, M4, K), lambda n: (n, 0, 0)),
                      pl.BlockSpec((K, C), lambda n: (0, 0)),
                      pl.BlockSpec((1, C), lambda n: (0, 0))],
            out_specs=pl.BlockSpec((1, P, C), lambda n: (n, 0, 0)),
            scratch_shapes=[pltpu.VMEM((3, halo + P, C), jnp.float32)]),
        compiler_params=pltpu.CompilerParams(dimension_semantics=("parallel",)),
    )(col_par, w2d, b2d)


# ---------------------------------------------------------------------------
# Kernel 2: both b2 identity Residual(64,64) blocks, fused (per image)
# ---------------------------------------------------------------------------
def _b2_kernel(x_ref, w1a_ref, b1a_ref, w2a_ref, b2a_ref,
               w1b_ref, b1b_ref, w2b_ref, b2b_ref, o_ref, xp_ref, slab_ref,
               *, P, W, C, pad):
    mL, mR = _edge_masks(P, W, C)
    # zero only the halos; the interior is fully overwritten below
    xp_ref[0:pad, :] = jnp.zeros((pad, C), jnp.float32)
    xp_ref[pad + P:P + 2 * pad, :] = jnp.zeros((pad, C), jnp.float32)
    x = x_ref[0].astype(jnp.float32)
    for (w1, b1, w2, b2) in ((w1a_ref, b1a_ref, w2a_ref, b2a_ref),
                             (w1b_ref, b1b_ref, w2b_ref, b2b_ref)):
        xp_ref[pad:pad + P, :] = x
        y = _conv3x3_slab(xp_ref, slab_ref, w1, mL, mR, P=P, W=W, C=C, pad=pad)
        y = jnp.maximum(y + b1[...], 0.0)
        xp_ref[pad:pad + P, :] = y
        z = _conv3x3_slab(xp_ref, slab_ref, w2, mL, mR, P=P, W=W, C=C, pad=pad)
        x = jnp.maximum(z + b2[...] + x, 0.0)
    o_ref[0] = x.astype(o_ref.dtype)


def b2_stage(x, H, W, blocks):
    N, P, C = x.shape
    assert P == H * W
    pad = _round_up(W + 1, 8)
    ba, bb = blocks
    wspec = pl.BlockSpec((9 * C, C), lambda n: (0, 0))
    bspec = pl.BlockSpec((1, C), lambda n: (0, 0))
    return pl.pallas_call(
        functools.partial(_b2_kernel, P=P, W=W, C=C, pad=pad),
        out_shape=jax.ShapeDtypeStruct((N, P, C), jnp.bfloat16),
        grid_spec=pltpu.PrefetchScalarGridSpec(
            num_scalar_prefetch=0,
            grid=(N,),
            in_specs=[pl.BlockSpec((1, P, C), lambda n: (n, 0, 0)),
                      wspec, bspec, wspec, bspec,
                      wspec, bspec, wspec, bspec],
            out_specs=pl.BlockSpec((1, P, C), lambda n: (n, 0, 0)),
            scratch_shapes=[pltpu.VMEM((P + 2 * pad, C), jnp.float32),
                            pltpu.VMEM((P, 9 * C), jnp.bfloat16)]),
        compiler_params=pltpu.CompilerParams(dimension_semantics=("parallel",)),
    )(x, ba['w1'], ba['b1'], ba['w2'], ba['b2'],
      bb['w1'], bb['b1'], bb['w2'], bb['b2'])


# ---------------------------------------------------------------------------
# Kernel 3: the whole b3 stage, fused (per image)
#   Residual(64->128, 1x1conv, s2):  conv1(3x3,s2 via pre-gathered patches)+bn1+relu,
#                                    conv2(3x3,s1)+bn2, 1x1/s2 shortcut, add, relu
#   Residual(128,128): identity block
# ---------------------------------------------------------------------------
def _b3_kernel(col_ref, xs_ref, c1w_ref, c1b_ref, c2w_ref, c2b_ref,
               scw_ref, scb_ref, d1w_ref, d1b_ref, d2w_ref, d2b_ref,
               o_ref, xp_ref, slab_ref, *, P, W, C, pad):
    mL, mR = _edge_masks(P, W, C)
    xp_ref[0:pad, :] = jnp.zeros((pad, C), jnp.float32)
    xp_ref[pad + P:P + 2 * pad, :] = jnp.zeros((pad, C), jnp.float32)
    # --- Residual(64 -> 128, use_1x1conv=True, strides=2) ---
    y = jnp.dot(col_ref[0], c1w_ref[...], preferred_element_type=jnp.float32)
    y = jnp.maximum(y + c1b_ref[...], 0.0)                     # conv1 + bn1 + relu
    sc = jnp.dot(xs_ref[0], scw_ref[...],
                 preferred_element_type=jnp.float32) + scb_ref[...]   # 1x1/s2 shortcut
    xp_ref[pad:pad + P, :] = y
    z = _conv3x3_slab(xp_ref, slab_ref, c2w_ref, mL, mR, P=P, W=W, C=C, pad=pad)
    x = jnp.maximum(z + c2b_ref[...] + sc, 0.0)                # conv2 + bn2 + add + relu
    # --- Residual(128, 128) ---
    xp_ref[pad:pad + P, :] = x
    u = _conv3x3_slab(xp_ref, slab_ref, d1w_ref, mL, mR, P=P, W=W, C=C, pad=pad)
    u = jnp.maximum(u + d1b_ref[...], 0.0)
    xp_ref[pad:pad + P, :] = u
    v = _conv3x3_slab(xp_ref, slab_ref, d2w_ref, mL, mR, P=P, W=W, C=C, pad=pad)
    o_ref[0] = jnp.maximum(v + d2b_ref[...] + x, 0.0).astype(o_ref.dtype)


def b3_stage(col1, xs, H, W, blocks):
    N, P, K1 = col1.shape
    assert P == H * W
    b0, bl1 = blocks
    C = b0['w1'].shape[1]
    Cin = xs.shape[-1]
    pad = _round_up(W + 1, 8)
    full2 = lambda shp: pl.BlockSpec(shp, lambda n: (0, 0))
    return pl.pallas_call(
        functools.partial(_b3_kernel, P=P, W=W, C=C, pad=pad),
        out_shape=jax.ShapeDtypeStruct((N, P, C), jnp.bfloat16),
        grid_spec=pltpu.PrefetchScalarGridSpec(
            num_scalar_prefetch=0,
            grid=(N,),
            in_specs=[pl.BlockSpec((1, P, K1), lambda n: (n, 0, 0)),
                      pl.BlockSpec((1, P, Cin), lambda n: (n, 0, 0)),
                      full2((K1, C)), full2((1, C)),
                      full2((9 * C, C)), full2((1, C)),
                      full2((Cin, C)), full2((1, C)),
                      full2((9 * C, C)), full2((1, C)),
                      full2((9 * C, C)), full2((1, C))],
            out_specs=pl.BlockSpec((1, P, C), lambda n: (n, 0, 0)),
            scratch_shapes=[pltpu.VMEM((P + 2 * pad, C), jnp.float32),
                            pltpu.VMEM((P, 9 * C), jnp.bfloat16)]),
        compiler_params=pltpu.CompilerParams(dimension_semantics=("parallel",)),
    )(col1, xs, b0['w1'], b0['b1'], b0['w2'], b0['b2'], b0['ws'], b0['bs'],
      bl1['w1'], bl1['b1'], bl1['w2'], bl1['b2'])


# ---------------------------------------------------------------------------
# JAX-side glue: strided patch extraction for the (few, tiny) stride-2 convs
# ---------------------------------------------------------------------------
def _im2col(x, k, stride, pad):
    N, H, W, C = x.shape
    xp = jnp.pad(x, ((0, 0), (pad, pad), (pad, pad), (0, 0)))
    Ho = (H + 2 * pad - k) // stride + 1
    Wo = (W + 2 * pad - k) // stride + 1
    cols = [xp[:, a:a + stride * Ho:stride, b:b + stride * Wo:stride, :]
            for a in range(k) for b in range(k)]
    col = jnp.concatenate(cols, axis=-1)                 # (N, Ho, Wo, k*k*C)
    return col.reshape(N * Ho * Wo, k * k * C), Ho, Wo


# ---------------------------------------------------------------------------
# Parameters: raw (PyTorch layout) + folded (BN fused, bf16, kernel layouts)
# ---------------------------------------------------------------------------
def _init_conv(key, cout, cin, k):
    kw, kb = jax.random.split(key)
    bound = 1.0 / float(np.sqrt(cin * k * k))
    w = jax.random.uniform(kw, (cout, cin, k, k), jnp.float32, -bound, bound)
    b = jax.random.uniform(kb, (cout,), jnp.float32, -bound, bound)
    return w, b


def _init_bn(key, c):
    k1, k2, k3, k4 = jax.random.split(key, 4)
    return (jax.random.uniform(k1, (c,), jnp.float32, 0.5, 1.5),    # gamma
            jax.random.uniform(k2, (c,), jnp.float32, -0.5, 0.5),   # beta
            0.1 * jax.random.normal(k3, (c,), jnp.float32),         # running_mean
            jax.random.uniform(k4, (c,), jnp.float32, 0.5, 1.5))    # running_var


def init_raw_params(key):
    ks = iter(jax.random.split(key, 24))
    raw = {}
    w, b = _init_conv(next(ks), 64, 1, 7)
    raw['b1'] = {'conv_w': w, 'conv_b': b, 'bn': _init_bn(next(ks), 64)}
    raw['b2'] = []
    for _ in range(2):
        w1, b1 = _init_conv(next(ks), 64, 64, 3)
        w2, b2 = _init_conv(next(ks), 64, 64, 3)
        raw['b2'].append({'conv1_w': w1, 'conv1_b': b1, 'bn1': _init_bn(next(ks), 64),
                          'conv2_w': w2, 'conv2_b': b2, 'bn2': _init_bn(next(ks), 64)})
    w1, b1 = _init_conv(next(ks), 128, 64, 3)
    w2, b2 = _init_conv(next(ks), 128, 128, 3)
    w3, b3 = _init_conv(next(ks), 128, 64, 1)
    blk0 = {'conv1_w': w1, 'conv1_b': b1, 'bn1': _init_bn(next(ks), 128),
            'conv2_w': w2, 'conv2_b': b2, 'bn2': _init_bn(next(ks), 128),
            'conv3_w': w3, 'conv3_b': b3}
    w1, b1 = _init_conv(next(ks), 128, 128, 3)
    w2, b2 = _init_conv(next(ks), 128, 128, 3)
    blk1 = {'conv1_w': w1, 'conv1_b': b1, 'bn1': _init_bn(next(ks), 128),
            'conv2_w': w2, 'conv2_b': b2, 'bn2': _init_bn(next(ks), 128)}
    raw['b3'] = [blk0, blk1]
    return raw


def _fold_bn(w, b, bn):
    g, beta, mean, var = bn
    s = g / jnp.sqrt(var + EPS)
    return w * s[:, None, None, None], (b - mean) * s + beta


def _w_2d(w):          # (Cout,Cin,kh,kw) -> (kh*kw*Cin, Cout), (kh,kw,ci) row order
    return jnp.transpose(w, (2, 3, 1, 0)).reshape(-1, w.shape[0])


def fold_params(raw):
    bf = jnp.bfloat16
    f = {}
    # stem: fold BN, flatten, zero-pad K 49 -> 64 (8-aligned), cast bf16
    w, b = _fold_bn(raw['b1']['conv_w'], raw['b1']['conv_b'], raw['b1']['bn'])
    w2d = _w_2d(w)
    kpad = _round_up(w2d.shape[0], 64)
    w2d = jnp.pad(w2d, ((0, kpad - w2d.shape[0]), (0, 0)))
    f['b1'] = {'w2d': w2d.astype(bf), 'b2d': b.reshape(1, -1)}
    f['b2'] = []
    for p in raw['b2']:
        w1, b1 = _fold_bn(p['conv1_w'], p['conv1_b'], p['bn1'])
        w2, b2 = _fold_bn(p['conv2_w'], p['conv2_b'], p['bn2'])
        f['b2'].append({'w1': _w_2d(w1).astype(bf), 'b1': b1.reshape(1, -1),
                        'w2': _w_2d(w2).astype(bf), 'b2': b2.reshape(1, -1)})
    p = raw['b3'][0]
    w1, b1 = _fold_bn(p['conv1_w'], p['conv1_b'], p['bn1'])
    w2, b2 = _fold_bn(p['conv2_w'], p['conv2_b'], p['bn2'])
    blk0 = {'w1': _w_2d(w1).astype(bf), 'b1': b1.reshape(1, -1),
            'w2': _w_2d(w2).astype(bf), 'b2': b2.reshape(1, -1),
            'ws': jnp.transpose(p['conv3_w'][:, :, 0, 0], (1, 0)).astype(bf),
            'bs': p['conv3_b'].reshape(1, -1)}
    p = raw['b3'][1]
    w1, b1 = _fold_bn(p['conv1_w'], p['conv1_b'], p['bn1'])
    w2, b2 = _fold_bn(p['conv2_w'], p['conv2_b'], p['bn2'])
    blk1 = {'w1': _w_2d(w1).astype(bf), 'b1': b1.reshape(1, -1),
            'w2': _w_2d(w2).astype(bf), 'b2': b2.reshape(1, -1)}
    f['b3'] = [blk0, blk1]
    return f


# ---------------------------------------------------------------------------
# Forward pass (NCHW in, NCHW out, like the PyTorch module)
# ---------------------------------------------------------------------------
def encoder_forward(x_nchw, params):
    x = jnp.transpose(x_nchw, (0, 2, 3, 1)).astype(jnp.float32)   # NHWC
    N = x.shape[0]

    # ---- b1: Conv(1->64,7,s2,p3)+BN+ReLU fused with MaxPool(3,2,1)
    w2d = params['b1']['w2d']
    Kp = w2d.shape[0]
    col, Hc, Wc = _im2col(x, 7, 2, 3)                              # (N*Hc*Wc, 49)
    col = jnp.pad(col, ((0, 0), (0, Kp - col.shape[-1])))
    col = col.reshape(N, Hc, Wc, Kp)
    Ho, Wo = Hc // 2, Wc // 2
    col_par = jnp.concatenate(
        [col[:, pr::2, pc::2, :].reshape(N, Ho * Wo, Kp)
         for pr in (0, 1) for pc in (0, 1)], axis=1).astype(jnp.bfloat16)
    xb = stem_conv_pool(col_par, w2d, params['b1']['b2d'], Ho, Wo)  # (N, Ho*Wo, 64) bf16

    # ---- b2: both identity Residual(64,64) blocks in one fused kernel
    xb = b2_stage(xb, Ho, Wo, params['b2'])

    # ---- b3: Residual(64,128,1x1,s2) + Residual(128,128) in one fused kernel
    C2 = xb.shape[-1]
    x4 = xb.reshape(N, Ho, Wo, C2)
    col1, H3, W3 = _im2col(x4, 3, 2, 1)                            # s2 patch gather (glue)
    col1 = col1.reshape(N, H3 * W3, 9 * C2)
    xs = x4[:, ::2, ::2, :].reshape(N, H3 * W3, C2)                # 1x1/s2 shortcut input
    xo = b3_stage(col1, xs, H3, W3, params['b3'])                  # (N, H3*W3, 128) bf16

    C3 = xo.shape[-1]
    return jnp.transpose(xo.reshape(N, H3, W3, C3), (0, 3, 1, 2)).astype(jnp.float32)


# ---------------------------------------------------------------------------
# Pure-JAX reference (XLA, HIGHEST precision, f32) of the same module
# ---------------------------------------------------------------------------
def _conv_ref(x, w, b, stride, pad):
    y = jax.lax.conv_general_dilated(
        x, jnp.transpose(w, (2, 3, 1, 0)),
        window_strides=(stride, stride),
        padding=[(pad, pad), (pad, pad)],
        dimension_numbers=('NHWC', 'HWIO', 'NHWC'),
        precision=jax.lax.Precision.HIGHEST)
    return y + b[None, None, None, :]


def _bn_ref(x, bn):
    g, beta, mean, var = bn
    return (x - mean) * (g / jnp.sqrt(var + EPS)) + beta


def _residual_ref(x, p, stride):
    y = jax.nn.relu(_bn_ref(_conv_ref(x, p['conv1_w'], p['conv1_b'], stride, 1), p['bn1']))
    y = _bn_ref(_conv_ref(y, p['conv2_w'], p['conv2_b'], 1, 1), p['bn2'])
    sc = x if 'conv3_w' not in p else _conv_ref(x, p['conv3_w'], p['conv3_b'], stride, 0)
    return jax.nn.relu(y + sc)


def encoder_ref(x_nchw, raw):
    x = jnp.transpose(x_nchw, (0, 2, 3, 1)).astype(jnp.float32)
    x = jax.nn.relu(_bn_ref(_conv_ref(x, raw['b1']['conv_w'], raw['b1']['conv_b'], 2, 3),
                            raw['b1']['bn']))
    x = jax.lax.reduce_window(x, -jnp.inf, jax.lax.max,
                              (1, 3, 3, 1), (1, 2, 2, 1),
                              [(0, 0), (1, 1), (1, 1), (0, 0)])
    for p in raw['b2']:
        x = _residual_ref(x, p, 1)
    x = _residual_ref(x, raw['b3'][0], 2)
    x = _residual_ref(x, raw['b3'][1], 1)
    return jnp.transpose(x, (0, 3, 1, 2))


if __name__ == "__main__":
    key = jax.random.PRNGKey(0)
    kx, kp = jax.random.split(key)
    x = jax.random.normal(kx, (2, 1, 32, 32), jnp.float32)   # NCHW, like PyTorch
    raw = init_raw_params(kp)
    params = fold_params(raw)             # BN folding + bf16 re-layout, outside jit

    fwd = jax.jit(encoder_forward)
    out = jax.block_until_ready(fwd(x, params))

    assert out.shape == (2, 128, 4, 4), out.shape
    assert bool(jnp.all(jnp.isfinite(out)))

    # numerical check of the (bf16-input, f32-accumulate) Pallas path vs f32 XLA
    ref = jax.block_until_ready(jax.jit(encoder_ref)(x, raw))
    err = float(jnp.max(jnp.abs(out - ref)))
    scale = 1.0 + float(jnp.max(jnp.abs(ref)))
    assert err <= 5e-2 * scale, (err, scale)

    print("KERNEL_OK")
</pallas_src>

<mosaic_0001>
module attributes {stable_mosaic.version = 11 : i64} {
  func.func @_stem_kernel(%arg0: i32, %arg1: memref<1x256x64xbf16, #tpu.memory_space<vmem>>, %arg2: memref<64x64xbf16, #tpu.memory_space<vmem>>, %arg3: memref<1x64xf32, #tpu.memory_space<vmem>>, %arg4: memref<1x64x64xbf16, #tpu.memory_space<vmem>>, %arg5: memref<3x80x64xf32, #tpu.memory_space<vmem>>) attributes {dimension_semantics = [#tpu.dimension_semantics<parallel>], iteration_bounds = array<i64: 2>, scalar_prefetch = 0 : i64, scratch_operands = 1 : i64, tpu.core_type = #tpu.core_type<tc>, window_params = [{transform_indices = @transform_0, window_bounds = array<i64: 1, 256, 64>}, {pipeline_mode = #tpu.pipeline_mode<synchronous>, transform_indices = @transform_1, window_bounds = array<i64: 64, 64>}, {pipeline_mode = #tpu.pipeline_mode<synchronous>, transform_indices = @transform_2, window_bounds = array<i64: 1, 64>}, {transform_indices = @transform_3, window_bounds = array<i64: 1, 64, 64>}]} {
    %c0 = arith.constant 0 : index
    %c0_0 = arith.constant 0 : index
    %c0_1 = arith.constant 0 : index
    %0 = vector.load %arg1[%c0, %c0_0, %c0_1] : memref<1x256x64xbf16, #tpu.memory_space<vmem>>, vector<1x256x64xbf16>
    %1 = vector.shape_cast %0 : vector<1x256x64xbf16> to vector<256x64xbf16>
    %c0_2 = arith.constant 0 : index
    %c0_3 = arith.constant 0 : index
    %2 = vector.load %arg2[%c0_2, %c0_3] : memref<64x64xbf16, #tpu.memory_space<vmem>>, vector<64x64xbf16>
    %cst = arith.constant dense<0.000000e+00> : vector<256x64xf32>
    %3 = tpu.matmul %1, %2, %cst {dimension_numbers = #tpu.dot_dimension_numbers<[1], [0], [0], [1], [0, 0, 1, 1], [], []>} : vector<256x64xbf16>, vector<64x64xbf16>, vector<256x64xf32> -> vector<256x64xf32>
    %c0_4 = arith.constant 0 : index
    %c0_5 = arith.constant 0 : index
    %4 = vector.load %arg3[%c0_4, %c0_5] : memref<1x64xf32, #tpu.memory_space<vmem>>, vector<1x64xf32>
    %5 = vector.broadcast %4 : vector<1x64xf32> to vector<256x64xf32>
    %6 = arith.addf %3, %5 : vector<256x64xf32>
    %cst_6 = arith.constant 0.000000e+00 : f32
    %7 = vector.broadcast %cst_6 : f32 to vector<256x64xf32>
    %8 = arith.maximumf %6, %7 : vector<256x64xf32>
    %9 = vector.extract_strided_slice %8 {offsets = [0, 0], sizes = [64, 64], strides = [1, 1]} : vector<256x64xf32> to vector<64x64xf32>
    %10 = vector.extract_strided_slice %8 {offsets = [64, 0], sizes = [64, 64], strides = [1, 1]} : vector<256x64xf32> to vector<64x64xf32>
    %11 = vector.extract_strided_slice %8 {offsets = [128, 0], sizes = [64, 64], strides = [1, 1]} : vector<256x64xf32> to vector<64x64xf32>
    %12 = vector.extract_strided_slice %8 {offsets = [192, 0], sizes = [64, 64], strides = [1, 1]} : vector<256x64xf32> to vector<64x64xf32>
    %cst_7 = arith.constant 0.000000e+00 : f32
    %13 = vector.broadcast %cst_7 : f32 to vector<16x64xf32>
    %c0_8 = arith.constant 0 : index
    %c0_9 = arith.constant 0 : index
    %c0_10 = arith.constant 0 : index
    %14 = vector.load %arg5[%c0_8, %c0_9, %c0_10] : memref<3x80x64xf32, #tpu.memory_space<vmem>>, vector<1x16x64xf32>
    %15 = vector.shape_cast %14 : vector<1x16x64xf32> to vector<16x64xf32>
    %16 = vector.shape_cast %13 : vector<16x64xf32> to vector<1x16x64xf32>
    tpu.vector_store %arg5[%c0_8, %c0_9, %c0_10], %16 {strides = array<i32>} : memref<3x80x64xf32, #tpu.memory_space<vmem>>, vector<1x16x64xf32>,
    %cst_11 = arith.constant 0.000000e+00 : f32
    %17 = vector.broadcast %cst_11 : f32 to vector<16x64xf32>
    %c1 = arith.constant 1 : index
    %c0_12 = arith.constant 0 : index
    %c0_13 = arith.constant 0 : index
    %18 = vector.load %arg5[%c1, %c0_12, %c0_13] : memref<3x80x64xf32, #tpu.memory_space<vmem>>, vector<1x16x64xf32>
    %19 = vector.shape_cast %18 : vector<1x16x64xf32> to vector<16x64xf32>
    %20 = vector.shape_cast %17 : vector<16x64xf32> to vector<1x16x64xf32>
    tpu.vector_store %arg5[%c1, %c0_12, %c0_13], %20 {strides = array<i32>} : memref<3x80x64xf32, #tpu.memory_space<vmem>>, vector<1x16x64xf32>,
    %cst_14 = arith.constant 0.000000e+00 : f32
    %21 = vector.broadcast %cst_14 : f32 to vector<16x64xf32>
    %c2 = arith.constant 2 : index
    %c0_15 = arith.constant 0 : index
    %c0_16 = arith.constant 0 : index
    %22 = vector.load %arg5[%c2, %c0_15, %c0_16] : memref<3x80x64xf32, #tpu.memory_space<vmem>>, vector<1x16x64xf32>
    %23 = vector.shape_cast %22 : vector<1x16x64xf32> to vector<16x64xf32>
    %24 = vector.shape_cast %21 : vector<16x64xf32> to vector<1x16x64xf32>
    tpu.vector_store %arg5[%c2, %c0_15, %c0_16], %24 {strides = array<i32>} : memref<3x80x64xf32, #tpu.memory_space<vmem>>, vector<1x16x64xf32>,
    %c0_17 = arith.constant 0 : index
    %c16 = arith.constant 16 : index
    %c0_18 = arith.constant 0 : index
    %25 = vector.load %arg5[%c0_17, %c16, %c0_18] : memref<3x80x64xf32, #tpu.memory_space<vmem>>, vector<1x64x64xf32>
    %26 = vector.shape_cast %25 : vector<1x64x64xf32> to vector<64x64xf32>
    %27 = vector.shape_cast %10 : vector<64x64xf32> to vector<1x64x64xf32>
    tpu.vector_store %arg5[%c0_17, %c16, %c0_18], %27 {strides = array<i32>} : memref<3x80x64xf32, #tpu.memory_space<vmem>>, vector<1x64x64xf32>,
    %c1_19 = arith.constant 1 : index
    %c16_20 = arith.constant 16 : index
    %c0_21 = arith.constant 0 : index
    %28 = vector.load %arg5[%c1_19, %c16_20, %c0_21] : memref<3x80x64xf32, #tpu.memory_space<vmem>>, vector<1x64x64xf32>
    %29 = vector.shape_cast %28 : vector<1x64x64xf32> to vector<64x64xf32>
    %30 = vector.shape_cast %11 : vector<64x64xf32> to vector<1x64x64xf32>
    tpu.vector_store %arg5[%c1_19, %c16_20, %c0_21], %30 {strides = array<i32>} : memref<3x80x64xf32, #tpu.memory_space<vmem>>, vector<1x64x64xf32>,
    %c2_22 = arith.constant 2 : index
    %c16_23 = arith.constant 16 : index
    %c0_24 = arith.constant 0 : index
    %31 = vector.load %arg5[%c2_22, %c16_23, %c0_24] : memref<3x80x64xf32, #tpu.memory_space<vmem>>, vector<1x64x64xf32>
    %32 = vector.shape_cast %31 : vector<1x64x64xf32> to vector<64x64xf32>
    %33 = vector.shape_cast %12 : vector<64x64xf32> to vector<1x64x64xf32>
    tpu.vector_store %arg5[%c2_22, %c16_23, %c0_24], %33 {strides = array<i32>} : memref<3x80x64xf32, #tpu.memory_space<vmem>>, vector<1x64x64xf32>,
    %34 = tpu.iota {dimensions = array<i32: 0>} : vector<64x64xi32>
    %c8_i32 = arith.constant 8 : i32
    %c0_i32 = arith.constant 0 : i32
    %35 = arith.cmpi eq, %c8_i32, %c0_i32 : i32
    %c1_i32 = arith.constant 1 : i32
    %36 = arith.select %35, %c1_i32, %c8_i32 : i32
    %37 = vector.broadcast %36 : i32 to vector<64x64xi32>
    %38 = arith.remsi %34, %37 : vector<64x64xi32>
    %c0_i32_25 = arith.constant 0 : i32
    %39 = vector.broadcast %c0_i32_25 : i32 to vector<64x64xi32>
    %40 = arith.cmpi ne, %38, %39 : vector<64x64xi32>
    %c0_i32_26 = arith.constant 0 : i32
    %41 = vector.broadcast %c0_i32_26 : i32 to vector<64x64xi32>
    %42 = arith.cmpi slt, %38, %41 : vector<64x64xi32>
    %c0_i32_27 = arith.constant 0 : i32
    %43 = arith.cmpi slt, %36, %c0_i32_27 : i32
    %44 = vector.broadcast %43 : i1 to vector<64x64xi1>
    %45 = vector.broadcast %44 : vector<64x64xi1> to vector<64x64xi1>
    %46 = arith.xori %42, %45 : vector<64x64xi1>
    %47 = arith.andi %46, %40 : vector<64x64xi1>
    %48 = vector.broadcast %36 : i32 to vector<64x64xi32>
    %49 = arith.addi %38, %48 : vector<64x64xi32>
    %50 = arith.select %47, %49, %38 : vector<64x64xi1>, vector<64x64xi32>
    %c0_i32_28 = arith.constant 0 : i32
    %51 = vector.broadcast %c0_i32_28 : i32 to vector<64x64xi32>
    %52 = arith.cmpi ne, %50, %51 : vector<64x64xi32>
    %53 = arith.maximumf %9, %10 : vector<64x64xf32>
    %54 = arith.maximumf %11, %12 : vector<64x64xf32>
    %55 = arith.maximumf %53, %54 : vector<64x64xf32>
    %c0_29 = arith.constant 0 : index
    %c15 = arith.constant 15 : index
    %c0_30 = arith.constant 0 : index
    %56 = vector.load %arg5[%c0_29, %c15, %c0_30] : memref<3x80x64xf32, #tpu.memory_space<vmem>>, vector<1x64x64xf32>
    %57 = vector.shape_cast %56 : vector<1x64x64xf32> to vector<64x64xf32>
    %cst_31 = arith.constant 0.000000e+00 : f32
    %58 = vector.broadcast %cst_31 : f32 to vector<64x64xf32>
    %59 = arith.select %52, %57, %58 : vector<64x64xi1>, vector<64x64xf32>
    %60 = arith.maximumf %55, %59 : vector<64x64xf32>
    %c2_32 = arith.constant 2 : index
    %c15_33 = arith.constant 15 : index
    %c0_34 = arith.constant 0 : index
    %61 = vector.load %arg5[%c2_32, %c15_33, %c0_34] : memref<3x80x64xf32, #tpu.memory_space<vmem>>, vector<1x64x64xf32>
    %62 = vector.shape_cast %61 : vector<1x64x64xf32> to vector<64x64xf32>
    %cst_35 = arith.constant 0.000000e+00 : f32
    %63 = vector.broadcast %cst_35 : f32 to vector<64x64xf32>
    %64 = arith.select %52, %62, %63 : vector<64x64xi1>, vector<64x64xf32>
    %65 = arith.maximumf %60, %64 : vector<64x64xf32>
    %c1_36 = arith.constant 1 : index
    %c8 = arith.constant 8 : index
    %c0_37 = arith.constant 0 : index
    %66 = vector.load %arg5[%c1_36, %c8, %c0_37] : memref<3x80x64xf32, #tpu.memory_space<vmem>>, vector<1x64x64xf32>
    %67 = vector.shape_cast %66 : vector<1x64x64xf32> to vector<64x64xf32>
    %68 = arith.maximumf %65, %67 : vector<64x64xf32>
    %c2_38 = arith.constant 2 : index
    %c8_39 = arith.constant 8 : index
    %c0_40 = arith.constant 0 : index
    %69 = vector.load %arg5[%c2_38, %c8_39, %c0_40] : memref<3x80x64xf32, #tpu.memory_space<vmem>>, vector<1x64x64xf32>
    %70 = vector.shape_cast %69 : vector<1x64x64xf32> to vector<64x64xf32>
    %71 = arith.maximumf %68, %70 : vector<64x64xf32>
    %c2_41 = arith.constant 2 : index
    %c7 = arith.constant 7 : index
    %c0_42 = arith.constant 0 : index
    %72 = vector.load %arg5[%c2_41, %c7, %c0_42] : memref<3x80x64xf32, #tpu.memory_space<vmem>>, vector<1x64x64xf32>
    %73 = vector.shape_cast %72 : vector<1x64x64xf32> to vector<64x64xf32>
    %cst_43 = arith.constant 0.000000e+00 : f32
    %74 = vector.broadcast %cst_43 : f32 to vector<64x64xf32>
    %75 = arith.select %52, %73, %74 : vector<64x64xi1>, vector<64x64xf32>
    %76 = arith.maximumf %71, %75 : vector<64x64xf32>
    %77 = arith.truncf %76 : vector<64x64xf32> to vector<64x64xbf16>
    %c0_44 = arith.constant 0 : index
    %c0_45 = arith.constant 0 : index
    %c0_46 = arith.constant 0 : index
    %78 = vector.load %arg4[%c0_44, %c0_45, %c0_46] : memref<1x64x64xbf16, #tpu.memory_space<vmem>>, vector<1x64x64xbf16>
    %79 = vector.shape_cast %78 : vector<1x64x64xbf16> to vector<64x64xbf16>
    %80 = vector.shape_cast %77 : vector<64x64xbf16> to vector<1x64x64xbf16>
    tpu.vector_store %arg4[%c0_44, %c0_45, %c0_46], %80 {strides = array<i32>} : memref<1x64x64xbf16, #tpu.memory_space<vmem>>, vector<1x64x64xbf16>,
    return
  }
  func.func @transform_0(%arg0: i32) -> (i32, i32, i32) {
    %c0_i32 = arith.constant 0 : i32
    %c0_i32_0 = arith.constant 0 : i32
    %c0_i32_1 = arith.constant 0 : i32
    return %arg0, %c0_i32, %c0_i32_0 : i32, i32, i32
  }
  func.func @transform_1(%arg0: i32) -> (i32, i32) {
    %c0_i32 = arith.constant 0 : i32
    %c0_i32_0 = arith.constant 0 : i32
    %c0_i32_1 = arith.constant 0 : i32
    return %c0_i32, %c0_i32_0 : i32, i32
  }
  func.func @transform_2(%arg0: i32) -> (i32, i32) {
    %c0_i32 = arith.constant 0 : i32
    %c0_i32_0 = arith.constant 0 : i32
    %c0_i32_1 = arith.constant 0 : i32
    return %c0_i32, %c0_i32_0 : i32, i32
  }
  func.func @transform_3(%arg0: i32) -> (i32, i32, i32) {
    %c0_i32 = arith.constant 0 : i32
    %c0_i32_0 = arith.constant 0 : i32
    %c0_i32_1 = arith.constant 0 : i32
    return %arg0, %c0_i32, %c0_i32_0 : i32, i32, i32
  }
}

module attributes {stable_mosaic.version = 11 : i64} {
  func.func @_b2_kernel(%arg0: i32, %arg1: memref<1x64x64xbf16, #tpu.memory_space<vmem>>, %arg2: memref<576x64xbf16, #tpu.memory_space<vmem>>, %arg3: memref<1x64xf32, #tpu.memory_space<vmem>>, %arg4: memref<576x64xbf16, #tpu.memory_space<vmem>>, %arg5: memref<1x64xf32, #tpu.memory_space<vmem>>, %arg6: memref<576x64xbf16, #tpu.memory_space<vmem>>, %arg7: memref<1x64xf32, #tpu.memory_space<vmem>>, %arg8: memref<576x64xbf16, #tpu.memory_space<vmem>>, %arg9: memref<1x64xf32, #tpu.memory_space<vmem>>, %arg10: memref<1x64x64xbf16, #tpu.memory_space<vmem>>, %arg11: memref<96x64xf32, #tpu.memory_space<vmem>>, %arg12: memref<64x576xbf16, #tpu.memory_space<vmem>>) attributes {dimension_semantics = [#tpu.dimension_semantics<parallel>], iteration_bounds = array<i64: 2>, scalar_prefetch = 0 : i64, scratch_operands = 2 : i64, tpu.core_type = #tpu.core_type<tc>, window_params = [{transform_indices = @transform_0, window_bounds = array<i64: 1, 64, 64>}, {pipeline_mode = #tpu.pipeline_mode<synchronous>, transform_indices = @transform_1, window_bounds = array<i64: 576, 64>}, {pipeline_mode = #tpu.pipeline_mode<synchronous>, transform_indices = @transform_2, window_bounds = array<i64: 1, 64>}, {pipeline_mode = #tpu.pipeline_mode<synchronous>, transform_indices = @transform_3, window_bounds = array<i64: 576, 64>}, {pipeline_mode = #tpu.pipeline_mode<synchronous>, transform_indices = @transform_4, window_bounds = array<i64: 1, 64>}, {pipeline_mode = #tpu.pipeline_mode<synchronous>, transform_indices = @transform_5, window_bounds = array<i64: 576, 64>}, {pipeline_mode = #tpu.pipeline_mode<synchronous>, transform_indices = @transform_6, window_bounds = array<i64: 1, 64>}, {pipeline_mode = #tpu.pipeline_mode<synchronous>, transform_indices = @transform_7, window_bounds = array<i64: 576, 64>}, {pipeline_mode = #tpu.pipeline_mode<synchronous>, transform_indices = @transform_8, window_bounds = array<i64: 1, 64>}, {transform_indices = @transform_9, window_bounds = array<i64: 1, 64, 64>}]} {
    %0 = tpu.iota {dimensions = array<i32: 0>} : vector<64x64xi32>
    %c8_i32 = arith.constant 8 : i32
    %c0_i32 = arith.constant 0 : i32
    %1 = arith.cmpi eq, %c8_i32, %c0_i32 : i32
    %c1_i32 = arith.constant 1 : i32
    %2 = arith.select %1, %c1_i32, %c8_i32 : i32
    %3 = vector.broadcast %2 : i32 to vector<64x64xi32>
    %4 = arith.remsi %0, %3 : vector<64x64xi32>
    %c0_i32_0 = arith.constant 0 : i32
    %5 = vector.broadcast %c0_i32_0 : i32 to vector<64x64xi32>
    %6 = arith.cmpi ne, %4, %5 : vector<64x64xi32>
    %c0_i32_1 = arith.constant 0 : i32
    %7 = vector.broadcast %c0_i32_1 : i32 to vector<64x64xi32>
    %8 = arith.cmpi slt, %4, %7 : vector<64x64xi32>
    %c0_i32_2 = arith.constant 0 : i32
    %9 = arith.cmpi slt, %2, %c0_i32_2 : i32
    %10 = vector.broadcast %9 : i1 to vector<64x64xi1>
    %11 = vector.broadcast %10 : vector<64x64xi1> to vector<64x64xi1>
    %12 = arith.xori %8, %11 : vector<64x64xi1>
    %13 = arith.andi %12, %6 : vector<64x64xi1>
    %14 = vector.broadcast %2 : i32 to vector<64x64xi32>
    %15 = arith.addi %4, %14 : vector<64x64xi32>
    %16 = arith.select %13, %15, %4 : vector<64x64xi1>, vector<64x64xi32>
    %c0_i32_3 = arith.constant 0 : i32
    %17 = vector.broadcast %c0_i32_3 : i32 to vector<64x64xi32>
    %18 = arith.cmpi ne, %16, %17 : vector<64x64xi32>
    %c7_i32 = arith.constant 7 : i32
    %19 = vector.broadcast %c7_i32 : i32 to vector<64x64xi32>
    %20 = arith.cmpi ne, %16, %19 : vector<64x64xi32>
    %cst = arith.constant 0.000000e+00 : f32
    %21 = vector.broadcast %cst : f32 to vector<16x64xf32>
    %c0 = arith.constant 0 : index
    %c0_4 = arith.constant 0 : index
    %22 = vector.load %arg11[%c0, %c0_4] : memref<96x64xf32, #tpu.memory_space<vmem>>, vector<16x64xf32>
    tpu.vector_store %arg11[%c0, %c0_4], %21 {strides = array<i32>} : memref<96x64xf32, #tpu.memory_space<vmem>>, vector<16x64xf32>,
    %cst_5 = arith.constant 0.000000e+00 : f32
    %23 = vector.broadcast %cst_5 : f32 to vector<16x64xf32>
    %c80 = arith.constant 80 : index
    %c0_6 = arith.constant 0 : index
    %24 = vector.load %arg11[%c80, %c0_6] : memref<96x64xf32, #tpu.memory_space<vmem>>, vector<16x64xf32>
    tpu.vector_store %arg11[%c80, %c0_6], %23 {strides = array<i32>} : memref<96x64xf32, #tpu.memory_space<vmem>>, vector<16x64xf32>,
    %c0_7 = arith.constant 0 : index
    %c0_8 = arith.constant 0 : index
    %c0_9 = arith.constant 0 : index
    %25 = vector.load %arg1[%c0_7, %c0_8, %c0_9] : memref<1x64x64xbf16, #tpu.memory_space<vmem>>, vector<1x64x64xbf16>
    %26 = vector.shape_cast %25 : vector<1x64x64xbf16> to vector<64x64xbf16>
    %27 = arith.extf %26 : vector<64x64xbf16> to vector<64x64xf32>
    %c16 = arith.constant 16 : index
    %c0_10 = arith.constant 0 : index
    %28 = vector.load %arg11[%c16, %c0_10] : memref<96x64xf32, #tpu.memory_space<vmem>>, vector<64x64xf32>
    tpu.vector_store %arg11[%c16, %c0_10], %27 {strides = array<i32>} : memref<96x64xf32, #tpu.memory_space<vmem>>, vector<64x64xf32>,
    %c7 = arith.constant 7 : index
    %c0_11 = arith.constant 0 : index
    %29 = vector.load %arg11[%c7, %c0_11] : memref<96x64xf32, #tpu.memory_space<vmem>>, vector<64x64xf32>
    %cst_12 = arith.constant 0.000000e+00 : f32
    %30 = vector.broadcast %cst_12 : f32 to vector<64x64xf32>
    %31 = arith.select %18, %29, %30 : vector<64x64xi1>, vector<64x64xf32>
    %32 = arith.truncf %31 : vector<64x64xf32> to vector<64x64xbf16>
    %c0_13 = arith.constant 0 : index
    %c0_14 = arith.constant 0 : index
    %33 = vector.load %arg12[%c0_13, %c0_14] : memref<64x576xbf16, #tpu.memory_space<vmem>>, vector<64x64xbf16>
    tpu.vector_store %arg12[%c0_13, %c0_14], %32 {strides = array<i32>} : memref<64x576xbf16, #tpu.memory_space<vmem>>, vector<64x64xbf16>,
    %c8 = arith.constant 8 : index
    %c0_15 = arith.constant 0 : index
    %34 = vector.load %arg11[%c8, %c0_15] : memref<96x64xf32, #tpu.memory_space<vmem>>, vector<64x64xf32>
    %35 = arith.truncf %34 : vector<64x64xf32> to vector<64x64xbf16>
    %c0_16 = arith.constant 0 : index
    %c64 = arith.constant 64 : index
    %36 = vector.load %arg12[%c0_16, %c64] : memref<64x576xbf16, #tpu.memory_space<vmem>>, vector<64x64xbf16>
    tpu.vector_store %arg12[%c0_16, %c64], %35 {strides = array<i32>} : memref<64x576xbf16, #tpu.memory_space<vmem>>, vector<64x64xbf16>,
    %c9 = arith.constant 9 : index
    %c0_17 = arith.constant 0 : index
    %37 = vector.load %arg11[%c9, %c0_17] : memref<96x64xf32, #tpu.memory_space<vmem>>, vector<64x64xf32>
    %cst_18 = arith.constant 0.000000e+00 : f32
    %38 = vector.broadcast %cst_18 : f32 to vector<64x64xf32>
    %39 = arith.select %20, %37, %38 : vector<64x64xi1>, vector<64x64xf32>
    %40 = arith.truncf %39 : vector<64x64xf32> to vector<64x64xbf16>
    %c0_19 = arith.constant 0 : index
    %c128 = arith.constant 128 : index
    %41 = vector.load %arg12[%c0_19, %c128] : memref<64x576xbf16, #tpu.memory_space<vmem>>, vector<64x64xbf16>
    tpu.vector_store %arg12[%c0_19, %c128], %40 {strides = array<i32>} : memref<64x576xbf16, #tpu.memory_space<vmem>>, vector<64x64xbf16>,
    %c15 = arith.constant 15 : index
    %c0_20 = arith.constant 0 : index
    %42 = vector.load %arg11[%c15, %c0_20] : memref<96x64xf32, #tpu.memory_space<vmem>>, vector<64x64xf32>
    %cst_21 = arith.constant 0.000000e+00 : f32
    %43 = vector.broadcast %cst_21 : f32 to vector<64x64xf32>
    %44 = arith.select %18, %42, %43 : vector<64x64xi1>, vector<64x64xf32>
    %45 = arith.truncf %44 : vector<64x64xf32> to vector<64x64xbf16>
    %c0_22 = arith.constant 0 : index
    %c192 = arith.constant 192 : index
    %46 = vector.load %arg12[%c0_22, %c192] : memref<64x576xbf16, #tpu.memory_space<vmem>>, vector<64x64xbf16>
    tpu.vector_store %arg12[%c0_22, %c192], %45 {strides = array<i32>} : memref<64x576xbf16, #tpu.memory_space<vmem>>, vector<64x64xbf16>,
    %c16_23 = arith.constant 16 : index
    %c0_24 = arith.constant 0 : index
    %47 = vector.load %arg11[%c16_23, %c0_24] : memref<96x64xf32, #tpu.memory_space<vmem>>, vector<64x64xf32>
    %48 = arith.truncf %47 : vector<64x64xf32> to vector<64x64xbf16>
    %c0_25 = arith.constant 0 : index
    %c256 = arith.constant 256 : index
    %49 = vector.load %arg12[%c0_25, %c256] : memref<64x576xbf16, #tpu.memory_space<vmem>>, vector<64x64xbf16>
    tpu.vector_store %arg12[%c0_25, %c256], %48 {strides = array<i32>} : memref<64x576xbf16, #tpu.memory_space<vmem>>, vector<64x64xbf16>,
    %c17 = arith.constant 17 : index
    %c0_26 = arith.constant 0 : index
    %50 = vector.load %arg11[%c17, %c0_26] : memref<96x64xf32, #tpu.memory_space<vmem>>, vector<64x64xf32>
    %cst_27 = arith.constant 0.000000e+00 : f32
    %51 = vector.broadcast %cst_27 : f32 to vector<64x64xf32>
    %52 = arith.select %20, %50, %51 : vector<64x64xi1>, vector<64x64xf32>
    %53 = arith.truncf %52 : vector<64x64xf32> to vector<64x64xbf16>
    %c0_28 = arith.constant 0 : index
    %c320 = arith.constant 320 : index
    %54 = vector.load %arg12[%c0_28, %c320] : memref<64x576xbf16, #tpu.memory_space<vmem>>, vector<64x64xbf16>
    tpu.vector_store %arg12[%c0_28, %c320], %53 {strides = array<i32>} : memref<64x576xbf16, #tpu.memory_space<vmem>>, vector<64x64xbf16>,
    %c23 = arith.constant 23 : index
    %c0_29 = arith.constant 0 : index
    %55 = vector.load %arg11[%c23, %c0_29] : memref<96x64xf32, #tpu.memory_space<vmem>>, vector<64x64xf32>
    %cst_30 = arith.constant 0.000000e+00 : f32
    %56 = vector.broadcast %cst_30 : f32 to vector<64x64xf32>
    %57 = arith.select %18, %55, %56 : vector<64x64xi1>, vector<64x64xf32>
    %58 = arith.truncf %57 : vector<64x64xf32> to vector<64x64xbf16>
    %c0_31 = arith.constant 0 : index
    %c384 = arith.constant 384 : index
    %59 = vector.load %arg12[%c0_31, %c384] : memref<64x576xbf16, #tpu.memory_space<vmem>>, vector<64x64xbf16>
    tpu.vector_store %arg12[%c0_31, %c384], %58 {strides = array<i32>} : memref<64x576xbf16, #tpu.memory_space<vmem>>, vector<64x64xbf16>,
    %c24 = arith.constant 24 : index
    %c0_32 = arith.constant 0 : index
    %60 = vector.load %arg11[%c24, %c0_32] : memref<96x64xf32, #tpu.memory_space<vmem>>, vector<64x64xf32>
    %61 = arith.truncf %60 : vector<64x64xf32> to vector<64x64xbf16>
    %c0_33 = arith.constant 0 : index
    %c448 = arith.constant 448 : index
    %62 = vector.load %arg12[%c0_33, %c448] : memref<64x576xbf16, #tpu.memory_space<vmem>>, vector<64x64xbf16>
    tpu.vector_store %arg12[%c0_33, %c448], %61 {strides = array<i32>} : memref<64x576xbf16, #tpu.memory_space<vmem>>, vector<64x64xbf16>,
    %c25 = arith.constant 25 : index
    %c0_34 = arith.constant 0 : index
    %63 = vector.load %arg11[%c25, %c0_34] : memref<96x64xf32, #tpu.memory_space<vmem>>, vector<64x64xf32>
    %cst_35 = arith.constant 0.000000e+00 : f32
    %64 = vector.broadcast %cst_35 : f32 to vector<64x64xf32>
    %65 = arith.select %20, %63, %64 : vector<64x64xi1>, vector<64x64xf32>
    %66 = arith.truncf %65 : vector<64x64xf32> to vector<64x64xbf16>
    %c0_36 = arith.constant 0 : index
    %c512 = arith.constant 512 : index
    %67 = vector.load %arg12[%c0_36, %c512] : memref<64x576xbf16, #tpu.memory_space<vmem>>, vector<64x64xbf16>
    tpu.vector_store %arg12[%c0_36, %c512], %66 {strides = array<i32>} : memref<64x576xbf16, #tpu.memory_space<vmem>>, vector<64x64xbf16>,
    %c0_37 = arith.constant 0 : index
    %c0_38 = arith.constant 0 : index
    %68 = vector.load %arg12[%c0_37, %c0_38] : memref<64x576xbf16, #tpu.memory_space<vmem>>, vector<64x576xbf16>
    %c0_39 = arith.constant 0 : index
    %c0_40 = arith.constant 0 : index
    %69 = vector.load %arg2[%c0_39, %c0_40] : memref<576x64xbf16, #tpu.memory_space<vmem>>, vector<576x64xbf16>
    %cst_41 = arith.constant dense<0.000000e+00> : vector<64x64xf32>
    %70 = tpu.matmul %68, %69, %cst_41 {dimension_numbers = #tpu.dot_dimension_numbers<[1], [0], [0], [1], [0, 0, 1, 1], [], []>} : vector<64x576xbf16>, vector<576x64xbf16>, vector<64x64xf32> -> vector<64x64xf32>
    %c0_42 = arith.constant 0 : index
    %c0_43 = arith.constant 0 : index
    %71 = vector.load %arg3[%c0_42, %c0_43] : memref<1x64xf32, #tpu.memory_space<vmem>>, vector<1x64xf32>
    %72 = vector.broadcast %71 : vector<1x64xf32> to vector<64x64xf32>
    %73 = arith.addf %70, %72 : vector<64x64xf32>
    %cst_44 = arith.constant 0.000000e+00 : f32
    %74 = vector.broadcast %cst_44 : f32 to vector<64x64xf32>
    %75 = arith.maximumf %73, %74 : vector<64x64xf32>
    %c16_45 = arith.constant 16 : index
    %c0_46 = arith.constant 0 : index
    %76 = vector.load %arg11[%c16_45, %c0_46] : memref<96x64xf32, #tpu.memory_space<vmem>>, vector<64x64xf32>
    tpu.vector_store %arg11[%c16_45, %c0_46], %75 {strides = array<i32>} : memref<96x64xf32, #tpu.memory_space<vmem>>, vector<64x64xf32>,
    %c7_47 = arith.constant 7 : index
    %c0_48 = arith.constant 0 : index
    %77 = vector.load %arg11[%c7_47, %c0_48] : memref<96x64xf32, #tpu.memory_space<vmem>>, vector<64x64xf32>
    %cst_49 = arith.constant 0.000000e+00 : f32
    %78 = vector.broadcast %cst_49 : f32 to vector<64x64xf32>
    %79 = arith.select %18, %77, %78 : vector<64x64xi1>, vector<64x64xf32>
    %80 = arith.truncf %79 : vector<64x64xf32> to vector<64x64xbf16>
    %c0_50 = arith.constant 0 : index
    %c0_51 = arith.constant 0 : index
    %81 = vector.load %arg12[%c0_50, %c0_51] : memref<64x576xbf16, #tpu.memory_space<vmem>>, vector<64x64xbf16>
    tpu.vector_store %arg12[%c0_50, %c0_51], %80 {strides = array<i32>} : memref<64x576xbf16, #tpu.memory_space<vmem>>, vector<64x64xbf16>,
    %c8_52 = arith.constant 8 : index
    %c0_53 = arith.constant 0 : index
    %82 = vector.load %arg11[%c8_52, %c0_53] : memref<96x64xf32, #tpu.memory_space<vmem>>, vector<64x64xf32>
    %83 = arith.truncf %82 : vector<64x64xf32> to vector<64x64xbf16>
    %c0_54 = arith.constant 0 : index
    %c64_55 = arith.constant 64 : index
    %84 = vector.load %arg12[%c0_54, %c64_55] : memref<64x576xbf16, #tpu.memory_space<vmem>>, vector<64x64xbf16>
    tpu.vector_store %arg12[%c0_54, %c64_55], %83 {strides = array<i32>} : memref<64x576xbf16, #tpu.memory_space<vmem>>, vector<64x64xbf16>,
    %c9_56 = arith.constant 9 : index
    %c0_57 = arith.constant 0 : index
    %85 = vector.load %arg11[%c9_56, %c0_57] : memref<96x64xf32, #tpu.memory_space<vmem>>, vector<64x64xf32>
    %cst_58 = arith.constant 0.000000e+00 : f32
    %86 = vector.broadcast %cst_58 : f32 to vector<64x64xf32>
    %87 = arith.select %20, %85, %86 : vector<64x64xi1>, vector<64x64xf32>
    %88 = arith.truncf %87 : vector<64x64xf32> to vector<64x64xbf16>
    %c0_59 = arith.constant 0 : index
    %c128_60 = arith.constant 128 : index
    %89 = vector.load %arg12[%c0_59, %c128_60] : memref<64x576xbf16, #tpu.memory_space<vmem>>, vector<64x64xbf16>
    tpu.vector_store %arg12[%c0_59, %c128_60], %88 {strides = array<i32>} : memref<64x576xbf16, #tpu.memory_space<vmem>>, vector<64x64xbf16>,
    %c15_61 = arith.constant 15 : index
    %c0_62 = arith.constant 0 : index
    %90 = vector.load %arg11[%c15_61, %c0_62] : memref<96x64xf32, #tpu.memory_space<vmem>>, vector<64x64xf32>
    %cst_63 = arith.constant 0.000000e+00 : f32
    %91 = vector.broadcast %cst_63 : f32 to vector<64x64xf32>
    %92 = arith.select %18, %90, %91 : vector<64x64xi1>, vector<64x64xf32>
    %93 = arith.truncf %92 : vector<64x64xf32> to vector<64x64xbf16>
    %c0_64 = arith.constant 0 : index
    %c192_65 = arith.constant 192 : index
    %94 = vector.load %arg12[%c0_64, %c192_65] : memref<64x576xbf16, #tpu.memory_space<vmem>>, vector<64x64xbf16>
    tpu.vector_store %arg12[%c0_64, %c192_65], %93 {strides = array<i32>} : memref<64x576xbf16, #tpu.memory_space<vmem>>, vector<64x64xbf16>,
    %c16_66 = arith.constant 16 : index
    %c0_67 = arith.constant 0 : index
    %95 = vector.load %arg11[%c16_66, %c0_67] : memref<96x64xf32, #tpu.memory_space<vmem>>, vector<64x64xf32>
    %96 = arith.truncf %95 : vector<64x64xf32> to vector<64x64xbf16>
    %c0_68 = arith.constant 0 : index
    %c256_69 = arith.constant 256 : index
    %97 = vector.load %arg12[%c0_68, %c256_69] : memref<64x576xbf16, #tpu.memory_space<vmem>>, vector<64x64xbf16>
    tpu.vector_store %arg12[%c0_68, %c256_69], %96 {strides = array<i32>} : memref<64x576xbf16, #tpu.memory_space<vmem>>, vector<64x64xbf16>,
    %c17_70 = arith.constant 17 : index
    %c0_71 = arith.constant 0 : index
    %98 = vector.load %arg11[%c17_70, %c0_71] : memref<96x64xf32, #tpu.memory_space<vmem>>, vector<64x64xf32>
    %cst_72 = arith.constant 0.000000e+00 : f32
    %99 = vector.broadcast %cst_72 : f32 to vector<64x64xf32>
    %100 = arith.select %20, %98, %99 : vector<64x64xi1>, vector<64x64xf32>
    %101 = arith.truncf %100 : vector<64x64xf32> to vector<64x64xbf16>
    %c0_73 = arith.constant 0 : index
    %c320_74 = arith.constant 320 : index
    %102 = vector.load %arg12[%c0_73, %c320_74] : memref<64x576xbf16, #tpu.memory_space<vmem>>, vector<64x64xbf16>
    tpu.vector_store %arg12[%c0_73, %c320_74], %101 {strides = array<i32>} : memref<64x576xbf16, #tpu.memory_space<vmem>>, vector<64x64xbf16>,
    %c23_75 = arith.constant 23 : index
    %c0_76 = arith.constant 0 : index
    %103 = vector.load %arg11[%c23_75, %c0_76] : memref<96x64xf32, #tpu.memory_space<vmem>>, vector<64x64xf32>
    %cst_77 = arith.constant 0.000000e+00 : f32
    %104 = vector.broadcast %cst_77 : f32 to vector<64x64xf32>
    %105 = arith.select %18, %103, %104 : vector<64x64xi1>, vector<64x64xf32>
    %106 = arith.truncf %105 : vector<64x64xf32> to vector<64x64xbf16>
    %c0_78 = arith.constant 0 : index
    %c384_79 = arith.constant 384 : index
    %107 = vector.load %arg12[%c0_78, %c384_79] : memref<64x576xbf16, #tpu.memory_space<vmem>>, vector<64x64xbf16>
    tpu.vector_store %arg12[%c0_78, %c384_79], %106 {strides = array<i32>} : memref<64x576xbf16, #tpu.memory_space<vmem>>, vector<64x64xbf16>,
    %c24_80 = arith.constant 24 : index
    %c0_81 = arith.constant 0 : index
    %108 = vector.load %arg11[%c24_80, %c0_81] : memref<96x64xf32, #tpu.memory_space<vmem>>, vector<64x64xf32>
    %109 = arith.truncf %108 : vector<64x64xf32> to vector<64x64xbf16>
    %c0_82 = arith.constant 0 : index
    %c448_83 = arith.constant 448 : index
    %110 = vector.load %arg12[%c0_82, %c448_83] : memref<64x576xbf16, #tpu.memory_space<vmem>>, vector<64x64xbf16>
    tpu.vector_store %arg12[%c0_82, %c448_83], %109 {strides = array<i32>} : memref<64x576xbf16, #tpu.memory_space<vmem>>, vector<64x64xbf16>,
    %c25_84 = arith.constant 25 : index
    %c0_85 = arith.constant 0 : index
    %111 = vector.load %arg11[%c25_84, %c0_85] : memref<96x64xf32, #tpu.memory_space<vmem>>, vector<64x64xf32>
    %cst_86 = arith.constant 0.000000e+00 : f32
    %112 = vector.broadcast %cst_86 : f32 to vector<64x64xf32>
    %113 = arith.select %20, %111, %112 : vector<64x64xi1>, vector<64x64xf32>
    %114 = arith.truncf %113 : vector<64x64xf32> to vector<64x64xbf16>
    %c0_87 = arith.constant 0 : index
    %c512_88 = arith.constant 512 : index
    %115 = vector.load %arg12[%c0_87, %c512_88] : memref<64x576xbf16, #tpu.memory_space<vmem>>, vector<64x64xbf16>
    tpu.vector_store %arg12[%c0_87, %c512_88], %114 {strides = array<i32>} : memref<64x576xbf16, #tpu.memory_space<vmem>>, vector<64x64xbf16>,
    %c0_89 = arith.constant 0 : index
    %c0_90 = arith.constant 0 : index
    %116 = vector.load %arg12[%c0_89, %c0_90] : memref<64x576xbf16, #tpu.memory_space<vmem>>, vector<64x576xbf16>
    %c0_91 = arith.constant 0 : index
    %c0_92 = arith.constant 0 : index
    %117 = vector.load %arg4[%c0_91, %c0_92] : memref<576x64xbf16, #tpu.memory_space<vmem>>, vector<576x64xbf16>
    %cst_93 = arith.constant dense<0.000000e+00> : vector<64x64xf32>
    %118 = tpu.matmul %116, %117, %cst_93 {dimension_numbers = #tpu.dot_dimension_numbers<[1], [0], [0], [1], [0, 0, 1, 1], [], []>} : vector<64x576xbf16>, vector<576x64xbf16>, vector<64x64xf32> -> vector<64x64xf32>
    %c0_94 = arith.constant 0 : index
    %c0_95 = arith.constant 0 : index
    %119 = vector.load %arg5[%c0_94, %c0_95] : memref<1x64xf32, #tpu.memory_space<vmem>>, vector<1x64xf32>
    %120 = vector.broadcast %119 : vector<1x64xf32> to vector<64x64xf32>
    %121 = arith.addf %118, %120 : vector<64x64xf32>
    %122 = arith.addf %121, %27 : vector<64x64xf32>
    %cst_96 = arith.constant 0.000000e+00 : f32
    %123 = vector.broadcast %cst_96 : f32 to vector<64x64xf32>
    %124 = arith.maximumf %122, %123 : vector<64x64xf32>
    %c16_97 = arith.constant 16 : index
    %c0_98 = arith.constant 0 : index
    %125 = vector.load %arg11[%c16_97, %c0_98] : memref<96x64xf32, #tpu.memory_space<vmem>>, vector<64x64xf32>
    tpu.vector_store %arg11[%c16_97, %c0_98], %124 {strides = array<i32>} : memref<96x64xf32, #tpu.memory_space<vmem>>, vector<64x64xf32>,
    %c7_99 = arith.constant 7 : index
    %c0_100 = arith.constant 0 : index
    %126 = vector.load %arg11[%c7_99, %c0_100] : memref<96x64xf32, #tpu.memory_space<vmem>>, vector<64x64xf32>
    %cst_101 = arith.constant 0.000000e+00 : f32
    %127 = vector.broadcast %cst_101 : f32 to vector<64x64xf32>
    %128 = arith.select %18, %126, %127 : vector<64x64xi1>, vector<64x64xf32>
    %129 = arith.truncf %128 : vector<64x64xf32> to vector<64x64xbf16>
    %c0_102 = arith.constant 0 : index
    %c0_103 = arith.constant 0 : index
    %130 = vector.load %arg12[%c0_102, %c0_103] : memref<64x576xbf16, #tpu.memory_space<vmem>>, vector<64x64xbf16>
    tpu.vector_store %arg12[%c0_102, %c0_103], %129 {strides = array<i32>} : memref<64x576xbf16, #tpu.memory_space<vmem>>, vector<64x64xbf16>,
    %c8_104 = arith.constant 8 : index
    %c0_105 = arith.constant 0 : index
    %131 = vector.load %arg11[%c8_104, %c0_105] : memref<96x64xf32, #tpu.memory_space<vmem>>, vector<64x64xf32>
    %132 = arith.truncf %131 : vector<64x64xf32> to vector<64x64xbf16>
    %c0_106 = arith.constant 0 : index
    %c64_107 = arith.constant 64 : index
    %133 = vector.load %arg12[%c0_106, %c64_107] : memref<64x576xbf16, #tpu.memory_space<vmem>>, vector<64x64xbf16>
    tpu.vector_store %arg12[%c0_106, %c64_107], %132 {strides = array<i32>} : memref<64x576xbf16, #tpu.memory_space<vmem>>, vector<64x64xbf16>,
    %c9_108 = arith.constant 9 : index
    %c0_109 = arith.constant 0 : index
    %134 = vector.load %arg11[%c9_108, %c0_109] : memref<96x64xf32, #tpu.memory_space<vmem>>, vector<64x64xf32>
    %cst_110 = arith.constant 0.000000e+00 : f32
    %135 = vector.broadcast %cst_110 : f32 to vector<64x64xf32>
    %136 = arith.select %20, %134, %135 : vector<64x64xi1>, vector<64x64xf32>
    %137 = arith.truncf %136 : vector<64x64xf32> to vector<64x64xbf16>
    %c0_111 = arith.constant 0 : index
    %c128_112 = arith.constant 128 : index
    %138 = vector.load %arg12[%c0_111, %c128_112] : memref<64x576xbf16, #tpu.memory_space<vmem>>, vector<64x64xbf16>
    tpu.vector_store %arg12[%c0_111, %c128_112], %137 {strides = array<i32>} : memref<64x576xbf16, #tpu.memory_space<vmem>>, vector<64x64xbf16>,
    %c15_113 = arith.constant 15 : index
    %c0_114 = arith.constant 0 : index
    %139 = vector.load %arg11[%c15_113, %c0_114] : memref<96x64xf32, #tpu.memory_space<vmem>>, vector<64x64xf32>
    %cst_115 = arith.constant 0.000000e+00 : f32
    %140 = vector.broadcast %cst_115 : f32 to vector<64x64xf32>
    %141 = arith.select %18, %139, %140 : vector<64x64xi1>, vector<64x64xf32>
    %142 = arith.truncf %141 : vector<64x64xf32> to vector<64x64xbf16>
    %c0_116 = arith.constant 0 : index
    %c192_117 = arith.constant 192 : index
    %143 = vector.load %arg12[%c0_116, %c192_117] : memref<64x576xbf16, #tpu.memory_space<vmem>>, vector<64x64xbf16>
    tpu.vector_store %arg12[%c0_116, %c192_117], %142 {strides = array<i32>} : memref<64x576xbf16, #tpu.memory_space<vmem>>, vector<64x64xbf16>,
    %c16_118 = arith.constant 16 : index
    %c0_119 = arith.constant 0 : index
    %144 = vector.load %arg11[%c16_118, %c0_119] : memref<96x64xf32, #tpu.memory_space<vmem>>, vector<64x64xf32>
    %145 = arith.truncf %144 : vector<64x64xf32> to vector<64x64xbf16>
    %c0_120 = arith.constant 0 : index
    %c256_121 = arith.constant 256 : index
    %146 = vector.load %arg12[%c0_120, %c256_121] : memref<64x576xbf16, #tpu.memory_space<vmem>>, vector<64x64xbf16>
    tpu.vector_store %arg12[%c0_120, %c256_121], %145 {strides = array<i32>} : memref<64x576xbf16, #tpu.memory_space<vmem>>, vector<64x64xbf16>,
    %c17_122 = arith.constant 17 : index
    %c0_123 = arith.constant 0 : index
    %147 = vector.load %arg11[%c17_122, %c0_123] : memref<96x64xf32, #tpu.memory_space<vmem>>, vector<64x64xf32>
    %cst_124 = arith.constant 0.000000e+00 : f32
    %148 = vector.broadcast %cst_124 : f32 to vector<64x64xf32>
    %149 = arith.select %20, %147, %148 : vector<64x64xi1>, vector<64x64xf32>
    %150 = arith.truncf %149 : vector<64x64xf32> to vector<64x64xbf16>
    %c0_125 = arith.constant 0 : index
    %c320_126 = arith.constant 320 : index
    %151 = vector.load %arg12[%c0_125, %c320_126] : memref<64x576xbf16, #tpu.memory_space<vmem>>, vector<64x64xbf16>
    tpu.vector_store %arg12[%c0_125, %c320_126], %150 {strides = array<i32>} : memref<64x576xbf16, #tpu.memory_space<vmem>>, vector<64x64xbf16>,
    %c23_127 = arith.constant 23 : index
    %c0_128 = arith.constant 0 : index
    %152 = vector.load %arg11[%c23_127, %c0_128] : memref<96x64xf32, #tpu.memory_space<vmem>>, vector<64x64xf32>
    %cst_129 = arith.constant 0.000000e+00 : f32
    %153 = vector.broadcast %cst_129 : f32 to vector<64x64xf32>
    %154 = arith.select %18, %152, %153 : vector<64x64xi1>, vector<64x64xf32>
    %155 = arith.truncf %154 : vector<64x64xf32> to vector<64x64xbf16>
    %c0_130 = arith.constant 0 : index
    %c384_131 = arith.constant 384 : index
    %156 = vector.load %arg12[%c0_130, %c384_131] : memref<64x576xbf16, #tpu.memory_space<vmem>>, vector<64x64xbf16>
    tpu.vector_store %arg12[%c0_130, %c384_131], %155 {strides = array<i32>} : memref<64x576xbf16, #tpu.memory_space<vmem>>, vector<64x64xbf16>,
    %c24_132 = arith.constant 24 : index
    %c0_133 = arith.constant 0 : index
    %157 = vector.load %arg11[%c24_132, %c0_133] : memref<96x64xf32, #tpu.memory_space<vmem>>, vector<64x64xf32>
    %158 = arith.truncf %157 : vector<64x64xf32> to vector<64x64xbf16>
    %c0_134 = arith.constant 0 : index
    %c448_135 = arith.constant 448 : index
    %159 = vector.load %arg12[%c0_134, %c448_135] : memref<64x576xbf16, #tpu.memory_space<vmem>>, vector<64x64xbf16>
    tpu.vector_store %arg12[%c0_134, %c448_135], %158 {strides = array<i32>} : memref<64x576xbf16, #tpu.memory_space<vmem>>, vector<64x64xbf16>,
    %c25_136 = arith.constant 25 : index
    %c0_137 = arith.constant 0 : index
    %160 = vector.load %arg11[%c25_136, %c0_137] : memref<96x64xf32, #tpu.memory_space<vmem>>, vector<64x64xf32>
    %cst_138 = arith.constant 0.000000e+00 : f32
    %161 = vector.broadcast %cst_138 : f32 to vector<64x64xf32>
    %162 = arith.select %20, %160, %161 : vector<64x64xi1>, vector<64x64xf32>
    %163 = arith.truncf %162 : vector<64x64xf32> to vector<64x64xbf16>
    %c0_139 = arith.constant 0 : index
    %c512_140 = arith.constant 512 : index
    %164 = vector.load %arg12[%c0_139, %c512_140] : memref<64x576xbf16, #tpu.memory_space<vmem>>, vector<64x64xbf16>
    tpu.vector_store %arg12[%c0_139, %c512_140], %163 {strides = array<i32>} : memref<64x576xbf16, #tpu.memory_space<vmem>>, vector<64x64xbf16>,
    %c0_141 = arith.constant 0 : index
    %c0_142 = arith.constant 0 : index
    %165 = vector.load %arg12[%c0_141, %c0_142] : memref<64x576xbf16, #tpu.memory_space<vmem>>, vector<64x576xbf16>
    %c0_143 = arith.constant 0 : index
    %c0_144 = arith.constant 0 : index
    %166 = vector.load %arg6[%c0_143, %c0_144] : memref<576x64xbf16, #tpu.memory_space<vmem>>, vector<576x64xbf16>
    %cst_145 = arith.constant dense<0.000000e+00> : vector<64x64xf32>
    %167 = tpu.matmul %165, %166, %cst_145 {dimension_numbers = #tpu.dot_dimension_numbers<[1], [0], [0], [1], [0, 0, 1, 1], [], []>} : vector<64x576xbf16>, vector<576x64xbf16>, vector<64x64xf32> -> vector<64x64xf32>
    %c0_146 = arith.constant 0 : index
    %c0_147 = arith.constant 0 : index
    %168 = vector.load %arg7[%c0_146, %c0_147] : memref<1x64xf32, #tpu.memory_space<vmem>>, vector<1x64xf32>
    %169 = vector.broadcast %168 : vector<1x64xf32> to vector<64x64xf32>
    %170 = arith.addf %167, %169 : vector<64x64xf32>
    %cst_148 = arith.constant 0.000000e+00 : f32
    %171 = vector.broadcast %cst_148 : f32 to vector<64x64xf32>
    %172 = arith.maximumf %170, %171 : vector<64x64xf32>
    %c16_149 = arith.constant 16 : index
    %c0_150 = arith.constant 0 : index
    %173 = vector.load %arg11[%c16_149, %c0_150] : memref<96x64xf32, #tpu.memory_space<vmem>>, vector<64x64xf32>
    tpu.vector_store %arg11[%c16_149, %c0_150], %172 {strides = array<i32>} : memref<96x64xf32, #tpu.memory_space<vmem>>, vector<64x64xf32>,
    %c7_151 = arith.constant 7 : index
    %c0_152 = arith.constant 0 : index
    %174 = vector.load %arg11[%c7_151, %c0_152] : memref<96x64xf32, #tpu.memory_space<vmem>>, vector<64x64xf32>
    %cst_153 = arith.constant 0.000000e+00 : f32
    %175 = vector.broadcast %cst_153 : f32 to vector<64x64xf32>
    %176 = arith.select %18, %174, %175 : vector<64x64xi1>, vector<64x64xf32>
    %177 = arith.truncf %176 : vector<64x64xf32> to vector<64x64xbf16>
    %c0_154 = arith.constant 0 : index
    %c0_155 = arith.constant 0 : index
    %178 = vector.load %arg12[%c0_154, %c0_155] : memref<64x576xbf16, #tpu.memory_space<vmem>>, vector<64x64xbf16>
    tpu.vector_store %arg12[%c0_154, %c0_155], %177 {strides = array<i32>} : memref<64x576xbf16, #tpu.memory_space<vmem>>, vector<64x64xbf16>,
    %c8_156 = arith.constant 8 : index
    %c0_157 = arith.constant 0 : index
    %179 = vector.load %arg11[%c8_156, %c0_157] : memref<96x64xf32, #tpu.memory_space<vmem>>, vector<64x64xf32>
    %180 = arith.truncf %179 : vector<64x64xf32> to vector<64x64xbf16>
    %c0_158 = arith.constant 0 : index
    %c64_159 = arith.constant 64 : index
    %181 = vector.load %arg12[%c0_158, %c64_159] : memref<64x576xbf16, #tpu.memory_space<vmem>>, vector<64x64xbf16>
    tpu.vector_store %arg12[%c0_158, %c64_159], %180 {strides = array<i32>} : memref<64x576xbf16, #tpu.memory_space<vmem>>, vector<64x64xbf16>,
    %c9_160 = arith.constant 9 : index
    %c0_161 = arith.constant 0 : index
    %182 = vector.load %arg11[%c9_160, %c0_161] : memref<96x64xf32, #tpu.memory_space<vmem>>, vector<64x64xf32>
    %cst_162 = arith.constant 0.000000e+00 : f32
    %183 = vector.broadcast %cst_162 : f32 to vector<64x64xf32>
    %184 = arith.select %20, %182, %183 : vector<64x64xi1>, vector<64x64xf32>
    %185 = arith.truncf %184 : vector<64x64xf32> to vector<64x64xbf16>
    %c0_163 = arith.constant 0 : index
    %c128_164 = arith.constant 128 : index
    %186 = vector.load %arg12[%c0_163, %c128_164] : memref<64x576xbf16, #tpu.memory_space<vmem>>, vector<64x64xbf16>
    tpu.vector_store %arg12[%c0_163, %c128_164], %185 {strides = array<i32>} : memref<64x576xbf16, #tpu.memory_space<vmem>>, vector<64x64xbf16>,
    %c15_165 = arith.constant 15 : index
    %c0_166 = arith.constant 0 : index
    %187 = vector.load %arg11[%c15_165, %c0_166] : memref<96x64xf32, #tpu.memory_space<vmem>>, vector<64x64xf32>
    %cst_167 = arith.constant 0.000000e+00 : f32
    %188 = vector.broadcast %cst_167 : f32 to vector<64x64xf32>
    %189 = arith.select %18, %187, %188 : vector<64x64xi1>, vector<64x64xf32>
    %190 = arith.truncf %189 : vector<64x64xf32> to vector<64x64xbf16>
    %c0_168 = arith.constant 0 : index
    %c192_169 = arith.constant 192 : index
    %191 = vector.load %arg12[%c0_168, %c192_169] : memref<64x576xbf16, #tpu.memory_space<vmem>>, vector<64x64xbf16>
    tpu.vector_store %arg12[%c0_168, %c192_169], %190 {strides = array<i32>} : memref<64x576xbf16, #tpu.memory_space<vmem>>, vector<64x64xbf16>,
    %c16_170 = arith.constant 16 : index
    %c0_171 = arith.constant 0 : index
    %192 = vector.load %arg11[%c16_170, %c0_171] : memref<96x64xf32, #tpu.memory_space<vmem>>, vector<64x64xf32>
    %193 = arith.truncf %192 : vector<64x64xf32> to vector<64x64xbf16>
    %c0_172 = arith.constant 0 : index
    %c256_173 = arith.constant 256 : index
    %194 = vector.load %arg12[%c0_172, %c256_173] : memref<64x576xbf16, #tpu.memory_space<vmem>>, vector<64x64xbf16>
    tpu.vector_store %arg12[%c0_172, %c256_173], %193 {strides = array<i32>} : memref<64x576xbf16, #tpu.memory_space<vmem>>, vector<64x64xbf16>,
    %c17_174 = arith.constant 17 : index
    %c0_175 = arith.constant 0 : index
    %195 = vector.load %arg11[%c17_174, %c0_175] : memref<96x64xf32, #tpu.memory_space<vmem>>, vector<64x64xf32>
    %cst_176 = arith.constant 0.000000e+00 : f32
    %196 = vector.broadcast %cst_176 : f32 to vector<64x64xf32>
    %197 = arith.select %20, %195, %196 : vector<64x64xi1>, vector<64x64xf32>
    %198 = arith.truncf %197 : vector<64x64xf32> to vector<64x64xbf16>
    %c0_177 = arith.constant 0 : index
    %c320_178 = arith.constant 320 : index
    %199 = vector.load %arg12[%c0_177, %c320_178] : memref<64x576xbf16, #tpu.memory_space<vmem>>, vector<64x64xbf16>
    tpu.vector_store %arg12[%c0_177, %c320_178], %198 {strides = array<i32>} : memref<64x576xbf16, #tpu.memory_space<vmem>>, vector<64x64xbf16>,
    %c23_179 = arith.constant 23 : index
    %c0_180 = arith.constant 0 : index
    %200 = vector.load %arg11[%c23_179, %c0_180] : memref<96x64xf32, #tpu.memory_space<vmem>>, vector<64x64xf32>
    %cst_181 = arith.constant 0.000000e+00 : f32
    %201 = vector.broadcast %cst_181 : f32 to vector<64x64xf32>
    %202 = arith.select %18, %200, %201 : vector<64x64xi1>, vector<64x64xf32>
    %203 = arith.truncf %202 : vector<64x64xf32> to vector<64x64xbf16>
    %c0_182 = arith.constant 0 : index
    %c384_183 = arith.constant 384 : index
    %204 = vector.load %arg12[%c0_182, %c384_183] : memref<64x576xbf16, #tpu.memory_space<vmem>>, vector<64x64xbf16>
    tpu.vector_store %arg12[%c0_182, %c384_183], %203 {strides = array<i32>} : memref<64x576xbf16, #tpu.memory_space<vmem>>, vector<64x64xbf16>,
    %c24_184 = arith.constant 24 : index
    %c0_185 = arith.constant 0 : index
    %205 = vector.load %arg11[%c24_184, %c0_185] : memref<96x64xf32, #tpu.memory_space<vmem>>, vector<64x64xf32>
    %206 = arith.truncf %205 : vector<64x64xf32> to vector<64x64xbf16>
    %c0_186 = arith.constant 0 : index
    %c448_187 = arith.constant 448 : index
    %207 = vector.load %arg12[%c0_186, %c448_187] : memref<64x576xbf16, #tpu.memory_space<vmem>>, vector<64x64xbf16>
    tpu.vector_store %arg12[%c0_186, %c448_187], %206 {strides = array<i32>} : memref<64x576xbf16, #tpu.memory_space<vmem>>, vector<64x64xbf16>,
    %c25_188 = arith.constant 25 : index
    %c0_189 = arith.constant 0 : index
    %208 = vector.load %arg11[%c25_188, %c0_189] : memref<96x64xf32, #tpu.memory_space<vmem>>, vector<64x64xf32>
    %cst_190 = arith.constant 0.000000e+00 : f32
    %209 = vector.broadcast %cst_190 : f32 to vector<64x64xf32>
    %210 = arith.select %20, %208, %209 : vector<64x64xi1>, vector<64x64xf32>
    %211 = arith.truncf %210 : vector<64x64xf32> to vector<64x64xbf16>
    %c0_191 = arith.constant 0 : index
    %c512_192 = arith.constant 512 : index
    %212 = vector.load %arg12[%c0_191, %c512_192] : memref<64x576xbf16, #tpu.memory_space<vmem>>, vector<64x64xbf16>
    tpu.vector_store %arg12[%c0_191, %c512_192], %211 {strides = array<i32>} : memref<64x576xbf16, #tpu.memory_space<vmem>>, vector<64x64xbf16>,
    %c0_193 = arith.constant 0 : index
    %c0_194 = arith.constant 0 : index
    %213 = vector.load %arg12[%c0_193, %c0_194] : memref<64x576xbf16, #tpu.memory_space<vmem>>, vector<64x576xbf16>
    %c0_195 = arith.constant 0 : index
    %c0_196 = arith.constant 0 : index
    %214 = vector.load %arg8[%c0_195, %c0_196] : memref<576x64xbf16, #tpu.memory_space<vmem>>, vector<576x64xbf16>
    %cst_197 = arith.constant dense<0.000000e+00> : vector<64x64xf32>
    %215 = tpu.matmul %213, %214, %cst_197 {dimension_numbers = #tpu.dot_dimension_numbers<[1], [0], [0], [1], [0, 0, 1, 1], [], []>} : vector<64x576xbf16>, vector<576x64xbf16>, vector<64x64xf32> -> vector<64x64xf32>
    %c0_198 = arith.constant 0 : index
    %c0_199 = arith.constant 0 : index
    %216 = vector.load %arg9[%c0_198, %c0_199] : memref<1x64xf32, #tpu.memory_space<vmem>>, vector<1x64xf32>
    %217 = vector.broadcast %216 : vector<1x64xf32> to vector<64x64xf32>
    %218 = arith.addf %215, %217 : vector<64x64xf32>
    %219 = arith.addf %218, %124 : vector<64x64xf32>
    %cst_200 = arith.constant 0.000000e+00 : f32
    %220 = vector.broadcast %cst_200 : f32 to vector<64x64xf32>
    %221 = arith.maximumf %219, %220 : vector<64x64xf32>
    %222 = arith.truncf %221 : vector<64x64xf32> to vector<64x64xbf16>
    %c0_201 = arith.constant 0 : index
    %c0_202 = arith.constant 0 : index
    %c0_203 = arith.constant 0 : index
    %223 = vector.load %arg10[%c0_201, %c0_202, %c0_203] : memref<1x64x64xbf16, #tpu.memory_space<vmem>>, vector<1x64x64xbf16>
    %224 = vector.shape_cast %223 : vector<1x64x64xbf16> to vector<64x64xbf16>
    %225 = vector.shape_cast %222 : vector<64x64xbf16> to vector<1x64x64xbf16>
    tpu.vector_store %arg10[%c0_201, %c0_202, %c0_203], %225 {strides = array<i32>} : memref<1x64x64xbf16, #tpu.memory_space<vmem>>, vector<1x64x64xbf16>,
    return
  }
  func.func @transform_0(%arg0: i32) -> (i32, i32, i32) {
    %c0_i32 = arith.constant 0 : i32
    %c0_i32_0 = arith.constant 0 : i32
    %c0_i32_1 = arith.constant 0 : i32
    return %arg0, %c0_i32, %c0_i32_0 : i32, i32, i32
  }
  func.func @transform_1(%arg0: i32) -> (i32, i32) {
    %c0_i32 = arith.constant 0 : i32
    %c0_i32_0 = arith.constant 0 : i32
    %c0_i32_1 = arith.constant 0 : i32
    return %c0_i32, %c0_i32_0 : i32, i32
  }
  func.func @transform_2(%arg0: i32) -> (i32, i32) {
    %c0_i32 = arith.constant 0 : i32
    %c0_i32_0 = arith.constant 0 : i32
    %c0_i32_1 = arith.constant 0 : i32
    return %c0_i32, %c0_i32_0 : i32, i32
  }
  func.func @transform_3(%arg0: i32) -> (i32, i32) {
    %c0_i32 = arith.constant 0 : i32
    %c0_i32_0 = arith.constant 0 : i32
    %c0_i32_1 = arith.constant 0 : i32
    return %c0_i32, %c0_i32_0 : i32, i32
  }
  func.func @transform_4(%arg0: i32) -> (i32, i32) {
    %c0_i32 = arith.constant 0 : i32
    %c0_i32_0 = arith.constant 0 : i32
    %c0_i32_1 = arith.constant 0 : i32
    return %c0_i32, %c0_i32_0 : i32, i32
  }
  func.func @transform_5(%arg0: i32) -> (i32, i32) {
    %c0_i32 = arith.constant 0 : i32
    %c0_i32_0 = arith.constant 0 : i32
    %c0_i32_1 = arith.constant 0 : i32
    return %c0_i32, %c0_i32_0 : i32, i32
  }
  func.func @transform_6(%arg0: i32) -> (i32, i32) {
    %c0_i32 = arith.constant 0 : i32
    %c0_i32_0 = arith.constant 0 : i32
    %c0_i32_1 = arith.constant 0 : i32
    return %c0_i32, %c0_i32_0 : i32, i32
  }
  func.func @transform_7(%arg0: i32) -> (i32, i32) {
    %c0_i32 = arith.constant 0 : i32
    %c0_i32_0 = arith.constant 0 : i32
    %c0_i32_1 = arith.constant 0 : i32
    return %c0_i32, %c0_i32_0 : i32, i32
  }
  func.func @transform_8(%arg0: i32) -> (i32, i32) {
    %c0_i32 = arith.constant 0 : i32
    %c0_i32_0 = arith.constant 0 : i32
    %c0_i32_1 = arith.constant 0 : i32
    return %c0_i32, %c0_i32_0 : i32, i32
  }
  func.func @transform_9(%arg0: i32) -> (i32, i32, i32) {
    %c0_i32 = arith.constant 0 : i32
    %c0_i32_0 = arith.constant 0 : i32
    %c0_i32_1 = arith.constant 0 : i32
    return %arg0, %c0_i32, %c0_i32_0 : i32, i32, i32
  }
}

module attributes {stable_mosaic.version = 11 : i64} {
  func.func @_b3_kernel(%arg0: i32, %arg1: memref<1x16x576xbf16, #tpu.memory_space<vmem>>, %arg2: memref<1x16x64xbf16, #tpu.memory_space<vmem>>, %arg3: memref<576x128xbf16, #tpu.memory_space<vmem>>, %arg4: memref<1x128xf32, #tpu.memory_space<vmem>>, %arg5: memref<1152x128xbf16, #tpu.memory_space<vmem>>, %arg6: memref<1x128xf32, #tpu.memory_space<vmem>>, %arg7: memref<64x128xbf16, #tpu.memory_space<vmem>>, %arg8: memref<1x128xf32, #tpu.memory_space<vmem>>, %arg9: memref<1152x128xbf16, #tpu.memory_space<vmem>>, %arg10: memref<1x128xf32, #tpu.memory_space<vmem>>, %arg11: memref<1152x128xbf16, #tpu.memory_space<vmem>>, %arg12: memref<1x128xf32, #tpu.memory_space<vmem>>, %arg13: memref<1x16x128xbf16, #tpu.memory_space<vmem>>, %arg14: memref<32x128xf32, #tpu.memory_space<vmem>>, %arg15: memref<16x1152xbf16, #tpu.memory_space<vmem>>) attributes {dimension_semantics = [#tpu.dimension_semantics<parallel>], iteration_bounds = array<i64: 2>, scalar_prefetch = 0 : i64, scratch_operands = 2 : i64, tpu.core_type = #tpu.core_type<tc>, window_params = [{transform_indices = @transform_0, window_bounds = array<i64: 1, 16, 576>}, {transform_indices = @transform_1, window_bounds = array<i64: 1, 16, 64>}, {pipeline_mode = #tpu.pipeline_mode<synchronous>, transform_indices = @transform_2, window_bounds = array<i64: 576, 128>}, {pipeline_mode = #tpu.pipeline_mode<synchronous>, transform_indices = @transform_3, window_bounds = array<i64: 1, 128>}, {pipeline_mode = #tpu.pipeline_mode<synchronous>, transform_indices = @transform_4, window_bounds = array<i64: 1152, 128>}, {pipeline_mode = #tpu.pipeline_mode<synchronous>, transform_indices = @transform_5, window_bounds = array<i64: 1, 128>}, {pipeline_mode = #tpu.pipeline_mode<synchronous>, transform_indices = @transform_6, window_bounds = array<i64: 64, 128>}, {pipeline_mode = #tpu.pipeline_mode<synchronous>, transform_indices = @transform_7, window_bounds = array<i64: 1, 128>}, {pipeline_mode = #tpu.pipeline_mode<synchronous>, transform_indices = @transform_8, window_bounds = array<i64: 1152, 128>}, {pipeline_mode = #tpu.pipeline_mode<synchronous>, transform_indices = @transform_9, window_bounds = array<i64: 1, 128>}, {pipeline_mode = #tpu.pipeline_mode<synchronous>, transform_indices = @transform_10, window_bounds = array<i64: 1152, 128>}, {pipeline_mode = #tpu.pipeline_mode<synchronous>, transform_indices = @transform_11, window_bounds = array<i64: 1, 128>}, {transform_indices = @transform_12, window_bounds = array<i64: 1, 16, 128>}]} {
    %0 = tpu.iota {dimensions = array<i32: 0>} : vector<16x128xi32>
    %c4_i32 = arith.constant 4 : i32
    %c0_i32 = arith.constant 0 : i32
    %1 = arith.cmpi eq, %c4_i32, %c0_i32 : i32
    %c1_i32 = arith.constant 1 : i32
    %2 = arith.select %1, %c1_i32, %c4_i32 : i32
    %3 = vector.broadcast %2 : i32 to vector<16x128xi32>
    %4 = arith.remsi %0, %3 : vector<16x128xi32>
    %c0_i32_0 = arith.constant 0 : i32
    %5 = vector.broadcast %c0_i32_0 : i32 to vector<16x128xi32>
    %6 = arith.cmpi ne, %4, %5 : vector<16x128xi32>
    %c0_i32_1 = arith.constant 0 : i32
    %7 = vector.broadcast %c0_i32_1 : i32 to vector<16x128xi32>
    %8 = arith.cmpi slt, %4, %7 : vector<16x128xi32>
    %c0_i32_2 = arith.constant 0 : i32
    %9 = arith.cmpi slt, %2, %c0_i32_2 : i32
    %10 = vector.broadcast %9 : i1 to vector<16x128xi1>
    %11 = vector.broadcast %10 : vector<16x128xi1> to vector<16x128xi1>
    %12 = arith.xori %8, %11 : vector<16x128xi1>
    %13 = arith.andi %12, %6 : vector<16x128xi1>
    %14 = vector.broadcast %2 : i32 to vector<16x128xi32>
    %15 = arith.addi %4, %14 : vector<16x128xi32>
    %16 = arith.select %13, %15, %4 : vector<16x128xi1>, vector<16x128xi32>
    %c0_i32_3 = arith.constant 0 : i32
    %17 = vector.broadcast %c0_i32_3 : i32 to vector<16x128xi32>
    %18 = arith.cmpi ne, %16, %17 : vector<16x128xi32>
    %c3_i32 = arith.constant 3 : i32
    %19 = vector.broadcast %c3_i32 : i32 to vector<16x128xi32>
    %20 = arith.cmpi ne, %16, %19 : vector<16x128xi32>
    %cst = arith.constant 0.000000e+00 : f32
    %21 = vector.broadcast %cst : f32 to vector<8x128xf32>
    %c0 = arith.constant 0 : index
    %c0_4 = arith.constant 0 : index
    %22 = vector.load %arg14[%c0, %c0_4] : memref<32x128xf32, #tpu.memory_space<vmem>>, vector<8x128xf32>
    tpu.vector_store %arg14[%c0, %c0_4], %21 {strides = array<i32>} : memref<32x128xf32, #tpu.memory_space<vmem>>, vector<8x128xf32>,
    %cst_5 = arith.constant 0.000000e+00 : f32
    %23 = vector.broadcast %cst_5 : f32 to vector<8x128xf32>
    %c24 = arith.constant 24 : index
    %c0_6 = arith.constant 0 : index
    %24 = vector.load %arg14[%c24, %c0_6] : memref<32x128xf32, #tpu.memory_space<vmem>>, vector<8x128xf32>
    tpu.vector_store %arg14[%c24, %c0_6], %23 {strides = array<i32>} : memref<32x128xf32, #tpu.memory_space<vmem>>, vector<8x128xf32>,
    %c0_7 = arith.constant 0 : index
    %c0_8 = arith.constant 0 : index
    %c0_9 = arith.constant 0 : index
    %25 = vector.load %arg1[%c0_7, %c0_8, %c0_9] : memref<1x16x576xbf16, #tpu.memory_space<vmem>>, vector<1x16x576xbf16>
    %26 = vector.shape_cast %25 : vector<1x16x576xbf16> to vector<16x576xbf16>
    %c0_10 = arith.constant 0 : index
    %c0_11 = arith.constant 0 : index
    %27 = vector.load %arg3[%c0_10, %c0_11] : memref<576x128xbf16, #tpu.memory_space<vmem>>, vector<576x128xbf16>
    %cst_12 = arith.constant dense<0.000000e+00> : vector<16x128xf32>
    %28 = tpu.matmul %26, %27, %cst_12 {dimension_numbers = #tpu.dot_dimension_numbers<[1], [0], [0], [1], [0, 0, 1, 1], [], []>} : vector<16x576xbf16>, vector<576x128xbf16>, vector<16x128xf32> -> vector<16x128xf32>
    %c0_13 = arith.constant 0 : index
    %c0_14 = arith.constant 0 : index
    %29 = vector.load %arg4[%c0_13, %c0_14] : memref<1x128xf32, #tpu.memory_space<vmem>>, vector<1x128xf32>
    %30 = vector.broadcast %29 : vector<1x128xf32> to vector<16x128xf32>
    %31 = arith.addf %28, %30 : vector<16x128xf32>
    %cst_15 = arith.constant 0.000000e+00 : f32
    %32 = vector.broadcast %cst_15 : f32 to vector<16x128xf32>
    %33 = arith.maximumf %31, %32 : vector<16x128xf32>
    %c0_16 = arith.constant 0 : index
    %c0_17 = arith.constant 0 : index
    %c0_18 = arith.constant 0 : index
    %34 = vector.load %arg2[%c0_16, %c0_17, %c0_18] : memref<1x16x64xbf16, #tpu.memory_space<vmem>>, vector<1x16x64xbf16>
    %35 = vector.shape_cast %34 : vector<1x16x64xbf16> to vector<16x64xbf16>
    %c0_19 = arith.constant 0 : index
    %c0_20 = arith.constant 0 : index
    %36 = vector.load %arg7[%c0_19, %c0_20] : memref<64x128xbf16, #tpu.memory_space<vmem>>, vector<64x128xbf16>
    %cst_21 = arith.constant dense<0.000000e+00> : vector<16x128xf32>
    %37 = tpu.matmul %35, %36, %cst_21 {dimension_numbers = #tpu.dot_dimension_numbers<[1], [0], [0], [1], [0, 0, 1, 1], [], []>} : vector<16x64xbf16>, vector<64x128xbf16>, vector<16x128xf32> -> vector<16x128xf32>
    %c0_22 = arith.constant 0 : index
    %c0_23 = arith.constant 0 : index
    %38 = vector.load %arg8[%c0_22, %c0_23] : memref<1x128xf32, #tpu.memory_space<vmem>>, vector<1x128xf32>
    %39 = vector.broadcast %38 : vector<1x128xf32> to vector<16x128xf32>
    %40 = arith.addf %37, %39 : vector<16x128xf32>
    %c8 = arith.constant 8 : index
    %c0_24 = arith.constant 0 : index
    %41 = vector.load %arg14[%c8, %c0_24] : memref<32x128xf32, #tpu.memory_space<vmem>>, vector<16x128xf32>
    tpu.vector_store %arg14[%c8, %c0_24], %33 {strides = array<i32>} : memref<32x128xf32, #tpu.memory_space<vmem>>, vector<16x128xf32>,
    %c3 = arith.constant 3 : index
    %c0_25 = arith.constant 0 : index
    %42 = vector.load %arg14[%c3, %c0_25] : memref<32x128xf32, #tpu.memory_space<vmem>>, vector<16x128xf32>
    %cst_26 = arith.constant 0.000000e+00 : f32
    %43 = vector.broadcast %cst_26 : f32 to vector<16x128xf32>
    %44 = arith.select %18, %42, %43 : vector<16x128xi1>, vector<16x128xf32>
    %45 = arith.truncf %44 : vector<16x128xf32> to vector<16x128xbf16>
    %c0_27 = arith.constant 0 : index
    %c0_28 = arith.constant 0 : index
    %46 = vector.load %arg15[%c0_27, %c0_28] : memref<16x1152xbf16, #tpu.memory_space<vmem>>, vector<16x128xbf16>
    tpu.vector_store %arg15[%c0_27, %c0_28], %45 {strides = array<i32>} : memref<16x1152xbf16, #tpu.memory_space<vmem>>, vector<16x128xbf16>,
    %c4 = arith.constant 4 : index
    %c0_29 = arith.constant 0 : index
    %47 = vector.load %arg14[%c4, %c0_29] : memref<32x128xf32, #tpu.memory_space<vmem>>, vector<16x128xf32>
    %48 = arith.truncf %47 : vector<16x128xf32> to vector<16x128xbf16>
    %c0_30 = arith.constant 0 : index
    %c128 = arith.constant 128 : index
    %49 = vector.load %arg15[%c0_30, %c128] : memref<16x1152xbf16, #tpu.memory_space<vmem>>, vector<16x128xbf16>
    tpu.vector_store %arg15[%c0_30, %c128], %48 {strides = array<i32>} : memref<16x1152xbf16, #tpu.memory_space<vmem>>, vector<16x128xbf16>,
    %c5 = arith.constant 5 : index
    %c0_31 = arith.constant 0 : index
    %50 = vector.load %arg14[%c5, %c0_31] : memref<32x128xf32, #tpu.memory_space<vmem>>, vector<16x128xf32>
    %cst_32 = arith.constant 0.000000e+00 : f32
    %51 = vector.broadcast %cst_32 : f32 to vector<16x128xf32>
    %52 = arith.select %20, %50, %51 : vector<16x128xi1>, vector<16x128xf32>
    %53 = arith.truncf %52 : vector<16x128xf32> to vector<16x128xbf16>
    %c0_33 = arith.constant 0 : index
    %c256 = arith.constant 256 : index
    %54 = vector.load %arg15[%c0_33, %c256] : memref<16x1152xbf16, #tpu.memory_space<vmem>>, vector<16x128xbf16>
    tpu.vector_store %arg15[%c0_33, %c256], %53 {strides = array<i32>} : memref<16x1152xbf16, #tpu.memory_space<vmem>>, vector<16x128xbf16>,
    %c7 = arith.constant 7 : index
    %c0_34 = arith.constant 0 : index
    %55 = vector.load %arg14[%c7, %c0_34] : memref<32x128xf32, #tpu.memory_space<vmem>>, vector<16x128xf32>
    %cst_35 = arith.constant 0.000000e+00 : f32
    %56 = vector.broadcast %cst_35 : f32 to vector<16x128xf32>
    %57 = arith.select %18, %55, %56 : vector<16x128xi1>, vector<16x128xf32>
    %58 = arith.truncf %57 : vector<16x128xf32> to vector<16x128xbf16>
    %c0_36 = arith.constant 0 : index
    %c384 = arith.constant 384 : index
    %59 = vector.load %arg15[%c0_36, %c384] : memref<16x1152xbf16, #tpu.memory_space<vmem>>, vector<16x128xbf16>
    tpu.vector_store %arg15[%c0_36, %c384], %58 {strides = array<i32>} : memref<16x1152xbf16, #tpu.memory_space<vmem>>, vector<16x128xbf16>,
    %c8_37 = arith.constant 8 : index
    %c0_38 = arith.constant 0 : index
    %60 = vector.load %arg14[%c8_37, %c0_38] : memref<32x128xf32, #tpu.memory_space<vmem>>, vector<16x128xf32>
    %61 = arith.truncf %60 : vector<16x128xf32> to vector<16x128xbf16>
    %c0_39 = arith.constant 0 : index
    %c512 = arith.constant 512 : index
    %62 = vector.load %arg15[%c0_39, %c512] : memref<16x1152xbf16, #tpu.memory_space<vmem>>, vector<16x128xbf16>
    tpu.vector_store %arg15[%c0_39, %c512], %61 {strides = array<i32>} : memref<16x1152xbf16, #tpu.memory_space<vmem>>, vector<16x128xbf16>,
    %c9 = arith.constant 9 : index
    %c0_40 = arith.constant 0 : index
    %63 = vector.load %arg14[%c9, %c0_40] : memref<32x128xf32, #tpu.memory_space<vmem>>, vector<16x128xf32>
    %cst_41 = arith.constant 0.000000e+00 : f32
    %64 = vector.broadcast %cst_41 : f32 to vector<16x128xf32>
    %65 = arith.select %20, %63, %64 : vector<16x128xi1>, vector<16x128xf32>
    %66 = arith.truncf %65 : vector<16x128xf32> to vector<16x128xbf16>
    %c0_42 = arith.constant 0 : index
    %c640 = arith.constant 640 : index
    %67 = vector.load %arg15[%c0_42, %c640] : memref<16x1152xbf16, #tpu.memory_space<vmem>>, vector<16x128xbf16>
    tpu.vector_store %arg15[%c0_42, %c640], %66 {strides = array<i32>} : memref<16x1152xbf16, #tpu.memory_space<vmem>>, vector<16x128xbf16>,
    %c11 = arith.constant 11 : index
    %c0_43 = arith.constant 0 : index
    %68 = vector.load %arg14[%c11, %c0_43] : memref<32x128xf32, #tpu.memory_space<vmem>>, vector<16x128xf32>
    %cst_44 = arith.constant 0.000000e+00 : f32
    %69 = vector.broadcast %cst_44 : f32 to vector<16x128xf32>
    %70 = arith.select %18, %68, %69 : vector<16x128xi1>, vector<16x128xf32>
    %71 = arith.truncf %70 : vector<16x128xf32> to vector<16x128xbf16>
    %c0_45 = arith.constant 0 : index
    %c768 = arith.constant 768 : index
    %72 = vector.load %arg15[%c0_45, %c768] : memref<16x1152xbf16, #tpu.memory_space<vmem>>, vector<16x128xbf16>
    tpu.vector_store %arg15[%c0_45, %c768], %71 {strides = array<i32>} : memref<16x1152xbf16, #tpu.memory_space<vmem>>, vector<16x128xbf16>,
    %c12 = arith.constant 12 : index
    %c0_46 = arith.constant 0 : index
    %73 = vector.load %arg14[%c12, %c0_46] : memref<32x128xf32, #tpu.memory_space<vmem>>, vector<16x128xf32>
    %74 = arith.truncf %73 : vector<16x128xf32> to vector<16x128xbf16>
    %c0_47 = arith.constant 0 : index
    %c896 = arith.constant 896 : index
    %75 = vector.load %arg15[%c0_47, %c896] : memref<16x1152xbf16, #tpu.memory_space<vmem>>, vector<16x128xbf16>
    tpu.vector_store %arg15[%c0_47, %c896], %74 {strides = array<i32>} : memref<16x1152xbf16, #tpu.memory_space<vmem>>, vector<16x128xbf16>,
    %c13 = arith.constant 13 : index
    %c0_48 = arith.constant 0 : index
    %76 = vector.load %arg14[%c13, %c0_48] : memref<32x128xf32, #tpu.memory_space<vmem>>, vector<16x128xf32>
    %cst_49 = arith.constant 0.000000e+00 : f32
    %77 = vector.broadcast %cst_49 : f32 to vector<16x128xf32>
    %78 = arith.select %20, %76, %77 : vector<16x128xi1>, vector<16x128xf32>
    %79 = arith.truncf %78 : vector<16x128xf32> to vector<16x128xbf16>
    %c0_50 = arith.constant 0 : index
    %c1024 = arith.constant 1024 : index
    %80 = vector.load %arg15[%c0_50, %c1024] : memref<16x1152xbf16, #tpu.memory_space<vmem>>, vector<16x128xbf16>
    tpu.vector_store %arg15[%c0_50, %c1024], %79 {strides = array<i32>} : memref<16x1152xbf16, #tpu.memory_space<vmem>>, vector<16x128xbf16>,
    %c0_51 = arith.constant 0 : index
    %c0_52 = arith.constant 0 : index
    %81 = vector.load %arg15[%c0_51, %c0_52] : memref<16x1152xbf16, #tpu.memory_space<vmem>>, vector<16x1152xbf16>
    %c0_53 = arith.constant 0 : index
    %c0_54 = arith.constant 0 : index
    %82 = vector.load %arg5[%c0_53, %c0_54] : memref<1152x128xbf16, #tpu.memory_space<vmem>>, vector<1152x128xbf16>
    %cst_55 = arith.constant dense<0.000000e+00> : vector<16x128xf32>
    %83 = tpu.matmul %81, %82, %cst_55 {dimension_numbers = #tpu.dot_dimension_numbers<[1], [0], [0], [1], [0, 0, 1, 1], [], []>} : vector<16x1152xbf16>, vector<1152x128xbf16>, vector<16x128xf32> -> vector<16x128xf32>
    %c0_56 = arith.constant 0 : index
    %c0_57 = arith.constant 0 : index
    %84 = vector.load %arg6[%c0_56, %c0_57] : memref<1x128xf32, #tpu.memory_space<vmem>>, vector<1x128xf32>
    %85 = vector.broadcast %84 : vector<1x128xf32> to vector<16x128xf32>
    %86 = arith.addf %83, %85 : vector<16x128xf32>
    %87 = arith.addf %86, %40 : vector<16x128xf32>
    %cst_58 = arith.constant 0.000000e+00 : f32
    %88 = vector.broadcast %cst_58 : f32 to vector<16x128xf32>
    %89 = arith.maximumf %87, %88 : vector<16x128xf32>
    %c8_59 = arith.constant 8 : index
    %c0_60 = arith.constant 0 : index
    %90 = vector.load %arg14[%c8_59, %c0_60] : memref<32x128xf32, #tpu.memory_space<vmem>>, vector<16x128xf32>
    tpu.vector_store %arg14[%c8_59, %c0_60], %89 {strides = array<i32>} : memref<32x128xf32, #tpu.memory_space<vmem>>, vector<16x128xf32>,
    %c3_61 = arith.constant 3 : index
    %c0_62 = arith.constant 0 : index
    %91 = vector.load %arg14[%c3_61, %c0_62] : memref<32x128xf32, #tpu.memory_space<vmem>>, vector<16x128xf32>
    %cst_63 = arith.constant 0.000000e+00 : f32
    %92 = vector.broadcast %cst_63 : f32 to vector<16x128xf32>
    %93 = arith.select %18, %91, %92 : vector<16x128xi1>, vector<16x128xf32>
    %94 = arith.truncf %93 : vector<16x128xf32> to vector<16x128xbf16>
    %c0_64 = arith.constant 0 : index
    %c0_65 = arith.constant 0 : index
    %95 = vector.load %arg15[%c0_64, %c0_65] : memref<16x1152xbf16, #tpu.memory_space<vmem>>, vector<16x128xbf16>
    tpu.vector_store %arg15[%c0_64, %c0_65], %94 {strides = array<i32>} : memref<16x1152xbf16, #tpu.memory_space<vmem>>, vector<16x128xbf16>,
    %c4_66 = arith.constant 4 : index
    %c0_67 = arith.constant 0 : index
    %96 = vector.load %arg14[%c4_66, %c0_67] : memref<32x128xf32, #tpu.memory_space<vmem>>, vector<16x128xf32>
    %97 = arith.truncf %96 : vector<16x128xf32> to vector<16x128xbf16>
    %c0_68 = arith.constant 0 : index
    %c128_69 = arith.constant 128 : index
    %98 = vector.load %arg15[%c0_68, %c128_69] : memref<16x1152xbf16, #tpu.memory_space<vmem>>, vector<16x128xbf16>
    tpu.vector_store %arg15[%c0_68, %c128_69], %97 {strides = array<i32>} : memref<16x1152xbf16, #tpu.memory_space<vmem>>, vector<16x128xbf16>,
    %c5_70 = arith.constant 5 : index
    %c0_71 = arith.constant 0 : index
    %99 = vector.load %arg14[%c5_70, %c0_71] : memref<32x128xf32, #tpu.memory_space<vmem>>, vector<16x128xf32>
    %cst_72 = arith.constant 0.000000e+00 : f32
    %100 = vector.broadcast %cst_72 : f32 to vector<16x128xf32>
    %101 = arith.select %20, %99, %100 : vector<16x128xi1>, vector<16x128xf32>
    %102 = arith.truncf %101 : vector<16x128xf32> to vector<16x128xbf16>
    %c0_73 = arith.constant 0 : index
    %c256_74 = arith.constant 256 : index
    %103 = vector.load %arg15[%c0_73, %c256_74] : memref<16x1152xbf16, #tpu.memory_space<vmem>>, vector<16x128xbf16>
    tpu.vector_store %arg15[%c0_73, %c256_74], %102 {strides = array<i32>} : memref<16x1152xbf16, #tpu.memory_space<vmem>>, vector<16x128xbf16>,
    %c7_75 = arith.constant 7 : index
    %c0_76 = arith.constant 0 : index
    %104 = vector.load %arg14[%c7_75, %c0_76] : memref<32x128xf32, #tpu.memory_space<vmem>>, vector<16x128xf32>
    %cst_77 = arith.constant 0.000000e+00 : f32
    %105 = vector.broadcast %cst_77 : f32 to vector<16x128xf32>
    %106 = arith.select %18, %104, %105 : vector<16x128xi1>, vector<16x128xf32>
    %107 = arith.truncf %106 : vector<16x128xf32> to vector<16x128xbf16>
    %c0_78 = arith.constant 0 : index
    %c384_79 = arith.constant 384 : index
    %108 = vector.load %arg15[%c0_78, %c384_79] : memref<16x1152xbf16, #tpu.memory_space<vmem>>, vector<16x128xbf16>
    tpu.vector_store %arg15[%c0_78, %c384_79], %107 {strides = array<i32>} : memref<16x1152xbf16, #tpu.memory_space<vmem>>, vector<16x128xbf16>,
    %c8_80 = arith.constant 8 : index
    %c0_81 = arith.constant 0 : index
    %109 = vector.load %arg14[%c8_80, %c0_81] : memref<32x128xf32, #tpu.memory_space<vmem>>, vector<16x128xf32>
    %110 = arith.truncf %109 : vector<16x128xf32> to vector<16x128xbf16>
    %c0_82 = arith.constant 0 : index
    %c512_83 = arith.constant 512 : index
    %111 = vector.load %arg15[%c0_82, %c512_83] : memref<16x1152xbf16, #tpu.memory_space<vmem>>, vector<16x128xbf16>
    tpu.vector_store %arg15[%c0_82, %c512_83], %110 {strides = array<i32>} : memref<16x1152xbf16, #tpu.memory_space<vmem>>, vector<16x128xbf16>,
    %c9_84 = arith.constant 9 : index
    %c0_85 = arith.constant 0 : index
    %112 = vector.load %arg14[%c9_84, %c0_85] : memref<32x128xf32, #tpu.memory_space<vmem>>, vector<16x128xf32>
    %cst_86 = arith.constant 0.000000e+00 : f32
    %113 = vector.broadcast %cst_86 : f32 to vector<16x128xf32>
    %114 = arith.select %20, %112, %113 : vector<16x128xi1>, vector<16x128xf32>
    %115 = arith.truncf %114 : vector<16x128xf32> to vector<16x128xbf16>
    %c0_87 = arith.constant 0 : index
    %c640_88 = arith.constant 640 : index
    %116 = vector.load %arg15[%c0_87, %c640_88] : memref<16x1152xbf16, #tpu.memory_space<vmem>>, vector<16x128xbf16>
    tpu.vector_store %arg15[%c0_87, %c640_88], %115 {strides = array<i32>} : memref<16x1152xbf16, #tpu.memory_space<vmem>>, vector<16x128xbf16>,
    %c11_89 = arith.constant 11 : index
    %c0_90 = arith.constant 0 : index
    %117 = vector.load %arg14[%c11_89, %c0_90] : memref<32x128xf32, #tpu.memory_space<vmem>>, vector<16x128xf32>
    %cst_91 = arith.constant 0.000000e+00 : f32
    %118 = vector.broadcast %cst_91 : f32 to vector<16x128xf32>
    %119 = arith.select %18, %117, %118 : vector<16x128xi1>, vector<16x128xf32>
    %120 = arith.truncf %119 : vector<16x128xf32> to vector<16x128xbf16>
    %c0_92 = arith.constant 0 : index
    %c768_93 = arith.constant 768 : index
    %121 = vector.load %arg15[%c0_92, %c768_93] : memref<16x1152xbf16, #tpu.memory_space<vmem>>, vector<16x128xbf16>
    tpu.vector_store %arg15[%c0_92, %c768_93], %120 {strides = array<i32>} : memref<16x1152xbf16, #tpu.memory_space<vmem>>, vector<16x128xbf16>,
    %c12_94 = arith.constant 12 : index
    %c0_95 = arith.constant 0 : index
    %122 = vector.load %arg14[%c12_94, %c0_95] : memref<32x128xf32, #tpu.memory_space<vmem>>, vector<16x128xf32>
    %123 = arith.truncf %122 : vector<16x128xf32> to vector<16x128xbf16>
    %c0_96 = arith.constant 0 : index
    %c896_97 = arith.constant 896 : index
    %124 = vector.load %arg15[%c0_96, %c896_97] : memref<16x1152xbf16, #tpu.memory_space<vmem>>, vector<16x128xbf16>
    tpu.vector_store %arg15[%c0_96, %c896_97], %123 {strides = array<i32>} : memref<16x1152xbf16, #tpu.memory_space<vmem>>, vector<16x128xbf16>,
    %c13_98 = arith.constant 13 : index
    %c0_99 = arith.constant 0 : index
    %125 = vector.load %arg14[%c13_98, %c0_99] : memref<32x128xf32, #tpu.memory_space<vmem>>, vector<16x128xf32>
    %cst_100 = arith.constant 0.000000e+00 : f32
    %126 = vector.broadcast %cst_100 : f32 to vector<16x128xf32>
    %127 = arith.select %20, %125, %126 : vector<16x128xi1>, vector<16x128xf32>
    %128 = arith.truncf %127 : vector<16x128xf32> to vector<16x128xbf16>
    %c0_101 = arith.constant 0 : index
    %c1024_102 = arith.constant 1024 : index
    %129 = vector.load %arg15[%c0_101, %c1024_102] : memref<16x1152xbf16, #tpu.memory_space<vmem>>, vector<16x128xbf16>
    tpu.vector_store %arg15[%c0_101, %c1024_102], %128 {strides = array<i32>} : memref<16x1152xbf16, #tpu.memory_space<vmem>>, vector<16x128xbf16>,
    %c0_103 = arith.constant 0 : index
    %c0_104 = arith.constant 0 : index
    %130 = vector.load %arg15[%c0_103, %c0_104] : memref<16x1152xbf16, #tpu.memory_space<vmem>>, vector<16x1152xbf16>
    %c0_105 = arith.constant 0 : index
    %c0_106 = arith.constant 0 : index
    %131 = vector.load %arg9[%c0_105, %c0_106] : memref<1152x128xbf16, #tpu.memory_space<vmem>>, vector<1152x128xbf16>
    %cst_107 = arith.constant dense<0.000000e+00> : vector<16x128xf32>
    %132 = tpu.matmul %130, %131, %cst_107 {dimension_numbers = #tpu.dot_dimension_numbers<[1], [0], [0], [1], [0, 0, 1, 1], [], []>} : vector<16x1152xbf16>, vector<1152x128xbf16>, vector<16x128xf32> -> vector<16x128xf32>
    %c0_108 = arith.constant 0 : index
    %c0_109 = arith.constant 0 : index
    %133 = vector.load %arg10[%c0_108, %c0_109] : memref<1x128xf32, #tpu.memory_space<vmem>>, vector<1x128xf32>
    %134 = vector.broadcast %133 : vector<1x128xf32> to vector<16x128xf32>
    %135 = arith.addf %132, %134 : vector<16x128xf32>
    %cst_110 = arith.constant 0.000000e+00 : f32
    %136 = vector.broadcast %cst_110 : f32 to vector<16x128xf32>
    %137 = arith.maximumf %135, %136 : vector<16x128xf32>
    %c8_111 = arith.constant 8 : index
    %c0_112 = arith.constant 0 : index
    %138 = vector.load %arg14[%c8_111, %c0_112] : memref<32x128xf32, #tpu.memory_space<vmem>>, vector<16x128xf32>
    tpu.vector_store %arg14[%c8_111, %c0_112], %137 {strides = array<i32>} : memref<32x128xf32, #tpu.memory_space<vmem>>, vector<16x128xf32>,
    %c3_113 = arith.constant 3 : index
    %c0_114 = arith.constant 0 : index
    %139 = vector.load %arg14[%c3_113, %c0_114] : memref<32x128xf32, #tpu.memory_space<vmem>>, vector<16x128xf32>
    %cst_115 = arith.constant 0.000000e+00 : f32
    %140 = vector.broadcast %cst_115 : f32 to vector<16x128xf32>
    %141 = arith.select %18, %139, %140 : vector<16x128xi1>, vector<16x128xf32>
    %142 = arith.truncf %141 : vector<16x128xf32> to vector<16x128xbf16>
    %c0_116 = arith.constant 0 : index
    %c0_117 = arith.constant 0 : index
    %143 = vector.load %arg15[%c0_116, %c0_117] : memref<16x1152xbf16, #tpu.memory_space<vmem>>, vector<16x128xbf16>
    tpu.vector_store %arg15[%c0_116, %c0_117], %142 {strides = array<i32>} : memref<16x1152xbf16, #tpu.memory_space<vmem>>, vector<16x128xbf16>,
    %c4_118 = arith.constant 4 : index
    %c0_119 = arith.constant 0 : index
    %144 = vector.load %arg14[%c4_118, %c0_119] : memref<32x128xf32, #tpu.memory_space<vmem>>, vector<16x128xf32>
    %145 = arith.truncf %144 : vector<16x128xf32> to vector<16x128xbf16>
    %c0_120 = arith.constant 0 : index
    %c128_121 = arith.constant 128 : index
    %146 = vector.load %arg15[%c0_120, %c128_121] : memref<16x1152xbf16, #tpu.memory_space<vmem>>, vector<16x128xbf16>
    tpu.vector_store %arg15[%c0_120, %c128_121], %145 {strides = array<i32>} : memref<16x1152xbf16, #tpu.memory_space<vmem>>, vector<16x128xbf16>,
    %c5_122 = arith.constant 5 : index
    %c0_123 = arith.constant 0 : index
    %147 = vector.load %arg14[%c5_122, %c0_123] : memref<32x128xf32, #tpu.memory_space<vmem>>, vector<16x128xf32>
    %cst_124 = arith.constant 0.000000e+00 : f32
    %148 = vector.broadcast %cst_124 : f32 to vector<16x128xf32>
    %149 = arith.select %20, %147, %148 : vector<16x128xi1>, vector<16x128xf32>
    %150 = arith.truncf %149 : vector<16x128xf32> to vector<16x128xbf16>
    %c0_125 = arith.constant 0 : index
    %c256_126 = arith.constant 256 : index
    %151 = vector.load %arg15[%c0_125, %c256_126] : memref<16x1152xbf16, #tpu.memory_space<vmem>>, vector<16x128xbf16>
    tpu.vector_store %arg15[%c0_125, %c256_126], %150 {strides = array<i32>} : memref<16x1152xbf16, #tpu.memory_space<vmem>>, vector<16x128xbf16>,
    %c7_127 = arith.constant 7 : index
    %c0_128 = arith.constant 0 : index
    %152 = vector.load %arg14[%c7_127, %c0_128] : memref<32x128xf32, #tpu.memory_space<vmem>>, vector<16x128xf32>
    %cst_129 = arith.constant 0.000000e+00 : f32
    %153 = vector.broadcast %cst_129 : f32 to vector<16x128xf32>
    %154 = arith.select %18, %152, %153 : vector<16x128xi1>, vector<16x128xf32>
    %155 = arith.truncf %154 : vector<16x128xf32> to vector<16x128xbf16>
    %c0_130 = arith.constant 0 : index
    %c384_131 = arith.constant 384 : index
    %156 = vector.load %arg15[%c0_130, %c384_131] : memref<16x1152xbf16, #tpu.memory_space<vmem>>, vector<16x128xbf16>
    tpu.vector_store %arg15[%c0_130, %c384_131], %155 {strides = array<i32>} : memref<16x1152xbf16, #tpu.memory_space<vmem>>, vector<16x128xbf16>,
    %c8_132 = arith.constant 8 : index
    %c0_133 = arith.constant 0 : index
    %157 = vector.load %arg14[%c8_132, %c0_133] : memref<32x128xf32, #tpu.memory_space<vmem>>, vector<16x128xf32>
    %158 = arith.truncf %157 : vector<16x128xf32> to vector<16x128xbf16>
    %c0_134 = arith.constant 0 : index
    %c512_135 = arith.constant 512 : index
    %159 = vector.load %arg15[%c0_134, %c512_135] : memref<16x1152xbf16, #tpu.memory_space<vmem>>, vector<16x128xbf16>
    tpu.vector_store %arg15[%c0_134, %c512_135], %158 {strides = array<i32>} : memref<16x1152xbf16, #tpu.memory_space<vmem>>, vector<16x128xbf16>,
    %c9_136 = arith.constant 9 : index
    %c0_137 = arith.constant 0 : index
    %160 = vector.load %arg14[%c9_136, %c0_137] : memref<32x128xf32, #tpu.memory_space<vmem>>, vector<16x128xf32>
    %cst_138 = arith.constant 0.000000e+00 : f32
    %161 = vector.broadcast %cst_138 : f32 to vector<16x128xf32>
    %162 = arith.select %20, %160, %161 : vector<16x128xi1>, vector<16x128xf32>
    %163 = arith.truncf %162 : vector<16x128xf32> to vector<16x128xbf16>
    %c0_139 = arith.constant 0 : index
    %c640_140 = arith.constant 640 : index
    %164 = vector.load %arg15[%c0_139, %c640_140] : memref<16x1152xbf16, #tpu.memory_space<vmem>>, vector<16x128xbf16>
    tpu.vector_store %arg15[%c0_139, %c640_140], %163 {strides = array<i32>} : memref<16x1152xbf16, #tpu.memory_space<vmem>>, vector<16x128xbf16>,
    %c11_141 = arith.constant 11 : index
    %c0_142 = arith.constant 0 : index
    %165 = vector.load %arg14[%c11_141, %c0_142] : memref<32x128xf32, #tpu.memory_space<vmem>>, vector<16x128xf32>
    %cst_143 = arith.constant 0.000000e+00 : f32
    %166 = vector.broadcast %cst_143 : f32 to vector<16x128xf32>
    %167 = arith.select %18, %165, %166 : vector<16x128xi1>, vector<16x128xf32>
    %168 = arith.truncf %167 : vector<16x128xf32> to vector<16x128xbf16>
    %c0_144 = arith.constant 0 : index
    %c768_145 = arith.constant 768 : index
    %169 = vector.load %arg15[%c0_144, %c768_145] : memref<16x1152xbf16, #tpu.memory_space<vmem>>, vector<16x128xbf16>
    tpu.vector_store %arg15[%c0_144, %c768_145], %168 {strides = array<i32>} : memref<16x1152xbf16, #tpu.memory_space<vmem>>, vector<16x128xbf16>,
    %c12_146 = arith.constant 12 : index
    %c0_147 = arith.constant 0 : index
    %170 = vector.load %arg14[%c12_146, %c0_147] : memref<32x128xf32, #tpu.memory_space<vmem>>, vector<16x128xf32>
    %171 = arith.truncf %170 : vector<16x128xf32> to vector<16x128xbf16>
    %c0_148 = arith.constant 0 : index
    %c896_149 = arith.constant 896 : index
    %172 = vector.load %arg15[%c0_148, %c896_149] : memref<16x1152xbf16, #tpu.memory_space<vmem>>, vector<16x128xbf16>
    tpu.vector_store %arg15[%c0_148, %c896_149], %171 {strides = array<i32>} : memref<16x1152xbf16, #tpu.memory_space<vmem>>, vector<16x128xbf16>,
    %c13_150 = arith.constant 13 : index
    %c0_151 = arith.constant 0 : index
    %173 = vector.load %arg14[%c13_150, %c0_151] : memref<32x128xf32, #tpu.memory_space<vmem>>, vector<16x128xf32>
    %cst_152 = arith.constant 0.000000e+00 : f32
    %174 = vector.broadcast %cst_152 : f32 to vector<16x128xf32>
    %175 = arith.select %20, %173, %174 : vector<16x128xi1>, vector<16x128xf32>
    %176 = arith.truncf %175 : vector<16x128xf32> to vector<16x128xbf16>
    %c0_153 = arith.constant 0 : index
    %c1024_154 = arith.constant 1024 : index
    %177 = vector.load %arg15[%c0_153, %c1024_154] : memref<16x1152xbf16, #tpu.memory_space<vmem>>, vector<16x128xbf16>
    tpu.vector_store %arg15[%c0_153, %c1024_154], %176 {strides = array<i32>} : memref<16x1152xbf16, #tpu.memory_space<vmem>>, vector<16x128xbf16>,
    %c0_155 = arith.constant 0 : index
    %c0_156 = arith.constant 0 : index
    %178 = vector.load %arg15[%c0_155, %c0_156] : memref<16x1152xbf16, #tpu.memory_space<vmem>>, vector<16x1152xbf16>
    %c0_157 = arith.constant 0 : index
    %c0_158 = arith.constant 0 : index
    %179 = vector.load %arg11[%c0_157, %c0_158] : memref<1152x128xbf16, #tpu.memory_space<vmem>>, vector<1152x128xbf16>
    %cst_159 = arith.constant dense<0.000000e+00> : vector<16x128xf32>
    %180 = tpu.matmul %178, %179, %cst_159 {dimension_numbers = #tpu.dot_dimension_numbers<[1], [0], [0], [1], [0, 0, 1, 1], [], []>} : vector<16x1152xbf16>, vector<1152x128xbf16>, vector<16x128xf32> -> vector<16x128xf32>
    %c0_160 = arith.constant 0 : index
    %c0_161 = arith.constant 0 : index
    %181 = vector.load %arg12[%c0_160, %c0_161] : memref<1x128xf32, #tpu.memory_space<vmem>>, vector<1x128xf32>
    %182 = vector.broadcast %181 : vector<1x128xf32> to vector<16x128xf32>
    %183 = arith.addf %180, %182 : vector<16x128xf32>
    %184 = arith.addf %183, %89 : vector<16x128xf32>
    %cst_162 = arith.constant 0.000000e+00 : f32
    %185 = vector.broadcast %cst_162 : f32 to vector<16x128xf32>
    %186 = arith.maximumf %184, %185 : vector<16x128xf32>
    %187 = arith.truncf %186 : vector<16x128xf32> to vector<16x128xbf16>
    %c0_163 = arith.constant 0 : index
    %c0_164 = arith.constant 0 : index
    %c0_165 = arith.constant 0 : index
    %188 = vector.load %arg13[%c0_163, %c0_164, %c0_165] : memref<1x16x128xbf16, #tpu.memory_space<vmem>>, vector<1x16x128xbf16>
    %189 = vector.shape_cast %188 : vector<1x16x128xbf16> to vector<16x128xbf16>
    %190 = vector.shape_cast %187 : vector<16x128xbf16> to vector<1x16x128xbf16>
    tpu.vector_store %arg13[%c0_163, %c0_164, %c0_165], %190 {strides = array<i32>} : memref<1x16x128xbf16, #tpu.memory_space<vmem>>, vector<1x16x128xbf16>,
    return
  }
  func.func @transform_0(%arg0: i32) -> (i32, i32, i32) {
    %c0_i32 = arith.constant 0 : i32
    %c0_i32_0 = arith.constant 0 : i32
    %c0_i32_1 = arith.constant 0 : i32
    return %arg0, %c0_i32, %c0_i32_0 : i32, i32, i32
  }
  func.func @transform_1(%arg0: i32) -> (i32, i32, i32) {
    %c0_i32 = arith.constant 0 : i32
    %c0_i32_0 = arith.constant 0 : i32
    %c0_i32_1 = arith.constant 0 : i32
    return %arg0, %c0_i32, %c0_i32_0 : i32, i32, i32
  }
  func.func @transform_2(%arg0: i32) -> (i32, i32) {
    %c0_i32 = arith.constant 0 : i32
    %c0_i32_0 = arith.constant 0 : i32
    %c0_i32_1 = arith.constant 0 : i32
    return %c0_i32, %c0_i32_0 : i32, i32
  }
  func.func @transform_3(%arg0: i32) -> (i32, i32) {
    %c0_i32 = arith.constant 0 : i32
    %c0_i32_0 = arith.constant 0 : i32
    %c0_i32_1 = arith.constant 0 : i32
    return %c0_i32, %c0_i32_0 : i32, i32
  }
  func.func @transform_4(%arg0: i32) -> (i32, i32) {
    %c0_i32 = arith.constant 0 : i32
    %c0_i32_0 = arith.constant 0 : i32
    %c0_i32_1 = arith.constant 0 : i32
    return %c0_i32, %c0_i32_0 : i32, i32
  }
  func.func @transform_5(%arg0: i32) -> (i32, i32) {
    %c0_i32 = arith.constant 0 : i32
    %c0_i32_0 = arith.constant 0 : i32
    %c0_i32_1 = arith.constant 0 : i32
    return %c0_i32, %c0_i32_0 : i32, i32
  }
  func.func @transform_6(%arg0: i32) -> (i32, i32) {
    %c0_i32 = arith.constant 0 : i32
    %c0_i32_0 = arith.constant 0 : i32
    %c0_i32_1 = arith.constant 0 : i32
    return %c0_i32, %c0_i32_0 : i32, i32
  }
  func.func @transform_7(%arg0: i32) -> (i32, i32) {
    %c0_i32 = arith.constant 0 : i32
    %c0_i32_0 = arith.constant 0 : i32
    %c0_i32_1 = arith.constant 0 : i32
    return %c0_i32, %c0_i32_0 : i32, i32
  }
  func.func @transform_8(%arg0: i32) -> (i32, i32) {
    %c0_i32 = arith.constant 0 : i32
    %c0_i32_0 = arith.constant 0 : i32
    %c0_i32_1 = arith.constant 0 : i32
    return %c0_i32, %c0_i32_0 : i32, i32
  }
  func.func @transform_9(%arg0: i32) -> (i32, i32) {
    %c0_i32 = arith.constant 0 : i32
    %c0_i32_0 = arith.constant 0 : i32
    %c0_i32_1 = arith.constant 0 : i32
    return %c0_i32, %c0_i32_0 : i32, i32
  }
  func.func @transform_10(%arg0: i32) -> (i32, i32) {
    %c0_i32 = arith.constant 0 : i32
    %c0_i32_0 = arith.constant 0 : i32
    %c0_i32_1 = arith.constant 0 : i32
    return %c0_i32, %c0_i32_0 : i32, i32
  }
  func.func @transform_11(%arg0: i32) -> (i32, i32) {
    %c0_i32 = arith.constant 0 : i32
    %c0_i32_0 = arith.constant 0 : i32
    %c0_i32_1 = arith.constant 0 : i32
    return %c0_i32, %c0_i32_0 : i32, i32
  }
  func.func @transform_12(%arg0: i32) -> (i32, i32, i32) {
    %c0_i32 = arith.constant 0 : i32
    %c0_i32_0 = arith.constant 0 : i32
    %c0_i32_1 = arith.constant 0 : i32
    return %arg0, %c0_i32, %c0_i32_0 : i32, i32, i32
  }
}

</mosaic_0001>

<llo_original>
// kernel: encoder_forward.3
$region0: #{encoder_forward.3}
  #allocation0 [shape = 'u32[]', space=smem, size = 0x4, offset = 0x4, fixed_abs, tag = 'smem constant byte address 0x4 - core index']
  #allocation1 [shape = 'u32[144,128]{1,0:T(1,128)}', space=vmem, size = 0x12000, scoped, tag = 'internal scratch']
  #allocation2 [shape = 'f32[3,80,64]{2,1,0:T(8,128)}', space=vmem, size = 0x1e000, scoped, tag = 'scratch operand']
  %s0 = inlined_call_operand.vmem [shape: bf16[2,256,64], index: 0, kind: input, shape index: {}]
  %s1 = inlined_call_operand.vmem [shape: bf16[64,64], index: 1, kind: input, shape index: {}]
  %s2 = inlined_call_operand.vmem [shape: f32[1,64], index: 2, kind: input, shape index: {}]
  %s3 = inlined_call_operand.vmem [shape: bf16[2,64,64], index: 3, kind: output, shape index: {}]
  %s4 = sld [smem:[#allocation0]]
  $region45: #{encoder_forward.3} parent=0
    _
  %s6 = ssub.s32 1, %s4
  %s7 = scalar_select 0, %s6, %s4
  loop: start=0, step=1, limit=4
  $region2: #{encoder_forward.3} parent=0 // loop_pre_header
    _
  $region3: #{encoder_forward.3} parent=0 // loop_header
    %s9 = sphi 0, %s13
    %p10 = scmp.ge.s32.totalorder %s9, 4
    %s19 = sphi 0, %s21
    %s22 = sphi 0, %s19
    %s23 = sphi 0, %s22
    %s39 = sphi 0, %s23
    %s43 = sphi 0, %s43
    %s45 = sphi 0, %s43
    %s46 = sphi 0, %s45
    %s60 = sphi 0, %s46
    %s64 = sphi 0, %s64
    %s66 = sphi 0, %s64
    %s67 = sphi 0, %s66
    %s81 = sphi 0, %s67
    %s87 = sphi 0, %s89
    %s90 = sphi 0, %s87
    %s91 = sphi 0, %s90
    %s107 = sphi 0, %s91
  $region4: #{encoder_forward.3} parent=0 // loop_header_branch
    %12 = sbr.rel (%p10) target = $region8
  $region5: #{encoder_forward.3} parent=0 // loop_body
    %s14 = ssub.s32 %s9, 1
    %s15 = ssub.s32 %s9, 2
    %s16 = sadd.s32 %s9, 1
    %s17 = ssub.s32 %s9, %s16
    %p18 = scmp.eq.s32.totalorder %s17, 0
    %s20 = sadd.s32 %s19, 1
    %s21 = scalar_select %p18, %s19, %s20
    %p24 = pneg %p18
    %p25 = scmp.eq.s32.totalorder %s9, 1
    %p26 = por %p24, %p25
    %p27 = scmp.ne.s32.totalorder %s19, %s22
    %p28 = scmp.eq.s32.totalorder %s9, 0
    %p29 = por %p27, %p28
    %p30 = scmp.ne.s32.totalorder %s19, %s22
    %p31 = scmp.eq.s32.totalorder %s14, 1
    %p32 = por %p30, %p31
    %p33 = scmp.ne.s32.totalorder %s22, %s23
    %p34 = scmp.eq.s32.totalorder %s14, 0
    %p35 = por %p33, %p34
    %p36 = scmp.ne.s32.totalorder %s22, %s23
    %p37 = scmp.eq.s32.totalorder %s15, 1
    %p38 = por %p36, %p37
    %p40 = scmp.ne.s32.totalorder %s23, %s39
    %p41 = scmp.eq.s32.totalorder %s15, 0
    %p42 = por %p40, %p41
    %s44 = sadd.s32 %s43, 1
    %p47 = scmp.eq.s32.totalorder %s9, 1
    %p48 = scmp.ne.s32.totalorder %s43, %s45
    %p49 = scmp.eq.s32.totalorder %s9, 0
    %p50 = por %p48, %p49
    %p51 = scmp.ne.s32.totalorder %s43, %s45
    %p52 = scmp.eq.s32.totalorder %s14, 1
    %p53 = por %p51, %p52
    %p54 = scmp.ne.s32.totalorder %s45, %s46
    %p55 = scmp.eq.s32.totalorder %s14, 0
    %p56 = por %p54, %p55
    %p57 = scmp.ne.s32.totalorder %s45, %s46
    %p58 = scmp.eq.s32.totalorder %s15, 1
    %p59 = por %p57, %p58
    %p61 = scmp.ne.s32.totalorder %s46, %s60
    %p62 = scmp.eq.s32.totalorder %s15, 0
    %p63 = por %p61, %p62
    %s65 = sadd.s32 %s64, 1
    %p68 = scmp.eq.s32.totalorder %s9, 1
    %p69 = scmp.ne.s32.totalorder %s64, %s66
    %p70 = scmp.eq.s32.totalorder %s9, 0
    %p71 = por %p69, %p70
    %p72 = scmp.ne.s32.totalorder %s64, %s66
    %p73 = scmp.eq.s32.totalorder %s14, 1
    %p74 = por %p72, %p73
    %p75 = scmp.ne.s32.totalorder %s66, %s67
    %p76 = scmp.eq.s32.totalorder %s14, 0
    %p77 = por %p75, %p76
    %p78 = scmp.ne.s32.totalorder %s66, %s67
    %p79 = scmp.eq.s32.totalorder %s15, 1
    %p80 = por %p78, %p79
    %p82 = scmp.ne.s32.totalorder %s67, %s81
    %p83 = scmp.eq.s32.totalorder %s15, 0
    %p84 = por %p82, %p83
    %s85 = ssub.s32 %s9, %s16
    %p86 = scmp.eq.s32.totalorder %s85, 0
    %s88 = sadd.s32 %s87, 1
    %s89 = scalar_select %p86, %s87, %s88
    %p92 = pneg %p86
    %p93 = scmp.eq.s32.totalorder %s9, 1
    %p94 = por %p92, %p93
    %p95 = scmp.ne.s32.totalorder %s87, %s90
    %p96 = scmp.eq.s32.totalorder %s9, 0
    %p97 = por %p95, %p96
    %p98 = scmp.ne.s32.totalorder %s87, %s90
    %p99 = scmp.eq.s32.totalorder %s14, 1
    %p100 = por %p98, %p99
    %p101 = scmp.ne.s32.totalorder %s90, %s91
    %p102 = scmp.eq.s32.totalorder %s14, 0
    %p103 = por %p101, %p102
    %p104 = scmp.ne.s32.totalorder %s90, %s91
    %p105 = scmp.eq.s32.totalorder %s15, 1
    %p106 = por %p104, %p105
    %p108 = scmp.ne.s32.totalorder %s91, %s107
    %p109 = scmp.eq.s32.totalorder %s15, 0
    %p110 = por %p108, %p109
    %p111 = scmp.le.s32.totalorder 1, %s9
    %p112 = scmp.lt.s32.totalorder %s9, 3
    %p113 = pnand %p111, %p112
    %p114 = pneg %p113
    // Predicated region
    $region9: #{encoder_forward.3} parent=5 // pred_check
      _
    $region10: #{encoder_forward.3} parent=5 // pred_check_branch
      %116 = sbr.rel (%p113) target = $region12
    $region11: #{encoder_forward.3} parent=5 // pred_region
      %s117 = ssub.s32 %s9, 1
      // Predicated region
      $region13: #{encoder_forward.3} parent=11 // pred_check
        %p118 = pneg %p56
      $region14: #{encoder_forward.3} parent=11 // pred_check_branch
        %120 = sbr.rel (%p118) target = $region16
      $region15: #{encoder_forward.3} parent=11 // pred_region
        _
      $region16: #{encoder_forward.3} parent=11 // pred_fallthru
        _
      // Predicated region
      $region17: #{encoder_forward.3} parent=11 // pred_check
        %p121 = pneg %p77
      $region18: #{encoder_forward.3} parent=11 // pred_check_branch
        %123 = sbr.rel (%p121) target = $region20
      $region19: #{encoder_forward.3} parent=11 // pred_region
        _
      $region20: #{encoder_forward.3} parent=11 // pred_fallthru
        _
    $region12: #{encoder_forward.3} parent=5 // pred_fallthru
      _
    %p124 = scmp.lt.s32.totalorder %s9, 2
    // Predicated region
    $region21: #{encoder_forward.3} parent=5 // pred_check
      %p125 = pneg %p124
    $region22: #{encoder_forward.3} parent=5 // pred_check_branch
      %127 = sbr.rel (%p125) target = $region24
    $region23: #{encoder_forward.3} parent=5 // pred_region
      // Predicated region
      $region25: #{encoder_forward.3} parent=23 // pred_check
        %p128 = pneg %p29
      $region26: #{encoder_forward.3} parent=23 // pred_check_branch
        %130 = sbr.rel (%p128) target = $region28
      $region27: #{encoder_forward.3} parent=23 // pred_region
        %p131 = scmp.lt.s32.totalorder %s9, 1
        %s132 = scalar_select %p131, %s9, 1
        %s133 = smul.addr %s132, 32
        %s134 = smul.addr %s133, 4
        %s135 = scalar_lea.vmem %s0, %s134
      $region28: #{encoder_forward.3} parent=23 // pred_fallthru
        _
    $region24: #{encoder_forward.3} parent=5 // pred_fallthru
      _
    %p136 = scmp.le.s32.totalorder 1, %s9
    %p137 = scmp.lt.s32.totalorder %s9, 3
    %p138 = pnand %p136, %p137
    %p139 = pneg %p138
    // Predicated region
    $region29: #{encoder_forward.3} parent=5 // pred_check
      _
    $region30: #{encoder_forward.3} parent=5 // pred_check_branch
      %141 = sbr.rel (%p138) target = $region32
    $region31: #{encoder_forward.3} parent=5 // pred_region
      %s142 = ssub.s32 %s9, 1
      %p143 = scmp.lt.s32.totalorder %s14, 1
      %s144 = scalar_select %p143, %s14, 1
      %s145 = smul.addr %s144, 32
      %s146 = smul.addr %s145, 4
      %s147 = scalar_lea.vmem %s0, %s146
      %p148 = pneg %p35
      %p149 = pneg %p32
      %p150 = pneg %p56
      %p151 = pneg %p53
      %p152 = pneg %p77
      %p153 = pneg %p74
      %p154 = pneg %p103
      %p155 = pneg %p100
      %p156 = scmp.lt.s32.totalorder %s14, 1
      %s157 = scalar_select %p156, %s14, 1
      %s158 = smul.addr %s157, 8
      %s159 = smul.addr %s158, 4
      %s160 = scalar_lea.vmem %s3, %s159
      %p161 = scmp.lt.s32.totalorder %s14, 1
      %s162 = scalar_select %p161, %s14, 1
      %s163 = smul.addr %s162, 32
      %s164 = smul.addr %s163, 4
      %s165 = scalar_lea.vmem %s0, %s164
      %p166 = scmp.lt.s32.totalorder %s14, 1
      %s167 = scalar_select %p166, %s14, 1
      %s168 = smul.addr %s167, 8
      %s169 = smul.addr %s168, 4
      %s170 = scalar_lea.vmem %s3, %s169
      %v172 = vld [vmem:[%s165] sm:$0xf]
      %v173 = vld [vmem:[%s165 + $0x4] sm:$0xf]
      %v174 = vld [vmem:[%s165 + $0x8] sm:$0xf]
      %v175 = vld [vmem:[%s165 + $0xc] sm:$0xf]
      %v176 = vld [vmem:[%s165 + $0x10] sm:$0xf]
      %v177 = vld [vmem:[%s165 + $0x14] sm:$0xf]
      %v178 = vld [vmem:[%s165 + $0x18] sm:$0xf]
      %v179 = vld [vmem:[%s165 + $0x1c] sm:$0xf]
      %v180 = vld [vmem:[%s165 + $0x20] sm:$0xf]
      %v181 = vld [vmem:[%s165 + $0x24] sm:$0xf]
      %v182 = vld [vmem:[%s165 + $0x28] sm:$0xf]
      %v183 = vld [vmem:[%s165 + $0x2c] sm:$0xf]
      %v184 = vld [vmem:[%s165 + $0x30] sm:$0xf]
      %v185 = vld [vmem:[%s165 + $0x34] sm:$0xf]
      %v186 = vld [vmem:[%s165 + $0x38] sm:$0xf]
      %v187 = vld [vmem:[%s165 + $0x3c] sm:$0xf]
      %v188 = vld [vmem:[%s165 + $0x40] sm:$0xf]
      %v189 = vld [vmem:[%s165 + $0x44] sm:$0xf]
      %v190 = vld [vmem:[%s165 + $0x48] sm:$0xf]
      %v191 = vld [vmem:[%s165 + $0x4c] sm:$0xf]
      %v192 = vld [vmem:[%s165 + $0x50] sm:$0xf]
      %v193 = vld [vmem:[%s165 + $0x54] sm:$0xf]
      %v194 = vld [vmem:[%s165 + $0x58] sm:$0xf]
      %v195 = vld [vmem:[%s165 + $0x5c] sm:$0xf]
      %v196 = vld [vmem:[%s165 + $0x60] sm:$0xf]
      %v197 = vld [vmem:[%s165 + $0x64] sm:$0xf]
      %v198 = vld [vmem:[%s165 + $0x68] sm:$0xf]
      %v199 = vld [vmem:[%s165 + $0x6c] sm:$0xf]
      %v200 = vld [vmem:[%s165 + $0x70] sm:$0xf]
      %v201 = vld [vmem:[%s165 + $0x74] sm:$0xf]
      %v202 = vld [vmem:[%s165 + $0x78] sm:$0xf]
      %v203 = vld [vmem:[%s165 + $0x7c] sm:$0xf]
      %v204 = vld [vmem:[%s1] sm:$0xf]
      %v205 = vld [vmem:[%s1 + $0x4] sm:$0xf]
      %v206 = vld [vmem:[%s1 + $0x8] sm:$0xf]
      %v207 = vld [vmem:[%s1 + $0xc] sm:$0xf]
      %v208 = vld [vmem:[%s1 + $0x10] sm:$0xf]
      %v209 = vld [vmem:[%s1 + $0x14] sm:$0xf]
      %v210 = vld [vmem:[%s1 + $0x18] sm:$0xf]
      %v211 = vld [vmem:[%s1 + $0x1c] sm:$0xf]
      %v212 = vld [vmem:[%s2] sm:$0x1]
      %v214 = vlaneseq
      %v215 = vshrl.u32 %v214, 7
      %v216 = vsub.s32 0, %v215
      %v217 = vrot.slane %v212, %v216
      %v251 = vunpack.c.l.b16 %v172
      %v252 = vunpack.c.l.b16 %v173
      %v253 = vunpack.c.l.b16 %v174
      %v254 = vunpack.c.l.b16 %v175
      %v255 = vunpack.c.l.b16 %v176
      %v256 = vunpack.c.l.b16 %v177
      %v257 = vunpack.c.l.b16 %v178
      %v258 = vunpack.c.l.b16 %v179
      %v259 = vunpack.c.l.b16 %v180
      %v260 = vunpack.c.l.b16 %v181
      %v261 = vunpack.c.l.b16 %v182
      %v262 = vunpack.c.l.b16 %v183
      %v263 = vunpack.c.l.b16 %v184
      %v264 = vunpack.c.l.b16 %v185
      %v265 = vunpack.c.l.b16 %v186
      %v266 = vunpack.c.l.b16 %v187
      %v267 = vunpack.c.l.b16 %v188
      %v268 = vunpack.c.l.b16 %v189
      %v269 = vunpack.c.l.b16 %v190
      %v270 = vunpack.c.l.b16 %v191
      %v271 = vunpack.c.l.b16 %v192
      %v272 = vunpack.c.l.b16 %v193
      %v273 = vunpack.c.l.b16 %v194
      %v274 = vunpack.c.l.b16 %v195
      %v275 = vunpack.c.l.b16 %v196
      %v276 = vunpack.c.l.b16 %v197
      %v277 = vunpack.c.l.b16 %v198
      %v278 = vunpack.c.l.b16 %v199
      %v279 = vunpack.c.l.b16 %v200
      %v280 = vunpack.c.l.b16 %v201
      %v281 = vunpack.c.l.b16 %v202
      %v282 = vunpack.c.l.b16 %v203
      %v283 = vpack.c.b16 %v252, %v251
      %v284 = vpack.c.b16 %v254, %v253
      %v285 = vpack.c.b16 %v256, %v255
      %v286 = vpack.c.b16 %v258, %v257
      %v287 = vpack.c.b16 %v260, %v259
      %v288 = vpack.c.b16 %v262, %v261
      %v289 = vpack.c.b16 %v264, %v263
      %v290 = vpack.c.b16 %v266, %v265
      %v291 = vpack.c.b16 %v268, %v267
      %v292 = vpack.c.b16 %v270, %v269
      %v293 = vpack.c.b16 %v272, %v271
      %v294 = vpack.c.b16 %v274, %v273
      %v295 = vpack.c.b16 %v276, %v275
      %v296 = vpack.c.b16 %v278, %v277
      %v297 = vpack.c.b16 %v280, %v279
      %v298 = vpack.c.b16 %v282, %v281
      %v307 = vunpack.c.l.b16 %v204
      %v308 = vunpack.c.l.b16 %v205
      %v309 = vunpack.c.l.b16 %v206
      %v310 = vunpack.c.l.b16 %v207
      %v311 = vunpack.c.l.b16 %v208
      %v312 = vunpack.c.l.b16 %v209
      %v313 = vunpack.c.l.b16 %v210
      %v314 = vunpack.c.l.b16 %v211
      %v315 = vpack.c.b16 %v308, %v307
      %v316 = vpack.c.b16 %v310, %v309
      %v317 = vpack.c.b16 %v312, %v311
      %v318 = vpack.c.b16 %v314, %v313
      %vm323 = vcmask 523264
      %v325 = vsel %vm323, %v283, 0
      %v328 = vsel %vm323, %v284, 0
      %v331 = vsel %vm323, %v285, 0
      %v334 = vsel %vm323, %v286, 0
      %v337 = vsel %vm323, %v287, 0
      %v340 = vsel %vm323, %v288, 0
      %v343 = vsel %vm323, %v289, 0
      %v346 = vsel %vm323, %v290, 0
      %v349 = vsel %vm323, %v291, 0
      %v352 = vsel %vm323, %v292, 0
      %v355 = vsel %vm323, %v293, 0
      %v358 = vsel %vm323, %v294, 0
      %v361 = vsel %vm323, %v295, 0
      %v364 = vsel %vm323, %v296, 0
      %v367 = vsel %vm323, %v297, 0
      %v370 = vsel %vm323, %v298, 0
      %372 = vmatprep.subr.bf16.mxu0 0
      %373 = vmatpush1.bf16.msra.mxu0 %v315
      %374 = vmatprep.subr.bf16.mxu0 0
      %375 = vmatpush1.bf16.msra.mxu0 %v316
      %376 = vmatprep.subr.bf16.mxu0 0
      %377 = vmatpush1.bf16.msra.mxu0 %v317
      %378 = vmatprep.subr.bf16.mxu0 0
      %379 = vmatpush1.bf16.msra.mxu0 %v318
      %380 = vmatprep.subr.bf16.mxu0 0
      %381 = vmatpush1.bf16.msra.mxu0 0
      %382 = vmatprep.subr.bf16.mxu0 0
      %383 = vmatpush1.bf16.msra.mxu0 0
      %384 = vmatprep.subr.bf16.mxu0 0
      %385 = vmatpush1.bf16.msra.mxu0 0
      %386 = vmatprep.subr.bf16.mxu0 0
      %387 = vmatpush1.bf16.msra.mxu0 0
      %388 = vmatprep.subr.bf16.mxu0 0
      %389 = vmatpush1.bf16.msra.mxu0 0
      %390 = vmatprep.subr.bf16.mxu0 0
      %391 = vmatpush1.bf16.msra.mxu0 0
      %392 = vmatprep.subr.bf16.mxu0 0
      %393 = vmatpush1.bf16.msra.mxu0 0
      %394 = vmatprep.subr.bf16.mxu0 0
      %395 = vmatpush1.bf16.msra.mxu0 0
      %396 = vmatprep.subr.bf16.mxu0 0
      %397 = vmatpush1.bf16.msra.mxu0 0
      %398 = vmatprep.subr.bf16.mxu0 0
      %399 = vmatpush1.bf16.msra.mxu0 0
      %400 = vmatprep.subr.bf16.mxu0 0
      %401 = vmatpush1.bf16.msra.mxu0 0
      %402 = vmatprep.subr.bf16.mxu0 0
      %403 = vmatpush1.bf16.msra.mxu0 0
      %404 = vmatprep.mubr.bf16.mxu0 0
      %405 = vmatmul.mubr.bf16.gmra.mrb[0].mxu0 %v325
      %v406 = vpop.f32.mrb[0].mxu0
      %v407 = vadd.f32 %v217, %v406
      %v408 = vpop.f32.mrb[0].mxu0
      %v409 = vpop.f32.mrb[0].mxu0
      %v410 = vadd.f32 %v217, %v409
      %v411 = vpop.f32.mrb[0].mxu0
      %412 = vmatprep.mubr.bf16.mxu0 0
      %413 = vmatmul.mubr.bf16.gmra.mrb[0].mxu0 %v328
      %v414 = vpop.f32.mrb[0].mxu0
      %v415 = vadd.f32 %v217, %v414
      %v416 = vpop.f32.mrb[0].mxu0
      %v417 = vpop.f32.mrb[0].mxu0
      %v418 = vadd.f32 %v217, %v417
      %v419 = vpop.f32.mrb[0].mxu0
      %420 = vmatprep.mubr.bf16.mxu0 0
      %421 = vmatmul.mubr.bf16.gmra.mrb[0].mxu0 %v331
      %v422 = vpop.f32.mrb[0].mxu0
      %v423 = vadd.f32 %v217, %v422
      %v424 = vpop.f32.mrb[0].mxu0
      %v425 = vpop.f32.mrb[0].mxu0
      %v426 = vadd.f32 %v217, %v425
      %v427 = vpop.f32.mrb[0].mxu0
      %428 = vmatprep.mubr.bf16.mxu0 0
      %429 = vmatmul.mubr.bf16.gmra.mrb[0].mxu0 %v334
      %v430 = vpop.f32.mrb[0].mxu0
      %v431 = vadd.f32 %v217, %v430
      %v432 = vpop.f32.mrb[0].mxu0
      %v433 = vpop.f32.mrb[0].mxu0
      %v434 = vadd.f32 %v217, %v433
      %v435 = vpop.f32.mrb[0].mxu0
      %436 = vmatprep.mubr.bf16.mxu0 0
      %437 = vmatmul.mubr.bf16.gmra.mrb[0].mxu0 %v337
      %v438 = vpop.f32.mrb[0].mxu0
      %v439 = vadd.f32 %v217, %v438
      %v440 = vpop.f32.mrb[0].mxu0
      %v441 = vpop.f32.mrb[0].mxu0
      %v442 = vadd.f32 %v217, %v441
      %v443 = vpop.f32.mrb[0].mxu0
      %444 = vmatprep.mubr.bf16.mxu0 0
      %445 = vmatmul.mubr.bf16.gmra.mrb[0].mxu0 %v340
      %v446 = vpop.f32.mrb[0].mxu0
      %v447 = vadd.f32 %v217, %v446
      %v448 = vpop.f32.mrb[0].mxu0
      %v449 = vpop.f32.mrb[0].mxu0
      %v450 = vadd.f32 %v217, %v449
      %v451 = vpop.f32.mrb[0].mxu0
      %452 = vmatprep.mubr.bf16.mxu0 0
      %453 = vmatmul.mubr.bf16.gmra.mrb[0].mxu0 %v343
      %v454 = vpop.f32.mrb[0].mxu0
      %v455 = vadd.f32 %v217, %v454
      %v456 = vpop.f32.mrb[0].mxu0
      %v457 = vpop.f32.mrb[0].mxu0
      %v458 = vadd.f32 %v217, %v457
      %v459 = vpop.f32.mrb[0].mxu0
      %460 = vmatprep.mubr.bf16.mxu0 0
      %461 = vmatmul.mubr.bf16.gmra.mrb[0].mxu0 %v346
      %v462 = vpop.f32.mrb[0].mxu0
      %v463 = vadd.f32 %v217, %v462
      %v464 = vpop.f32.mrb[0].mxu0
      %v465 = vpop.f32.mrb[0].mxu0
      %v466 = vadd.f32 %v217, %v465
      %v467 = vpop.f32.mrb[0].mxu0
      %468 = vmatprep.mubr.bf16.mxu0 0
      %469 = vmatmul.mubr.bf16.gmra.mrb[0].mxu0 %v349
      %v470 = vpop.f32.mrb[0].mxu0
      %v471 = vadd.f32 %v217, %v470
      %v472 = vpop.f32.mrb[0].mxu0
      %v473 = vpop.f32.mrb[0].mxu0
      %v474 = vadd.f32 %v217, %v473
      %v475 = vpop.f32.mrb[0].mxu0
      %476 = vmatprep.mubr.bf16.mxu0 0
      %477 = vmatmul.mubr.bf16.gmra.mrb[0].mxu0 %v352
      %v478 = vpop.f32.mrb[0].mxu0
      %v479 = vadd.f32 %v217, %v478
      %v480 = vpop.f32.mrb[0].mxu0
      %v481 = vpop.f32.mrb[0].mxu0
      %v482 = vadd.f32 %v217, %v481
      %v483 = vpop.f32.mrb[0].mxu0
      %484 = vmatprep.mubr.bf16.mxu0 0
      %485 = vmatmul.mubr.bf16.gmra.mrb[0].mxu0 %v355
      %v486 = vpop.f32.mrb[0].mxu0
      %v487 = vadd.f32 %v217, %v486
      %v488 = vpop.f32.mrb[0].mxu0
      %v489 = vpop.f32.mrb[0].mxu0
      %v490 = vadd.f32 %v217, %v489
      %v491 = vpop.f32.mrb[0].mxu0
      %492 = vmatprep.mubr.bf16.mxu0 0
      %493 = vmatmul.mubr.bf16.gmra.mrb[0].mxu0 %v358
      %v494 = vpop.f32.mrb[0].mxu0
      %v495 = vadd.f32 %v217, %v494
      %v496 = vpop.f32.mrb[0].mxu0
      %v497 = vpop.f32.mrb[0].mxu0
      %v498 = vadd.f32 %v217, %v497
      %v499 = vpop.f32.mrb[0].mxu0
      %500 = vmatprep.mubr.bf16.mxu0 0
      %501 = vmatmul.mubr.bf16.gmra.mrb[0].mxu0 %v361
      %v502 = vpop.f32.mrb[0].mxu0
      %v503 = vadd.f32 %v217, %v502
      %v504 = vpop.f32.mrb[0].mxu0
      %v505 = vpop.f32.mrb[0].mxu0
      %v506 = vadd.f32 %v217, %v505
      %v507 = vpop.f32.mrb[0].mxu0
      %508 = vmatprep.mubr.bf16.mxu0 0
      %509 = vmatmul.mubr.bf16.gmra.mrb[0].mxu0 %v364
      %v510 = vpop.f32.mrb[0].mxu0
      %v511 = vadd.f32 %v217, %v510
      %v512 = vpop.f32.mrb[0].mxu0
      %v513 = vpop.f32.mrb[0].mxu0
      %v514 = vadd.f32 %v217, %v513
      %v515 = vpop.f32.mrb[0].mxu0
      %516 = vmatprep.mubr.bf16.mxu0 0
      %517 = vmatmul.mubr.bf16.gmra.mrb[0].mxu0 %v367
      %v518 = vpop.f32.mrb[0].mxu0
      %v519 = vadd.f32 %v217, %v518
      %v520 = vpop.f32.mrb[0].mxu0
      %v521 = vpop.f32.mrb[0].mxu0
      %v522 = vadd.f32 %v217, %v521
      %v523 = vpop.f32.mrb[0].mxu0
      %524 = vmatprep.mubr.bf16.mxu0 0
      %525 = vmatmul.mubr.bf16.gmra.mrb[0].mxu0 %v370
      %v526 = vpop.f32.mrb[0].mxu0
      %v527 = vadd.f32 %v217, %v526
      %v528 = vpop.f32.mrb[0].mxu0
      %v529 = vpop.f32.mrb[0].mxu0
      %v530 = vadd.f32 %v217, %v529
      %v531 = vpop.f32.mrb[0].mxu0
      %532 = vdwg.mxu0
      %v533 = vmax.f32 %v407, 0.0
      %v534 = vmax.f32 %v410, 0.0
      %v535 = vmax.f32 %v415, 0.0
      %v536 = vmax.f32 %v418, 0.0
      %v537 = vmax.f32 %v423, 0.0
      %v538 = vmax.f32 %v426, 0.0
      %v539 = vmax.f32 %v431, 0.0
      %v540 = vmax.f32 %v434, 0.0
      %v541 = vmax.f32 %v439, 0.0
      %v542 = vmax.f32 %v442, 0.0
      %v543 = vmax.f32 %v447, 0.0
      %v544 = vmax.f32 %v450, 0.0
      %v545 = vmax.f32 %v455, 0.0
      %v546 = vmax.f32 %v458, 0.0
      %v547 = vmax.f32 %v463, 0.0
      %v548 = vmax.f32 %v466, 0.0
      %v549 = vmax.f32 %v471, 0.0
      %v550 = vmax.f32 %v474, 0.0
      %v551 = vmax.f32 %v479, 0.0
      %v552 = vmax.f32 %v482, 0.0
      %v553 = vmax.f32 %v487, 0.0
      %v554 = vmax.f32 %v490, 0.0
      %v555 = vmax.f32 %v495, 0.0
      %v556 = vmax.f32 %v498, 0.0
      %v557 = vmax.f32 %v503, 0.0
      %v558 = vmax.f32 %v506, 0.0
      %v559 = vmax.f32 %v511, 0.0
      %v560 = vmax.f32 %v514, 0.0
      %v561 = vmax.f32 %v519, 0.0
      %v562 = vmax.f32 %v522, 0.0
      %v563 = vmax.f32 %v527, 0.0
      %v564 = vmax.f32 %v530, 0.0
      %565 = vst.msk [vmem:[#allocation2] sm:$0xff] %vm323, 0.0
      %566 = vst.msk [vmem:[#allocation2 + $0x8] sm:$0xff] %vm323, 0.0
      %s567 = scalar_lea.vmem [#allocation2], 80
      %568 = vst.msk [vmem:[%s567] sm:$0xff] %vm323, 0.0
      %569 = vst.msk [vmem:[%s567 + $0x8] sm:$0xff] %vm323, 0.0
      %s570 = scalar_lea.vmem [#allocation2], 160
      %571 = vst.msk [vmem:[%s570] sm:$0xff] %vm323, 0.0
      %572 = vst.msk [vmem:[%s570 + $0x8] sm:$0xff] %vm323, 0.0
      %573 = vst.msk [vmem:[#allocation2 + $0x10] sm:$0xff] %vm323, %v541
      %574 = vst.msk [vmem:[#allocation2 + $0x18] sm:$0xff] %vm323, %v542
      %575 = vst.msk [vmem:[#allocation2 + $0x20] sm:$0xff] %vm323, %v543
      %576 = vst.msk [vmem:[#allocation2 + $0x28] sm:$0xff] %vm323, %v544
      %577 = vst.msk [vmem:[#allocation2 + $0x30] sm:$0xff] %vm323, %v545
      %578 = vst.msk [vmem:[#allocation2 + $0x38] sm:$0xff] %vm323, %v546
      %579 = vst.msk [vmem:[#allocation2 + $0x40] sm:$0xff] %vm323, %v547
      %580 = vst.msk [vmem:[#allocation2 + $0x48] sm:$0xff] %vm323, %v548
      %581 = vst.msk [vmem:[%s567 + $0x10] sm:$0xff] %vm323, %v549
      %582 = vst.msk [vmem:[%s567 + $0x18] sm:$0xff] %vm323, %v550
      %583 = vst.msk [vmem:[%s567 + $0x20] sm:$0xff] %vm323, %v551
      %584 = vst.msk [vmem:[%s567 + $0x28] sm:$0xff] %vm323, %v552
      %585 = vst.msk [vmem:[%s567 + $0x30] sm:$0xff] %vm323, %v553
      %586 = vst.msk [vmem:[%s567 + $0x38] sm:$0xff] %vm323, %v554
      %587 = vst.msk [vmem:[%s567 + $0x40] sm:$0xff] %vm323, %v555
      %588 = vst.msk [vmem:[%s567 + $0x48] sm:$0xff] %vm323, %v556
      %589 = vst.msk [vmem:[%s570 + $0x10] sm:$0xff] %vm323, %v557
      %590 = vst.msk [vmem:[%s570 + $0x18] sm:$0xff] %vm323, %v558
      %591 = vst.msk [vmem:[%s570 + $0x20] sm:$0xff] %vm323, %v559
      %592 = vst.msk [vmem:[%s570 + $0x28] sm:$0xff] %vm323, %v560
      %593 = vst.msk [vmem:[%s570 + $0x30] sm:$0xff] %vm323, %v561
      %594 = vst.msk [vmem:[%s570 + $0x38] sm:$0xff] %vm323, %v562
      %595 = vst.msk [vmem:[%s570 + $0x40] sm:$0xff] %vm323, %v563
      %596 = vst.msk [vmem:[%s570 + $0x48] sm:$0xff] %vm323, %v564
      %v597 = vlaneseq
      %v598 = vshrl.u32 %v597, 7
      %v599 = vadd.s32 %v598, 8
      %v600 = vadd.s32 %v598, 16
      %v601 = vadd.s32 %v598, 24
      %v602 = vadd.s32 %v598, 32
      %v603 = vadd.s32 %v598, 40
      %v604 = vadd.s32 %v598, 48
      %v605 = vadd.s32 %v598, 56
      %vm606 = vcmp.lt.s32.totalorder %v598, 0
      %v607 = vsub.s32 0, %v598
      %v608 = vsel %vm606, %v607, %v598
      %v609 = vshrl.u32 %v608, 3
      %v610 = vand.u32 %v608, 7
      %v611 = vsub.s32 0, %v610
      %v612 = vsel %vm606, %v611, %v610
      %vm613 = vcmp.lt.s32.totalorder %v599, 0
      %v614 = vsub.s32 0, %v599
      %v615 = vsel %vm613, %v614, %v599
      %v616 = vshrl.u32 %v615, 3
      %v617 = vand.u32 %v615, 7
      %v618 = vsub.s32 0, %v617
      %v619 = vsel %vm613, %v618, %v617
      %vm620 = vcmp.lt.s32.totalorder %v600, 0
      %v621 = vsub.s32 0, %v600
      %v622 = vsel %vm620, %v621, %v600
      %v623 = vshrl.u32 %v622, 3
      %v624 = vand.u32 %v622, 7
      %v625 = vsub.s32 0, %v624
      %v626 = vsel %vm620, %v625, %v624
      %vm627 = vcmp.lt.s32.totalorder %v601, 0
      %v628 = vsub.s32 0, %v601
      %v629 = vsel %vm627, %v628, %v601
      %v630 = vshrl.u32 %v629, 3
      %v631 = vand.u32 %v629, 7
      %v632 = vsub.s32 0, %v631
      %v633 = vsel %vm627, %v632, %v631
      %vm634 = vcmp.lt.s32.totalorder %v602, 0
      %v635 = vsub.s32 0, %v602
      %v636 = vsel %vm634, %v635, %v602
      %v637 = vshrl.u32 %v636, 3
      %v638 = vand.u32 %v636, 7
      %v639 = vsub.s32 0, %v638
      %v640 = vsel %vm634, %v639, %v638
      %vm641 = vcmp.lt.s32.totalorder %v603, 0
      %v642 = vsub.s32 0, %v603
      %v643 = vsel %vm641, %v642, %v603
      %v644 = vshrl.u32 %v643, 3
      %v645 = vand.u32 %v643, 7
      %v646 = vsub.s32 0, %v645
      %v647 = vsel %vm641, %v646, %v645
      %vm648 = vcmp.lt.s32.totalorder %v604, 0
      %v649 = vsub.s32 0, %v604
      %v650 = vsel %vm648, %v649, %v604
      %v651 = vshrl.u32 %v650, 3
      %v652 = vand.u32 %v650, 7
      %v653 = vsub.s32 0, %v652
      %v654 = vsel %vm648, %v653, %v652
      %vm655 = vcmp.lt.s32.totalorder %v605, 0
      %v656 = vsub.s32 0, %v605
      %v657 = vsel %vm655, %v656, %v605
      %v658 = vshrl.u32 %v657, 3
      %v659 = vand.u32 %v657, 7
      %v660 = vsub.s32 0, %v659
      %v661 = vsel %vm655, %v660, %v659
      %vm662 = vcmp.ne.s32.totalorder %v612, 0
      %vm663 = vcmp.ne.s32.totalorder %v619, 0
      %vm664 = vcmp.ne.s32.totalorder %v626, 0
      %vm665 = vcmp.ne.s32.totalorder %v633, 0
      %vm666 = vcmp.ne.s32.totalorder %v640, 0
      %vm667 = vcmp.ne.s32.totalorder %v647, 0
      %vm668 = vcmp.ne.s32.totalorder %v654, 0
      %vm669 = vcmp.ne.s32.totalorder %v661, 0
      %vm670 = vcmp.lt.s32.totalorder %v612, 0
      %vm671 = vcmp.lt.s32.totalorder %v619, 0
      %vm672 = vcmp.lt.s32.totalorder %v626, 0
      %vm673 = vcmp.lt.s32.totalorder %v633, 0
      %vm674 = vcmp.lt.s32.totalorder %v640, 0
      %vm675 = vcmp.lt.s32.totalorder %v647, 0
      %vm676 = vcmp.lt.s32.totalorder %v654, 0
      %vm677 = vcmp.lt.s32.totalorder %v661, 0
      %vm678 = vmand %vm670, %vm662
      %vm679 = vmand %vm671, %vm663
      %vm680 = vmand %vm672, %vm664
      %vm681 = vmand %vm673, %vm665
      %vm682 = vmand %vm674, %vm666
      %vm683 = vmand %vm675, %vm667
      %vm684 = vmand %vm676, %vm668
      %vm685 = vmand %vm677, %vm669
      %v686 = vadd.s32 %v612, 8
      %v687 = vadd.s32 %v619, 8
      %v688 = vadd.s32 %v626, 8
      %v689 = vadd.s32 %v633, 8
      %v690 = vadd.s32 %v640, 8
      %v691 = vadd.s32 %v647, 8
      %v692 = vadd.s32 %v654, 8
      %v693 = vadd.s32 %v661, 8
      %v694 = vsel %vm678, %v686, %v612
      %v695 = vsel %vm679, %v687, %v619
      %v696 = vsel %vm680, %v688, %v626
      %v697 = vsel %vm681, %v689, %v633
      %v698 = vsel %vm682, %v690, %v640
      %v699 = vsel %vm683, %v691, %v647
      %v700 = vsel %vm684, %v692, %v654
      %v701 = vsel %vm685, %v693, %v661
      %vm702 = vcmp.ne.s32.totalorder %v694, 0
      %vm703 = vcmp.ne.s32.totalorder %v695, 0
      %vm704 = vcmp.ne.s32.totalorder %v696, 0
      %vm705 = vcmp.ne.s32.totalorder %v697, 0
      %vm706 = vcmp.ne.s32.totalorder %v698, 0
      %vm707 = vcmp.ne.s32.totalorder %v699, 0
      %vm708 = vcmp.ne.s32.totalorder %v700, 0
      %vm709 = vcmp.ne.s32.totalorder %v701, 0
      %v710 = vmax.f32 %v533, %v541
      %v711 = vmax.f32 %v534, %v542
      %v712 = vmax.f32 %v535, %v543
      %v713 = vmax.f32 %v536, %v544
      %v714 = vmax.f32 %v537, %v545
      %v715 = vmax.f32 %v538, %v546
      %v716 = vmax.f32 %v539, %v547
      %v717 = vmax.f32 %v540, %v548
      %v718 = vmax.f32 %v549, %v557
      %v719 = vmax.f32 %v550, %v558
      %v720 = vmax.f32 %v551, %v559
      %v721 = vmax.f32 %v552, %v560
      %v722 = vmax.f32 %v553, %v561
      %v723 = vmax.f32 %v554, %v562
      %v724 = vmax.f32 %v555, %v563
      %v725 = vmax.f32 %v556, %v564
      %v726 = vmax.f32 %v710, %v718
      %v727 = vmax.f32 %v711, %v719
      %v728 = vmax.f32 %v712, %v720
      %v729 = vmax.f32 %v713, %v721
      %v730 = vmax.f32 %v714, %v722
      %v731 = vmax.f32 %v715, %v723
      %v732 = vmax.f32 %v716, %v724
      %v733 = vmax.f32 %v717, %v725
      %v734 = vld [vmem:[#allocation2 + $0xf] sm:$0xff]
      %v735 = vld [vmem:[#allocation2 + $0x17] sm:$0xff]
      %v736 = vld [vmem:[#allocation2 + $0x1f] sm:$0xff]
      %v737 = vld [vmem:[#allocation2 + $0x27] sm:$0xff]
      %v738 = vld [vmem:[#allocation2 + $0x2f] sm:$0xff]
      %v739 = vld [vmem:[#allocation2 + $0x37] sm:$0xff]
      %v740 = vld [vmem:[#allocation2 + $0x3f] sm:$0xff]
      %v741 = vld [vmem:[#allocation2 + $0x47] sm:$0xff]
      %v742 = vsel %vm702, %v734, 0.0
      %v743 = vsel %vm703, %v735, 0.0
      %v744 = vsel %vm704, %v736, 0.0
      %v745 = vsel %vm705, %v737, 0.0
      %v746 = vsel %vm706, %v738, 0.0
      %v747 = vsel %vm707, %v739, 0.0
      %v748 = vsel %vm708, %v740, 0.0
      %v749 = vsel %vm709, %v741, 0.0
      %v750 = vmax.f32 %v726, %v742
      %v751 = vmax.f32 %v727, %v743
      %v752 = vmax.f32 %v728, %v744
      %v753 = vmax.f32 %v729, %v745
      %v754 = vmax.f32 %v730, %v746
      %v755 = vmax.f32 %v731, %v747
      %v756 = vmax.f32 %v732, %v748
      %v757 = vmax.f32 %v733, %v749
      %v758 = vld [vmem:[%s570 + $0xf] sm:$0xff]
      %v759 = vld [vmem:[%s570 + $0x17] sm:$0xff]
      %v760 = vld [vmem:[%s570 + $0x1f] sm:$0xff]
      %v761 = vld [vmem:[%s570 + $0x27] sm:$0xff]
      %v762 = vld [vmem:[%s570 + $0x2f] sm:$0xff]
      %v763 = vld [vmem:[%s570 + $0x37] sm:$0xff]
      %v764 = vld [vmem:[%s570 + $0x3f] sm:$0xff]
      %v765 = vld [vmem:[%s570 + $0x47] sm:$0xff]
      %v766 = vsel %vm702, %v758, 0.0
      %v767 = vsel %vm703, %v759, 0.0
      %v768 = vsel %vm704, %v760, 0.0
      %v769 = vsel %vm705, %v761, 0.0
      %v770 = vsel %vm706, %v762, 0.0
      %v771 = vsel %vm707, %v763, 0.0
      %v772 = vsel %vm708, %v764, 0.0
      %v773 = vsel %vm709, %v765, 0.0
      %v774 = vmax.f32 %v750, %v766
      %v775 = vmax.f32 %v751, %v767
      %v776 = vmax.f32 %v752, %v768
      %v777 = vmax.f32 %v753, %v769
      %v778 = vmax.f32 %v754, %v770
      %v779 = vmax.f32 %v755, %v771
      %v780 = vmax.f32 %v756, %v772
      %v781 = vmax.f32 %v757, %v773
      %v782 = vld [vmem:[%s567 + $0x8] sm:$0xff]
      %v783 = vld [vmem:[%s567 + $0x10] sm:$0xff]
      %v784 = vld [vmem:[%s567 + $0x18] sm:$0xff]
      %v785 = vld [vmem:[%s567 + $0x20] sm:$0xff]
      %v786 = vld [vmem:[%s567 + $0x28] sm:$0xff]
      %v787 = vld [vmem:[%s567 + $0x30] sm:$0xff]
      %v788 = vld [vmem:[%s567 + $0x38] sm:$0xff]
      %v789 = vld [vmem:[%s567 + $0x40] sm:$0xff]
      %v790 = vmax.f32 %v774, %v782
      %v791 = vmax.f32 %v775, %v783
      %v792 = vmax.f32 %v776, %v784
      %v793 = vmax.f32 %v777, %v785
      %v794 = vmax.f32 %v778, %v786
      %v795 = vmax.f32 %v779, %v787
      %v796 = vmax.f32 %v780, %v788
      %v797 = vmax.f32 %v781, %v789
      %v798 = vld [vmem:[%s570 + $0x8] sm:$0xff]
      %v799 = vld [vmem:[%s570 + $0x10] sm:$0xff]
      %v800 = vld [vmem:[%s570 + $0x18] sm:$0xff]
      %v801 = vld [vmem:[%s570 + $0x20] sm:$0xff]
      %v802 = vld [vmem:[%s570 + $0x28] sm:$0xff]
      %v803 = vld [vmem:[%s570 + $0x30] sm:$0xff]
      %v804 = vld [vmem:[%s570 + $0x38] sm:$0xff]
      %v805 = vld [vmem:[%s570 + $0x40] sm:$0xff]
      %v806 = vmax.f32 %v790, %v798
      %v807 = vmax.f32 %v791, %v799
      %v808 = vmax.f32 %v792, %v800
      %v809 = vmax.f32 %v793, %v801
      %v810 = vmax.f32 %v794, %v802
      %v811 = vmax.f32 %v795, %v803
      %v812 = vmax.f32 %v796, %v804
      %v813 = vmax.f32 %v797, %v805
      %v814 = vld [vmem:[%s570 + $0x7] sm:$0xff]
      %v815 = vsel %vm702, %v814, 0.0
      %v816 = vsel %vm703, %v758, 0.0
      %v817 = vsel %vm704, %v759, 0.0
      %v818 = vsel %vm705, %v760, 0.0
      %v819 = vsel %vm706, %v761, 0.0
      %v820 = vsel %vm707, %v762, 0.0
      %v821 = vsel %vm708, %v763, 0.0
      %v822 = vsel %vm709, %v764, 0.0
      %v823 = vmax.f32 %v806, %v815
      %v824 = vmax.f32 %v807, %v816
      %v825 = vmax.f32 %v808, %v817
      %v826 = vmax.f32 %v809, %v818
      %v827 = vmax.f32 %v810, %v819
      %v828 = vmax.f32 %v811, %v820
      %v829 = vmax.f32 %v812, %v821
      %v830 = vmax.f32 %v813, %v822
      %v831 = vpack.c.bf16 %v824, %v823
      %v832 = vpack.c.bf16 %v826, %v825
      %v833 = vpack.c.bf16 %v828, %v827
      %v834 = vpack.c.bf16 %v830, %v829
      %v839 = vunpack.c.l.b16 %v831
      %v840 = vunpack.c.h.b16 %v831
      %v841 = vunpack.c.l.b16 %v832
      %v842 = vunpack.c.h.b16 %v832
      %v843 = vunpack.c.l.b16 %v833
      %v844 = vunpack.c.h.b16 %v833
      %v845 = vunpack.c.l.b16 %v834
      %v846 = vunpack.c.h.b16 %v834
      %v847 = vpack.c.b16 %v839, %v839
      %v848 = vpack.c.b16 %v840, %v840
      %v849 = vpack.c.b16 %v841, %v841
      %v850 = vpack.c.b16 %v842, %v842
      %v851 = vpack.c.b16 %v843, %v843
      %v852 = vpack.c.b16 %v844, %v844
      %v853 = vpack.c.b16 %v845, %v845
      %v854 = vpack.c.b16 %v846, %v846
      %vm863 = vcmask 519168
      %864 = vst.msk [vmem:[%s170] sm:$0xf] %vm863, %v847
      %865 = vst.msk [vmem:[%s170 + $0x4] sm:$0xf] %vm863, %v848
      %866 = vst.msk [vmem:[%s170 + $0x8] sm:$0xf] %vm863, %v849
      %867 = vst.msk [vmem:[%s170 + $0xc] sm:$0xf] %vm863, %v850
      %868 = vst.msk [vmem:[%s170 + $0x10] sm:$0xf] %vm863, %v851
      %869 = vst.msk [vmem:[%s170 + $0x14] sm:$0xf] %vm863, %v852
      %870 = vst.msk [vmem:[%s170 + $0x18] sm:$0xf] %vm863, %v853
      %871 = vst.msk [vmem:[%s170 + $0x1c] sm:$0xf] %vm863, %v854
      %p872 = scmp.lt.s32.totalorder %s14, 1
      %s873 = scalar_select %p872, %s14, 1
      %s874 = smul.addr %s873, 8
      %s875 = smul.addr %s874, 4
      %s876 = scalar_lea.vmem %s3, %s875
      // Predicated region
      $region33: #{encoder_forward.3} parent=31 // pred_check
        %p877 = pneg %p100
      $region34: #{encoder_forward.3} parent=31 // pred_check_branch
        %879 = sbr.rel (%p877) target = $region36
      $region35: #{encoder_forward.3} parent=31 // pred_region
        _
      $region36: #{encoder_forward.3} parent=31 // pred_fallthru
        _
    $region32: #{encoder_forward.3} parent=5 // pred_fallthru
      _
    %p880 = scmp.le.s32.totalorder 2, %s9
    // Predicated region
    $region37: #{encoder_forward.3} parent=5 // pred_check
      %p881 = pneg %p880
    $region38: #{encoder_forward.3} parent=5 // pred_check_branch
      %883 = sbr.rel (%p881) target = $region40
    $region39: #{encoder_forward.3} parent=5 // pred_region
      %s884 = ssub.s32 %s9, 2
      // Predicated region
      $region41: #{encoder_forward.3} parent=39 // pred_check
        %p885 = pneg %p106
      $region42: #{encoder_forward.3} parent=39 // pred_check_branch
        %887 = sbr.rel (%p885) target = $region44
      $region43: #{encoder_forward.3} parent=39 // pred_region
        %p888 = scmp.lt.s32.totalorder %s15, 1
        %s889 = scalar_select %p888, %s15, 1
        %s890 = smul.addr %s889, 8
        %s891 = smul.addr %s890, 4
        %s892 = scalar_lea.vmem %s3, %s891
      $region44: #{encoder_forward.3} parent=39 // pred_fallthru
        _
    $region40: #{encoder_forward.3} parent=5 // pred_fallthru
      _
  $region6: #{encoder_forward.3} parent=0 // loop_footer
    %s13 = sadd.s32 1, %s9
  $region7: #{encoder_forward.3} parent=0 // loop_footer_branch
    %8 = sbr.rel target = $region3
  $region8: #{encoder_forward.3} parent=0 // loop_exit
    _

// kernel: encoder_forward.4
$region0: #{encoder_forward.4}
  #allocation0 [shape = 'u32[]', space=smem, size = 0x4, offset = 0x4, fixed_abs, tag = 'smem constant byte address 0x4 - core index']
  #allocation1 [shape = 'u32[144,128]{1,0:T(1,128)}', space=vmem, size = 0x12000, scoped, tag = 'internal scratch']
  #allocation2 [shape = 'f32[96,64]{1,0:T(8,128)}', space=vmem, size = 0xc000, scoped, tag = 'scratch operand']
  #allocation3 [shape = 'bf16[64,576]{1,0:T(16,128)(2,1)}', space=vmem, size = 0x14000, scoped, tag = 'scratch operand']
  %s0 = inlined_call_operand.vmem [shape: bf16[2,64,64], index: 0, kind: input, shape index: {}]
  %s1 = inlined_call_operand.vmem [shape: bf16[576,64], index: 1, kind: input, shape index: {}]
  %s2 = inlined_call_operand.vmem [shape: f32[1,64], index: 2, kind: input, shape index: {}]
  %s3 = inlined_call_operand.vmem [shape: bf16[576,64], index: 3, kind: input, shape index: {}]
  %s4 = inlined_call_operand.vmem [shape: f32[1,64], index: 4, kind: input, shape index: {}]
  %s5 = inlined_call_operand.vmem [shape: bf16[576,64], index: 5, kind: input, shape index: {}]
  %s6 = inlined_call_operand.vmem [shape: f32[1,64], index: 6, kind: input, shape index: {}]
  %s7 = inlined_call_operand.vmem [shape: bf16[576,64], index: 7, kind: input, shape index: {}]
  %s8 = inlined_call_operand.vmem [shape: f32[1,64], index: 8, kind: input, shape index: {}]
  %s9 = inlined_call_operand.vmem [shape: bf16[2,64,64], index: 9, kind: output, shape index: {}]
  %s10 = sld [smem:[#allocation0]]
  $region69: #{encoder_forward.4} parent=0
    _
  %s12 = ssub.s32 1, %s10
  %s13 = scalar_select 0, %s12, %s10
  loop: start=0, step=1, limit=4
  $region2: #{encoder_forward.4} parent=0 // loop_pre_header
    _
  $region3: #{encoder_forward.4} parent=0 // loop_header
    %s15 = sphi 0, %s19
    %p16 = scmp.ge.s32.totalorder %s15, 4
    %s25 = sphi 0, %s27
    %s28 = sphi 0, %s25
    %s29 = sphi 0, %s28
    %s45 = sphi 0, %s29
    %s49 = sphi 0, %s49
    %s51 = sphi 0, %s49
    %s52 = sphi 0, %s51
    %s66 = sphi 0, %s52
    %s70 = sphi 0, %s70
    %s72 = sphi 0, %s70
    %s73 = sphi 0, %s72
    %s87 = sphi 0, %s73
    %s91 = sphi 0, %s91
    %s93 = sphi 0, %s91
    %s94 = sphi 0, %s93
    %s108 = sphi 0, %s94
    %s112 = sphi 0, %s112
    %s114 = sphi 0, %s112
    %s115 = sphi 0, %s114
    %s129 = sphi 0, %s115
    %s133 = sphi 0, %s133
    %s135 = sphi 0, %s133
    %s136 = sphi 0, %s135
    %s150 = sphi 0, %s136
    %s154 = sphi 0, %s154
    %s156 = sphi 0, %s154
    %s157 = sphi 0, %s156
    %s171 = sphi 0, %s157
    %s175 = sphi 0, %s175
    %s177 = sphi 0, %s175
    %s178 = sphi 0, %s177
    %s192 = sphi 0, %s178
    %s196 = sphi 0, %s196
    %s198 = sphi 0, %s196
    %s199 = sphi 0, %s198
    %s213 = sphi 0, %s199
    %s219 = sphi 0, %s221
    %s222 = sphi 0, %s219
    %s223 = sphi 0, %s222
    %s239 = sphi 0, %s223
  $region4: #{encoder_forward.4} parent=0 // loop_header_branch
    %18 = sbr.rel (%p16) target = $region8
  $region5: #{encoder_forward.4} parent=0 // loop_body
    %s20 = ssub.s32 %s15, 1
    %s21 = ssub.s32 %s15, 2
    %s22 = sadd.s32 %s15, 1
    %s23 = ssub.s32 %s15, %s22
    %p24 = scmp.eq.s32.totalorder %s23, 0
    %s26 = sadd.s32 %s25, 1
    %s27 = scalar_select %p24, %s25, %s26
    %p30 = pneg %p24
    %p31 = scmp.eq.s32.totalorder %s15, 1
    %p32 = por %p30, %p31
    %p33 = scmp.ne.s32.totalorder %s25, %s28
    %p34 = scmp.eq.s32.totalorder %s15, 0
    %p35 = por %p33, %p34
    %p36 = scmp.ne.s32.totalorder %s25, %s28
    %p37 = scmp.eq.s32.totalorder %s20, 1
    %p38 = por %p36, %p37
    %p39 = scmp.ne.s32.totalorder %s28, %s29
    %p40 = scmp.eq.s32.totalorder %s20, 0
    %p41 = por %p39, %p40
    %p42 = scmp.ne.s32.totalorder %s28, %s29
    %p43 = scmp.eq.s32.totalorder %s21, 1
    %p44 = por %p42, %p43
    %p46 = scmp.ne.s32.totalorder %s29, %s45
    %p47 = scmp.eq.s32.totalorder %s21, 0
    %p48 = por %p46, %p47
    %s50 = sadd.s32 %s49, 1
    %p53 = scmp.eq.s32.totalorder %s15, 1
    %p54 = scmp.ne.s32.totalorder %s49, %s51
    %p55 = scmp.eq.s32.totalorder %s15, 0
    %p56 = por %p54, %p55
    %p57 = scmp.ne.s32.totalorder %s49, %s51
    %p58 = scmp.eq.s32.totalorder %s20, 1
    %p59 = por %p57, %p58
    %p60 = scmp.ne.s32.totalorder %s51, %s52
    %p61 = scmp.eq.s32.totalorder %s20, 0
    %p62 = por %p60, %p61
    %p63 = scmp.ne.s32.totalorder %s51, %s52
    %p64 = scmp.eq.s32.totalorder %s21, 1
    %p65 = por %p63, %p64
    %p67 = scmp.ne.s32.totalorder %s52, %s66
    %p68 = scmp.eq.s32.totalorder %s21, 0
    %p69 = por %p67, %p68
    %s71 = sadd.s32 %s70, 1
    %p74 = scmp.eq.s32.totalorder %s15, 1
    %p75 = scmp.ne.s32.totalorder %s70, %s72
    %p76 = scmp.eq.s32.totalorder %s15, 0
    %p77 = por %p75, %p76
    %p78 = scmp.ne.s32.totalorder %s70, %s72
    %p79 = scmp.eq.s32.totalorder %s20, 1
    %p80 = por %p78, %p79
    %p81 = scmp.ne.s32.totalorder %s72, %s73
    %p82 = scmp.eq.s32.totalorder %s20, 0
    %p83 = por %p81, %p82
    %p84 = scmp.ne.s32.totalorder %s72, %s73
    %p85 = scmp.eq.s32.totalorder %s21, 1
    %p86 = por %p84, %p85
    %p88 = scmp.ne.s32.totalorder %s73, %s87
    %p89 = scmp.eq.s32.totalorder %s21, 0
    %p90 = por %p88, %p89
    %s92 = sadd.s32 %s91, 1
    %p95 = scmp.eq.s32.totalorder %s15, 1
    %p96 = scmp.ne.s32.totalorder %s91, %s93
    %p97 = scmp.eq.s32.totalorder %s15, 0
    %p98 = por %p96, %p97
    %p99 = scmp.ne.s32.totalorder %s91, %s93
    %p100 = scmp.eq.s32.totalorder %s20, 1
    %p101 = por %p99, %p100
    %p102 = scmp.ne.s32.totalorder %s93, %s94
    %p103 = scmp.eq.s32.totalorder %s20, 0
    %p104 = por %p102, %p103
    %p105 = scmp.ne.s32.totalorder %s93, %s94
    %p106 = scmp.eq.s32.totalorder %s21, 1
    %p107 = por %p105, %p106
    %p109 = scmp.ne.s32.totalorder %s94, %s108
    %p110 = scmp.eq.s32.totalorder %s21, 0
    %p111 = por %p109, %p110
    %s113 = sadd.s32 %s112, 1
    %p116 = scmp.eq.s32.totalorder %s15, 1
    %p117 = scmp.ne.s32.totalorder %s112, %s114
    %p118 = scmp.eq.s32.totalorder %s15, 0
    %p119 = por %p117, %p118
    %p120 = scmp.ne.s32.totalorder %s112, %s114
    %p121 = scmp.eq.s32.totalorder %s20, 1
    %p122 = por %p120, %p121
    %p123 = scmp.ne.s32.totalorder %s114, %s115
    %p124 = scmp.eq.s32.totalorder %s20, 0
    %p125 = por %p123, %p124
    %p126 = scmp.ne.s32.totalorder %s114, %s115
    %p127 = scmp.eq.s32.totalorder %s21, 1
    %p128 = por %p126, %p127
    %p130 = scmp.ne.s32.totalorder %s115, %s129
    %p131 = scmp.eq.s32.totalorder %s21, 0
    %p132 = por %p130, %p131
    %s134 = sadd.s32 %s133, 1
    %p137 = scmp.eq.s32.totalorder %s15, 1
    %p138 = scmp.ne.s32.totalorder %s133, %s135
    %p139 = scmp.eq.s32.totalorder %s15, 0
    %p140 = por %p138, %p139
    %p141 = scmp.ne.s32.totalorder %s133, %s135
    %p142 = scmp.eq.s32.totalorder %s20, 1
    %p143 = por %p141, %p142
    %p144 = scmp.ne.s32.totalorder %s135, %s136
    %p145 = scmp.eq.s32.totalorder %s20, 0
    %p146 = por %p144, %p145
    %p147 = scmp.ne.s32.totalorder %s135, %s136
    %p148 = scmp.eq.s32.totalorder %s21, 1
    %p149 = por %p147, %p148
    %p151 = scmp.ne.s32.totalorder %s136, %s150
    %p152 = scmp.eq.s32.totalorder %s21, 0
    %p153 = por %p151, %p152
    %s155 = sadd.s32 %s154, 1
    %p158 = scmp.eq.s32.totalorder %s15, 1
    %p159 = scmp.ne.s32.totalorder %s154, %s156
    %p160 = scmp.eq.s32.totalorder %s15, 0
    %p161 = por %p159, %p160
    %p162 = scmp.ne.s32.totalorder %s154, %s156
    %p163 = scmp.eq.s32.totalorder %s20, 1
    %p164 = por %p162, %p163
    %p165 = scmp.ne.s32.totalorder %s156, %s157
    %p166 = scmp.eq.s32.totalorder %s20, 0
    %p167 = por %p165, %p166
    %p168 = scmp.ne.s32.totalorder %s156, %s157
    %p169 = scmp.eq.s32.totalorder %s21, 1
    %p170 = por %p168, %p169
    %p172 = scmp.ne.s32.totalorder %s157, %s171
    %p173 = scmp.eq.s32.totalorder %s21, 0
    %p174 = por %p172, %p173
    %s176 = sadd.s32 %s175, 1
    %p179 = scmp.eq.s32.totalorder %s15, 1
    %p180 = scmp.ne.s32.totalorder %s175, %s177
    %p181 = scmp.eq.s32.totalorder %s15, 0
    %p182 = por %p180, %p181
    %p183 = scmp.ne.s32.totalorder %s175, %s177
    %p184 = scmp.eq.s32.totalorder %s20, 1
    %p185 = por %p183, %p184
    %p186 = scmp.ne.s32.totalorder %s177, %s178
    %p187 = scmp.eq.s32.totalorder %s20, 0
    %p188 = por %p186, %p187
    %p189 = scmp.ne.s32.totalorder %s177, %s178
    %p190 = scmp.eq.s32.totalorder %s21, 1
    %p191 = por %p189, %p190
    %p193 = scmp.ne.s32.totalorder %s178, %s192
    %p194 = scmp.eq.s32.totalorder %s21, 0
    %p195 = por %p193, %p194
    %s197 = sadd.s32 %s196, 1
    %p200 = scmp.eq.s32.totalorder %s15, 1
    %p201 = scmp.ne.s32.totalorder %s196, %s198
    %p202 = scmp.eq.s32.totalorder %s15, 0
    %p203 = por %p201, %p202
    %p204 = scmp.ne.s32.totalorder %s196, %s198
    %p205 = scmp.eq.s32.totalorder %s20, 1
    %p206 = por %p204, %p205
    %p207 = scmp.ne.s32.totalorder %s198, %s199
    %p208 = scmp.eq.s32.totalorder %s20, 0
    %p209 = por %p207, %p208
    %p210 = scmp.ne.s32.totalorder %s198, %s199
    %p211 = scmp.eq.s32.totalorder %s21, 1
    %p212 = por %p210, %p211
    %p214 = scmp.ne.s32.totalorder %s199, %s213
    %p215 = scmp.eq.s32.totalorder %s21, 0
    %p216 = por %p214, %p215
    %s217 = ssub.s32 %s15, %s22
    %p218 = scmp.eq.s32.totalorder %s217, 0
    %s220 = sadd.s32 %s219, 1
    %s221 = scalar_select %p218, %s219, %s220
    %p224 = pneg %p218
    %p225 = scmp.eq.s32.totalorder %s15, 1
    %p226 = por %p224, %p225
    %p227 = scmp.ne.s32.totalorder %s219, %s222
    %p228 = scmp.eq.s32.totalorder %s15, 0
    %p229 = por %p227, %p228
    %p230 = scmp.ne.s32.totalorder %s219, %s222
    %p231 = scmp.eq.s32.totalorder %s20, 1
    %p232 = por %p230, %p231
    %p233 = scmp.ne.s32.totalorder %s222, %s223
    %p234 = scmp.eq.s32.totalorder %s20, 0
    %p235 = por %p233, %p234
    %p236 = scmp.ne.s32.totalorder %s222, %s223
    %p237 = scmp.eq.s32.totalorder %s21, 1
    %p238 = por %p236, %p237
    %p240 = scmp.ne.s32.totalorder %s223, %s239
    %p241 = scmp.eq.s32.totalorder %s21, 0
    %p242 = por %p240, %p241
    %p243 = scmp.le.s32.totalorder 1, %s15
    %p244 = scmp.lt.s32.totalorder %s15, 3
    %p245 = pnand %p243, %p244
    %p246 = pneg %p245
    // Predicated region
    $region9: #{encoder_forward.4} parent=5 // pred_check
      _
    $region10: #{encoder_forward.4} parent=5 // pred_check_branch
      %248 = sbr.rel (%p245) target = $region12
    $region11: #{encoder_forward.4} parent=5 // pred_region
      %s249 = ssub.s32 %s15, 1
      // Predicated region
      $region13: #{encoder_forward.4} parent=11 // pred_check
        %p250 = pneg %p62
      $region14: #{encoder_forward.4} parent=11 // pred_check_branch
        %252 = sbr.rel (%p250) target = $region16
      $region15: #{encoder_forward.4} parent=11 // pred_region
        _
      $region16: #{encoder_forward.4} parent=11 // pred_fallthru
        _
      // Predicated region
      $region17: #{encoder_forward.4} parent=11 // pred_check
        %p253 = pneg %p83
      $region18: #{encoder_forward.4} parent=11 // pred_check_branch
        %255 = sbr.rel (%p253) target = $region20
      $region19: #{encoder_forward.4} parent=11 // pred_region
        _
      $region20: #{encoder_forward.4} parent=11 // pred_fallthru
        _
      // Predicated region
      $region21: #{encoder_forward.4} parent=11 // pred_check
        %p256 = pneg %p104
      $region22: #{encoder_forward.4} parent=11 // pred_check_branch
        %258 = sbr.rel (%p256) target = $region24
      $region23: #{encoder_forward.4} parent=11 // pred_region
        _
      $region24: #{encoder_forward.4} parent=11 // pred_fallthru
        _
      // Predicated region
      $region25: #{encoder_forward.4} parent=11 // pred_check
        %p259 = pneg %p125
      $region26: #{encoder_forward.4} parent=11 // pred_check_branch
        %261 = sbr.rel (%p259) target = $region28
      $region27: #{encoder_forward.4} parent=11 // pred_region
        _
      $region28: #{encoder_forward.4} parent=11 // pred_fallthru
        _
      // Predicated region
      $region29: #{encoder_forward.4} parent=11 // pred_check
        %p262 = pneg %p146
      $region30: #{encoder_forward.4} parent=11 // pred_check_branch
        %264 = sbr.rel (%p262) target = $region32
      $region31: #{encoder_forward.4} parent=11 // pred_region
        _
      $region32: #{encoder_forward.4} parent=11 // pred_fallthru
        _
      // Predicated region
      $region33: #{encoder_forward.4} parent=11 // pred_check
        %p265 = pneg %p167
      $region34: #{encoder_forward.4} parent=11 // pred_check_branch
        %267 = sbr.rel (%p265) target = $region36
      $region35: #{encoder_forward.4} parent=11 // pred_region
        _
      $region36: #{encoder_forward.4} parent=11 // pred_fallthru
        _
      // Predicated region
      $region37: #{encoder_forward.4} parent=11 // pred_check
        %p268 = pneg %p188
      $region38: #{encoder_forward.4} parent=11 // pred_check_branch
        %270 = sbr.rel (%p268) target = $region40
      $region39: #{encoder_forward.4} parent=11 // pred_region
        _
      $region40: #{encoder_forward.4} parent=11 // pred_fallthru
        _
      // Predicated region
      $region41: #{encoder_forward.4} parent=11 // pred_check
        %p271 = pneg %p209
      $region42: #{encoder_forward.4} parent=11 // pred_check_branch
        %273 = sbr.rel (%p271) target = $region44
      $region43: #{encoder_forward.4} parent=11 // pred_region
        _
      $region44: #{encoder_forward.4} parent=11 // pred_fallthru
        _
    $region12: #{encoder_forward.4} parent=5 // pred_fallthru
      _
    %p274 = scmp.lt.s32.totalorder %s15, 2
    // Predicated region
    $region45: #{encoder_forward.4} parent=5 // pred_check
      %p275 = pneg %p274
    $region46: #{encoder_forward.4} parent=5 // pred_check_branch
      %277 = sbr.rel (%p275) target = $region48
    $region47: #{encoder_forward.4} parent=5 // pred_region
      // Predicated region
      $region49: #{encoder_forward.4} parent=47 // pred_check
        %p278 = pneg %p35
      $region50: #{encoder_forward.4} parent=47 // pred_check_branch
        %280 = sbr.rel (%p278) target = $region52
      $region51: #{encoder_forward.4} parent=47 // pred_region
        %p281 = scmp.lt.s32.totalorder %s15, 1
        %s282 = scalar_select %p281, %s15, 1
        %s283 = smul.addr %s282, 8
        %s284 = smul.addr %s283, 4
        %s285 = scalar_lea.vmem %s0, %s284
      $region52: #{encoder_forward.4} parent=47 // pred_fallthru
        _
    $region48: #{encoder_forward.4} parent=5 // pred_fallthru
      _
    %p286 = scmp.le.s32.totalorder 1, %s15
    %p287 = scmp.lt.s32.totalorder %s15, 3
    %p288 = pnand %p286, %p287
    %p289 = pneg %p288
    // Predicated region
    $region53: #{encoder_forward.4} parent=5 // pred_check
      _
    $region54: #{encoder_forward.4} parent=5 // pred_check_branch
      %291 = sbr.rel (%p288) target = $region56
    $region55: #{encoder_forward.4} parent=5 // pred_region
      %s292 = ssub.s32 %s15, 1
      %p293 = scmp.lt.s32.totalorder %s20, 1
      %s294 = scalar_select %p293, %s20, 1
      %s295 = smul.addr %s294, 8
      %s296 = smul.addr %s295, 4
      %s297 = scalar_lea.vmem %s0, %s296
      %p298 = pneg %p41
      %p299 = pneg %p38
      %p300 = pneg %p62
      %p301 = pneg %p59
      %p302 = pneg %p83
      %p303 = pneg %p80
      %p304 = pneg %p104
      %p305 = pneg %p101
      %p306 = pneg %p125
      %p307 = pneg %p122
      %p308 = pneg %p146
      %p309 = pneg %p143
      %p310 = pneg %p167
      %p311 = pneg %p164
      %p312 = pneg %p188
      %p313 = pneg %p185
      %p314 = pneg %p209
      %p315 = pneg %p206
      %p316 = pneg %p235
      %p317 = pneg %p232
      %p318 = scmp.lt.s32.totalorder %s20, 1
      %s319 = scalar_select %p318, %s20, 1
      %s320 = smul.addr %s319, 8
      %s321 = smul.addr %s320, 4
      %s322 = scalar_lea.vmem %s9, %s321
      %p323 = scmp.lt.s32.totalorder %s20, 1
      %s324 = scalar_select %p323, %s20, 1
      %s325 = smul.addr %s324, 8
      %s326 = smul.addr %s325, 4
      %s327 = scalar_lea.vmem %s0, %s326
      %p328 = scmp.lt.s32.totalorder %s20, 1
      %s329 = scalar_select %p328, %s20, 1
      %s330 = smul.addr %s329, 8
      %s331 = smul.addr %s330, 4
      %s332 = scalar_lea.vmem %s9, %s331
      %v334 = vlaneseq
      %v335 = vshrl.u32 %v334, 7
      %v336 = vadd.s32 %v335, 8
      %v337 = vadd.s32 %v335, 16
      %v338 = vadd.s32 %v335, 24
      %v339 = vadd.s32 %v335, 32
      %v340 = vadd.s32 %v335, 40
      %v341 = vadd.s32 %v335, 48
      %v342 = vadd.s32 %v335, 56
      %vm343 = vcmp.lt.s32.totalorder %v335, 0
      %v344 = vsub.s32 0, %v335
      %v345 = vsel %vm343, %v344, %v335
      %v346 = vshrl.u32 %v345, 3
      %v347 = vand.u32 %v345, 7
      %v348 = vsub.s32 0, %v347
      %v349 = vsel %vm343, %v348, %v347
      %vm350 = vcmp.lt.s32.totalorder %v336, 0
      %v351 = vsub.s32 0, %v336
      %v352 = vsel %vm350, %v351, %v336
      %v353 = vshrl.u32 %v352, 3
      %v354 = vand.u32 %v352, 7
      %v355 = vsub.s32 0, %v354
      %v356 = vsel %vm350, %v355, %v354
      %vm357 = vcmp.lt.s32.totalorder %v337, 0
      %v358 = vsub.s32 0, %v337
      %v359 = vsel %vm357, %v358, %v337
      %v360 = vshrl.u32 %v359, 3
      %v361 = vand.u32 %v359, 7
      %v362 = vsub.s32 0, %v361
      %v363 = vsel %vm357, %v362, %v361
      %vm364 = vcmp.lt.s32.totalorder %v338, 0
      %v365 = vsub.s32 0, %v338
      %v366 = vsel %vm364, %v365, %v338
      %v367 = vshrl.u32 %v366, 3
      %v368 = vand.u32 %v366, 7
      %v369 = vsub.s32 0, %v368
      %v370 = vsel %vm364, %v369, %v368
      %vm371 = vcmp.lt.s32.totalorder %v339, 0
      %v372 = vsub.s32 0, %v339
      %v373 = vsel %vm371, %v372, %v339
      %v374 = vshrl.u32 %v373, 3
      %v375 = vand.u32 %v373, 7
      %v376 = vsub.s32 0, %v375
      %v377 = vsel %vm371, %v376, %v375
      %vm378 = vcmp.lt.s32.totalorder %v340, 0
      %v379 = vsub.s32 0, %v340
      %v380 = vsel %vm378, %v379, %v340
      %v381 = vshrl.u32 %v380, 3
      %v382 = vand.u32 %v380, 7
      %v383 = vsub.s32 0, %v382
      %v384 = vsel %vm378, %v383, %v382
      %vm385 = vcmp.lt.s32.totalorder %v341, 0
      %v386 = vsub.s32 0, %v341
      %v387 = vsel %vm385, %v386, %v341
      %v388 = vshrl.u32 %v387, 3
      %v389 = vand.u32 %v387, 7
      %v390 = vsub.s32 0, %v389
      %v391 = vsel %vm385, %v390, %v389
      %vm392 = vcmp.lt.s32.totalorder %v342, 0
      %v393 = vsub.s32 0, %v342
      %v394 = vsel %vm392, %v393, %v342
      %v395 = vshrl.u32 %v394, 3
      %v396 = vand.u32 %v394, 7
      %v397 = vsub.s32 0, %v396
      %v398 = vsel %vm392, %v397, %v396
      %vm399 = vcmp.ne.s32.totalorder %v349, 0
      %vm400 = vcmp.ne.s32.totalorder %v356, 0
      %vm401 = vcmp.ne.s32.totalorder %v363, 0
      %vm402 = vcmp.ne.s32.totalorder %v370, 0
      %vm403 = vcmp.ne.s32.totalorder %v377, 0
      %vm404 = vcmp.ne.s32.totalorder %v384, 0
      %vm405 = vcmp.ne.s32.totalorder %v391, 0
      %vm406 = vcmp.ne.s32.totalorder %v398, 0
      %vm407 = vcmp.lt.s32.totalorder %v349, 0
      %vm408 = vcmp.lt.s32.totalorder %v356, 0
      %vm409 = vcmp.lt.s32.totalorder %v363, 0
      %vm410 = vcmp.lt.s32.totalorder %v370, 0
      %vm411 = vcmp.lt.s32.totalorder %v377, 0
      %vm412 = vcmp.lt.s32.totalorder %v384, 0
      %vm413 = vcmp.lt.s32.totalorder %v391, 0
      %vm414 = vcmp.lt.s32.totalorder %v398, 0
      %vm415 = vmand %vm407, %vm399
      %vm416 = vmand %vm408, %vm400
      %vm417 = vmand %vm409, %vm401
      %vm418 = vmand %vm410, %vm402
      %vm419 = vmand %vm411, %vm403
      %vm420 = vmand %vm412, %vm404
      %vm421 = vmand %vm413, %vm405
      %vm422 = vmand %vm414, %vm406
      %v423 = vadd.s32 %v349, 8
      %v424 = vadd.s32 %v356, 8
      %v425 = vadd.s32 %v363, 8
      %v426 = vadd.s32 %v370, 8
      %v427 = vadd.s32 %v377, 8
      %v428 = vadd.s32 %v384, 8
      %v429 = vadd.s32 %v391, 8
      %v430 = vadd.s32 %v398, 8
      %v431 = vsel %vm415, %v423, %v349
      %v432 = vsel %vm416, %v424, %v356
      %v433 = vsel %vm417, %v425, %v363
      %v434 = vsel %vm418, %v426, %v370
      %v435 = vsel %vm419, %v427, %v377
      %v436 = vsel %vm420, %v428, %v384
      %v437 = vsel %vm421, %v429, %v391
      %v438 = vsel %vm422, %v430, %v398
      %vm439 = vcmp.ne.s32.totalorder %v431, 0
      %vm440 = vcmp.ne.s32.totalorder %v432, 0
      %vm441 = vcmp.ne.s32.totalorder %v433, 0
      %vm442 = vcmp.ne.s32.totalorder %v434, 0
      %vm443 = vcmp.ne.s32.totalorder %v435, 0
      %vm444 = vcmp.ne.s32.totalorder %v436, 0
      %vm445 = vcmp.ne.s32.totalorder %v437, 0
      %vm446 = vcmp.ne.s32.totalorder %v438, 0
      %vm447 = vcmp.ne.s32.totalorder %v431, 7
      %vm448 = vcmp.ne.s32.totalorder %v432, 7
      %vm449 = vcmp.ne.s32.totalorder %v433, 7
      %vm450 = vcmp.ne.s32.totalorder %v434, 7
      %vm451 = vcmp.ne.s32.totalorder %v435, 7
      %vm452 = vcmp.ne.s32.totalorder %v436, 7
      %vm453 = vcmp.ne.s32.totalorder %v437, 7
      %vm454 = vcmp.ne.s32.totalorder %v438, 7
      %vm455 = vcmask 523264
      %456 = vst.msk [vmem:[#allocation2] sm:$0xff] %vm455, 0.0
      %457 = vst.msk [vmem:[#allocation2 + $0x8] sm:$0xff] %vm455, 0.0
      %458 = vst.msk [vmem:[#allocation2 + $0x50] sm:$0xff] %vm455, 0.0
      %459 = vst.msk [vmem:[#allocation2 + $0x58] sm:$0xff] %vm455, 0.0
      %v460 = vld [vmem:[%s327] sm:$0xf]
      %v461 = vld [vmem:[%s327 + $0x4] sm:$0xf]
      %v462 = vld [vmem:[%s327 + $0x8] sm:$0xf]
      %v463 = vld [vmem:[%s327 + $0xc] sm:$0xf]
      %v464 = vld [vmem:[%s327 + $0x10] sm:$0xf]
      %v465 = vld [vmem:[%s327 + $0x14] sm:$0xf]
      %v466 = vld [vmem:[%s327 + $0x18] sm:$0xf]
      %v467 = vld [vmem:[%s327 + $0x1c] sm:$0xf]
      %v468 = vunpack.c.l.bf16 %v460
      %v469 = vunpack.c.l.bf16 %v461
      %v470 = vunpack.c.l.bf16 %v462
      %v471 = vunpack.c.l.bf16 %v463
      %v472 = vunpack.c.l.bf16 %v464
      %v473 = vunpack.c.l.bf16 %v465
      %v474 = vunpack.c.l.bf16 %v466
      %v475 = vunpack.c.l.bf16 %v467
      %476 = vst.msk [vmem:[#allocation2 + $0x10] sm:$0xff] %vm455, %v468
      %477 = vst.msk [vmem:[#allocation2 + $0x18] sm:$0xff] %vm455, %v469
      %478 = vst.msk [vmem:[#allocation2 + $0x20] sm:$0xff] %vm455, %v470
      %479 = vst.msk [vmem:[#allocation2 + $0x28] sm:$0xff] %vm455, %v471
      %480 = vst.msk [vmem:[#allocation2 + $0x30] sm:$0xff] %vm455, %v472
      %481 = vst.msk [vmem:[#allocation2 + $0x38] sm:$0xff] %vm455, %v473
      %482 = vst.msk [vmem:[#allocation2 + $0x40] sm:$0xff] %vm455, %v474
      %483 = vst.msk [vmem:[#allocation2 + $0x48] sm:$0xff] %vm455, %v475
      %v484 = vld [vmem:[#allocation2 + $0x7] sm:$0xff]
      %v485 = vld [vmem:[#allocation2 + $0xf] sm:$0xff]
      %v486 = vld [vmem:[#allocation2 + $0x17] sm:$0xff]
      %v487 = vld [vmem:[#allocation2 + $0x1f] sm:$0xff]
      %v488 = vld [vmem:[#allocation2 + $0x27] sm:$0xff]
      %v489 = vld [vmem:[#allocation2 + $0x2f] sm:$0xff]
      %v490 = vld [vmem:[#allocation2 + $0x37] sm:$0xff]
      %v491 = vld [vmem:[#allocation2 + $0x3f] sm:$0xff]
      %v492 = vsel %vm439, %v484, 0.0
      %v493 = vsel %vm440, %v485, 0.0
      %v494 = vsel %vm441, %v486, 0.0
      %v495 = vsel %vm442, %v487, 0.0
      %v496 = vsel %vm443, %v488, 0.0
      %v497 = vsel %vm444, %v489, 0.0
      %v498 = vsel %vm445, %v490, 0.0
      %v499 = vsel %vm446, %v491, 0.0
      %v500 = vpack.c.bf16 %v493, %v492
      %v501 = vpack.c.bf16 %v495, %v494
      %v502 = vpack.c.bf16 %v497, %v496
      %v503 = vpack.c.bf16 %v499, %v498
      %504 = vst.msk [vmem:[#allocation3] sm:$0xff] %vm455, %v500
      %505 = vst.msk [vmem:[#allocation3 + $0x28] sm:$0xff] %vm455, %v501
      %506 = vst.msk [vmem:[#allocation3 + $0x50] sm:$0xff] %vm455, %v502
      %507 = vst.msk [vmem:[#allocation3 + $0x78] sm:$0xff] %vm455, %v503
      %v508 = vld [vmem:[#allocation2 + $0x8] sm:$0xff]
      %v509 = vld [vmem:[#allocation2 + $0x10] sm:$0xff]
      %v510 = vld [vmem:[#allocation2 + $0x18] sm:$0xff]
      %v511 = vld [vmem:[#allocation2 + $0x20] sm:$0xff]
      %v512 = vld [vmem:[#allocation2 + $0x28] sm:$0xff]
      %v513 = vld [vmem:[#allocation2 + $0x30] sm:$0xff]
      %v514 = vld [vmem:[#allocation2 + $0x38] sm:$0xff]
      %v515 = vld [vmem:[#allocation2 + $0x40] sm:$0xff]
      %v516 = vpack.c.bf16 %v509, %v508
      %v517 = vpack.c.bf16 %v511, %v510
      %v518 = vpack.c.bf16 %v513, %v512
      %v519 = vpack.c.bf16 %v515, %v514
      %524 = vrot.lane.b32.xlu0 %v516, 64
      %v525 = vpop.permute.xlu0 %524
      %526 = vrot.lane.b32.xlu0 %v517, 64
      %v527 = vpop.permute.xlu0 %526
      %528 = vrot.lane.b32.xlu0 %v518, 64
      %v529 = vpop.permute.xlu0 %528
      %530 = vrot.lane.b32.xlu0 %v519, 64
      %v531 = vpop.permute.xlu0 %530
      %vm536 = vcmask 1048064
      %537 = vst.msk [vmem:[#allocation3] sm:$0xff] %vm536, %v525
      %538 = vst.msk [vmem:[#allocation3 + $0x28] sm:$0xff] %vm536, %v527
      %539 = vst.msk [vmem:[#allocation3 + $0x50] sm:$0xff] %vm536, %v529
      %540 = vst.msk [vmem:[#allocation3 + $0x78] sm:$0xff] %vm536, %v531
      %v541 = vld [vmem:[#allocation2 + $0x9] sm:$0xff]
      %v542 = vld [vmem:[#allocation2 + $0x11] sm:$0xff]
      %v543 = vld [vmem:[#allocation2 + $0x19] sm:$0xff]
      %v544 = vld [vmem:[#allocation2 + $0x21] sm:$0xff]
      %v545 = vld [vmem:[#allocation2 + $0x29] sm:$0xff]
      %v546 = vld [vmem:[#allocation2 + $0x31] sm:$0xff]
      %v547 = vld [vmem:[#allocation2 + $0x39] sm:$0xff]
      %v548 = vld [vmem:[#allocation2 + $0x41] sm:$0xff]
      %v549 = vsel %vm447, %v541, 0.0
      %v550 = vsel %vm448, %v542, 0.0
      %v551 = vsel %vm449, %v543, 0.0
      %v552 = vsel %vm450, %v544, 0.0
      %v553 = vsel %vm451, %v545, 0.0
      %v554 = vsel %vm452, %v546, 0.0
      %v555 = vsel %vm453, %v547, 0.0
      %v556 = vsel %vm454, %v548, 0.0
      %v557 = vpack.c.bf16 %v550, %v549
      %v558 = vpack.c.bf16 %v552, %v551
      %v559 = vpack.c.bf16 %v554, %v553
      %v560 = vpack.c.bf16 %v556, %v555
      %561 = vst.msk [vmem:[#allocation3 + $0x8] sm:$0xff] %vm455, %v557
      %562 = vst.msk [vmem:[#allocation3 + $0x30] sm:$0xff] %vm455, %v558
      %563 = vst.msk [vmem:[#allocation3 + $0x58] sm:$0xff] %vm455, %v559
      %564 = vst.msk [vmem:[#allocation3 + $0x80] sm:$0xff] %vm455, %v560
      %v565 = vld [vmem:[#allocation2 + $0xf] sm:$0xff]
      %v566 = vld [vmem:[#allocation2 + $0x17] sm:$0xff]
      %v567 = vld [vmem:[#allocation2 + $0x1f] sm:$0xff]
      %v568 = vld [vmem:[#allocation2 + $0x27] sm:$0xff]
      %v569 = vld [vmem:[#allocation2 + $0x2f] sm:$0xff]
      %v570 = vld [vmem:[#allocation2 + $0x37] sm:$0xff]
      %v571 = vld [vmem:[#allocation2 + $0x3f] sm:$0xff]
      %v572 = vld [vmem:[#allocation2 + $0x47] sm:$0xff]
      %v573 = vsel %vm439, %v565, 0.0
      %v574 = vsel %vm440, %v566, 0.0
      %v575 = vsel %vm441, %v567, 0.0
      %v576 = vsel %vm442, %v568, 0.0
      %v577 = vsel %vm443, %v569, 0.0
      %v578 = vsel %vm444, %v570, 0.0
      %v579 = vsel %vm445, %v571, 0.0
      %v580 = vsel %vm446, %v572, 0.0
      %v581 = vpack.c.bf16 %v574, %v573
      %v582 = vpack.c.bf16 %v576, %v575
      %v583 = vpack.c.bf16 %v578, %v577
      %v584 = vpack.c.bf16 %v580, %v579
      %589 = vrot.lane.b32.xlu0 %v581, 64
      %v590 = vpop.permute.xlu0 %589
      %591 = vrot.lane.b32.xlu0 %v582, 64
      %v592 = vpop.permute.xlu0 %591
      %593 = vrot.lane.b32.xlu0 %v583, 64
      %v594 = vpop.permute.xlu0 %593
      %595 = vrot.lane.b32.xlu0 %v584, 64
      %v596 = vpop.permute.xlu0 %595
      %601 = vst.msk [vmem:[#allocation3 + $0x8] sm:$0xff] %vm536, %v590
      %602 = vst.msk [vmem:[#allocation3 + $0x30] sm:$0xff] %vm536, %v592
      %603 = vst.msk [vmem:[#allocation3 + $0x58] sm:$0xff] %vm536, %v594
      %604 = vst.msk [vmem:[#allocation3 + $0x80] sm:$0xff] %vm536, %v596
      %v605 = vld [vmem:[#allocation2 + $0x10] sm:$0xff]
      %v606 = vld [vmem:[#allocation2 + $0x18] sm:$0xff]
      %v607 = vld [vmem:[#allocation2 + $0x20] sm:$0xff]
      %v608 = vld [vmem:[#allocation2 + $0x28] sm:$0xff]
      %v609 = vld [vmem:[#allocation2 + $0x30] sm:$0xff]
      %v610 = vld [vmem:[#allocation2 + $0x38] sm:$0xff]
      %v611 = vld [vmem:[#allocation2 + $0x40] sm:$0xff]
      %v612 = vld [vmem:[#allocation2 + $0x48] sm:$0xff]
      %v613 = vpack.c.bf16 %v606, %v605
      %v614 = vpack.c.bf16 %v608, %v607
      %v615 = vpack.c.bf16 %v610, %v609
      %v616 = vpack.c.bf16 %v612, %v611
      %617 = vst.msk [vmem:[#allocation3 + $0x10] sm:$0xff] %vm455, %v613
      %618 = vst.msk [vmem:[#allocation3 + $0x38] sm:$0xff] %vm455, %v614
      %619 = vst.msk [vmem:[#allocation3 + $0x60] sm:$0xff] %vm455, %v615
      %620 = vst.msk [vmem:[#allocation3 + $0x88] sm:$0xff] %vm455, %v616
      %v621 = vld [vmem:[#allocation2 + $0x11] sm:$0xff]
      %v622 = vld [vmem:[#allocation2 + $0x19] sm:$0xff]
      %v623 = vld [vmem:[#allocation2 + $0x21] sm:$0xff]
      %v624 = vld [vmem:[#allocation2 + $0x29] sm:$0xff]
      %v625 = vld [vmem:[#allocation2 + $0x31] sm:$0xff]
      %v626 = vld [vmem:[#allocation2 + $0x39] sm:$0xff]
      %v627 = vld [vmem:[#allocation2 + $0x41] sm:$0xff]
      %v628 = vld [vmem:[#allocation2 + $0x49] sm:$0xff]
      %v629 = vsel %vm447, %v621, 0.0
      %v630 = vsel %vm448, %v622, 0.0
      %v631 = vsel %vm449, %v623, 0.0
      %v632 = vsel %vm450, %v624, 0.0
      %v633 = vsel %vm451, %v625, 0.0
      %v634 = vsel %vm452, %v626, 0.0
      %v635 = vsel %vm453, %v627, 0.0
      %v636 = vsel %vm454, %v628, 0.0
      %v637 = vpack.c.bf16 %v630, %v629
      %v638 = vpack.c.bf16 %v632, %v631
      %v639 = vpack.c.bf16 %v634, %v633
      %v640 = vpack.c.bf16 %v636, %v635
      %645 = vrot.lane.b32.xlu0 %v637, 64
      %v646 = vpop.permute.xlu0 %645
      %647 = vrot.lane.b32.xlu0 %v638, 64
      %v648 = vpop.permute.xlu0 %647
      %649 = vrot.lane.b32.xlu0 %v639, 64
      %v650 = vpop.permute.xlu0 %649
      %651 = vrot.lane.b32.xlu0 %v640, 64
      %v652 = vpop.permute.xlu0 %651
      %657 = vst.msk [vmem:[#allocation3 + $0x10] sm:$0xff] %vm536, %v646
      %658 = vst.msk [vmem:[#allocation3 + $0x38] sm:$0xff] %vm536, %v648
      %659 = vst.msk [vmem:[#allocation3 + $0x60] sm:$0xff] %vm536, %v650
      %660 = vst.msk [vmem:[#allocation3 + $0x88] sm:$0xff] %vm536, %v652
      %v661 = vld [vmem:[#allocation2 + $0x17] sm:$0xff]
      %v662 = vld [vmem:[#allocation2 + $0x1f] sm:$0xff]
      %v663 = vld [vmem:[#allocation2 + $0x27] sm:$0xff]
      %v664 = vld [vmem:[#allocation2 + $0x2f] sm:$0xff]
      %v665 = vld [vmem:[#allocation2 + $0x37] sm:$0xff]
      %v666 = vld [vmem:[#allocation2 + $0x3f] sm:$0xff]
      %v667 = vld [vmem:[#allocation2 + $0x47] sm:$0xff]
      %v668 = vld [vmem:[#allocation2 + $0x4f] sm:$0xff]
      %v669 = vsel %vm439, %v661, 0.0
      %v670 = vsel %vm440, %v662, 0.0
      %v671 = vsel %vm441, %v663, 0.0
      %v672 = vsel %vm442, %v664, 0.0
      %v673 = vsel %vm443, %v665, 0.0
      %v674 = vsel %vm444, %v666, 0.0
      %v675 = vsel %vm445, %v667, 0.0
      %v676 = vsel %vm446, %v668, 0.0
      %v677 = vpack.c.bf16 %v670, %v669
      %v678 = vpack.c.bf16 %v672, %v671
      %v679 = vpack.c.bf16 %v674, %v673
      %v680 = vpack.c.bf16 %v676, %v675
      %681 = vst.msk [vmem:[#allocation3 + $0x18] sm:$0xff] %vm455, %v677
      %682 = vst.msk [vmem:[#allocation3 + $0x40] sm:$0xff] %vm455, %v678
      %683 = vst.msk [vmem:[#allocation3 + $0x68] sm:$0xff] %vm455, %v679
      %684 = vst.msk [vmem:[#allocation3 + $0x90] sm:$0xff] %vm455, %v680
      %v685 = vld [vmem:[#allocation2 + $0x18] sm:$0xff]
      %v686 = vld [vmem:[#allocation2 + $0x20] sm:$0xff]
      %v687 = vld [vmem:[#allocation2 + $0x28] sm:$0xff]
      %v688 = vld [vmem:[#allocation2 + $0x30] sm:$0xff]
      %v689 = vld [vmem:[#allocation2 + $0x38] sm:$0xff]
      %v690 = vld [vmem:[#allocation2 + $0x40] sm:$0xff]
      %v691 = vld [vmem:[#allocation2 + $0x48] sm:$0xff]
      %v692 = vld [vmem:[#allocation2 + $0x50] sm:$0xff]
      %v693 = vpack.c.bf16 %v686, %v685
      %v694 = vpack.c.bf16 %v688, %v687
      %v695 = vpack.c.bf16 %v690, %v689
      %v696 = vpack.c.bf16 %v692, %v691
      %701 = vrot.lane.b32.xlu0 %v693, 64
      %v702 = vpop.permute.xlu0 %701
      %703 = vrot.lane.b32.xlu0 %v694, 64
      %v704 = vpop.permute.xlu0 %703
      %705 = vrot.lane.b32.xlu0 %v695, 64
      %v706 = vpop.permute.xlu0 %705
      %707 = vrot.lane.b32.xlu0 %v696, 64
      %v708 = vpop.permute.xlu0 %707
      %713 = vst.msk [vmem:[#allocation3 + $0x18] sm:$0xff] %vm536, %v702
      %714 = vst.msk [vmem:[#allocation3 + $0x40] sm:$0xff] %vm536, %v704
      %715 = vst.msk [vmem:[#allocation3 + $0x68] sm:$0xff] %vm536, %v706
      %716 = vst.msk [vmem:[#allocation3 + $0x90] sm:$0xff] %vm536, %v708
      %v717 = vld [vmem:[#allocation2 + $0x19] sm:$0xff]
      %v718 = vld [vmem:[#allocation2 + $0x21] sm:$0xff]
      %v719 = vld [vmem:[#allocation2 + $0x29] sm:$0xff]
      %v720 = vld [vmem:[#allocation2 + $0x31] sm:$0xff]
      %v721 = vld [vmem:[#allocation2 + $0x39] sm:$0xff]
      %v722 = vld [vmem:[#allocation2 + $0x41] sm:$0xff]
      %v723 = vld [vmem:[#allocation2 + $0x49] sm:$0xff]
      %v724 = vld [vmem:[#allocation2 + $0x51] sm:$0xff]
      %v725 = vsel %vm447, %v717, 0.0
      %v726 = vsel %vm448, %v718, 0.0
      %v727 = vsel %vm449, %v719, 0.0
      %v728 = vsel %vm450, %v720, 0.0
      %v729 = vsel %vm451, %v721, 0.0
      %v730 = vsel %vm452, %v722, 0.0
      %v731 = vsel %vm453, %v723, 0.0
      %v732 = vsel %vm454, %v724, 0.0
      %v733 = vpack.c.bf16 %v726, %v725
      %v734 = vpack.c.bf16 %v728, %v727
      %v735 = vpack.c.bf16 %v730, %v729
      %v736 = vpack.c.bf16 %v732, %v731
      %737 = vst.msk [vmem:[#allocation3 + $0x20] sm:$0xff] %vm455, %v733
      %738 = vst.msk [vmem:[#allocation3 + $0x48] sm:$0xff] %vm455, %v734
      %739 = vst.msk [vmem:[#allocation3 + $0x70] sm:$0xff] %vm455, %v735
      %740 = vst.msk [vmem:[#allocation3 + $0x98] sm:$0xff] %vm455, %v736
      %v741 = vld [vmem:[#allocation3] sm:$0xff]
      %v742 = vld [vmem:[#allocation3 + $0x8] sm:$0xff]
      %v743 = vld [vmem:[#allocation3 + $0x10] sm:$0xff]
      %v744 = vld [vmem:[#allocation3 + $0x18] sm:$0xff]
      %v745 = vld [vmem:[#allocation3 + $0x20] sm:$0xff]
      %v746 = vld [vmem:[#allocation3 + $0x28] sm:$0xff]
      %v747 = vld [vmem:[#allocation3 + $0x30] sm:$0xff]
      %v748 = vld [vmem:[#allocation3 + $0x38] sm:$0xff]
      %v749 = vld [vmem:[#allocation3 + $0x40] sm:$0xff]
      %v750 = vld [vmem:[#allocation3 + $0x48] sm:$0xff]
      %v751 = vld [vmem:[#allocation3 + $0x50] sm:$0xff]
      %v752 = vld [vmem:[#allocation3 + $0x58] sm:$0xff]
      %v753 = vld [vmem:[#allocation3 + $0x60] sm:$0xff]
      %v754 = vld [vmem:[#allocation3 + $0x68] sm:$0xff]
      %v755 = vld [vmem:[#allocation3 + $0x70] sm:$0xff]
      %v756 = vld [vmem:[#allocation3 + $0x78] sm:$0xff]
      %v757 = vld [vmem:[#allocation3 + $0x80] sm:$0xff]
      %v758 = vld [vmem:[#allocation3 + $0x88] sm:$0xff]
      %v759 = vld [vmem:[#allocation3 + $0x90] sm:$0xff]
      %v760 = vld [vmem:[#allocation3 + $0x98] sm:$0xff]
      %v761 = vld [vmem:[%s1] sm:$0xf]
      %v762 = vld [vmem:[%s1 + $0x4] sm:$0xf]
      %v763 = vld [vmem:[%s1 + $0x8] sm:$0xf]
      %v764 = vld [vmem:[%s1 + $0xc] sm:$0xf]
      %v765 = vld [vmem:[%s1 + $0x10] sm:$0xf]
      %v766 = vld [vmem:[%s1 + $0x14] sm:$0xf]
      %v767 = vld [vmem:[%s1 + $0x18] sm:$0xf]
      %v768 = vld [vmem:[%s1 + $0x1c] sm:$0xf]
      %v769 = vld [vmem:[%s1 + $0x20] sm:$0xf]
      %v770 = vld [vmem:[%s1 + $0x24] sm:$0xf]
      %v771 = vld [vmem:[%s1 + $0x28] sm:$0xf]
      %v772 = vld [vmem:[%s1 + $0x2c] sm:$0xf]
      %v773 = vld [vmem:[%s1 + $0x30] sm:$0xf]
      %v774 = vld [vmem:[%s1 + $0x34] sm:$0xf]
      %v775 = vld [vmem:[%s1 + $0x38] sm:$0xf]
      %v776 = vld [vmem:[%s1 + $0x3c] sm:$0xf]
      %v777 = vld [vmem:[%s1 + $0x40] sm:$0xf]
      %v778 = vld [vmem:[%s1 + $0x44] sm:$0xf]
      %v779 = vld [vmem:[%s1 + $0x48] sm:$0xf]
      %v780 = vld [vmem:[%s1 + $0x4c] sm:$0xf]
      %v781 = vld [vmem:[%s1 + $0x50] sm:$0xf]
      %v782 = vld [vmem:[%s1 + $0x54] sm:$0xf]
      %v783 = vld [vmem:[%s1 + $0x58] sm:$0xf]
      %v784 = vld [vmem:[%s1 + $0x5c] sm:$0xf]
      %v785 = vld [vmem:[%s1 + $0x60] sm:$0xf]
      %v786 = vld [vmem:[%s1 + $0x64] sm:$0xf]
      %v787 = vld [vmem:[%s1 + $0x68] sm:$0xf]
      %v788 = vld [vmem:[%s1 + $0x6c] sm:$0xf]
      %v789 = vld [vmem:[%s1 + $0x70] sm:$0xf]
      %v790 = vld [vmem:[%s1 + $0x74] sm:$0xf]
      %v791 = vld [vmem:[%s1 + $0x78] sm:$0xf]
      %v792 = vld [vmem:[%s1 + $0x7c] sm:$0xf]
      %v793 = vld [vmem:[%s1 + $0x80] sm:$0xf]
      %v794 = vld [vmem:[%s1 + $0x84] sm:$0xf]
      %v795 = vld [vmem:[%s1 + $0x88] sm:$0xf]
      %v796 = vld [vmem:[%s1 + $0x8c] sm:$0xf]
      %v797 = vld [vmem:[%s1 + $0x90] sm:$0xf]
      %v798 = vld [vmem:[%s1 + $0x94] sm:$0xf]
      %v799 = vld [vmem:[%s1 + $0x98] sm:$0xf]
      %v800 = vld [vmem:[%s1 + $0x9c] sm:$0xf]
      %v801 = vld [vmem:[%s1 + $0xa0] sm:$0xf]
      %v802 = vld [vmem:[%s1 + $0xa4] sm:$0xf]
      %v803 = vld [vmem:[%s1 + $0xa8] sm:$0xf]
      %v804 = vld [vmem:[%s1 + $0xac] sm:$0xf]
      %v805 = vld [vmem:[%s1 + $0xb0] sm:$0xf]
      %v806 = vld [vmem:[%s1 + $0xb4] sm:$0xf]
      %v807 = vld [vmem:[%s1 + $0xb8] sm:$0xf]
      %v808 = vld [vmem:[%s1 + $0xbc] sm:$0xf]
      %v809 = vld [vmem:[%s1 + $0xc0] sm:$0xf]
      %v810 = vld [vmem:[%s1 + $0xc4] sm:$0xf]
      %v811 = vld [vmem:[%s1 + $0xc8] sm:$0xf]
      %v812 = vld [vmem:[%s1 + $0xcc] sm:$0xf]
      %v813 = vld [vmem:[%s1 + $0xd0] sm:$0xf]
      %v814 = vld [vmem:[%s1 + $0xd4] sm:$0xf]
      %v815 = vld [vmem:[%s1 + $0xd8] sm:$0xf]
      %v816 = vld [vmem:[%s1 + $0xdc] sm:$0xf]
      %v817 = vld [vmem:[%s1 + $0xe0] sm:$0xf]
      %v818 = vld [vmem:[%s1 + $0xe4] sm:$0xf]
      %v819 = vld [vmem:[%s1 + $0xe8] sm:$0xf]
      %v820 = vld [vmem:[%s1 + $0xec] sm:$0xf]
      %v821 = vld [vmem:[%s1 + $0xf0] sm:$0xf]
      %v822 = vld [vmem:[%s1 + $0xf4] sm:$0xf]
      %v823 = vld [vmem:[%s1 + $0xf8] sm:$0xf]
      %v824 = vld [vmem:[%s1 + $0xfc] sm:$0xf]
      %v825 = vld [vmem:[%s1 + $0x100] sm:$0xf]
      %v826 = vld [vmem:[%s1 + $0x104] sm:$0xf]
      %v827 = vld [vmem:[%s1 + $0x108] sm:$0xf]
      %v828 = vld [vmem:[%s1 + $0x10c] sm:$0xf]
      %v829 = vld [vmem:[%s1 + $0x110] sm:$0xf]
      %v830 = vld [vmem:[%s1 + $0x114] sm:$0xf]
      %v831 = vld [vmem:[%s1 + $0x118] sm:$0xf]
      %v832 = vld [vmem:[%s1 + $0x11c] sm:$0xf]
      %v833 = vld [vmem:[%s2] sm:$0x1]
      %v835 = vlaneseq
      %v836 = vshrl.u32 %v835, 7
      %v837 = vsub.s32 0, %v836
      %v838 = vrot.slane %v833, %v837
      %v912 = vunpack.c.l.b16 %v761
      %v913 = vunpack.c.l.b16 %v762
      %v914 = vunpack.c.l.b16 %v763
      %v915 = vunpack.c.l.b16 %v764
      %v916 = vunpack.c.l.b16 %v765
      %v917 = vunpack.c.l.b16 %v766
      %v918 = vunpack.c.l.b16 %v767
      %v919 = vunpack.c.l.b16 %v768
      %v920 = vunpack.c.l.b16 %v769
      %v921 = vunpack.c.l.b16 %v770
      %v922 = vunpack.c.l.b16 %v771
      %v923 = vunpack.c.l.b16 %v772
      %v924 = vunpack.c.l.b16 %v773
      %v925 = vunpack.c.l.b16 %v774
      %v926 = vunpack.c.l.b16 %v775
      %v927 = vunpack.c.l.b16 %v776
      %v928 = vunpack.c.l.b16 %v777
      %v929 = vunpack.c.l.b16 %v778
      %v930 = vunpack.c.l.b16 %v779
      %v931 = vunpack.c.l.b16 %v780
      %v932 = vunpack.c.l.b16 %v781
      %v933 = vunpack.c.l.b16 %v782
      %v934 = vunpack.c.l.b16 %v783
      %v935 = vunpack.c.l.b16 %v784
      %v936 = vunpack.c.l.b16 %v785
      %v937 = vunpack.c.l.b16 %v786
      %v938 = vunpack.c.l.b16 %v787
      %v939 = vunpack.c.l.b16 %v788
      %v940 = vunpack.c.l.b16 %v789
      %v941 = vunpack.c.l.b16 %v790
      %v942 = vunpack.c.l.b16 %v791
      %v943 = vunpack.c.l.b16 %v792
      %v944 = vunpack.c.l.b16 %v793
      %v945 = vunpack.c.l.b16 %v794
      %v946 = vunpack.c.l.b16 %v795
      %v947 = vunpack.c.l.b16 %v796
      %v948 = vunpack.c.l.b16 %v797
      %v949 = vunpack.c.l.b16 %v798
      %v950 = vunpack.c.l.b16 %v799
      %v951 = vunpack.c.l.b16 %v800
      %v952 = vunpack.c.l.b16 %v801
      %v953 = vunpack.c.l.b16 %v802
      %v954 = vunpack.c.l.b16 %v803
      %v955 = vunpack.c.l.b16 %v804
      %v956 = vunpack.c.l.b16 %v805
      %v957 = vunpack.c.l.b16 %v806
      %v958 = vunpack.c.l.b16 %v807
      %v959 = vunpack.c.l.b16 %v808
      %v960 = vunpack.c.l.b16 %v809
      %v961 = vunpack.c.l.b16 %v810
      %v962 = vunpack.c.l.b16 %v811
      %v963 = vunpack.c.l.b16 %v812
      %v964 = vunpack.c.l.b16 %v813
      %v965 = vunpack.c.l.b16 %v814
      %v966 = vunpack.c.l.b16 %v815
      %v967 = vunpack.c.l.b16 %v816
      %v968 = vunpack.c.l.b16 %v817
      %v969 = vunpack.c.l.b16 %v818
      %v970 = vunpack.c.l.b16 %v819
      %v971 = vunpack.c.l.b16 %v820
      %v972 = vunpack.c.l.b16 %v821
      %v973 = vunpack.c.l.b16 %v822
      %v974 = vunpack.c.l.b16 %v823
      %v975 = vunpack.c.l.b16 %v824
      %v976 = vunpack.c.l.b16 %v825
      %v977 = vunpack.c.l.b16 %v826
      %v978 = vunpack.c.l.b16 %v827
      %v979 = vunpack.c.l.b16 %v828
      %v980 = vunpack.c.l.b16 %v829
      %v981 = vunpack.c.l.b16 %v830
      %v982 = vunpack.c.l.b16 %v831
      %v983 = vunpack.c.l.b16 %v832
      %v984 = vpack.c.b16 %v913, %v912
      %v985 = vpack.c.b16 %v915, %v914
      %v986 = vpack.c.b16 %v917, %v916
      %v987 = vpack.c.b16 %v919, %v918
      %v988 = vpack.c.b16 %v921, %v920
      %v989 = vpack.c.b16 %v923, %v922
      %v990 = vpack.c.b16 %v925, %v924
      %v991 = vpack.c.b16 %v927, %v926
      %v992 = vpack.c.b16 %v929, %v928
      %v993 = vpack.c.b16 %v931, %v930
      %v994 = vpack.c.b16 %v933, %v932
      %v995 = vpack.c.b16 %v935, %v934
      %v996 = vpack.c.b16 %v937, %v936
      %v997 = vpack.c.b16 %v939, %v938
      %v998 = vpack.c.b16 %v941, %v940
      %v999 = vpack.c.b16 %v943, %v942
      %v1000 = vpack.c.b16 %v945, %v944
      %v1001 = vpack.c.b16 %v947, %v946
      %v1002 = vpack.c.b16 %v949, %v948
      %v1003 = vpack.c.b16 %v951, %v950
      %v1004 = vpack.c.b16 %v953, %v952
      %v1005 = vpack.c.b16 %v955, %v954
      %v1006 = vpack.c.b16 %v957, %v956
      %v1007 = vpack.c.b16 %v959, %v958
      %v1008 = vpack.c.b16 %v961, %v960
      %v1009 = vpack.c.b16 %v963, %v962
      %v1010 = vpack.c.b16 %v965, %v964
      %v1011 = vpack.c.b16 %v967, %v966
      %v1012 = vpack.c.b16 %v969, %v968
      %v1013 = vpack.c.b16 %v971, %v970
      %v1014 = vpack.c.b16 %v973, %v972
      %v1015 = vpack.c.b16 %v975, %v974
      %v1016 = vpack.c.b16 %v977, %v976
      %v1017 = vpack.c.b16 %v979, %v978
      %v1018 = vpack.c.b16 %v981, %v980
      %v1019 = vpack.c.b16 %v983, %v982
      %v1057 = vsel %vm455, %v745, 0
      %v1060 = vsel %vm455, %v750, 0
      %v1063 = vsel %vm455, %v755, 0
      %v1066 = vsel %vm455, %v760, 0
      %1068 = vmatprep.subr.bf16.mxu0 0
      %1069 = vmatpush1.bf16.msra.mxu0 %v984
      %1070 = vmatprep.subr.bf16.mxu0 0
      %1071 = vmatpush1.bf16.msra.mxu0 %v985
      %1072 = vmatprep.subr.bf16.mxu0 0
      %1073 = vmatpush1.bf16.msra.mxu0 %v986
      %1074 = vmatprep.subr.bf16.mxu0 0
      %1075 = vmatpush1.bf16.msra.mxu0 %v987
      %1076 = vmatprep.subr.bf16.mxu0 0
      %1077 = vmatpush1.bf16.msra.mxu0 %v988
      %1078 = vmatprep.subr.bf16.mxu0 0
      %1079 = vmatpush1.bf16.msra.mxu0 %v989
      %1080 = vmatprep.subr.bf16.mxu0 0
      %1081 = vmatpush1.bf16.msra.mxu0 %v990
      %1082 = vmatprep.subr.bf16.mxu0 0
      %1083 = vmatpush1.bf16.msra.mxu0 %v991
      %1084 = vmatprep.subr.bf16.mxu0 0
      %1085 = vmatpush1.bf16.msra.mxu0 %v992
      %1086 = vmatprep.subr.bf16.mxu0 0
      %1087 = vmatpush1.bf16.msra.mxu0 %v993
      %1088 = vmatprep.subr.bf16.mxu0 0
      %1089 = vmatpush1.bf16.msra.mxu0 %v994
      %1090 = vmatprep.subr.bf16.mxu0 0
      %1091 = vmatpush1.bf16.msra.mxu0 %v995
      %1092 = vmatprep.subr.bf16.mxu0 0
      %1093 = vmatpush1.bf16.msra.mxu0 %v996
      %1094 = vmatprep.subr.bf16.mxu0 0
      %1095 = vmatpush1.bf16.msra.mxu0 %v997
      %1096 = vmatprep.subr.bf16.mxu0 0
      %1097 = vmatpush1.bf16.msra.mxu0 %v998
      %1098 = vmatprep.subr.bf16.mxu0 0
      %1099 = vmatpush1.bf16.msra.mxu0 %v999
      %1100 = vmatprep.mubr.bf16.mxu0 %v742
      %1101 = vmatmul.mubr.bf16.gmra.mrb[0].mxu0 %v741
      %v1102 = vpop.f32.mrb[0].mxu0
      %v1103 = vadd.f32 %v838, %v1102
      %v1104 = vpop.f32.mrb[0].mxu0
      %v1105 = vpop.f32.mrb[0].mxu0
      %v1106 = vadd.f32 %v838, %v1105
      %v1107 = vpop.f32.mrb[0].mxu0
      %1108 = vmatprep.mubr.bf16.mxu0 %v747
      %1109 = vmatmul.mubr.bf16.gmra.mrb[0].mxu0 %v746
      %v1110 = vpop.f32.mrb[0].mxu0
      %v1111 = vadd.f32 %v838, %v1110
      %v1112 = vpop.f32.mrb[0].mxu0
      %v1113 = vpop.f32.mrb[0].mxu0
      %v1114 = vadd.f32 %v838, %v1113
      %v1115 = vpop.f32.mrb[0].mxu0
      %1116 = vmatprep.mubr.bf16.mxu0 %v752
      %1117 = vmatmul.mubr.bf16.gmra.mrb[0].mxu0 %v751
      %v1118 = vpop.f32.mrb[0].mxu0
      %v1119 = vadd.f32 %v838, %v1118
      %v1120 = vpop.f32.mrb[0].mxu0
      %v1121 = vpop.f32.mrb[0].mxu0
      %v1122 = vadd.f32 %v838, %v1121
      %v1123 = vpop.f32.mrb[0].mxu0
      %1124 = vmatprep.mubr.bf16.mxu0 %v757
      %1125 = vmatmul.mubr.bf16.gmra.mrb[0].mxu0 %v756
      %v1126 = vpop.f32.mrb[0].mxu0
      %v1127 = vadd.f32 %v838, %v1126
      %v1128 = vpop.f32.mrb[0].mxu0
      %v1129 = vpop.f32.mrb[0].mxu0
      %v1130 = vadd.f32 %v838, %v1129
      %v1131 = vpop.f32.mrb[0].mxu0
      %1132 = vdwg.mxu0
      %1133 = vmatprep.subr.bf16.mxu0 0
      %1134 = vmatpush1.bf16.msra.mxu0 %v1000
      %1135 = vmatprep.subr.bf16.mxu0 0
      %1136 = vmatpush1.bf16.msra.mxu0 %v1001
      %1137 = vmatprep.subr.bf16.mxu0 0
      %1138 = vmatpush1.bf16.msra.mxu0 %v1002
      %1139 = vmatprep.subr.bf16.mxu0 0
      %1140 = vmatpush1.bf16.msra.mxu0 %v1003
      %1141 = vmatprep.subr.bf16.mxu0 0
      %1142 = vmatpush1.bf16.msra.mxu0 %v1004
      %1143 = vmatprep.subr.bf16.mxu0 0
      %1144 = vmatpush1.bf16.msra.mxu0 %v1005
      %1145 = vmatprep.subr.bf16.mxu0 0
      %1146 = vmatpush1.bf16.msra.mxu0 %v1006
      %1147 = vmatprep.subr.bf16.mxu0 0
      %1148 = vmatpush1.bf16.msra.mxu0 %v1007
      %1149 = vmatprep.subr.bf16.mxu0 0
      %1150 = vmatpush1.bf16.msra.mxu0 %v1008
      %1151 = vmatprep.subr.bf16.mxu0 0
      %1152 = vmatpush1.bf16.msra.mxu0 %v1009
      %1153 = vmatprep.subr.bf16.mxu0 0
      %1154 = vmatpush1.bf16.msra.mxu0 %v1010
      %1155 = vmatprep.subr.bf16.mxu0 0
      %1156 = vmatpush1.bf16.msra.mxu0 %v1011
      %1157 = vmatprep.subr.bf16.mxu0 0
      %1158 = vmatpush1.bf16.msra.mxu0 %v1012
      %1159 = vmatprep.subr.bf16.mxu0 0
      %1160 = vmatpush1.bf16.msra.mxu0 %v1013
      %1161 = vmatprep.subr.bf16.mxu0 0
      %1162 = vmatpush1.bf16.msra.mxu0 %v1014
      %1163 = vmatprep.subr.bf16.mxu0 0
      %1164 = vmatpush1.bf16.msra.mxu0 %v1015
      %1165 = vmatprep.mubr.bf16.mxu0 %v744
      %1166 = vmatmul.mubr.bf16.gmra.mrb[0].mxu0 %v743
      %v1167 = vpop.f32.mrb[0].mxu0
      %v1168 = vadd.f32 %v1103, %v1167
      %v1169 = vpop.f32.mrb[0].mxu0
      %v1170 = vpop.f32.mrb[0].mxu0
      %v1171 = vadd.f32 %v1106, %v1170
      %v1172 = vpop.f32.mrb[0].mxu0
      %1173 = vmatprep.mubr.bf16.mxu0 %v749
      %1174 = vmatmul.mubr.bf16.gmra.mrb[0].mxu0 %v748
      %v1175 = vpop.f32.mrb[0].mxu0
      %v1176 = vadd.f32 %v1111, %v1175
      %v1177 = vpop.f32.mrb[0].mxu0
      %v1178 = vpop.f32.mrb[0].mxu0
      %v1179 = vadd.f32 %v1114, %v1178
      %v1180 = vpop.f32.mrb[0].mxu0
      %1181 = vmatprep.mubr.bf16.mxu0 %v754
      %1182 = vmatmul.mubr.bf16.gmra.mrb[0].mxu0 %v753
      %v1183 = vpop.f32.mrb[0].mxu0
      %v1184 = vadd.f32 %v1119, %v1183
      %v1185 = vpop.f32.mrb[0].mxu0
      %v1186 = vpop.f32.mrb[0].mxu0
      %v1187 = vadd.f32 %v1122, %v1186
      %v1188 = vpop.f32.mrb[0].mxu0
      %1189 = vmatprep.mubr.bf16.mxu0 %v759
      %1190 = vmatmul.mubr.bf16.gmra.mrb[0].mxu0 %v758
      %v1191 = vpop.f32.mrb[0].mxu0
      %v1192 = vadd.f32 %v1127, %v1191
      %v1193 = vpop.f32.mrb[0].mxu0
      %v1194 = vpop.f32.mrb[0].mxu0
      %v1195 = vadd.f32 %v1130, %v1194
      %v1196 = vpop.f32.mrb[0].mxu0
      %1197 = vdwg.mxu0
      %1198 = vmatprep.subr.bf16.mxu0 0
      %1199 = vmatpush1.bf16.msra.mxu0 %v1016
      %1200 = vmatprep.subr.bf16.mxu0 0
      %1201 = vmatpush1.bf16.msra.mxu0 %v1017
      %1202 = vmatprep.subr.bf16.mxu0 0
      %1203 = vmatpush1.bf16.msra.mxu0 %v1018
      %1204 = vmatprep.subr.bf16.mxu0 0
      %1205 = vmatpush1.bf16.msra.mxu0 %v1019
      %1206 = vmatprep.subr.bf16.mxu0 0
      %1207 = vmatpush1.bf16.msra.mxu0 0
      %1208 = vmatprep.subr.bf16.mxu0 0
      %1209 = vmatpush1.bf16.msra.mxu0 0
      %1210 = vmatprep.subr.bf16.mxu0 0
      %1211 = vmatpush1.bf16.msra.mxu0 0
      %1212 = vmatprep.subr.bf16.mxu0 0
      %1213 = vmatpush1.bf16.msra.mxu0 0
      %1214 = vmatprep.subr.bf16.mxu0 0
      %1215 = vmatpush1.bf16.msra.mxu0 0
      %1216 = vmatprep.subr.bf16.mxu0 0
      %1217 = vmatpush1.bf16.msra.mxu0 0
      %1218 = vmatprep.subr.bf16.mxu0 0
      %1219 = vmatpush1.bf16.msra.mxu0 0
      %1220 = vmatprep.subr.bf16.mxu0 0
      %1221 = vmatpush1.bf16.msra.mxu0 0
      %1222 = vmatprep.subr.bf16.mxu0 0
      %1223 = vmatpush1.bf16.msra.mxu0 0
      %1224 = vmatprep.subr.bf16.mxu0 0
      %1225 = vmatpush1.bf16.msra.mxu0 0
      %1226 = vmatprep.subr.bf16.mxu0 0
      %1227 = vmatpush1.bf16.msra.mxu0 0
      %1228 = vmatprep.subr.bf16.mxu0 0
      %1229 = vmatpush1.bf16.msra.mxu0 0
      %1230 = vmatprep.mubr.bf16.mxu0 0
      %1231 = vmatmul.mubr.bf16.gmra.mrb[0].mxu0 %v1057
      %v1232 = vpop.f32.mrb[0].mxu0
      %v1233 = vadd.f32 %v1168, %v1232
      %v1234 = vpop.f32.mrb[0].mxu0
      %v1235 = vpop.f32.mrb[0].mxu0
      %v1236 = vadd.f32 %v1171, %v1235
      %v1237 = vpop.f32.mrb[0].mxu0
      %1238 = vmatprep.mubr.bf16.mxu0 0
      %1239 = vmatmul.mubr.bf16.gmra.mrb[0].mxu0 %v1060
      %v1240 = vpop.f32.mrb[0].mxu0
      %v1241 = vadd.f32 %v1176, %v1240
      %v1242 = vpop.f32.mrb[0].mxu0
      %v1243 = vpop.f32.mrb[0].mxu0
      %v1244 = vadd.f32 %v1179, %v1243
      %v1245 = vpop.f32.mrb[0].mxu0
      %1246 = vmatprep.mubr.bf16.mxu0 0
      %1247 = vmatmul.mubr.bf16.gmra.mrb[0].mxu0 %v1063
      %v1248 = vpop.f32.mrb[0].mxu0
      %v1249 = vadd.f32 %v1184, %v1248
      %v1250 = vpop.f32.mrb[0].mxu0
      %v1251 = vpop.f32.mrb[0].mxu0
      %v1252 = vadd.f32 %v1187, %v1251
      %v1253 = vpop.f32.mrb[0].mxu0
      %1254 = vmatprep.mubr.bf16.mxu0 0
      %1255 = vmatmul.mubr.bf16.gmra.mrb[0].mxu0 %v1066
      %v1256 = vpop.f32.mrb[0].mxu0
      %v1257 = vadd.f32 %v1192, %v1256
      %v1258 = vpop.f32.mrb[0].mxu0
      %v1259 = vpop.f32.mrb[0].mxu0
      %v1260 = vadd.f32 %v1195, %v1259
      %v1261 = vpop.f32.mrb[0].mxu0
      %1262 = vdwg.mxu0
      %v1263 = vmax.f32 %v1233, 0.0
      %v1264 = vmax.f32 %v1236, 0.0
      %v1265 = vmax.f32 %v1241, 0.0
      %v1266 = vmax.f32 %v1244, 0.0
      %v1267 = vmax.f32 %v1249, 0.0
      %v1268 = vmax.f32 %v1252, 0.0
      %v1269 = vmax.f32 %v1257, 0.0
      %v1270 = vmax.f32 %v1260, 0.0
      %1271 = vst.msk [vmem:[#allocation2 + $0x10] sm:$0xff] %vm455, %v1263
      %1272 = vst.msk [vmem:[#allocation2 + $0x18] sm:$0xff] %vm455, %v1264
      %1273 = vst.msk [vmem:[#allocation2 + $0x20] sm:$0xff] %vm455, %v1265
      %1274 = vst.msk [vmem:[#allocation2 + $0x28] sm:$0xff] %vm455, %v1266
      %1275 = vst.msk [vmem:[#allocation2 + $0x30] sm:$0xff] %vm455, %v1267
      %1276 = vst.msk [vmem:[#allocation2 + $0x38] sm:$0xff] %vm455, %v1268
      %1277 = vst.msk [vmem:[#allocation2 + $0x40] sm:$0xff] %vm455, %v1269
      %1278 = vst.msk [vmem:[#allocation2 + $0x48] sm:$0xff] %vm455, %v1270
      %v1279 = vld [vmem:[#allocation2 + $0x7] sm:$0xff]
      %v1280 = vld [vmem:[#allocation2 + $0xf] sm:$0xff]
      %v1281 = vld [vmem:[#allocation2 + $0x17] sm:$0xff]
      %v1282 = vld [vmem:[#allocation2 + $0x1f] sm:$0xff]
      %v1283 = vld [vmem:[#allocation2 + $0x27] sm:$0xff]
      %v1284 = vld [vmem:[#allocation2 + $0x2f] sm:$0xff]
      %v1285 = vld [vmem:[#allocation2 + $0x37] sm:$0xff]
      %v1286 = vld [vmem:[#allocation2 + $0x3f] sm:$0xff]
      %v1287 = vsel %vm439, %v1279, 0.0
      %v1288 = vsel %vm440, %v1280, 0.0
      %v1289 = vsel %vm441, %v1281, 0.0
      %v1290 = vsel %vm442, %v1282, 0.0
      %v1291 = vsel %vm443, %v1283, 0.0
      %v1292 = vsel %vm444, %v1284, 0.0
      %v1293 = vsel %vm445, %v1285, 0.0
      %v1294 = vsel %vm446, %v1286, 0.0
      %v1295 = vpack.c.bf16 %v1288, %v1287
      %v1296 = vpack.c.bf16 %v1290, %v1289
      %v1297 = vpack.c.bf16 %v1292, %v1291
      %v1298 = vpack.c.bf16 %v1294, %v1293
      %1299 = vst.msk [vmem:[#allocation3] sm:$0xff] %vm455, %v1295
      %1300 = vst.msk [vmem:[#allocation3 + $0x28] sm:$0xff] %vm455, %v1296
      %1301 = vst.msk [vmem:[#allocation3 + $0x50] sm:$0xff] %vm455, %v1297
      %1302 = vst.msk [vmem:[#allocation3 + $0x78] sm:$0xff] %vm455, %v1298
      %v1303 = vld [vmem:[#allocation2 + $0x8] sm:$0xff]
      %v1304 = vld [vmem:[#allocation2 + $0x10] sm:$0xff]
      %v1305 = vld [vmem:[#allocation2 + $0x18] sm:$0xff]
      %v1306 = vld [vmem:[#allocation2 + $0x20] sm:$0xff]
      %v1307 = vld [vmem:[#allocation2 + $0x28] sm:$0xff]
      %v1308 = vld [vmem:[#allocation2 + $0x30] sm:$0xff]
      %v1309 = vld [vmem:[#allocation2 + $0x38] sm:$0xff]
      %v1310 = vld [vmem:[#allocation2 + $0x40] sm:$0xff]
      %v1311 = vpack.c.bf16 %v1304, %v1303
      %v1312 = vpack.c.bf16 %v1306, %v1305
      %v1313 = vpack.c.bf16 %v1308, %v1307
      %v1314 = vpack.c.bf16 %v1310, %v1309
      %1319 = vrot.lane.b32.xlu0 %v1311, 64
      %v1320 = vpop.permute.xlu0 %1319
      %1321 = vrot.lane.b32.xlu0 %v1312, 64
      %v1322 = vpop.permute.xlu0 %1321
      %1323 = vrot.lane.b32.xlu0 %v1313, 64
      %v1324 = vpop.permute.xlu0 %1323
      %1325 = vrot.lane.b32.xlu0 %v1314, 64
      %v1326 = vpop.permute.xlu0 %1325
      %1331 = vst.msk [vmem:[#allocation3] sm:$0xff] %vm536, %v1320
      %1332 = vst.msk [vmem:[#allocation3 + $0x28] sm:$0xff] %vm536, %v1322
      %1333 = vst.msk [vmem:[#allocation3 + $0x50] sm:$0xff] %vm536, %v1324
      %1334 = vst.msk [vmem:[#allocation3 + $0x78] sm:$0xff] %vm536, %v1326
      %v1335 = vld [vmem:[#allocation2 + $0x9] sm:$0xff]
      %v1336 = vld [vmem:[#allocation2 + $0x11] sm:$0xff]
      %v1337 = vld [vmem:[#allocation2 + $0x19] sm:$0xff]
      %v1338 = vld [vmem:[#allocation2 + $0x21] sm:$0xff]
      %v1339 = vld [vmem:[#allocation2 + $0x29] sm:$0xff]
      %v1340 = vld [vmem:[#allocation2 + $0x31] sm:$0xff]
      %v1341 = vld [vmem:[#allocation2 + $0x39] sm:$0xff]
      %v1342 = vld [vmem:[#allocation2 + $0x41] sm:$0xff]
      %v1343 = vsel %vm447, %v1335, 0.0
      %v1344 = vsel %vm448, %v1336, 0.0
      %v1345 = vsel %vm449, %v1337, 0.0
      %v1346 = vsel %vm450, %v1338, 0.0
      %v1347 = vsel %vm451, %v1339, 0.0
      %v1348 = vsel %vm452, %v1340, 0.0
      %v1349 = vsel %vm453, %v1341, 0.0
      %v1350 = vsel %vm454, %v1342, 0.0
      %v1351 = vpack.c.bf16 %v1344, %v1343
      %v1352 = vpack.c.bf16 %v1346, %v1345
      %v1353 = vpack.c.bf16 %v1348, %v1347
      %v1354 = vpack.c.bf16 %v1350, %v1349
      %1355 = vst.msk [vmem:[#allocation3 + $0x8] sm:$0xff] %vm455, %v1351
      %1356 = vst.msk [vmem:[#allocation3 + $0x30] sm:$0xff] %vm455, %v1352
      %1357 = vst.msk [vmem:[#allocation3 + $0x58] sm:$0xff] %vm455, %v1353
      %1358 = vst.msk [vmem:[#allocation3 + $0x80] sm:$0xff] %vm455, %v1354
      %v1359 = vld [vmem:[#allocation2 + $0xf] sm:$0xff]
      %v1360 = vld [vmem:[#allocation2 + $0x17] sm:$0xff]
      %v1361 = vld [vmem:[#allocation2 + $0x1f] sm:$0xff]
      %v1362 = vld [vmem:[#allocation2 + $0x27] sm:$0xff]
      %v1363 = vld [vmem:[#allocation2 + $0x2f] sm:$0xff]
      %v1364 = vld [vmem:[#allocation2 + $0x37] sm:$0xff]
      %v1365 = vld [vmem:[#allocation2 + $0x3f] sm:$0xff]
      %v1366 = vld [vmem:[#allocation2 + $0x47] sm:$0xff]
      %v1367 = vsel %vm439, %v1359, 0.0
      %v1368 = vsel %vm440, %v1360, 0.0
      %v1369 = vsel %vm441, %v1361, 0.0
      %v1370 = vsel %vm442, %v1362, 0.0
      %v1371 = vsel %vm443, %v1363, 0.0
      %v1372 = vsel %vm444, %v1364, 0.0
      %v1373 = vsel %vm445, %v1365, 0.0
      %v1374 = vsel %vm446, %v1366, 0.0
      %v1375 = vpack.c.bf16 %v1368, %v1367
      %v1376 = vpack.c.bf16 %v1370, %v1369
      %v1377 = vpack.c.bf16 %v1372, %v1371
      %v1378 = vpack.c.bf16 %v1374, %v1373
      %1383 = vrot.lane.b32.xlu0 %v1375, 64
      %v1384 = vpop.permute.xlu0 %1383
      %1385 = vrot.lane.b32.xlu0 %v1376, 64
      %v1386 = vpop.permute.xlu0 %1385
      %1387 = vrot.lane.b32.xlu0 %v1377, 64
      %v1388 = vpop.permute.xlu0 %1387
      %1389 = vrot.lane.b32.xlu0 %v1378, 64
      %v1390 = vpop.permute.xlu0 %1389
      %1395 = vst.msk [vmem:[#allocation3 + $0x8] sm:$0xff] %vm536, %v1384
      %1396 = vst.msk [vmem:[#allocation3 + $0x30] sm:$0xff] %vm536, %v1386
      %1397 = vst.msk [vmem:[#allocation3 + $0x58] sm:$0xff] %vm536, %v1388
      %1398 = vst.msk [vmem:[#allocation3 + $0x80] sm:$0xff] %vm536, %v1390
      %v1399 = vld [vmem:[#allocation2 + $0x10] sm:$0xff]
      %v1400 = vld [vmem:[#allocation2 + $0x18] sm:$0xff]
      %v1401 = vld [vmem:[#allocation2 + $0x20] sm:$0xff]
      %v1402 = vld [vmem:[#allocation2 + $0x28] sm:$0xff]
      %v1403 = vld [vmem:[#allocation2 + $0x30] sm:$0xff]
      %v1404 = vld [vmem:[#allocation2 + $0x38] sm:$0xff]
      %v1405 = vld [vmem:[#allocation2 + $0x40] sm:$0xff]
      %v1406 = vld [vmem:[#allocation2 + $0x48] sm:$0xff]
      %v1407 = vpack.c.bf16 %v1400, %v1399
      %v1408 = vpack.c.bf16 %v1402, %v1401
      %v1409 = vpack.c.bf16 %v1404, %v1403
      %v1410 = vpack.c.bf16 %v1406, %v1405
      %1411 = vst.msk [vmem:[#allocation3 + $0x10] sm:$0xff] %vm455, %v1407
      %1412 = vst.msk [vmem:[#allocation3 + $0x38] sm:$0xff] %vm455, %v1408
      %1413 = vst.msk [vmem:[#allocation3 + $0x60] sm:$0xff] %vm455, %v1409
      %1414 = vst.msk [vmem:[#allocation3 + $0x88] sm:$0xff] %vm455, %v1410
      %v1415 = vld [vmem:[#allocation2 + $0x11] sm:$0xff]
      %v1416 = vld [vmem:[#allocation2 + $0x19] sm:$0xff]
      %v1417 = vld [vmem:[#allocation2 + $0x21] sm:$0xff]
      %v1418 = vld [vmem:[#allocation2 + $0x29] sm:$0xff]
      %v1419 = vld [vmem:[#allocation2 + $0x31] sm:$0xff]
      %v1420 = vld [vmem:[#allocation2 + $0x39] sm:$0xff]
      %v1421 = vld [vmem:[#allocation2 + $0x41] sm:$0xff]
      %v1422 = vld [vmem:[#allocation2 + $0x49] sm:$0xff]
      %v1423 = vsel %vm447, %v1415, 0.0
      %v1424 = vsel %vm448, %v1416, 0.0
      %v1425 = vsel %vm449, %v1417, 0.0
      %v1426 = vsel %vm450, %v1418, 0.0
      %v1427 = vsel %vm451, %v1419, 0.0
      %v1428 = vsel %vm452, %v1420, 0.0
      %v1429 = vsel %vm453, %v1421, 0.0
      %v1430 = vsel %vm454, %v1422, 0.0
      %v1431 = vpack.c.bf16 %v1424, %v1423
      %v1432 = vpack.c.bf16 %v1426, %v1425
      %v1433 = vpack.c.bf16 %v1428, %v1427
      %v1434 = vpack.c.bf16 %v1430, %v1429
      %1439 = vrot.lane.b32.xlu0 %v1431, 64
      %v1440 = vpop.permute.xlu0 %1439
      %1441 = vrot.lane.b32.xlu0 %v1432, 64
      %v1442 = vpop.permute.xlu0 %1441
      %1443 = vrot.lane.b32.xlu0 %v1433, 64
      %v1444 = vpop.permute.xlu0 %1443
      %1445 = vrot.lane.b32.xlu0 %v1434, 64
      %v1446 = vpop.permute.xlu0 %1445
      %1451 = vst.msk [vmem:[#allocation3 + $0x10] sm:$0xff] %vm536, %v1440
      %1452 = vst.msk [vmem:[#allocation3 + $0x38] sm:$0xff] %vm536, %v1442
      %1453 = vst.msk [vmem:[#allocation3 + $0x60] sm:$0xff] %vm536, %v1444
      %1454 = vst.msk [vmem:[#allocation3 + $0x88] sm:$0xff] %vm536, %v1446
      %v1455 = vld [vmem:[#allocation2 + $0x17] sm:$0xff]
      %v1456 = vld [vmem:[#allocation2 + $0x1f] sm:$0xff]
      %v1457 = vld [vmem:[#allocation2 + $0x27] sm:$0xff]
      %v1458 = vld [vmem:[#allocation2 + $0x2f] sm:$0xff]
      %v1459 = vld [vmem:[#allocation2 + $0x37] sm:$0xff]
      %v1460 = vld [vmem:[#allocation2 + $0x3f] sm:$0xff]
      %v1461 = vld [vmem:[#allocation2 + $0x47] sm:$0xff]
      %v1462 = vld [vmem:[#allocation2 + $0x4f] sm:$0xff]
      %v1463 = vsel %vm439, %v1455, 0.0
      %v1464 = vsel %vm440, %v1456, 0.0
      %v1465 = vsel %vm441, %v1457, 0.0
      %v1466 = vsel %vm442, %v1458, 0.0
      %v1467 = vsel %vm443, %v1459, 0.0
      %v1468 = vsel %vm444, %v1460, 0.0
      %v1469 = vsel %vm445, %v1461, 0.0
      %v1470 = vsel %vm446, %v1462, 0.0
      %v1471 = vpack.c.bf16 %v1464, %v1463
      %v1472 = vpack.c.bf16 %v1466, %v1465
      %v1473 = vpack.c.bf16 %v1468, %v1467
      %v1474 = vpack.c.bf16 %v1470, %v1469
      %1475 = vst.msk [vmem:[#allocation3 + $0x18] sm:$0xff] %vm455, %v1471
      %1476 = vst.msk [vmem:[#allocation3 + $0x40] sm:$0xff] %vm455, %v1472
      %1477 = vst.msk [vmem:[#allocation3 + $0x68] sm:$0xff] %vm455, %v1473
      %1478 = vst.msk [vmem:[#allocation3 + $0x90] sm:$0xff] %vm455, %v1474
      %v1479 = vld [vmem:[#allocation2 + $0x18] sm:$0xff]
      %v1480 = vld [vmem:[#allocation2 + $0x20] sm:$0xff]
      %v1481 = vld [vmem:[#allocation2 + $0x28] sm:$0xff]
      %v1482 = vld [vmem:[#allocation2 + $0x30] sm:$0xff]
      %v1483 = vld [vmem:[#allocation2 + $0x38] sm:$0xff]
      %v1484 = vld [vmem:[#allocation2 + $0x40] sm:$0xff]
      %v1485 = vld [vmem:[#allocation2 + $0x48] sm:$0xff]
      %v1486 = vld [vmem:[#allocation2 + $0x50] sm:$0xff]
      %v1487 = vpack.c.bf16 %v1480, %v1479
      %v1488 = vpack.c.bf16 %v1482, %v1481
      %v1489 = vpack.c.bf16 %v1484, %v1483
      %v1490 = vpack.c.bf16 %v1486, %v1485
      %1495 = vrot.lane.b32.xlu0 %v1487, 64
      %v1496 = vpop.permute.xlu0 %1495
      %1497 = vrot.lane.b32.xlu0 %v1488, 64
      %v1498 = vpop.permute.xlu0 %1497
      %1499 = vrot.lane.b32.xlu0 %v1489, 64
      %v1500 = vpop.permute.xlu0 %1499
      %1501 = vrot.lane.b32.xlu0 %v1490, 64
      %v1502 = vpop.permute.xlu0 %1501
      %1507 = vst.msk [vmem:[#allocation3 + $0x18] sm:$0xff] %vm536, %v1496
      %1508 = vst.msk [vmem:[#allocation3 + $0x40] sm:$0xff] %vm536, %v1498
      %1509 = vst.msk [vmem:[#allocation3 + $0x68] sm:$0xff] %vm536, %v1500
      %1510 = vst.msk [vmem:[#allocation3 + $0x90] sm:$0xff] %vm536, %v1502
      %v1511 = vld [vmem:[#allocation2 + $0x19] sm:$0xff]
      %v1512 = vld [vmem:[#allocation2 + $0x21] sm:$0xff]
      %v1513 = vld [vmem:[#allocation2 + $0x29] sm:$0xff]
      %v1514 = vld [vmem:[#allocation2 + $0x31] sm:$0xff]
      %v1515 = vld [vmem:[#allocation2 + $0x39] sm:$0xff]
      %v1516 = vld [vmem:[#allocation2 + $0x41] sm:$0xff]
      %v1517 = vld [vmem:[#allocation2 + $0x49] sm:$0xff]
      %v1518 = vld [vmem:[#allocation2 + $0x51] sm:$0xff]
      %v1519 = vsel %vm447, %v1511, 0.0
      %v1520 = vsel %vm448, %v1512, 0.0
      %v1521 = vsel %vm449, %v1513, 0.0
      %v1522 = vsel %vm450, %v1514, 0.0
      %v1523 = vsel %vm451, %v1515, 0.0
      %v1524 = vsel %vm452, %v1516, 0.0
      %v1525 = vsel %vm453, %v1517, 0.0
      %v1526 = vsel %vm454, %v1518, 0.0
      %v1527 = vpack.c.bf16 %v1520, %v1519
      %v1528 = vpack.c.bf16 %v1522, %v1521
      %v1529 = vpack.c.bf16 %v1524, %v1523
      %v1530 = vpack.c.bf16 %v1526, %v1525
      %1531 = vst.msk [vmem:[#allocation3 + $0x20] sm:$0xff] %vm455, %v1527
      %1532 = vst.msk [vmem:[#allocation3 + $0x48] sm:$0xff] %vm455, %v1528
      %1533 = vst.msk [vmem:[#allocation3 + $0x70] sm:$0xff] %vm455, %v1529
      %1534 = vst.msk [vmem:[#allocation3 + $0x98] sm:$0xff] %vm455, %v1530
      %v1535 = vld [vmem:[#allocation3] sm:$0xff]
      %v1536 = vld [vmem:[#allocation3 + $0x8] sm:$0xff]
      %v1537 = vld [vmem:[#allocation3 + $0x10] sm:$0xff]
      %v1538 = vld [vmem:[#allocation3 + $0x18] sm:$0xff]
      %v1539 = vld [vmem:[#allocation3 + $0x20] sm:$0xff]
      %v1540 = vld [vmem:[#allocation3 + $0x28] sm:$0xff]
      %v1541 = vld [vmem:[#allocation3 + $0x30] sm:$0xff]
      %v1542 = vld [vmem:[#allocation3 + $0x38] sm:$0xff]
      %v1543 = vld [vmem:[#allocation3 + $0x40] sm:$0xff]
      %v1544 = vld [vmem:[#allocation3 + $0x48] sm:$0xff]
      %v1545 = vld [vmem:[#allocation3 + $0x50] sm:$0xff]
      %v1546 = vld [vmem:[#allocation3 + $0x58] sm:$0xff]
      %v1547 = vld [vmem:[#allocation3 + $0x60] sm:$0xff]
      %v1548 = vld [vmem:[#allocation3 + $0x68] sm:$0xff]
      %v1549 = vld [vmem:[#allocation3 + $0x70] sm:$0xff]
      %v1550 = vld [vmem:[#allocation3 + $0x78] sm:$0xff]
      %v1551 = vld [vmem:[#allocation3 + $0x80] sm:$0xff]
      %v1552 = vld [vmem:[#allocation3 + $0x88] sm:$0xff]
      %v1553 = vld [vmem:[#allocation3 + $0x90] sm:$0xff]
      %v1554 = vld [vmem:[#allocation3 + $0x98] sm:$0xff]
      %v1555 = vld [vmem:[%s3] sm:$0xf]
      %v1556 = vld [vmem:[%s3 + $0x4] sm:$0xf]
      %v1557 = vld [vmem:[%s3 + $0x8] sm:$0xf]
      %v1558 = vld [vmem:[%s3 + $0xc] sm:$0xf]
      %v1559 = vld [vmem:[%s3 + $0x10] sm:$0xf]
      %v1560 = vld [vmem:[%s3 + $0x14] sm:$0xf]
      %v1561 = vld [vmem:[%s3 + $0x18] sm:$0xf]
      %v1562 = vld [vmem:[%s3 + $0x1c] sm:$0xf]
      %v1563 = vld [vmem:[%s3 + $0x20] sm:$0xf]
      %v1564 = vld [vmem:[%s3 + $0x24] sm:$0xf]
      %v1565 = vld [vmem:[%s3 + $0x28] sm:$0xf]
      %v1566 = vld [vmem:[%s3 + $0x2c] sm:$0xf]
      %v1567 = vld [vmem:[%s3 + $0x30] sm:$0xf]
      %v1568 = vld [vmem:[%s3 + $0x34] sm:$0xf]
      %v1569 = vld [vmem:[%s3 + $0x38] sm:$0xf]
      %v1570 = vld [vmem:[%s3 + $0x3c] sm:$0xf]
      %v1571 = vld [vmem:[%s3 + $0x40] sm:$0xf]
      %v1572 = vld [vmem:[%s3 + $0x44] sm:$0xf]
      %v1573 = vld [vmem:[%s3 + $0x48] sm:$0xf]
      %v1574 = vld [vmem:[%s3 + $0x4c] sm:$0xf]
      %v1575 = vld [vmem:[%s3 + $0x50] sm:$0xf]
      %v1576 = vld [vmem:[%s3 + $0x54] sm:$0xf]
      %v1577 = vld [vmem:[%s3 + $0x58] sm:$0xf]
      %v1578 = vld [vmem:[%s3 + $0x5c] sm:$0xf]
      %v1579 = vld [vmem:[%s3 + $0x60] sm:$0xf]
      %v1580 = vld [vmem:[%s3 + $0x64] sm:$0xf]
      %v1581 = vld [vmem:[%s3 + $0x68] sm:$0xf]
      %v1582 = vld [vmem:[%s3 + $0x6c] sm:$0xf]
      %v1583 = vld [vmem:[%s3 + $0x70] sm:$0xf]
      %v1584 = vld [vmem:[%s3 + $0x74] sm:$0xf]
      %v1585 = vld [vmem:[%s3 + $0x78] sm:$0xf]
      %v1586 = vld [vmem:[%s3 + $0x7c] sm:$0xf]
      %v1587 = vld [vmem:[%s3 + $0x80] sm:$0xf]
      %v1588 = vld [vmem:[%s3 + $0x84] sm:$0xf]
      %v1589 = vld [vmem:[%s3 + $0x88] sm:$0xf]
      %v1590 = vld [vmem:[%s3 + $0x8c] sm:$0xf]
      %v1591 = vld [vmem:[%s3 + $0x90] sm:$0xf]
      %v1592 = vld [vmem:[%s3 + $0x94] sm:$0xf]
      %v1593 = vld [vmem:[%s3 + $0x98] sm:$0xf]
      %v1594 = vld [vmem:[%s3 + $0x9c] sm:$0xf]
      %v1595 = vld [vmem:[%s3 + $0xa0] sm:$0xf]
      %v1596 = vld [vmem:[%s3 + $0xa4] sm:$0xf]
      %v1597 = vld [vmem:[%s3 + $0xa8] sm:$0xf]
      %v1598 = vld [vmem:[%s3 + $0xac] sm:$0xf]
      %v1599 = vld [vmem:[%s3 + $0xb0] sm:$0xf]
      %v1600 = vld [vmem:[%s3 + $0xb4] sm:$0xf]
      %v1601 = vld [vmem:[%s3 + $0xb8] sm:$0xf]
      %v1602 = vld [vmem:[%s3 + $0xbc] sm:$0xf]
      %v1603 = vld [vmem:[%s3 + $0xc0] sm:$0xf]
      %v1604 = vld [vmem:[%s3 + $0xc4] sm:$0xf]
      %v1605 = vld [vmem:[%s3 + $0xc8] sm:$0xf]
      %v1606 = vld [vmem:[%s3 + $0xcc] sm:$0xf]
      %v1607 = vld [vmem:[%s3 + $0xd0] sm:$0xf]
      %v1608 = vld [vmem:[%s3 + $0xd4] sm:$0xf]
      %v1609 = vld [vmem:[%s3 + $0xd8] sm:$0xf]
      %v1610 = vld [vmem:[%s3 + $0xdc] sm:$0xf]
      %v1611 = vld [vmem:[%s3 + $0xe0] sm:$0xf]
      %v1612 = vld [vmem:[%s3 + $0xe4] sm:$0xf]
      %v1613 = vld [vmem:[%s3 + $0xe8] sm:$0xf]
      %v1614 = vld [vmem:[%s3 + $0xec] sm:$0xf]
      %v1615 = vld [vmem:[%s3 + $0xf0] sm:$0xf]
      %v1616 = vld [vmem:[%s3 + $0xf4] sm:$0xf]
      %v1617 = vld [vmem:[%s3 + $0xf8] sm:$0xf]
      %v1618 = vld [vmem:[%s3 + $0xfc] sm:$0xf]
      %v1619 = vld [vmem:[%s3 + $0x100] sm:$0xf]
      %v1620 = vld [vmem:[%s3 + $0x104] sm:$0xf]
      %v1621 = vld [vmem:[%s3 + $0x108] sm:$0xf]
      %v1622 = vld [vmem:[%s3 + $0x10c] sm:$0xf]
      %v1623 = vld [vmem:[%s3 + $0x110] sm:$0xf]
      %v1624 = vld [vmem:[%s3 + $0x114] sm:$0xf]
      %v1625 = vld [vmem:[%s3 + $0x118] sm:$0xf]
      %v1626 = vld [vmem:[%s3 + $0x11c] sm:$0xf]
      %v1627 = vld [vmem:[%s4] sm:$0x1]
      %v1629 = vlaneseq
      %v1630 = vshrl.u32 %v1629, 7
      %v1631 = vsub.s32 0, %v1630
      %v1632 = vrot.slane %v1627, %v1631
      %v1706 = vunpack.c.l.b16 %v1555
      %v1707 = vunpack.c.l.b16 %v1556
      %v1708 = vunpack.c.l.b16 %v1557
      %v1709 = vunpack.c.l.b16 %v1558
      %v1710 = vunpack.c.l.b16 %v1559
      %v1711 = vunpack.c.l.b16 %v1560
      %v1712 = vunpack.c.l.b16 %v1561
      %v1713 = vunpack.c.l.b16 %v1562
      %v1714 = vunpack.c.l.b16 %v1563
      %v1715 = vunpack.c.l.b16 %v1564
      %v1716 = vunpack.c.l.b16 %v1565
      %v1717 = vunpack.c.l.b16 %v1566
      %v1718 = vunpack.c.l.b16 %v1567
      %v1719 = vunpack.c.l.b16 %v1568
      %v1720 = vunpack.c.l.b16 %v1569
      %v1721 = vunpack.c.l.b16 %v1570
      %v1722 = vunpack.c.l.b16 %v1571
      %v1723 = vunpack.c.l.b16 %v1572
      %v1724 = vunpack.c.l.b16 %v1573
      %v1725 = vunpack.c.l.b16 %v1574
      %v1726 = vunpack.c.l.b16 %v1575
      %v1727 = vunpack.c.l.b16 %v1576
      %v1728 = vunpack.c.l.b16 %v1577
      %v1729 = vunpack.c.l.b16 %v1578
      %v1730 = vunpack.c.l.b16 %v1579
      %v1731 = vunpack.c.l.b16 %v1580
      %v1732 = vunpack.c.l.b16 %v1581
      %v1733 = vunpack.c.l.b16 %v1582
      %v1734 = vunpack.c.l.b16 %v1583
      %v1735 = vunpack.c.l.b16 %v1584
      %v1736 = vunpack.c.l.b16 %v1585
      %v1737 = vunpack.c.l.b16 %v1586
      %v1738 = vunpack.c.l.b16 %v1587
      %v1739 = vunpack.c.l.b16 %v1588
      %v1740 = vunpack.c.l.b16 %v1589
      %v1741 = vunpack.c.l.b16 %v1590
      %v1742 = vunpack.c.l.b16 %v1591
      %v1743 = vunpack.c.l.b16 %v1592
      %v1744 = vunpack.c.l.b16 %v1593
      %v1745 = vunpack.c.l.b16 %v1594
      %v1746 = vunpack.c.l.b16 %v1595
      %v1747 = vunpack.c.l.b16 %v1596
      %v1748 = vunpack.c.l.b16 %v1597
      %v1749 = vunpack.c.l.b16 %v1598
      %v1750 = vunpack.c.l.b16 %v1599
      %v1751 = vunpack.c.l.b16 %v1600
      %v1752 = vunpack.c.l.b16 %v1601
      %v1753 = vunpack.c.l.b16 %v1602
      %v1754 = vunpack.c.l.b16 %v1603
      %v1755 = vunpack.c.l.b16 %v1604
      %v1756 = vunpack.c.l.b16 %v1605
      %v1757 = vunpack.c.l.b16 %v1606
      %v1758 = vunpack.c.l.b16 %v1607
      %v1759 = vunpack.c.l.b16 %v1608
      %v1760 = vunpack.c.l.b16 %v1609
      %v1761 = vunpack.c.l.b16 %v1610
      %v1762 = vunpack.c.l.b16 %v1611
      %v1763 = vunpack.c.l.b16 %v1612
      %v1764 = vunpack.c.l.b16 %v1613
      %v1765 = vunpack.c.l.b16 %v1614
      %v1766 = vunpack.c.l.b16 %v1615
      %v1767 = vunpack.c.l.b16 %v1616
      %v1768 = vunpack.c.l.b16 %v1617
      %v1769 = vunpack.c.l.b16 %v1618
      %v1770 = vunpack.c.l.b16 %v1619
      %v1771 = vunpack.c.l.b16 %v1620
      %v1772 = vunpack.c.l.b16 %v1621
      %v1773 = vunpack.c.l.b16 %v1622
      %v1774 = vunpack.c.l.b16 %v1623
      %v1775 = vunpack.c.l.b16 %v1624
      %v1776 = vunpack.c.l.b16 %v1625
      %v1777 = vunpack.c.l.b16 %v1626
      %v1778 = vpack.c.b16 %v1707, %v1706
      %v1779 = vpack.c.b16 %v1709, %v1708
      %v1780 = vpack.c.b16 %v1711, %v1710
      %v1781 = vpack.c.b16 %v1713, %v1712
      %v1782 = vpack.c.b16 %v1715, %v1714
      %v1783 = vpack.c.b16 %v1717, %v1716
      %v1784 = vpack.c.b16 %v1719, %v1718
      %v1785 = vpack.c.b16 %v1721, %v1720
      %v1786 = vpack.c.b16 %v1723, %v1722
      %v1787 = vpack.c.b16 %v1725, %v1724
      %v1788 = vpack.c.b16 %v1727, %v1726
      %v1789 = vpack.c.b16 %v1729, %v1728
      %v1790 = vpack.c.b16 %v1731, %v1730
      %v1791 = vpack.c.b16 %v1733, %v1732
      %v1792 = vpack.c.b16 %v1735, %v1734
      %v1793 = vpack.c.b16 %v1737, %v1736
      %v1794 = vpack.c.b16 %v1739, %v1738
      %v1795 = vpack.c.b16 %v1741, %v1740
      %v1796 = vpack.c.b16 %v1743, %v1742
      %v1797 = vpack.c.b16 %v1745, %v1744
      %v1798 = vpack.c.b16 %v1747, %v1746
      %v1799 = vpack.c.b16 %v1749, %v1748
      %v1800 = vpack.c.b16 %v1751, %v1750
      %v1801 = vpack.c.b16 %v1753, %v1752
      %v1802 = vpack.c.b16 %v1755, %v1754
      %v1803 = vpack.c.b16 %v1757, %v1756
      %v1804 = vpack.c.b16 %v1759, %v1758
      %v1805 = vpack.c.b16 %v1761, %v1760
      %v1806 = vpack.c.b16 %v1763, %v1762
      %v1807 = vpack.c.b16 %v1765, %v1764
      %v1808 = vpack.c.b16 %v1767, %v1766
      %v1809 = vpack.c.b16 %v1769, %v1768
      %v1810 = vpack.c.b16 %v1771, %v1770
      %v1811 = vpack.c.b16 %v1773, %v1772
      %v1812 = vpack.c.b16 %v1775, %v1774
      %v1813 = vpack.c.b16 %v1777, %v1776
      %v1851 = vsel %vm455, %v1539, 0
      %v1854 = vsel %vm455, %v1544, 0
      %v1857 = vsel %vm455, %v1549, 0
      %v1860 = vsel %vm455, %v1554, 0
      %1862 = vmatprep.subr.bf16.mxu0 0
      %1863 = vmatpush1.bf16.msra.mxu0 %v1778
      %1864 = vmatprep.subr.bf16.mxu0 0
      %1865 = vmatpush1.bf16.msra.mxu0 %v1779
      %1866 = vmatprep.subr.bf16.mxu0 0
      %1867 = vmatpush1.bf16.msra.mxu0 %v1780
      %1868 = vmatprep.subr.bf16.mxu0 0
      %1869 = vmatpush1.bf16.msra.mxu0 %v1781
      %1870 = vmatprep.subr.bf16.mxu0 0
      %1871 = vmatpush1.bf16.msra.mxu0 %v1782
      %1872 = vmatprep.subr.bf16.mxu0 0
      %1873 = vmatpush1.bf16.msra.mxu0 %v1783
      %1874 = vmatprep.subr.bf16.mxu0 0
      %1875 = vmatpush1.bf16.msra.mxu0 %v1784
      %1876 = vmatprep.subr.bf16.mxu0 0
      %1877 = vmatpush1.bf16.msra.mxu0 %v1785
      %1878 = vmatprep.subr.bf16.mxu0 0
      %1879 = vmatpush1.bf16.msra.mxu0 %v1786
      %1880 = vmatprep.subr.bf16.mxu0 0
      %1881 = vmatpush1.bf16.msra.mxu0 %v1787
      %1882 = vmatprep.subr.bf16.mxu0 0
      %1883 = vmatpush1.bf16.msra.mxu0 %v1788
      %1884 = vmatprep.subr.bf16.mxu0 0
      %1885 = vmatpush1.bf16.msra.mxu0 %v1789
      %1886 = vmatprep.subr.bf16.mxu0 0
      %1887 = vmatpush1.bf16.msra.mxu0 %v1790
      %1888 = vmatprep.subr.bf16.mxu0 0
      %1889 = vmatpush1.bf16.msra.mxu0 %v1791
      %1890 = vmatprep.subr.bf16.mxu0 0
      %1891 = vmatpush1.bf16.msra.mxu0 %v1792
      %1892 = vmatprep.subr.bf16.mxu0 0
      %1893 = vmatpush1.bf16.msra.mxu0 %v1793
      %1894 = vmatprep.mubr.bf16.mxu0 %v1536
      %1895 = vmatmul.mubr.bf16.gmra.mrb[0].mxu0 %v1535
      %v1896 = vpop.f32.mrb[0].mxu0
      %v1897 = vadd.f32 %v1632, %v1896
      %v1898 = vpop.f32.mrb[0].mxu0
      %v1899 = vpop.f32.mrb[0].mxu0
      %v1900 = vadd.f32 %v1632, %v1899
      %v1901 = vpop.f32.mrb[0].mxu0
      %1902 = vmatprep.mubr.bf16.mxu0 %v1541
      %1903 = vmatmul.mubr.bf16.gmra.mrb[0].mxu0 %v1540
      %v1904 = vpop.f32.mrb[0].mxu0
      %v1905 = vadd.f32 %v1632, %v1904
      %v1906 = vpop.f32.mrb[0].mxu0
      %v1907 = vpop.f32.mrb[0].mxu0
      %v1908 = vadd.f32 %v1632, %v1907
      %v1909 = vpop.f32.mrb[0].mxu0
      %1910 = vmatprep.mubr.bf16.mxu0 %v1546
      %1911 = vmatmul.mubr.bf16.gmra.mrb[0].mxu0 %v1545
      %v1912 = vpop.f32.mrb[0].mxu0
      %v1913 = vadd.f32 %v1632, %v1912
      %v1914 = vpop.f32.mrb[0].mxu0
      %v1915 = vpop.f32.mrb[0].mxu0
      %v1916 = vadd.f32 %v1632, %v1915
      %v1917 = vpop.f32.mrb[0].mxu0
      %1918 = vmatprep.mubr.bf16.mxu0 %v1551
      %1919 = vmatmul.mubr.bf16.gmra.mrb[0].mxu0 %v1550
      %v1920 = vpop.f32.mrb[0].mxu0
      %v1921 = vadd.f32 %v1632, %v1920
      %v1922 = vpop.f32.mrb[0].mxu0
      %v1923 = vpop.f32.mrb[0].mxu0
      %v1924 = vadd.f32 %v1632, %v1923
      %v1925 = vpop.f32.mrb[0].mxu0
      %1926 = vdwg.mxu0
      %1927 = vmatprep.subr.bf16.mxu0 0
      %1928 = vmatpush1.bf16.msra.mxu0 %v1794
      %1929 = vmatprep.subr.bf16.mxu0 0
      %1930 = vmatpush1.bf16.msra.mxu0 %v1795
      %1931 = vmatprep.subr.bf16.mxu0 0
      %1932 = vmatpush1.bf16.msra.mxu0 %v1796
      %1933 = vmatprep.subr.bf16.mxu0 0
      %1934 = vmatpush1.bf16.msra.mxu0 %v1797
      %1935 = vmatprep.subr.bf16.mxu0 0
      %1936 = vmatpush1.bf16.msra.mxu0 %v1798
      %1937 = vmatprep.subr.bf16.mxu0 0
      %1938 = vmatpush1.bf16.msra.mxu0 %v1799
      %1939 = vmatprep.subr.bf16.mxu0 0
      %1940 = vmatpush1.bf16.msra.mxu0 %v1800
      %1941 = vmatprep.subr.bf16.mxu0 0
      %1942 = vmatpush1.bf16.msra.mxu0 %v1801
      %1943 = vmatprep.subr.bf16.mxu0 0
      %1944 = vmatpush1.bf16.msra.mxu0 %v1802
      %1945 = vmatprep.subr.bf16.mxu0 0
      %1946 = vmatpush1.bf16.msra.mxu0 %v1803
      %1947 = vmatprep.subr.bf16.mxu0 0
      %1948 = vmatpush1.bf16.msra.mxu0 %v1804
      %1949 = vmatprep.subr.bf16.mxu0 0
      %1950 = vmatpush1.bf16.msra.mxu0 %v1805
      %1951 = vmatprep.subr.bf16.mxu0 0
      %1952 = vmatpush1.bf16.msra.mxu0 %v1806
      %1953 = vmatprep.subr.bf16.mxu0 0
      %1954 = vmatpush1.bf16.msra.mxu0 %v1807
      %1955 = vmatprep.subr.bf16.mxu0 0
      %1956 = vmatpush1.bf16.msra.mxu0 %v1808
      %1957 = vmatprep.subr.bf16.mxu0 0
      %1958 = vmatpush1.bf16.msra.mxu0 %v1809
      %1959 = vmatprep.mubr.bf16.mxu0 %v1538
      %1960 = vmatmul.mubr.bf16.gmra.mrb[0].mxu0 %v1537
      %v1961 = vpop.f32.mrb[0].mxu0
      %v1962 = vadd.f32 %v1897, %v1961
      %v1963 = vpop.f32.mrb[0].mxu0
      %v1964 = vpop.f32.mrb[0].mxu0
      %v1965 = vadd.f32 %v1900, %v1964
      %v1966 = vpop.f32.mrb[0].mxu0
      %1967 = vmatprep.mubr.bf16.mxu0 %v1543
      %1968 = vmatmul.mubr.bf16.gmra.mrb[0].mxu0 %v1542
      %v1969 = vpop.f32.mrb[0].mxu0
      %v1970 = vadd.f32 %v1905, %v1969
      %v1971 = vpop.f32.mrb[0].mxu0
      %v1972 = vpop.f32.mrb[0].mxu0
      %v1973 = vadd.f32 %v1908, %v1972
      %v1974 = vpop.f32.mrb[0].mxu0
      %1975 = vmatprep.mubr.bf16.mxu0 %v1548
      %1976 = vmatmul.mubr.bf16.gmra.mrb[0].mxu0 %v1547
      %v1977 = vpop.f32.mrb[0].mxu0
      %v1978 = vadd.f32 %v1913, %v1977
      %v1979 = vpop.f32.mrb[0].mxu0
      %v1980 = vpop.f32.mrb[0].mxu0
      %v1981 = vadd.f32 %v1916, %v1980
      %v1982 = vpop.f32.mrb[0].mxu0
      %1983 = vmatprep.mubr.bf16.mxu0 %v1553
      %1984 = vmatmul.mubr.bf16.gmra.mrb[0].mxu0 %v1552
      %v1985 = vpop.f32.mrb[0].mxu0
      %v1986 = vadd.f32 %v1921, %v1985
      %v1987 = vpop.f32.mrb[0].mxu0
      %v1988 = vpop.f32.mrb[0].mxu0
      %v1989 = vadd.f32 %v1924, %v1988
      %v1990 = vpop.f32.mrb[0].mxu0
      %1991 = vdwg.mxu0
      %1992 = vmatprep.subr.bf16.mxu0 0
      %1993 = vmatpush1.bf16.msra.mxu0 %v1810
      %1994 = vmatprep.subr.bf16.mxu0 0
      %1995 = vmatpush1.bf16.msra.mxu0 %v1811
      %1996 = vmatprep.subr.bf16.mxu0 0
      %1997 = vmatpush1.bf16.msra.mxu0 %v1812
      %1998 = vmatprep.subr.bf16.mxu0 0
      %1999 = vmatpush1.bf16.msra.mxu0 %v1813
      %2000 = vmatprep.subr.bf16.mxu0 0
      %2001 = vmatpush1.bf16.msra.mxu0 0
      %2002 = vmatprep.subr.bf16.mxu0 0
      %2003 = vmatpush1.bf16.msra.mxu0 0
      %2004 = vmatprep.subr.bf16.mxu0 0
      %2005 = vmatpush1.bf16.msra.mxu0 0
      %2006 = vmatprep.subr.bf16.mxu0 0
      %2007 = vmatpush1.bf16.msra.mxu0 0
      %2008 = vmatprep.subr.bf16.mxu0 0
      %2009 = vmatpush1.bf16.msra.mxu0 0
      %2010 = vmatprep.subr.bf16.mxu0 0
      %2011 = vmatpush1.bf16.msra.mxu0 0
      %2012 = vmatprep.subr.bf16.mxu0 0
      %2013 = vmatpush1.bf16.msra.mxu0 0
      %2014 = vmatprep.subr.bf16.mxu0 0
      %2015 = vmatpush1.bf16.msra.mxu0 0
      %2016 = vmatprep.subr.bf16.mxu0 0
      %2017 = vmatpush1.bf16.msra.mxu0 0
      %2018 = vmatprep.subr.bf16.mxu0 0
      %2019 = vmatpush1.bf16.msra.mxu0 0
      %2020 = vmatprep.subr.bf16.mxu0 0
      %2021 = vmatpush1.bf16.msra.mxu0 0
      %2022 = vmatprep.subr.bf16.mxu0 0
      %2023 = vmatpush1.bf16.msra.mxu0 0
      %2024 = vmatprep.mubr.bf16.mxu0 0
      %2025 = vmatmul.mubr.bf16.gmra.mrb[0].mxu0 %v1851
      %v2026 = vpop.f32.mrb[0].mxu0
      %v2027 = vadd.f32 %v1962, %v2026
      %v2028 = vpop.f32.mrb[0].mxu0
      %v2029 = vpop.f32.mrb[0].mxu0
      %v2030 = vadd.f32 %v1965, %v2029
      %v2031 = vpop.f32.mrb[0].mxu0
      %2032 = vmatprep.mubr.bf16.mxu0 0
      %2033 = vmatmul.mubr.bf16.gmra.mrb[0].mxu0 %v1854
      %v2034 = vpop.f32.mrb[0].mxu0
      %v2035 = vadd.f32 %v1970, %v2034
      %v2036 = vpop.f32.mrb[0].mxu0
      %v2037 = vpop.f32.mrb[0].mxu0
      %v2038 = vadd.f32 %v1973, %v2037
      %v2039 = vpop.f32.mrb[0].mxu0
      %2040 = vmatprep.mubr.bf16.mxu0 0
      %2041 = vmatmul.mubr.bf16.gmra.mrb[0].mxu0 %v1857
      %v2042 = vpop.f32.mrb[0].mxu0
      %v2043 = vadd.f32 %v1978, %v2042
      %v2044 = vpop.f32.mrb[0].mxu0
      %v2045 = vpop.f32.mrb[0].mxu0
      %v2046 = vadd.f32 %v1981, %v2045
      %v2047 = vpop.f32.mrb[0].mxu0
      %2048 = vmatprep.mubr.bf16.mxu0 0
      %2049 = vmatmul.mubr.bf16.gmra.mrb[0].mxu0 %v1860
      %v2050 = vpop.f32.mrb[0].mxu0
      %v2051 = vadd.f32 %v1986, %v2050
      %v2052 = vpop.f32.mrb[0].mxu0
      %v2053 = vpop.f32.mrb[0].mxu0
      %v2054 = vadd.f32 %v1989, %v2053
      %v2055 = vpop.f32.mrb[0].mxu0
      %2056 = vdwg.mxu0
      %v2057 = vadd.f32 %v2027, %v468
      %v2058 = vadd.f32 %v2030, %v469
      %v2059 = vadd.f32 %v2035, %v470
      %v2060 = vadd.f32 %v2038, %v471
      %v2061 = vadd.f32 %v2043, %v472
      %v2062 = vadd.f32 %v2046, %v473
      %v2063 = vadd.f32 %v2051, %v474
      %v2064 = vadd.f32 %v2054, %v475
      %v2065 = vmax.f32 %v2057, 0.0
      %v2066 = vmax.f32 %v2058, 0.0
      %v2067 = vmax.f32 %v2059, 0.0
      %v2068 = vmax.f32 %v2060, 0.0
      %v2069 = vmax.f32 %v2061, 0.0
      %v2070 = vmax.f32 %v2062, 0.0
      %v2071 = vmax.f32 %v2063, 0.0
      %v2072 = vmax.f32 %v2064, 0.0
      %2073 = vst.msk [vmem:[#allocation2 + $0x10] sm:$0xff] %vm455, %v2065
      %2074 = vst.msk [vmem:[#allocation2 + $0x18] sm:$0xff] %vm455, %v2066
      %2075 = vst.msk [vmem:[#allocation2 + $0x20] sm:$0xff] %vm455, %v2067
      %2076 = vst.msk [vmem:[#allocation2 + $0x28] sm:$0xff] %vm455, %v2068
      %2077 = vst.msk [vmem:[#allocation2 + $0x30] sm:$0xff] %vm455, %v2069
      %2078 = vst.msk [vmem:[#allocation2 + $0x38] sm:$0xff] %vm455, %v2070
      %2079 = vst.msk [vmem:[#allocation2 + $0x40] sm:$0xff] %vm455, %v2071
      %2080 = vst.msk [vmem:[#allocation2 + $0x48] sm:$0xff] %vm455, %v2072
      %v2081 = vld [vmem:[#allocation2 + $0x7] sm:$0xff]
      %v2082 = vld [vmem:[#allocation2 + $0xf] sm:$0xff]
      %v2083 = vld [vmem:[#allocation2 + $0x17] sm:$0xff]
      %v2084 = vld [vmem:[#allocation2 + $0x1f] sm:$0xff]
      %v2085 = vld [vmem:[#allocation2 + $0x27] sm:$0xff]
      %v2086 = vld [vmem:[#allocation2 + $0x2f] sm:$0xff]
      %v2087 = vld [vmem:[#allocation2 + $0x37] sm:$0xff]
      %v2088 = vld [vmem:[#allocation2 + $0x3f] sm:$0xff]
      %v2089 = vsel %vm439, %v2081, 0.0
      %v2090 = vsel %vm440, %v2082, 0.0
      %v2091 = vsel %vm441, %v2083, 0.0
      %v2092 = vsel %vm442, %v2084, 0.0
      %v2093 = vsel %vm443, %v2085, 0.0
      %v2094 = vsel %vm444, %v2086, 0.0
      %v2095 = vsel %vm445, %v2087, 0.0
      %v2096 = vsel %vm446, %v2088, 0.0
      %v2097 = vpack.c.bf16 %v2090, %v2089
      %v2098 = vpack.c.bf16 %v2092, %v2091
      %v2099 = vpack.c.bf16 %v2094, %v2093
      %v2100 = vpack.c.bf16 %v2096, %v2095
      %2101 = vst.msk [vmem:[#allocation3] sm:$0xff] %vm455, %v2097
      %2102 = vst.msk [vmem:[#allocation3 + $0x28] sm:$0xff] %vm455, %v2098
      %2103 = vst.msk [vmem:[#allocation3 + $0x50] sm:$0xff] %vm455, %v2099
      %2104 = vst.msk [vmem:[#allocation3 + $0x78] sm:$0xff] %vm455, %v2100
      %v2105 = vld [vmem:[#allocation2 + $0x8] sm:$0xff]
      %v2106 = vld [vmem:[#allocation2 + $0x10] sm:$0xff]
      %v2107 = vld [vmem:[#allocation2 + $0x18] sm:$0xff]
      %v2108 = vld [vmem:[#allocation2 + $0x20] sm:$0xff]
      %v2109 = vld [vmem:[#allocation2 + $0x28] sm:$0xff]
      %v2110 = vld [vmem:[#allocation2 + $0x30] sm:$0xff]
      %v2111 = vld [vmem:[#allocation2 + $0x38] sm:$0xff]
      %v2112 = vld [vmem:[#allocation2 + $0x40] sm:$0xff]
      %v2113 = vpack.c.bf16 %v2106, %v2105
      %v2114 = vpack.c.bf16 %v2108, %v2107
      %v2115 = vpack.c.bf16 %v2110, %v2109
      %v2116 = vpack.c.bf16 %v2112, %v2111
      %2121 = vrot.lane.b32.xlu0 %v2113, 64
      %v2122 = vpop.permute.xlu0 %2121
      %2123 = vrot.lane.b32.xlu0 %v2114, 64
      %v2124 = vpop.permute.xlu0 %2123
      %2125 = vrot.lane.b32.xlu0 %v2115, 64
      %v2126 = vpop.permute.xlu0 %2125
      %2127 = vrot.lane.b32.xlu0 %v2116, 64
      %v2128 = vpop.permute.xlu0 %2127
      %2133 = vst.msk [vmem:[#allocation3] sm:$0xff] %vm536, %v2122
      %2134 = vst.msk [vmem:[#allocation3 + $0x28] sm:$0xff] %vm536, %v2124
      %2135 = vst.msk [vmem:[#allocation3 + $0x50] sm:$0xff] %vm536, %v2126
      %2136 = vst.msk [vmem:[#allocation3 + $0x78] sm:$0xff] %vm536, %v2128
      %v2137 = vld [vmem:[#allocation2 + $0x9] sm:$0xff]
      %v2138 = vld [vmem:[#allocation2 + $0x11] sm:$0xff]
      %v2139 = vld [vmem:[#allocation2 + $0x19] sm:$0xff]
      %v2140 = vld [vmem:[#allocation2 + $0x21] sm:$0xff]
      %v2141 = vld [vmem:[#allocation2 + $0x29] sm:$0xff]
      %v2142 = vld [vmem:[#allocation2 + $0x31] sm:$0xff]
      %v2143 = vld [vmem:[#allocation2 + $0x39] sm:$0xff]
      %v2144 = vld [vmem:[#allocation2 + $0x41] sm:$0xff]
      %v2145 = vsel %vm447, %v2137, 0.0
      %v2146 = vsel %vm448, %v2138, 0.0
      %v2147 = vsel %vm449, %v2139, 0.0
      %v2148 = vsel %vm450, %v2140, 0.0
      %v2149 = vsel %vm451, %v2141, 0.0
      %v2150 = vsel %vm452, %v2142, 0.0
      %v2151 = vsel %vm453, %v2143, 0.0
      %v2152 = vsel %vm454, %v2144, 0.0
      %v2153 = vpack.c.bf16 %v2146, %v2145
      %v2154 = vpack.c.bf16 %v2148, %v2147
      %v2155 = vpack.c.bf16 %v2150, %v2149
      %v2156 = vpack.c.bf16 %v2152, %v2151
      %2157 = vst.msk [vmem:[#allocation3 + $0x8] sm:$0xff] %vm455, %v2153
      %2158 = vst.msk [vmem:[#allocation3 + $0x30] sm:$0xff] %vm455, %v2154
      %2159 = vst.msk [vmem:[#allocation3 + $0x58] sm:$0xff] %vm455, %v2155
      %2160 = vst.msk [vmem:[#allocation3 + $0x80] sm:$0xff] %vm455, %v2156
      %v2161 = vld [vmem:[#allocation2 + $0xf] sm:$0xff]
      %v2162 = vld [vmem:[#allocation2 + $0x17] sm:$0xff]
      %v2163 = vld [vmem:[#allocation2 + $0x1f] sm:$0xff]
      %v2164 = vld [vmem:[#allocation2 + $0x27] sm:$0xff]
      %v2165 = vld [vmem:[#allocation2 + $0x2f] sm:$0xff]
      %v2166 = vld [vmem:[#allocation2 + $0x37] sm:$0xff]
      %v2167 = vld [vmem:[#allocation2 + $0x3f] sm:$0xff]
      %v2168 = vld [vmem:[#allocation2 + $0x47] sm:$0xff]
      %v2169 = vsel %vm439, %v2161, 0.0
      %v2170 = vsel %vm440, %v2162, 0.0
      %v2171 = vsel %vm441, %v2163, 0.0
      %v2172 = vsel %vm442, %v2164, 0.0
      %v2173 = vsel %vm443, %v2165, 0.0
      %v2174 = vsel %vm444, %v2166, 0.0
      %v2175 = vsel %vm445, %v2167, 0.0
      %v2176 = vsel %vm446, %v2168, 0.0
      %v2177 = vpack.c.bf16 %v2170, %v2169
      %v2178 = vpack.c.bf16 %v2172, %v2171
      %v2179 = vpack.c.bf16 %v2174, %v2173
      %v2180 = vpack.c.bf16 %v2176, %v2175
      %2185 = vrot.lane.b32.xlu0 %v2177, 64
      %v2186 = vpop.permute.xlu0 %2185
      %2187 = vrot.lane.b32.xlu0 %v2178, 64
      %v2188 = vpop.permute.xlu0 %2187
      %2189 = vrot.lane.b32.xlu0 %v2179, 64
      %v2190 = vpop.permute.xlu0 %2189
      %2191 = vrot.lane.b32.xlu0 %v2180, 64
      %v2192 = vpop.permute.xlu0 %2191
      %2197 = vst.msk [vmem:[#allocation3 + $0x8] sm:$0xff] %vm536, %v2186
      %2198 = vst.msk [vmem:[#allocation3 + $0x30] sm:$0xff] %vm536, %v2188
      %2199 = vst.msk [vmem:[#allocation3 + $0x58] sm:$0xff] %vm536, %v2190
      %2200 = vst.msk [vmem:[#allocation3 + $0x80] sm:$0xff] %vm536, %v2192
      %v2201 = vld [vmem:[#allocation2 + $0x10] sm:$0xff]
      %v2202 = vld [vmem:[#allocation2 + $0x18] sm:$0xff]
      %v2203 = vld [vmem:[#allocation2 + $0x20] sm:$0xff]
      %v2204 = vld [vmem:[#allocation2 + $0x28] sm:$0xff]
      %v2205 = vld [vmem:[#allocation2 + $0x30] sm:$0xff]
      %v2206 = vld [vmem:[#allocation2 + $0x38] sm:$0xff]
      %v2207 = vld [vmem:[#allocation2 + $0x40] sm:$0xff]
      %v2208 = vld [vmem:[#allocation2 + $0x48] sm:$0xff]
      %v2209 = vpack.c.bf16 %v2202, %v2201
      %v2210 = vpack.c.bf16 %v2204, %v2203
      %v2211 = vpack.c.bf16 %v2206, %v2205
      %v2212 = vpack.c.bf16 %v2208, %v2207
      %2213 = vst.msk [vmem:[#allocation3 + $0x10] sm:$0xff] %vm455, %v2209
      %2214 = vst.msk [vmem:[#allocation3 + $0x38] sm:$0xff] %vm455, %v2210
      %2215 = vst.msk [vmem:[#allocation3 + $0x60] sm:$0xff] %vm455, %v2211
      %2216 = vst.msk [vmem:[#allocation3 + $0x88] sm:$0xff] %vm455, %v2212
      %v2217 = vld [vmem:[#allocation2 + $0x11] sm:$0xff]
      %v2218 = vld [vmem:[#allocation2 + $0x19] sm:$0xff]
      %v2219 = vld [vmem:[#allocation2 + $0x21] sm:$0xff]
      %v2220 = vld [vmem:[#allocation2 + $0x29] sm:$0xff]
      %v2221 = vld [vmem:[#allocation2 + $0x31] sm:$0xff]
      %v2222 = vld [vmem:[#allocation2 + $0x39] sm:$0xff]
      %v2223 = vld [vmem:[#allocation2 + $0x41] sm:$0xff]
      %v2224 = vld [vmem:[#allocation2 + $0x49] sm:$0xff]
      %v2225 = vsel %vm447, %v2217, 0.0
      %v2226 = vsel %vm448, %v2218, 0.0
      %v2227 = vsel %vm449, %v2219, 0.0
      %v2228 = vsel %vm450, %v2220, 0.0
      %v2229 = vsel %vm451, %v2221, 0.0
      %v2230 = vsel %vm452, %v2222, 0.0
      %v2231 = vsel %vm453, %v2223, 0.0
      %v2232 = vsel %vm454, %v2224, 0.0
      %v2233 = vpack.c.bf16 %v2226, %v2225
      %v2234 = vpack.c.bf16 %v2228, %v2227
      %v2235 = vpack.c.bf16 %v2230, %v2229
      %v2236 = vpack.c.bf16 %v2232, %v2231
      %2241 = vrot.lane.b32.xlu0 %v2233, 64
      %v2242 = vpop.permute.xlu0 %2241
      %2243 = vrot.lane.b32.xlu0 %v2234, 64
      %v2244 = vpop.permute.xlu0 %2243
      %2245 = vrot.lane.b32.xlu0 %v2235, 64
      %v2246 = vpop.permute.xlu0 %2245
      %2247 = vrot.lane.b32.xlu0 %v2236, 64
      %v2248 = vpop.permute.xlu0 %2247
      %2253 = vst.msk [vmem:[#allocation3 + $0x10] sm:$0xff] %vm536, %v2242
      %2254 = vst.msk [vmem:[#allocation3 + $0x38] sm:$0xff] %vm536, %v2244
      %2255 = vst.msk [vmem:[#allocation3 + $0x60] sm:$0xff] %vm536, %v2246
      %2256 = vst.msk [vmem:[#allocation3 + $0x88] sm:$0xff] %vm536, %v2248
      %v2257 = vld [vmem:[#allocation2 + $0x17] sm:$0xff]
      %v2258 = vld [vmem:[#allocation2 + $0x1f] sm:$0xff]
      %v2259 = vld [vmem:[#allocation2 + $0x27] sm:$0xff]
      %v2260 = vld [vmem:[#allocation2 + $0x2f] sm:$0xff]
      %v2261 = vld [vmem:[#allocation2 + $0x37] sm:$0xff]
      %v2262 = vld [vmem:[#allocation2 + $0x3f] sm:$0xff]
      %v2263 = vld [vmem:[#allocation2 + $0x47] sm:$0xff]
      %v2264 = vld [vmem:[#allocation2 + $0x4f] sm:$0xff]
      %v2265 = vsel %vm439, %v2257, 0.0
      %v2266 = vsel %vm440, %v2258, 0.0
      %v2267 = vsel %vm441, %v2259, 0.0
      %v2268 = vsel %vm442, %v2260, 0.0
      %v2269 = vsel %vm443, %v2261, 0.0
      %v2270 = vsel %vm444, %v2262, 0.0
      %v2271 = vsel %vm445, %v2263, 0.0
      %v2272 = vsel %vm446, %v2264, 0.0
      %v2273 = vpack.c.bf16 %v2266, %v2265
      %v2274 = vpack.c.bf16 %v2268, %v2267
      %v2275 = vpack.c.bf16 %v2270, %v2269
      %v2276 = vpack.c.bf16 %v2272, %v2271
      %2277 = vst.msk [vmem:[#allocation3 + $0x18] sm:$0xff] %vm455, %v2273
      %2278 = vst.msk [vmem:[#allocation3 + $0x40] sm:$0xff] %vm455, %v2274
      %2279 = vst.msk [vmem:[#allocation3 + $0x68] sm:$0xff] %vm455, %v2275
      %2280 = vst.msk [vmem:[#allocation3 + $0x90] sm:$0xff] %vm455, %v2276
      %v2281 = vld [vmem:[#allocation2 + $0x18] sm:$0xff]
      %v2282 = vld [vmem:[#allocation2 + $0x20] sm:$0xff]
      %v2283 = vld [vmem:[#allocation2 + $0x28] sm:$0xff]
      %v2284 = vld [vmem:[#allocation2 + $0x30] sm:$0xff]
      %v2285 = vld [vmem:[#allocation2 + $0x38] sm:$0xff]
      %v2286 = vld [vmem:[#allocation2 + $0x40] sm:$0xff]
      %v2287 = vld [vmem:[#allocation2 + $0x48] sm:$0xff]
      %v2288 = vld [vmem:[#allocation2 + $0x50] sm:$0xff]
      %v2289 = vpack.c.bf16 %v2282, %v2281
      %v2290 = vpack.c.bf16 %v2284, %v2283
      %v2291 = vpack.c.bf16 %v2286, %v2285
      %v2292 = vpack.c.bf16 %v2288, %v2287
      %2297 = vrot.lane.b32.xlu0 %v2289, 64
      %v2298 = vpop.permute.xlu0 %2297
      %2299 = vrot.lane.b32.xlu0 %v2290, 64
      %v2300 = vpop.permute.xlu0 %2299
      %2301 = vrot.lane.b32.xlu0 %v2291, 64
      %v2302 = vpop.permute.xlu0 %2301
      %2303 = vrot.lane.b32.xlu0 %v2292, 64
      %v2304 = vpop.permute.xlu0 %2303
      %2309 = vst.msk [vmem:[#allocation3 + $0x18] sm:$0xff] %vm536, %v2298
      %2310 = vst.msk [vmem:[#allocation3 + $0x40] sm:$0xff] %vm536, %v2300
      %2311 = vst.msk [vmem:[#allocation3 + $0x68] sm:$0xff] %vm536, %v2302
      %2312 = vst.msk [vmem:[#allocation3 + $0x90] sm:$0xff] %vm536, %v2304
      %v2313 = vld [vmem:[#allocation2 + $0x19] sm:$0xff]
      %v2314 = vld [vmem:[#allocation2 + $0x21] sm:$0xff]
      %v2315 = vld [vmem:[#allocation2 + $0x29] sm:$0xff]
      %v2316 = vld [vmem:[#allocation2 + $0x31] sm:$0xff]
      %v2317 = vld [vmem:[#allocation2 + $0x39] sm:$0xff]
      %v2318 = vld [vmem:[#allocation2 + $0x41] sm:$0xff]
      %v2319 = vld [vmem:[#allocation2 + $0x49] sm:$0xff]
      %v2320 = vld [vmem:[#allocation2 + $0x51] sm:$0xff]
      %v2321 = vsel %vm447, %v2313, 0.0
      %v2322 = vsel %vm448, %v2314, 0.0
      %v2323 = vsel %vm449, %v2315, 0.0
      %v2324 = vsel %vm450, %v2316, 0.0
      %v2325 = vsel %vm451, %v2317, 0.0
      %v2326 = vsel %vm452, %v2318, 0.0
      %v2327 = vsel %vm453, %v2319, 0.0
      %v2328 = vsel %vm454, %v2320, 0.0
      %v2329 = vpack.c.bf16 %v2322, %v2321
      %v2330 = vpack.c.bf16 %v2324, %v2323
      %v2331 = vpack.c.bf16 %v2326, %v2325
      %v2332 = vpack.c.bf16 %v2328, %v2327
      %2333 = vst.msk [vmem:[#allocation3 + $0x20] sm:$0xff] %vm455, %v2329
      %2334 = vst.msk [vmem:[#allocation3 + $0x48] sm:$0xff] %vm455, %v2330
      %2335 = vst.msk [vmem:[#allocation3 + $0x70] sm:$0xff] %vm455, %v2331
      %2336 = vst.msk [vmem:[#allocation3 + $0x98] sm:$0xff] %vm455, %v2332
      %v2337 = vld [vmem:[#allocation3] sm:$0xff]
      %v2338 = vld [vmem:[#allocation3 + $0x8] sm:$0xff]
      %v2339 = vld [vmem:[#allocation3 + $0x10] sm:$0xff]
      %v2340 = vld [vmem:[#allocation3 + $0x18] sm:$0xff]
      %v2341 = vld [vmem:[#allocation3 + $0x20] sm:$0xff]
      %v2342 = vld [vmem:[#allocation3 + $0x28] sm:$0xff]
      %v2343 = vld [vmem:[#allocation3 + $0x30] sm:$0xff]
      %v2344 = vld [vmem:[#allocation3 + $0x38] sm:$0xff]
      %v2345 = vld [vmem:[#allocation3 + $0x40] sm:$0xff]
      %v2346 = vld [vmem:[#allocation3 + $0x48] sm:$0xff]
      %v2347 = vld [vmem:[#allocation3 + $0x50] sm:$0xff]
      %v2348 = vld [vmem:[#allocation3 + $0x58] sm:$0xff]
      %v2349 = vld [vmem:[#allocation3 + $0x60] sm:$0xff]
      %v2350 = vld [vmem:[#allocation3 + $0x68] sm:$0xff]
      %v2351 = vld [vmem:[#allocation3 + $0x70] sm:$0xff]
      %v2352 = vld [vmem:[#allocation3 + $0x78] sm:$0xff]
      %v2353 = vld [vmem:[#allocation3 + $0x80] sm:$0xff]
      %v2354 = vld [vmem:[#allocation3 + $0x88] sm:$0xff]
      %v2355 = vld [vmem:[#allocation3 + $0x90] sm:$0xff]
      %v2356 = vld [vmem:[#allocation3 + $0x98] sm:$0xff]
      %v2357 = vld [vmem:[%s5] sm:$0xf]
      %v2358 = vld [vmem:[%s5 + $0x4] sm:$0xf]
      %v2359 = vld [vmem:[%s5 + $0x8] sm:$0xf]
      %v2360 = vld [vmem:[%s5 + $0xc] sm:$0xf]
      %v2361 = vld [vmem:[%s5 + $0x10] sm:$0xf]
      %v2362 = vld [vmem:[%s5 + $0x14] sm:$0xf]
      %v2363 = vld [vmem:[%s5 + $0x18] sm:$0xf]
      %v2364 = vld [vmem:[%s5 + $0x1c] sm:$0xf]
      %v2365 = vld [vmem:[%s5 + $0x20] sm:$0xf]
      %v2366 = vld [vmem:[%s5 + $0x24] sm:$0xf]
      %v2367 = vld [vmem:[%s5 + $0x28] sm:$0xf]
      %v2368 = vld [vmem:[%s5 + $0x2c] sm:$0xf]
      %v2369 = vld [vmem:[%s5 + $0x30] sm:$0xf]
      %v2370 = vld [vmem:[%s5 + $0x34] sm:$0xf]
      %v2371 = vld [vmem:[%s5 + $0x38] sm:$0xf]
      %v2372 = vld [vmem:[%s5 + $0x3c] sm:$0xf]
      %v2373 = vld [vmem:[%s5 + $0x40] sm:$0xf]
      %v2374 = vld [vmem:[%s5 + $0x44] sm:$0xf]
      %v2375 = vld [vmem:[%s5 + $0x48] sm:$0xf]
      %v2376 = vld [vmem:[%s5 + $0x4c] sm:$0xf]
      %v2377 = vld [vmem:[%s5 + $0x50] sm:$0xf]
      %v2378 = vld [vmem:[%s5 + $0x54] sm:$0xf]
      %v2379 = vld [vmem:[%s5 + $0x58] sm:$0xf]
      %v2380 = vld [vmem:[%s5 + $0x5c] sm:$0xf]
      %v2381 = vld [vmem:[%s5 + $0x60] sm:$0xf]
      %v2382 = vld [vmem:[%s5 + $0x64] sm:$0xf]
      %v2383 = vld [vmem:[%s5 + $0x68] sm:$0xf]
      %v2384 = vld [vmem:[%s5 + $0x6c] sm:$0xf]
      %v2385 = vld [vmem:[%s5 + $0x70] sm:$0xf]
      %v2386 = vld [vmem:[%s5 + $0x74] sm:$0xf]
      %v2387 = vld [vmem:[%s5 + $0x78] sm:$0xf]
      %v2388 = vld [vmem:[%s5 + $0x7c] sm:$0xf]
      %v2389 = vld [vmem:[%s5 + $0x80] sm:$0xf]
      %v2390 = vld [vmem:[%s5 + $0x84] sm:$0xf]
      %v2391 = vld [vmem:[%s5 + $0x88] sm:$0xf]
      %v2392 = vld [vmem:[%s5 + $0x8c] sm:$0xf]
      %v2393 = vld [vmem:[%s5 + $0x90] sm:$0xf]
      %v2394 = vld [vmem:[%s5 + $0x94] sm:$0xf]
      %v2395 = vld [vmem:[%s5 + $0x98] sm:$0xf]
      %v2396 = vld [vmem:[%s5 + $0x9c] sm:$0xf]
      %v2397 = vld [vmem:[%s5 + $0xa0] sm:$0xf]
      %v2398 = vld [vmem:[%s5 + $0xa4] sm:$0xf]
      %v2399 = vld [vmem:[%s5 + $0xa8] sm:$0xf]
      %v2400 = vld [vmem:[%s5 + $0xac] sm:$0xf]
      %v2401 = vld [vmem:[%s5 + $0xb0] sm:$0xf]
      %v2402 = vld [vmem:[%s5 + $0xb4] sm:$0xf]
      %v2403 = vld [vmem:[%s5 + $0xb8] sm:$0xf]
      %v2404 = vld [vmem:[%s5 + $0xbc] sm:$0xf]
      %v2405 = vld [vmem:[%s5 + $0xc0] sm:$0xf]
      %v2406 = vld [vmem:[%s5 + $0xc4] sm:$0xf]
      %v2407 = vld [vmem:[%s5 + $0xc8] sm:$0xf]
      %v2408 = vld [vmem:[%s5 + $0xcc] sm:$0xf]
      %v2409 = vld [vmem:[%s5 + $0xd0] sm:$0xf]
      %v2410 = vld [vmem:[%s5 + $0xd4] sm:$0xf]
      %v2411 = vld [vmem:[%s5 + $0xd8] sm:$0xf]
      %v2412 = vld [vmem:[%s5 + $0xdc] sm:$0xf]
      %v2413 = vld [vmem:[%s5 + $0xe0] sm:$0xf]
      %v2414 = vld [vmem:[%s5 + $0xe4] sm:$0xf]
      %v2415 = vld [vmem:[%s5 + $0xe8] sm:$0xf]
      %v2416 = vld [vmem:[%s5 + $0xec] sm:$0xf]
      %v2417 = vld [vmem:[%s5 + $0xf0] sm:$0xf]
      %v2418 = vld [vmem:[%s5 + $0xf4] sm:$0xf]
      %v2419 = vld [vmem:[%s5 + $0xf8] sm:$0xf]
      %v2420 = vld [vmem:[%s5 + $0xfc] sm:$0xf]
      %v2421 = vld [vmem:[%s5 + $0x100] sm:$0xf]
      %v2422 = vld [vmem:[%s5 + $0x104] sm:$0xf]
      %v2423 = vld [vmem:[%s5 + $0x108] sm:$0xf]
      %v2424 = vld [vmem:[%s5 + $0x10c] sm:$0xf]
      %v2425 = vld [vmem:[%s5 + $0x110] sm:$0xf]
      %v2426 = vld [vmem:[%s5 + $0x114] sm:$0xf]
      %v2427 = vld [vmem:[%s5 + $0x118] sm:$0xf]
      %v2428 = vld [vmem:[%s5 + $0x11c] sm:$0xf]
      %v2429 = vld [vmem:[%s6] sm:$0x1]
      %v2431 = vlaneseq
      %v2432 = vshrl.u32 %v2431, 7
      %v2433 = vsub.s32 0, %v2432
      %v2434 = vrot.slane %v2429, %v2433
      %v2508 = vunpack.c.l.b16 %v2357
      %v2509 = vunpack.c.l.b16 %v2358
      %v2510 = vunpack.c.l.b16 %v2359
      %v2511 = vunpack.c.l.b16 %v2360
      %v2512 = vunpack.c.l.b16 %v2361
      %v2513 = vunpack.c.l.b16 %v2362
      %v2514 = vunpack.c.l.b16 %v2363
      %v2515 = vunpack.c.l.b16 %v2364
      %v2516 = vunpack.c.l.b16 %v2365
      %v2517 = vunpack.c.l.b16 %v2366
      %v2518 = vunpack.c.l.b16 %v2367
      %v2519 = vunpack.c.l.b16 %v2368
      %v2520 = vunpack.c.l.b16 %v2369
      %v2521 = vunpack.c.l.b16 %v2370
      %v2522 = vunpack.c.l.b16 %v2371
      %v2523 = vunpack.c.l.b16 %v2372
      %v2524 = vunpack.c.l.b16 %v2373
      %v2525 = vunpack.c.l.b16 %v2374
      %v2526 = vunpack.c.l.b16 %v2375
      %v2527 = vunpack.c.l.b16 %v2376
      %v2528 = vunpack.c.l.b16 %v2377
      %v2529 = vunpack.c.l.b16 %v2378
      %v2530 = vunpack.c.l.b16 %v2379
      %v2531 = vunpack.c.l.b16 %v2380
      %v2532 = vunpack.c.l.b16 %v2381
      %v2533 = vunpack.c.l.b16 %v2382
      %v2534 = vunpack.c.l.b16 %v2383
      %v2535 = vunpack.c.l.b16 %v2384
      %v2536 = vunpack.c.l.b16 %v2385
      %v2537 = vunpack.c.l.b16 %v2386
      %v2538 = vunpack.c.l.b16 %v2387
      %v2539 = vunpack.c.l.b16 %v2388
      %v2540 = vunpack.c.l.b16 %v2389
      %v2541 = vunpack.c.l.b16 %v2390
      %v2542 = vunpack.c.l.b16 %v2391
      %v2543 = vunpack.c.l.b16 %v2392
      %v2544 = vunpack.c.l.b16 %v2393
      %v2545 = vunpack.c.l.b16 %v2394
      %v2546 = vunpack.c.l.b16 %v2395
      %v2547 = vunpack.c.l.b16 %v2396
      %v2548 = vunpack.c.l.b16 %v2397
      %v2549 = vunpack.c.l.b16 %v2398
      %v2550 = vunpack.c.l.b16 %v2399
      %v2551 = vunpack.c.l.b16 %v2400
      %v2552 = vunpack.c.l.b16 %v2401
      %v2553 = vunpack.c.l.b16 %v2402
      %v2554 = vunpack.c.l.b16 %v2403
      %v2555 = vunpack.c.l.b16 %v2404
      %v2556 = vunpack.c.l.b16 %v2405
      %v2557 = vunpack.c.l.b16 %v2406
      %v2558 = vunpack.c.l.b16 %v2407
      %v2559 = vunpack.c.l.b16 %v2408
      %v2560 = vunpack.c.l.b16 %v2409
      %v2561 = vunpack.c.l.b16 %v2410
      %v2562 = vunpack.c.l.b16 %v2411
      %v2563 = vunpack.c.l.b16 %v2412
      %v2564 = vunpack.c.l.b16 %v2413
      %v2565 = vunpack.c.l.b16 %v2414
      %v2566 = vunpack.c.l.b16 %v2415
      %v2567 = vunpack.c.l.b16 %v2416
      %v2568 = vunpack.c.l.b16 %v2417
      %v2569 = vunpack.c.l.b16 %v2418
      %v2570 = vunpack.c.l.b16 %v2419
      %v2571 = vunpack.c.l.b16 %v2420
      %v2572 = vunpack.c.l.b16 %v2421
      %v2573 = vunpack.c.l.b16 %v2422
      %v2574 = vunpack.c.l.b16 %v2423
      %v2575 = vunpack.c.l.b16 %v2424
      %v2576 = vunpack.c.l.b16 %v2425
      %v2577 = vunpack.c.l.b16 %v2426
      %v2578 = vunpack.c.l.b16 %v2427
      %v2579 = vunpack.c.l.b16 %v2428
      %v2580 = vpack.c.b16 %v2509, %v2508
      %v2581 = vpack.c.b16 %v2511, %v2510
      %v2582 = vpack.c.b16 %v2513, %v2512
      %v2583 = vpack.c.b16 %v2515, %v2514
      %v2584 = vpack.c.b16 %v2517, %v2516
      %v2585 = vpack.c.b16 %v2519, %v2518
      %v2586 = vpack.c.b16 %v2521, %v2520
      %v2587 = vpack.c.b16 %v2523, %v2522
      %v2588 = vpack.c.b16 %v2525, %v2524
      %v2589 = vpack.c.b16 %v2527, %v2526
      %v2590 = vpack.c.b16 %v2529, %v2528
      %v2591 = vpack.c.b16 %v2531, %v2530
      %v2592 = vpack.c.b16 %v2533, %v2532
      %v2593 = vpack.c.b16 %v2535, %v2534
      %v2594 = vpack.c.b16 %v2537, %v2536
      %v2595 = vpack.c.b16 %v2539, %v2538
      %v2596 = vpack.c.b16 %v2541, %v2540
      %v2597 = vpack.c.b16 %v2543, %v2542
      %v2598 = vpack.c.b16 %v2545, %v2544
      %v2599 = vpack.c.b16 %v2547, %v2546
      %v2600 = vpack.c.b16 %v2549, %v2548
      %v2601 = vpack.c.b16 %v2551, %v2550
      %v2602 = vpack.c.b16 %v2553, %v2552
      %v2603 = vpack.c.b16 %v2555, %v2554
      %v2604 = vpack.c.b16 %v2557, %v2556
      %v2605 = vpack.c.b16 %v2559, %v2558
      %v2606 = vpack.c.b16 %v2561, %v2560
      %v2607 = vpack.c.b16 %v2563, %v2562
      %v2608 = vpack.c.b16 %v2565, %v2564
      %v2609 = vpack.c.b16 %v2567, %v2566
      %v2610 = vpack.c.b16 %v2569, %v2568
      %v2611 = vpack.c.b16 %v2571, %v2570
      %v2612 = vpack.c.b16 %v2573, %v2572
      %v2613 = vpack.c.b16 %v2575, %v2574
      %v2614 = vpack.c.b16 %v2577, %v2576
      %v2615 = vpack.c.b16 %v2579, %v2578
      %v2653 = vsel %vm455, %v2341, 0
      %v2656 = vsel %vm455, %v2346, 0
      %v2659 = vsel %vm455, %v2351, 0
      %v2662 = vsel %vm455, %v2356, 0
      %2664 = vmatprep.subr.bf16.mxu0 0
      %2665 = vmatpush1.bf16.msra.mxu0 %v2580
      %2666 = vmatprep.subr.bf16.mxu0 0
      %2667 = vmatpush1.bf16.msra.mxu0 %v2581
      %2668 = vmatprep.subr.bf16.mxu0 0
      %2669 = vmatpush1.bf16.msra.mxu0 %v2582
      %2670 = vmatprep.subr.bf16.mxu0 0
      %2671 = vmatpush1.bf16.msra.mxu0 %v2583
      %2672 = vmatprep.subr.bf16.mxu0 0
      %2673 = vmatpush1.bf16.msra.mxu0 %v2584
      %2674 = vmatprep.subr.bf16.mxu0 0
      %2675 = vmatpush1.bf16.msra.mxu0 %v2585
      %2676 = vmatprep.subr.bf16.mxu0 0
      %2677 = vmatpush1.bf16.msra.mxu0 %v2586
      %2678 = vmatprep.subr.bf16.mxu0 0
      %2679 = vmatpush1.bf16.msra.mxu0 %v2587
      %2680 = vmatprep.subr.bf16.mxu0 0
      %2681 = vmatpush1.bf16.msra.mxu0 %v2588
      %2682 = vmatprep.subr.bf16.mxu0 0
      %2683 = vmatpush1.bf16.msra.mxu0 %v2589
      %2684 = vmatprep.subr.bf16.mxu0 0
      %2685 = vmatpush1.bf16.msra.mxu0 %v2590
      %2686 = vmatprep.subr.bf16.mxu0 0
      %2687 = vmatpush1.bf16.msra.mxu0 %v2591
      %2688 = vmatprep.subr.bf16.mxu0 0
      %2689 = vmatpush1.bf16.msra.mxu0 %v2592
      %2690 = vmatprep.subr.bf16.mxu0 0
      %2691 = vmatpush1.bf16.msra.mxu0 %v2593
      %2692 = vmatprep.subr.bf16.mxu0 0
      %2693 = vmatpush1.bf16.msra.mxu0 %v2594
      %2694 = vmatprep.subr.bf16.mxu0 0
      %2695 = vmatpush1.bf16.msra.mxu0 %v2595
      %2696 = vmatprep.mubr.bf16.mxu0 %v2338
      %2697 = vmatmul.mubr.bf16.gmra.mrb[0].mxu0 %v2337
      %v2698 = vpop.f32.mrb[0].mxu0
      %v2699 = vadd.f32 %v2434, %v2698
      %v2700 = vpop.f32.mrb[0].mxu0
      %v2701 = vpop.f32.mrb[0].mxu0
      %v2702 = vadd.f32 %v2434, %v2701
      %v2703 = vpop.f32.mrb[0].mxu0
      %2704 = vmatprep.mubr.bf16.mxu0 %v2343
      %2705 = vmatmul.mubr.bf16.gmra.mrb[0].mxu0 %v2342
      %v2706 = vpop.f32.mrb[0].mxu0
      %v2707 = vadd.f32 %v2434, %v2706
      %v2708 = vpop.f32.mrb[0].mxu0
      %v2709 = vpop.f32.mrb[0].mxu0
      %v2710 = vadd.f32 %v2434, %v2709
      %v2711 = vpop.f32.mrb[0].mxu0
      %2712 = vmatprep.mubr.bf16.mxu0 %v2348
      %2713 = vmatmul.mubr.bf16.gmra.mrb[0].mxu0 %v2347
      %v2714 = vpop.f32.mrb[0].mxu0
      %v2715 = vadd.f32 %v2434, %v2714
      %v2716 = vpop.f32.mrb[0].mxu0
      %v2717 = vpop.f32.mrb[0].mxu0
      %v2718 = vadd.f32 %v2434, %v2717
      %v2719 = vpop.f32.mrb[0].mxu0
      %2720 = vmatprep.mubr.bf16.mxu0 %v2353
      %2721 = vmatmul.mubr.bf16.gmra.mrb[0].mxu0 %v2352
      %v2722 = vpop.f32.mrb[0].mxu0
      %v2723 = vadd.f32 %v2434, %v2722
      %v2724 = vpop.f32.mrb[0].mxu0
      %v2725 = vpop.f32.mrb[0].mxu0
      %v2726 = vadd.f32 %v2434, %v2725
      %v2727 = vpop.f32.mrb[0].mxu0
      %2728 = vdwg.mxu0
      %2729 = vmatprep.subr.bf16.mxu0 0
      %2730 = vmatpush1.bf16.msra.mxu0 %v2596
      %2731 = vmatprep.subr.bf16.mxu0 0
      %2732 = vmatpush1.bf16.msra.mxu0 %v2597
      %2733 = vmatprep.subr.bf16.mxu0 0
      %2734 = vmatpush1.bf16.msra.mxu0 %v2598
      %2735 = vmatprep.subr.bf16.mxu0 0
      %2736 = vmatpush1.bf16.msra.mxu0 %v2599
      %2737 = vmatprep.subr.bf16.mxu0 0
      %2738 = vmatpush1.bf16.msra.mxu0 %v2600
      %2739 = vmatprep.subr.bf16.mxu0 0
      %2740 = vmatpush1.bf16.msra.mxu0 %v2601
      %2741 = vmatprep.subr.bf16.mxu0 0
      %2742 = vmatpush1.bf16.msra.mxu0 %v2602
      %2743 = vmatprep.subr.bf16.mxu0 0
      %2744 = vmatpush1.bf16.msra.mxu0 %v2603
      %2745 = vmatprep.subr.bf16.mxu0 0
      %2746 = vmatpush1.bf16.msra.mxu0 %v2604
      %2747 = vmatprep.subr.bf16.mxu0 0
      %2748 = vmatpush1.bf16.msra.mxu0 %v2605
      %2749 = vmatprep.subr.bf16.mxu0 0
      %2750 = vmatpush1.bf16.msra.mxu0 %v2606
      %2751 = vmatprep.subr.bf16.mxu0 0
      %2752 = vmatpush1.bf16.msra.mxu0 %v2607
      %2753 = vmatprep.subr.bf16.mxu0 0
      %2754 = vmatpush1.bf16.msra.mxu0 %v2608
      %2755 = vmatprep.subr.bf16.mxu0 0
      %2756 = vmatpush1.bf16.msra.mxu0 %v2609
      %2757 = vmatprep.subr.bf16.mxu0 0
      %2758 = vmatpush1.bf16.msra.mxu0 %v2610
      %2759 = vmatprep.subr.bf16.mxu0 0
      %2760 = vmatpush1.bf16.msra.mxu0 %v2611
      %2761 = vmatprep.mubr.bf16.mxu0 %v2340
      %2762 = vmatmul.mubr.bf16.gmra.mrb[0].mxu0 %v2339
      %v2763 = vpop.f32.mrb[0].mxu0
      %v2764 = vadd.f32 %v2699, %v2763
      %v2765 = vpop.f32.mrb[0].mxu0
      %v2766 = vpop.f32.mrb[0].mxu0
      %v2767 = vadd.f32 %v2702, %v2766
      %v2768 = vpop.f32.mrb[0].mxu0
      %2769 = vmatprep.mubr.bf16.mxu0 %v2345
      %2770 = vmatmul.mubr.bf16.gmra.mrb[0].mxu0 %v2344
      %v2771 = vpop.f32.mrb[0].mxu0
      %v2772 = vadd.f32 %v2707, %v2771
      %v2773 = vpop.f32.mrb[0].mxu0
      %v2774 = vpop.f32.mrb[0].mxu0
      %v2775 = vadd.f32 %v2710, %v2774
      %v2776 = vpop.f32.mrb[0].mxu0
      %2777 = vmatprep.mubr.bf16.mxu0 %v2350
      %2778 = vmatmul.mubr.bf16.gmra.mrb[0].mxu0 %v2349
      %v2779 = vpop.f32.mrb[0].mxu0
      %v2780 = vadd.f32 %v2715, %v2779
      %v2781 = vpop.f32.mrb[0].mxu0
      %v2782 = vpop.f32.mrb[0].mxu0
      %v2783 = vadd.f32 %v2718, %v2782
      %v2784 = vpop.f32.mrb[0].mxu0
      %2785 = vmatprep.mubr.bf16.mxu0 %v2355
      %2786 = vmatmul.mubr.bf16.gmra.mrb[0].mxu0 %v2354
      %v2787 = vpop.f32.mrb[0].mxu0
      %v2788 = vadd.f32 %v2723, %v2787
      %v2789 = vpop.f32.mrb[0].mxu0
      %v2790 = vpop.f32.mrb[0].mxu0
      %v2791 = vadd.f32 %v2726, %v2790
      %v2792 = vpop.f32.mrb[0].mxu0
      %2793 = vdwg.mxu0
      %2794 = vmatprep.subr.bf16.mxu0 0
      %2795 = vmatpush1.bf16.msra.mxu0 %v2612
      %2796 = vmatprep.subr.bf16.mxu0 0
      %2797 = vmatpush1.bf16.msra.mxu0 %v2613
      %2798 = vmatprep.subr.bf16.mxu0 0
      %2799 = vmatpush1.bf16.msra.mxu0 %v2614
      %2800 = vmatprep.subr.bf16.mxu0 0
      %2801 = vmatpush1.bf16.msra.mxu0 %v2615
      %2802 = vmatprep.subr.bf16.mxu0 0
      %2803 = vmatpush1.bf16.msra.mxu0 0
      %2804 = vmatprep.subr.bf16.mxu0 0
      %2805 = vmatpush1.bf16.msra.mxu0 0
      %2806 = vmatprep.subr.bf16.mxu0 0
      %2807 = vmatpush1.bf16.msra.mxu0 0
      %2808 = vmatprep.subr.bf16.mxu0 0
      %2809 = vmatpush1.bf16.msra.mxu0 0
      %2810 = vmatprep.subr.bf16.mxu0 0
      %2811 = vmatpush1.bf16.msra.mxu0 0
      %2812 = vmatprep.subr.bf16.mxu0 0
      %2813 = vmatpush1.bf16.msra.mxu0 0
      %2814 = vmatprep.subr.bf16.mxu0 0
      %2815 = vmatpush1.bf16.msra.mxu0 0
      %2816 = vmatprep.subr.bf16.mxu0 0
      %2817 = vmatpush1.bf16.msra.mxu0 0
      %2818 = vmatprep.subr.bf16.mxu0 0
      %2819 = vmatpush1.bf16.msra.mxu0 0
      %2820 = vmatprep.subr.bf16.mxu0 0
      %2821 = vmatpush1.bf16.msra.mxu0 0
      %2822 = vmatprep.subr.bf16.mxu0 0
      %2823 = vmatpush1.bf16.msra.mxu0 0
      %2824 = vmatprep.subr.bf16.mxu0 0
      %2825 = vmatpush1.bf16.msra.mxu0 0
      %2826 = vmatprep.mubr.bf16.mxu0 0
      %2827 = vmatmul.mubr.bf16.gmra.mrb[0].mxu0 %v2653
      %v2828 = vpop.f32.mrb[0].mxu0
      %v2829 = vadd.f32 %v2764, %v2828
      %v2830 = vpop.f32.mrb[0].mxu0
      %v2831 = vpop.f32.mrb[0].mxu0
      %v2832 = vadd.f32 %v2767, %v2831
      %v2833 = vpop.f32.mrb[0].mxu0
      %2834 = vmatprep.mubr.bf16.mxu0 0
      %2835 = vmatmul.mubr.bf16.gmra.mrb[0].mxu0 %v2656
      %v2836 = vpop.f32.mrb[0].mxu0
      %v2837 = vadd.f32 %v2772, %v2836
      %v2838 = vpop.f32.mrb[0].mxu0
      %v2839 = vpop.f32.mrb[0].mxu0
      %v2840 = vadd.f32 %v2775, %v2839
      %v2841 = vpop.f32.mrb[0].mxu0
      %2842 = vmatprep.mubr.bf16.mxu0 0
      %2843 = vmatmul.mubr.bf16.gmra.mrb[0].mxu0 %v2659
      %v2844 = vpop.f32.mrb[0].mxu0
      %v2845 = vadd.f32 %v2780, %v2844
      %v2846 = vpop.f32.mrb[0].mxu0
      %v2847 = vpop.f32.mrb[0].mxu0
      %v2848 = vadd.f32 %v2783, %v2847
      %v2849 = vpop.f32.mrb[0].mxu0
      %2850 = vmatprep.mubr.bf16.mxu0 0
      %2851 = vmatmul.mubr.bf16.gmra.mrb[0].mxu0 %v2662
      %v2852 = vpop.f32.mrb[0].mxu0
      %v2853 = vadd.f32 %v2788, %v2852
      %v2854 = vpop.f32.mrb[0].mxu0
      %v2855 = vpop.f32.mrb[0].mxu0
      %v2856 = vadd.f32 %v2791, %v2855
      %v2857 = vpop.f32.mrb[0].mxu0
      %2858 = vdwg.mxu0
      %v2859 = vmax.f32 %v2829, 0.0
      %v2860 = vmax.f32 %v2832, 0.0
      %v2861 = vmax.f32 %v2837, 0.0
      %v2862 = vmax.f32 %v2840, 0.0
      %v2863 = vmax.f32 %v2845, 0.0
      %v2864 = vmax.f32 %v2848, 0.0
      %v2865 = vmax.f32 %v2853, 0.0
      %v2866 = vmax.f32 %v2856, 0.0
      %2867 = vst.msk [vmem:[#allocation2 + $0x10] sm:$0xff] %vm455, %v2859
      %2868 = vst.msk [vmem:[#allocation2 + $0x18] sm:$0xff] %vm455, %v2860
      %2869 = vst.msk [vmem:[#allocation2 + $0x20] sm:$0xff] %vm455, %v2861
      %2870 = vst.msk [vmem:[#allocation2 + $0x28] sm:$0xff] %vm455, %v2862
      %2871 = vst.msk [vmem:[#allocation2 + $0x30] sm:$0xff] %vm455, %v2863
      %2872 = vst.msk [vmem:[#allocation2 + $0x38] sm:$0xff] %vm455, %v2864
      %2873 = vst.msk [vmem:[#allocation2 + $0x40] sm:$0xff] %vm455, %v2865
      %2874 = vst.msk [vmem:[#allocation2 + $0x48] sm:$0xff] %vm455, %v2866
      %v2875 = vld [vmem:[#allocation2 + $0x7] sm:$0xff]
      %v2876 = vld [vmem:[#allocation2 + $0xf] sm:$0xff]
      %v2877 = vld [vmem:[#allocation2 + $0x17] sm:$0xff]
      %v2878 = vld [vmem:[#allocation2 + $0x1f] sm:$0xff]
      %v2879 = vld [vmem:[#allocation2 + $0x27] sm:$0xff]
      %v2880 = vld [vmem:[#allocation2 + $0x2f] sm:$0xff]
      %v2881 = vld [vmem:[#allocation2 + $0x37] sm:$0xff]
      %v2882 = vld [vmem:[#allocation2 + $0x3f] sm:$0xff]
      %v2883 = vsel %vm439, %v2875, 0.0
      %v2884 = vsel %vm440, %v2876, 0.0
      %v2885 = vsel %vm441, %v2877, 0.0
      %v2886 = vsel %vm442, %v2878, 0.0
      %v2887 = vsel %vm443, %v2879, 0.0
      %v2888 = vsel %vm444, %v2880, 0.0
      %v2889 = vsel %vm445, %v2881, 0.0
      %v2890 = vsel %vm446, %v2882, 0.0
      %v2891 = vpack.c.bf16 %v2884, %v2883
      %v2892 = vpack.c.bf16 %v2886, %v2885
      %v2893 = vpack.c.bf16 %v2888, %v2887
      %v2894 = vpack.c.bf16 %v2890, %v2889
      %2895 = vst.msk [vmem:[#allocation3] sm:$0xff] %vm455, %v2891
      %2896 = vst.msk [vmem:[#allocation3 + $0x28] sm:$0xff] %vm455, %v2892
      %2897 = vst.msk [vmem:[#allocation3 + $0x50] sm:$0xff] %vm455, %v2893
      %2898 = vst.msk [vmem:[#allocation3 + $0x78] sm:$0xff] %vm455, %v2894
      %v2899 = vld [vmem:[#allocation2 + $0x8] sm:$0xff]
      %v2900 = vld [vmem:[#allocation2 + $0x10] sm:$0xff]
      %v2901 = vld [vmem:[#allocation2 + $0x18] sm:$0xff]
      %v2902 = vld [vmem:[#allocation2 + $0x20] sm:$0xff]
      %v2903 = vld [vmem:[#allocation2 + $0x28] sm:$0xff]
      %v2904 = vld [vmem:[#allocation2 + $0x30] sm:$0xff]
      %v2905 = vld [vmem:[#allocation2 + $0x38] sm:$0xff]
      %v2906 = vld [vmem:[#allocation2 + $0x40] sm:$0xff]
      %v2907 = vpack.c.bf16 %v2900, %v2899
      %v2908 = vpack.c.bf16 %v2902, %v2901
      %v2909 = vpack.c.bf16 %v2904, %v2903
      %v2910 = vpack.c.bf16 %v2906, %v2905
      %2915 = vrot.lane.b32.xlu0 %v2907, 64
      %v2916 = vpop.permute.xlu0 %2915
      %2917 = vrot.lane.b32.xlu0 %v2908, 64
      %v2918 = vpop.permute.xlu0 %2917
      %2919 = vrot.lane.b32.xlu0 %v2909, 64
      %v2920 = vpop.permute.xlu0 %2919
      %2921 = vrot.lane.b32.xlu0 %v2910, 64
      %v2922 = vpop.permute.xlu0 %2921
      %2927 = vst.msk [vmem:[#allocation3] sm:$0xff] %vm536, %v2916
      %2928 = vst.msk [vmem:[#allocation3 + $0x28] sm:$0xff] %vm536, %v2918
      %2929 = vst.msk [vmem:[#allocation3 + $0x50] sm:$0xff] %vm536, %v2920
      %2930 = vst.msk [vmem:[#allocation3 + $0x78] sm:$0xff] %vm536, %v2922
      %v2931 = vld [vmem:[#allocation2 + $0x9] sm:$0xff]
      %v2932 = vld [vmem:[#allocation2 + $0x11] sm:$0xff]
      %v2933 = vld [vmem:[#allocation2 + $0x19] sm:$0xff]
      %v2934 = vld [vmem:[#allocation2 + $0x21] sm:$0xff]
      %v2935 = vld [vmem:[#allocation2 + $0x29] sm:$0xff]
      %v2936 = vld [vmem:[#allocation2 + $0x31] sm:$0xff]
      %v2937 = vld [vmem:[#allocation2 + $0x39] sm:$0xff]
      %v2938 = vld [vmem:[#allocation2 + $0x41] sm:$0xff]
      %v2939 = vsel %vm447, %v2931, 0.0
      %v2940 = vsel %vm448, %v2932, 0.0
      %v2941 = vsel %vm449, %v2933, 0.0
      %v2942 = vsel %vm450, %v2934, 0.0
      %v2943 = vsel %vm451, %v2935, 0.0
      %v2944 = vsel %vm452, %v2936, 0.0
      %v2945 = vsel %vm453, %v2937, 0.0
      %v2946 = vsel %vm454, %v2938, 0.0
      %v2947 = vpack.c.bf16 %v2940, %v2939
      %v2948 = vpack.c.bf16 %v2942, %v2941
      %v2949 = vpack.c.bf16 %v2944, %v2943
      %v2950 = vpack.c.bf16 %v2946, %v2945
      %2951 = vst.msk [vmem:[#allocation3 + $0x8] sm:$0xff] %vm455, %v2947
      %2952 = vst.msk [vmem:[#allocation3 + $0x30] sm:$0xff] %vm455, %v2948
      %2953 = vst.msk [vmem:[#allocation3 + $0x58] sm:$0xff] %vm455, %v2949
      %2954 = vst.msk [vmem:[#allocation3 + $0x80] sm:$0xff] %vm455, %v2950
      %v2955 = vld [vmem:[#allocation2 + $0xf] sm:$0xff]
      %v2956 = vld [vmem:[#allocation2 + $0x17] sm:$0xff]
      %v2957 = vld [vmem:[#allocation2 + $0x1f] sm:$0xff]
      %v2958 = vld [vmem:[#allocation2 + $0x27] sm:$0xff]
      %v2959 = vld [vmem:[#allocation2 + $0x2f] sm:$0xff]
      %v2960 = vld [vmem:[#allocation2 + $0x37] sm:$0xff]
      %v2961 = vld [vmem:[#allocation2 + $0x3f] sm:$0xff]
      %v2962 = vld [vmem:[#allocation2 + $0x47] sm:$0xff]
      %v2963 = vsel %vm439, %v2955, 0.0
      %v2964 = vsel %vm440, %v2956, 0.0
      %v2965 = vsel %vm441, %v2957, 0.0
      %v2966 = vsel %vm442, %v2958, 0.0
      %v2967 = vsel %vm443, %v2959, 0.0
      %v2968 = vsel %vm444, %v2960, 0.0
      %v2969 = vsel %vm445, %v2961, 0.0
      %v2970 = vsel %vm446, %v2962, 0.0
      %v2971 = vpack.c.bf16 %v2964, %v2963
      %v2972 = vpack.c.bf16 %v2966, %v2965
      %v2973 = vpack.c.bf16 %v2968, %v2967
      %v2974 = vpack.c.bf16 %v2970, %v2969
      %2979 = vrot.lane.b32.xlu0 %v2971, 64
      %v2980 = vpop.permute.xlu0 %2979
      %2981 = vrot.lane.b32.xlu0 %v2972, 64
      %v2982 = vpop.permute.xlu0 %2981
      %2983 = vrot.lane.b32.xlu0 %v2973, 64
      %v2984 = vpop.permute.xlu0 %2983
      %2985 = vrot.lane.b32.xlu0 %v2974, 64
      %v2986 = vpop.permute.xlu0 %2985
      %2991 = vst.msk [vmem:[#allocation3 + $0x8] sm:$0xff] %vm536, %v2980
      %2992 = vst.msk [vmem:[#allocation3 + $0x30] sm:$0xff] %vm536, %v2982
      %2993 = vst.msk [vmem:[#allocation3 + $0x58] sm:$0xff] %vm536, %v2984
      %2994 = vst.msk [vmem:[#allocation3 + $0x80] sm:$0xff] %vm536, %v2986
      %v2995 = vld [vmem:[#allocation2 + $0x10] sm:$0xff]
      %v2996 = vld [vmem:[#allocation2 + $0x18] sm:$0xff]
      %v2997 = vld [vmem:[#allocation2 + $0x20] sm:$0xff]
      %v2998 = vld [vmem:[#allocation2 + $0x28] sm:$0xff]
      %v2999 = vld [vmem:[#allocation2 + $0x30] sm:$0xff]
      %v3000 = vld [vmem:[#allocation2 + $0x38] sm:$0xff]
      %v3001 = vld [vmem:[#allocation2 + $0x40] sm:$0xff]
      %v3002 = vld [vmem:[#allocation2 + $0x48] sm:$0xff]
      %v3003 = vpack.c.bf16 %v2996, %v2995
      %v3004 = vpack.c.bf16 %v2998, %v2997
      %v3005 = vpack.c.bf16 %v3000, %v2999
      %v3006 = vpack.c.bf16 %v3002, %v3001
      %3007 = vst.msk [vmem:[#allocation3 + $0x10] sm:$0xff] %vm455, %v3003
      %3008 = vst.msk [vmem:[#allocation3 + $0x38] sm:$0xff] %vm455, %v3004
      %3009 = vst.msk [vmem:[#allocation3 + $0x60] sm:$0xff] %vm455, %v3005
      %3010 = vst.msk [vmem:[#allocation3 + $0x88] sm:$0xff] %vm455, %v3006
      %v3011 = vld [vmem:[#allocation2 + $0x11] sm:$0xff]
      %v3012 = vld [vmem:[#allocation2 + $0x19] sm:$0xff]
      %v3013 = vld [vmem:[#allocation2 + $0x21] sm:$0xff]
      %v3014 = vld [vmem:[#allocation2 + $0x29] sm:$0xff]
      %v3015 = vld [vmem:[#allocation2 + $0x31] sm:$0xff]
      %v3016 = vld [vmem:[#allocation2 + $0x39] sm:$0xff]
      %v3017 = vld [vmem:[#allocation2 + $0x41] sm:$0xff]
      %v3018 = vld [vmem:[#allocation2 + $0x49] sm:$0xff]
      %v3019 = vsel %vm447, %v3011, 0.0
      %v3020 = vsel %vm448, %v3012, 0.0
      %v3021 = vsel %vm449, %v3013, 0.0
      %v3022 = vsel %vm450, %v3014, 0.0
      %v3023 = vsel %vm451, %v3015, 0.0
      %v3024 = vsel %vm452, %v3016, 0.0
      %v3025 = vsel %vm453, %v3017, 0.0
      %v3026 = vsel %vm454, %v3018, 0.0
      %v3027 = vpack.c.bf16 %v3020, %v3019
      %v3028 = vpack.c.bf16 %v3022, %v3021
      %v3029 = vpack.c.bf16 %v3024, %v3023
      %v3030 = vpack.c.bf16 %v3026, %v3025
      %3035 = vrot.lane.b32.xlu0 %v3027, 64
      %v3036 = vpop.permute.xlu0 %3035
      %3037 = vrot.lane.b32.xlu0 %v3028, 64
      %v3038 = vpop.permute.xlu0 %3037
      %3039 = vrot.lane.b32.xlu0 %v3029, 64
      %v3040 = vpop.permute.xlu0 %3039
      %3041 = vrot.lane.b32.xlu0 %v3030, 64
      %v3042 = vpop.permute.xlu0 %3041
      %3047 = vst.msk [vmem:[#allocation3 + $0x10] sm:$0xff] %vm536, %v3036
      %3048 = vst.msk [vmem:[#allocation3 + $0x38] sm:$0xff] %vm536, %v3038
      %3049 = vst.msk [vmem:[#allocation3 + $0x60] sm:$0xff] %vm536, %v3040
      %3050 = vst.msk [vmem:[#allocation3 + $0x88] sm:$0xff] %vm536, %v3042
      %v3051 = vld [vmem:[#allocation2 + $0x17] sm:$0xff]
      %v3052 = vld [vmem:[#allocation2 + $0x1f] sm:$0xff]
      %v3053 = vld [vmem:[#allocation2 + $0x27] sm:$0xff]
      %v3054 = vld [vmem:[#allocation2 + $0x2f] sm:$0xff]
      %v3055 = vld [vmem:[#allocation2 + $0x37] sm:$0xff]
      %v3056 = vld [vmem:[#allocation2 + $0x3f] sm:$0xff]
      %v3057 = vld [vmem:[#allocation2 + $0x47] sm:$0xff]
      %v3058 = vld [vmem:[#allocation2 + $0x4f] sm:$0xff]
      %v3059 = vsel %vm439, %v3051, 0.0
      %v3060 = vsel %vm440, %v3052, 0.0
      %v3061 = vsel %vm441, %v3053, 0.0
      %v3062 = vsel %vm442, %v3054, 0.0
      %v3063 = vsel %vm443, %v3055, 0.0
      %v3064 = vsel %vm444, %v3056, 0.0
      %v3065 = vsel %vm445, %v3057, 0.0
      %v3066 = vsel %vm446, %v3058, 0.0
      %v3067 = vpack.c.bf16 %v3060, %v3059
      %v3068 = vpack.c.bf16 %v3062, %v3061
      %v3069 = vpack.c.bf16 %v3064, %v3063
      %v3070 = vpack.c.bf16 %v3066, %v3065
      %3071 = vst.msk [vmem:[#allocation3 + $0x18] sm:$0xff] %vm455, %v3067
      %3072 = vst.msk [vmem:[#allocation3 + $0x40] sm:$0xff] %vm455, %v3068
      %3073 = vst.msk [vmem:[#allocation3 + $0x68] sm:$0xff] %vm455, %v3069
      %3074 = vst.msk [vmem:[#allocation3 + $0x90] sm:$0xff] %vm455, %v3070
      %v3075 = vld [vmem:[#allocation2 + $0x18] sm:$0xff]
      %v3076 = vld [vmem:[#allocation2 + $0x20] sm:$0xff]
      %v3077 = vld [vmem:[#allocation2 + $0x28] sm:$0xff]
      %v3078 = vld [vmem:[#allocation2 + $0x30] sm:$0xff]
      %v3079 = vld [vmem:[#allocation2 + $0x38] sm:$0xff]
      %v3080 = vld [vmem:[#allocation2 + $0x40] sm:$0xff]
      %v3081 = vld [vmem:[#allocation2 + $0x48] sm:$0xff]
      %v3082 = vld [vmem:[#allocation2 + $0x50] sm:$0xff]
      %v3083 = vpack.c.bf16 %v3076, %v3075
      %v3084 = vpack.c.bf16 %v3078, %v3077
      %v3085 = vpack.c.bf16 %v3080, %v3079
      %v3086 = vpack.c.bf16 %v3082, %v3081
      %3091 = vrot.lane.b32.xlu0 %v3083, 64
      %v3092 = vpop.permute.xlu0 %3091
      %3093 = vrot.lane.b32.xlu0 %v3084, 64
      %v3094 = vpop.permute.xlu0 %3093
      %3095 = vrot.lane.b32.xlu0 %v3085, 64
      %v3096 = vpop.permute.xlu0 %3095
      %3097 = vrot.lane.b32.xlu0 %v3086, 64
      %v3098 = vpop.permute.xlu0 %3097
      %3103 = vst.msk [vmem:[#allocation3 + $0x18] sm:$0xff] %vm536, %v3092
      %3104 = vst.msk [vmem:[#allocation3 + $0x40] sm:$0xff] %vm536, %v3094
      %3105 = vst.msk [vmem:[#allocation3 + $0x68] sm:$0xff] %vm536, %v3096
      %3106 = vst.msk [vmem:[#allocation3 + $0x90] sm:$0xff] %vm536, %v3098
      %v3107 = vld [vmem:[#allocation2 + $0x19] sm:$0xff]
      %v3108 = vld [vmem:[#allocation2 + $0x21] sm:$0xff]
      %v3109 = vld [vmem:[#allocation2 + $0x29] sm:$0xff]
      %v3110 = vld [vmem:[#allocation2 + $0x31] sm:$0xff]
      %v3111 = vld [vmem:[#allocation2 + $0x39] sm:$0xff]
      %v3112 = vld [vmem:[#allocation2 + $0x41] sm:$0xff]
      %v3113 = vld [vmem:[#allocation2 + $0x49] sm:$0xff]
      %v3114 = vld [vmem:[#allocation2 + $0x51] sm:$0xff]
      %v3115 = vsel %vm447, %v3107, 0.0
      %v3116 = vsel %vm448, %v3108, 0.0
      %v3117 = vsel %vm449, %v3109, 0.0
      %v3118 = vsel %vm450, %v3110, 0.0
      %v3119 = vsel %vm451, %v3111, 0.0
      %v3120 = vsel %vm452, %v3112, 0.0
      %v3121 = vsel %vm453, %v3113, 0.0
      %v3122 = vsel %vm454, %v3114, 0.0
      %v3123 = vpack.c.bf16 %v3116, %v3115
      %v3124 = vpack.c.bf16 %v3118, %v3117
      %v3125 = vpack.c.bf16 %v3120, %v3119
      %v3126 = vpack.c.bf16 %v3122, %v3121
      %3127 = vst.msk [vmem:[#allocation3 + $0x20] sm:$0xff] %vm455, %v3123
      %3128 = vst.msk [vmem:[#allocation3 + $0x48] sm:$0xff] %vm455, %v3124
      %3129 = vst.msk [vmem:[#allocation3 + $0x70] sm:$0xff] %vm455, %v3125
      %3130 = vst.msk [vmem:[#allocation3 + $0x98] sm:$0xff] %vm455, %v3126
      %v3131 = vld [vmem:[#allocation3] sm:$0xff]
      %v3132 = vld [vmem:[#allocation3 + $0x8] sm:$0xff]
      %v3133 = vld [vmem:[#allocation3 + $0x10] sm:$0xff]
      %v3134 = vld [vmem:[#allocation3 + $0x18] sm:$0xff]
      %v3135 = vld [vmem:[#allocation3 + $0x20] sm:$0xff]
      %v3136 = vld [vmem:[#allocation3 + $0x28] sm:$0xff]
      %v3137 = vld [vmem:[#allocation3 + $0x30] sm:$0xff]
      %v3138 = vld [vmem:[#allocation3 + $0x38] sm:$0xff]
      %v3139 = vld [vmem:[#allocation3 + $0x40] sm:$0xff]
      %v3140 = vld [vmem:[#allocation3 + $0x48] sm:$0xff]
      %v3141 = vld [vmem:[#allocation3 + $0x50] sm:$0xff]
      %v3142 = vld [vmem:[#allocation3 + $0x58] sm:$0xff]
      %v3143 = vld [vmem:[#allocation3 + $0x60] sm:$0xff]
      %v3144 = vld [vmem:[#allocation3 + $0x68] sm:$0xff]
      %v3145 = vld [vmem:[#allocation3 + $0x70] sm:$0xff]
      %v3146 = vld [vmem:[#allocation3 + $0x78] sm:$0xff]
      %v3147 = vld [vmem:[#allocation3 + $0x80] sm:$0xff]
      %v3148 = vld [vmem:[#allocation3 + $0x88] sm:$0xff]
      %v3149 = vld [vmem:[#allocation3 + $0x90] sm:$0xff]
      %v3150 = vld [vmem:[#allocation3 + $0x98] sm:$0xff]
      %v3151 = vld [vmem:[%s7] sm:$0xf]
      %v3152 = vld [vmem:[%s7 + $0x4] sm:$0xf]
      %v3153 = vld [vmem:[%s7 + $0x8] sm:$0xf]
      %v3154 = vld [vmem:[%s7 + $0xc] sm:$0xf]
      %v3155 = vld [vmem:[%s7 + $0x10] sm:$0xf]
      %v3156 = vld [vmem:[%s7 + $0x14] sm:$0xf]
      %v3157 = vld [vmem:[%s7 + $0x18] sm:$0xf]
      %v3158 = vld [vmem:[%s7 + $0x1c] sm:$0xf]
      %v3159 = vld [vmem:[%s7 + $0x20] sm:$0xf]
      %v3160 = vld [vmem:[%s7 + $0x24] sm:$0xf]
      %v3161 = vld [vmem:[%s7 + $0x28] sm:$0xf]
      %v3162 = vld [vmem:[%s7 + $0x2c] sm:$0xf]
      %v3163 = vld [vmem:[%s7 + $0x30] sm:$0xf]
      %v3164 = vld [vmem:[%s7 + $0x34] sm:$0xf]
      %v3165 = vld [vmem:[%s7 + $0x38] sm:$0xf]
      %v3166 = vld [vmem:[%s7 + $0x3c] sm:$0xf]
      %v3167 = vld [vmem:[%s7 + $0x40] sm:$0xf]
      %v3168 = vld [vmem:[%s7 + $0x44] sm:$0xf]
      %v3169 = vld [vmem:[%s7 + $0x48] sm:$0xf]
      %v3170 = vld [vmem:[%s7 + $0x4c] sm:$0xf]
      %v3171 = vld [vmem:[%s7 + $0x50] sm:$0xf]
      %v3172 = vld [vmem:[%s7 + $0x54] sm:$0xf]
      %v3173 = vld [vmem:[%s7 + $0x58] sm:$0xf]
      %v3174 = vld [vmem:[%s7 + $0x5c] sm:$0xf]
      %v3175 = vld [vmem:[%s7 + $0x60] sm:$0xf]
      %v3176 = vld [vmem:[%s7 + $0x64] sm:$0xf]
      %v3177 = vld [vmem:[%s7 + $0x68] sm:$0xf]
      %v3178 = vld [vmem:[%s7 + $0x6c] sm:$0xf]
      %v3179 = vld [vmem:[%s7 + $0x70] sm:$0xf]
      %v3180 = vld [vmem:[%s7 + $0x74] sm:$0xf]
      %v3181 = vld [vmem:[%s7 + $0x78] sm:$0xf]
      %v3182 = vld [vmem:[%s7 + $0x7c] sm:$0xf]
      %v3183 = vld [vmem:[%s7 + $0x80] sm:$0xf]
      %v3184 = vld [vmem:[%s7 + $0x84] sm:$0xf]
      %v3185 = vld [vmem:[%s7 + $0x88] sm:$0xf]
      %v3186 = vld [vmem:[%s7 + $0x8c] sm:$0xf]
      %v3187 = vld [vmem:[%s7 + $0x90] sm:$0xf]
      %v3188 = vld [vmem:[%s7 + $0x94] sm:$0xf]
      %v3189 = vld [vmem:[%s7 + $0x98] sm:$0xf]
      %v3190 = vld [vmem:[%s7 + $0x9c] sm:$0xf]
      %v3191 = vld [vmem:[%s7 + $0xa0] sm:$0xf]
      %v3192 = vld [vmem:[%s7 + $0xa4] sm:$0xf]
      %v3193 = vld [vmem:[%s7 + $0xa8] sm:$0xf]
      %v3194 = vld [vmem:[%s7 + $0xac] sm:$0xf]
      %v3195 = vld [vmem:[%s7 + $0xb0] sm:$0xf]
      %v3196 = vld [vmem:[%s7 + $0xb4] sm:$0xf]
      %v3197 = vld [vmem:[%s7 + $0xb8] sm:$0xf]
      %v3198 = vld [vmem:[%s7 + $0xbc] sm:$0xf]
      %v3199 = vld [vmem:[%s7 + $0xc0] sm:$0xf]
      %v3200 = vld [vmem:[%s7 + $0xc4] sm:$0xf]
      %v3201 = vld [vmem:[%s7 + $0xc8] sm:$0xf]
      %v3202 = vld [vmem:[%s7 + $0xcc] sm:$0xf]
      %v3203 = vld [vmem:[%s7 + $0xd0] sm:$0xf]
      %v3204 = vld [vmem:[%s7 + $0xd4] sm:$0xf]
      %v3205 = vld [vmem:[%s7 + $0xd8] sm:$0xf]
      %v3206 = vld [vmem:[%s7 + $0xdc] sm:$0xf]
      %v3207 = vld [vmem:[%s7 + $0xe0] sm:$0xf]
      %v3208 = vld [vmem:[%s7 + $0xe4] sm:$0xf]
      %v3209 = vld [vmem:[%s7 + $0xe8] sm:$0xf]
      %v3210 = vld [vmem:[%s7 + $0xec] sm:$0xf]
      %v3211 = vld [vmem:[%s7 + $0xf0] sm:$0xf]
      %v3212 = vld [vmem:[%s7 + $0xf4] sm:$0xf]
      %v3213 = vld [vmem:[%s7 + $0xf8] sm:$0xf]
      %v3214 = vld [vmem:[%s7 + $0xfc] sm:$0xf]
      %v3215 = vld [vmem:[%s7 + $0x100] sm:$0xf]
      %v3216 = vld [vmem:[%s7 + $0x104] sm:$0xf]
      %v3217 = vld [vmem:[%s7 + $0x108] sm:$0xf]
      %v3218 = vld [vmem:[%s7 + $0x10c] sm:$0xf]
      %v3219 = vld [vmem:[%s7 + $0x110] sm:$0xf]
      %v3220 = vld [vmem:[%s7 + $0x114] sm:$0xf]
      %v3221 = vld [vmem:[%s7 + $0x118] sm:$0xf]
      %v3222 = vld [vmem:[%s7 + $0x11c] sm:$0xf]
      %v3223 = vld [vmem:[%s8] sm:$0x1]
      %v3225 = vlaneseq
      %v3226 = vshrl.u32 %v3225, 7
      %v3227 = vsub.s32 0, %v3226
      %v3228 = vrot.slane %v3223, %v3227
      %v3302 = vunpack.c.l.b16 %v3151
      %v3303 = vunpack.c.l.b16 %v3152
      %v3304 = vunpack.c.l.b16 %v3153
      %v3305 = vunpack.c.l.b16 %v3154
      %v3306 = vunpack.c.l.b16 %v3155
      %v3307 = vunpack.c.l.b16 %v3156
      %v3308 = vunpack.c.l.b16 %v3157
      %v3309 = vunpack.c.l.b16 %v3158
      %v3310 = vunpack.c.l.b16 %v3159
      %v3311 = vunpack.c.l.b16 %v3160
      %v3312 = vunpack.c.l.b16 %v3161
      %v3313 = vunpack.c.l.b16 %v3162
      %v3314 = vunpack.c.l.b16 %v3163
      %v3315 = vunpack.c.l.b16 %v3164
      %v3316 = vunpack.c.l.b16 %v3165
      %v3317 = vunpack.c.l.b16 %v3166
      %v3318 = vunpack.c.l.b16 %v3167
      %v3319 = vunpack.c.l.b16 %v3168
      %v3320 = vunpack.c.l.b16 %v3169
      %v3321 = vunpack.c.l.b16 %v3170
      %v3322 = vunpack.c.l.b16 %v3171
      %v3323 = vunpack.c.l.b16 %v3172
      %v3324 = vunpack.c.l.b16 %v3173
      %v3325 = vunpack.c.l.b16 %v3174
      %v3326 = vunpack.c.l.b16 %v3175
      %v3327 = vunpack.c.l.b16 %v3176
      %v3328 = vunpack.c.l.b16 %v3177
      %v3329 = vunpack.c.l.b16 %v3178
      %v3330 = vunpack.c.l.b16 %v3179
      %v3331 = vunpack.c.l.b16 %v3180
      %v3332 = vunpack.c.l.b16 %v3181
      %v3333 = vunpack.c.l.b16 %v3182
      %v3334 = vunpack.c.l.b16 %v3183
      %v3335 = vunpack.c.l.b16 %v3184
      %v3336 = vunpack.c.l.b16 %v3185
      %v3337 = vunpack.c.l.b16 %v3186
      %v3338 = vunpack.c.l.b16 %v3187
      %v3339 = vunpack.c.l.b16 %v3188
      %v3340 = vunpack.c.l.b16 %v3189
      %v3341 = vunpack.c.l.b16 %v3190
      %v3342 = vunpack.c.l.b16 %v3191
      %v3343 = vunpack.c.l.b16 %v3192
      %v3344 = vunpack.c.l.b16 %v3193
      %v3345 = vunpack.c.l.b16 %v3194
      %v3346 = vunpack.c.l.b16 %v3195
      %v3347 = vunpack.c.l.b16 %v3196
      %v3348 = vunpack.c.l.b16 %v3197
      %v3349 = vunpack.c.l.b16 %v3198
      %v3350 = vunpack.c.l.b16 %v3199
      %v3351 = vunpack.c.l.b16 %v3200
      %v3352 = vunpack.c.l.b16 %v3201
      %v3353 = vunpack.c.l.b16 %v3202
      %v3354 = vunpack.c.l.b16 %v3203
      %v3355 = vunpack.c.l.b16 %v3204
      %v3356 = vunpack.c.l.b16 %v3205
      %v3357 = vunpack.c.l.b16 %v3206
      %v3358 = vunpack.c.l.b16 %v3207
      %v3359 = vunpack.c.l.b16 %v3208
      %v3360 = vunpack.c.l.b16 %v3209
      %v3361 = vunpack.c.l.b16 %v3210
      %v3362 = vunpack.c.l.b16 %v3211
      %v3363 = vunpack.c.l.b16 %v3212
      %v3364 = vunpack.c.l.b16 %v3213
      %v3365 = vunpack.c.l.b16 %v3214
      %v3366 = vunpack.c.l.b16 %v3215
      %v3367 = vunpack.c.l.b16 %v3216
      %v3368 = vunpack.c.l.b16 %v3217
      %v3369 = vunpack.c.l.b16 %v3218
      %v3370 = vunpack.c.l.b16 %v3219
      %v3371 = vunpack.c.l.b16 %v3220
      %v3372 = vunpack.c.l.b16 %v3221
      %v3373 = vunpack.c.l.b16 %v3222
      %v3374 = vpack.c.b16 %v3303, %v3302
      %v3375 = vpack.c.b16 %v3305, %v3304
      %v3376 = vpack.c.b16 %v3307, %v3306
      %v3377 = vpack.c.b16 %v3309, %v3308
      %v3378 = vpack.c.b16 %v3311, %v3310
      %v3379 = vpack.c.b16 %v3313, %v3312
      %v3380 = vpack.c.b16 %v3315, %v3314
      %v3381 = vpack.c.b16 %v3317, %v3316
      %v3382 = vpack.c.b16 %v3319, %v3318
      %v3383 = vpack.c.b16 %v3321, %v3320
      %v3384 = vpack.c.b16 %v3323, %v3322
      %v3385 = vpack.c.b16 %v3325, %v3324
      %v3386 = vpack.c.b16 %v3327, %v3326
      %v3387 = vpack.c.b16 %v3329, %v3328
      %v3388 = vpack.c.b16 %v3331, %v3330
      %v3389 = vpack.c.b16 %v3333, %v3332
      %v3390 = vpack.c.b16 %v3335, %v3334
      %v3391 = vpack.c.b16 %v3337, %v3336
      %v3392 = vpack.c.b16 %v3339, %v3338
      %v3393 = vpack.c.b16 %v3341, %v3340
      %v3394 = vpack.c.b16 %v3343, %v3342
      %v3395 = vpack.c.b16 %v3345, %v3344
      %v3396 = vpack.c.b16 %v3347, %v3346
      %v3397 = vpack.c.b16 %v3349, %v3348
      %v3398 = vpack.c.b16 %v3351, %v3350
      %v3399 = vpack.c.b16 %v3353, %v3352
      %v3400 = vpack.c.b16 %v3355, %v3354
      %v3401 = vpack.c.b16 %v3357, %v3356
      %v3402 = vpack.c.b16 %v3359, %v3358
      %v3403 = vpack.c.b16 %v3361, %v3360
      %v3404 = vpack.c.b16 %v3363, %v3362
      %v3405 = vpack.c.b16 %v3365, %v3364
      %v3406 = vpack.c.b16 %v3367, %v3366
      %v3407 = vpack.c.b16 %v3369, %v3368
      %v3408 = vpack.c.b16 %v3371, %v3370
      %v3409 = vpack.c.b16 %v3373, %v3372
      %v3447 = vsel %vm455, %v3135, 0
      %v3450 = vsel %vm455, %v3140, 0
      %v3453 = vsel %vm455, %v3145, 0
      %v3456 = vsel %vm455, %v3150, 0
      %3458 = vmatprep.subr.bf16.mxu0 0
      %3459 = vmatpush1.bf16.msra.mxu0 %v3374
      %3460 = vmatprep.subr.bf16.mxu0 0
      %3461 = vmatpush1.bf16.msra.mxu0 %v3375
      %3462 = vmatprep.subr.bf16.mxu0 0
      %3463 = vmatpush1.bf16.msra.mxu0 %v3376
      %3464 = vmatprep.subr.bf16.mxu0 0
      %3465 = vmatpush1.bf16.msra.mxu0 %v3377
      %3466 = vmatprep.subr.bf16.mxu0 0
      %3467 = vmatpush1.bf16.msra.mxu0 %v3378
      %3468 = vmatprep.subr.bf16.mxu0 0
      %3469 = vmatpush1.bf16.msra.mxu0 %v3379
      %3470 = vmatprep.subr.bf16.mxu0 0
      %3471 = vmatpush1.bf16.msra.mxu0 %v3380
      %3472 = vmatprep.subr.bf16.mxu0 0
      %3473 = vmatpush1.bf16.msra.mxu0 %v3381
      %3474 = vmatprep.subr.bf16.mxu0 0
      %3475 = vmatpush1.bf16.msra.mxu0 %v3382
      %3476 = vmatprep.subr.bf16.mxu0 0
      %3477 = vmatpush1.bf16.msra.mxu0 %v3383
      %3478 = vmatprep.subr.bf16.mxu0 0
      %3479 = vmatpush1.bf16.msra.mxu0 %v3384
      %3480 = vmatprep.subr.bf16.mxu0 0
      %3481 = vmatpush1.bf16.msra.mxu0 %v3385
      %3482 = vmatprep.subr.bf16.mxu0 0
      %3483 = vmatpush1.bf16.msra.mxu0 %v3386
      %3484 = vmatprep.subr.bf16.mxu0 0
      %3485 = vmatpush1.bf16.msra.mxu0 %v3387
      %3486 = vmatprep.subr.bf16.mxu0 0
      %3487 = vmatpush1.bf16.msra.mxu0 %v3388
      %3488 = vmatprep.subr.bf16.mxu0 0
      %3489 = vmatpush1.bf16.msra.mxu0 %v3389
      %3490 = vmatprep.mubr.bf16.mxu0 %v3132
      %3491 = vmatmul.mubr.bf16.gmra.mrb[0].mxu0 %v3131
      %v3492 = vpop.f32.mrb[0].mxu0
      %v3493 = vadd.f32 %v3228, %v3492
      %v3494 = vpop.f32.mrb[0].mxu0
      %v3495 = vpop.f32.mrb[0].mxu0
      %v3496 = vadd.f32 %v3228, %v3495
      %v3497 = vpop.f32.mrb[0].mxu0
      %3498 = vmatprep.mubr.bf16.mxu0 %v3137
      %3499 = vmatmul.mubr.bf16.gmra.mrb[0].mxu0 %v3136
      %v3500 = vpop.f32.mrb[0].mxu0
      %v3501 = vadd.f32 %v3228, %v3500
      %v3502 = vpop.f32.mrb[0].mxu0
      %v3503 = vpop.f32.mrb[0].mxu0
      %v3504 = vadd.f32 %v3228, %v3503
      %v3505 = vpop.f32.mrb[0].mxu0
      %3506 = vmatprep.mubr.bf16.mxu0 %v3142
      %3507 = vmatmul.mubr.bf16.gmra.mrb[0].mxu0 %v3141
      %v3508 = vpop.f32.mrb[0].mxu0
      %v3509 = vadd.f32 %v3228, %v3508
      %v3510 = vpop.f32.mrb[0].mxu0
      %v3511 = vpop.f32.mrb[0].mxu0
      %v3512 = vadd.f32 %v3228, %v3511
      %v3513 = vpop.f32.mrb[0].mxu0
      %3514 = vmatprep.mubr.bf16.mxu0 %v3147
      %3515 = vmatmul.mubr.bf16.gmra.mrb[0].mxu0 %v3146
      %v3516 = vpop.f32.mrb[0].mxu0
      %v3517 = vadd.f32 %v3228, %v3516
      %v3518 = vpop.f32.mrb[0].mxu0
      %v3519 = vpop.f32.mrb[0].mxu0
      %v3520 = vadd.f32 %v3228, %v3519
      %v3521 = vpop.f32.mrb[0].mxu0
      %3522 = vdwg.mxu0
      %3523 = vmatprep.subr.bf16.mxu0 0
      %3524 = vmatpush1.bf16.msra.mxu0 %v3390
      %3525 = vmatprep.subr.bf16.mxu0 0
      %3526 = vmatpush1.bf16.msra.mxu0 %v3391
      %3527 = vmatprep.subr.bf16.mxu0 0
      %3528 = vmatpush1.bf16.msra.mxu0 %v3392
      %3529 = vmatprep.subr.bf16.mxu0 0
      %3530 = vmatpush1.bf16.msra.mxu0 %v3393
      %3531 = vmatprep.subr.bf16.mxu0 0
      %3532 = vmatpush1.bf16.msra.mxu0 %v3394
      %3533 = vmatprep.subr.bf16.mxu0 0
      %3534 = vmatpush1.bf16.msra.mxu0 %v3395
      %3535 = vmatprep.subr.bf16.mxu0 0
      %3536 = vmatpush1.bf16.msra.mxu0 %v3396
      %3537 = vmatprep.subr.bf16.mxu0 0
      %3538 = vmatpush1.bf16.msra.mxu0 %v3397
      %3539 = vmatprep.subr.bf16.mxu0 0
      %3540 = vmatpush1.bf16.msra.mxu0 %v3398
      %3541 = vmatprep.subr.bf16.mxu0 0
      %3542 = vmatpush1.bf16.msra.mxu0 %v3399
      %3543 = vmatprep.subr.bf16.mxu0 0
      %3544 = vmatpush1.bf16.msra.mxu0 %v3400
      %3545 = vmatprep.subr.bf16.mxu0 0
      %3546 = vmatpush1.bf16.msra.mxu0 %v3401
      %3547 = vmatprep.subr.bf16.mxu0 0
      %3548 = vmatpush1.bf16.msra.mxu0 %v3402
      %3549 = vmatprep.subr.bf16.mxu0 0
      %3550 = vmatpush1.bf16.msra.mxu0 %v3403
      %3551 = vmatprep.subr.bf16.mxu0 0
      %3552 = vmatpush1.bf16.msra.mxu0 %v3404
      %3553 = vmatprep.subr.bf16.mxu0 0
      %3554 = vmatpush1.bf16.msra.mxu0 %v3405
      %3555 = vmatprep.mubr.bf16.mxu0 %v3134
      %3556 = vmatmul.mubr.bf16.gmra.mrb[0].mxu0 %v3133
      %v3557 = vpop.f32.mrb[0].mxu0
      %v3558 = vadd.f32 %v3493, %v3557
      %v3559 = vpop.f32.mrb[0].mxu0
      %v3560 = vpop.f32.mrb[0].mxu0
      %v3561 = vadd.f32 %v3496, %v3560
      %v3562 = vpop.f32.mrb[0].mxu0
      %3563 = vmatprep.mubr.bf16.mxu0 %v3139
      %3564 = vmatmul.mubr.bf16.gmra.mrb[0].mxu0 %v3138
      %v3565 = vpop.f32.mrb[0].mxu0
      %v3566 = vadd.f32 %v3501, %v3565
      %v3567 = vpop.f32.mrb[0].mxu0
      %v3568 = vpop.f32.mrb[0].mxu0
      %v3569 = vadd.f32 %v3504, %v3568
      %v3570 = vpop.f32.mrb[0].mxu0
      %3571 = vmatprep.mubr.bf16.mxu0 %v3144
      %3572 = vmatmul.mubr.bf16.gmra.mrb[0].mxu0 %v3143
      %v3573 = vpop.f32.mrb[0].mxu0
      %v3574 = vadd.f32 %v3509, %v3573
      %v3575 = vpop.f32.mrb[0].mxu0
      %v3576 = vpop.f32.mrb[0].mxu0
      %v3577 = vadd.f32 %v3512, %v3576
      %v3578 = vpop.f32.mrb[0].mxu0
      %3579 = vmatprep.mubr.bf16.mxu0 %v3149
      %3580 = vmatmul.mubr.bf16.gmra.mrb[0].mxu0 %v3148
      %v3581 = vpop.f32.mrb[0].mxu0
      %v3582 = vadd.f32 %v3517, %v3581
      %v3583 = vpop.f32.mrb[0].mxu0
      %v3584 = vpop.f32.mrb[0].mxu0
      %v3585 = vadd.f32 %v3520, %v3584
      %v3586 = vpop.f32.mrb[0].mxu0
      %3587 = vdwg.mxu0
      %3588 = vmatprep.subr.bf16.mxu0 0
      %3589 = vmatpush1.bf16.msra.mxu0 %v3406
      %3590 = vmatprep.subr.bf16.mxu0 0
      %3591 = vmatpush1.bf16.msra.mxu0 %v3407
      %3592 = vmatprep.subr.bf16.mxu0 0
      %3593 = vmatpush1.bf16.msra.mxu0 %v3408
      %3594 = vmatprep.subr.bf16.mxu0 0
      %3595 = vmatpush1.bf16.msra.mxu0 %v3409
      %3596 = vmatprep.subr.bf16.mxu0 0
      %3597 = vmatpush1.bf16.msra.mxu0 0
      %3598 = vmatprep.subr.bf16.mxu0 0
      %3599 = vmatpush1.bf16.msra.mxu0 0
      %3600 = vmatprep.subr.bf16.mxu0 0
      %3601 = vmatpush1.bf16.msra.mxu0 0
      %3602 = vmatprep.subr.bf16.mxu0 0
      %3603 = vmatpush1.bf16.msra.mxu0 0
      %3604 = vmatprep.subr.bf16.mxu0 0
      %3605 = vmatpush1.bf16.msra.mxu0 0
      %3606 = vmatprep.subr.bf16.mxu0 0
      %3607 = vmatpush1.bf16.msra.mxu0 0
      %3608 = vmatprep.subr.bf16.mxu0 0
      %3609 = vmatpush1.bf16.msra.mxu0 0
      %3610 = vmatprep.subr.bf16.mxu0 0
      %3611 = vmatpush1.bf16.msra.mxu0 0
      %3612 = vmatprep.subr.bf16.mxu0 0
      %3613 = vmatpush1.bf16.msra.mxu0 0
      %3614 = vmatprep.subr.bf16.mxu0 0
      %3615 = vmatpush1.bf16.msra.mxu0 0
      %3616 = vmatprep.subr.bf16.mxu0 0
      %3617 = vmatpush1.bf16.msra.mxu0 0
      %3618 = vmatprep.subr.bf16.mxu0 0
      %3619 = vmatpush1.bf16.msra.mxu0 0
      %3620 = vmatprep.mubr.bf16.mxu0 0
      %3621 = vmatmul.mubr.bf16.gmra.mrb[0].mxu0 %v3447
      %v3622 = vpop.f32.mrb[0].mxu0
      %v3623 = vadd.f32 %v3558, %v3622
      %v3624 = vpop.f32.mrb[0].mxu0
      %v3625 = vpop.f32.mrb[0].mxu0
      %v3626 = vadd.f32 %v3561, %v3625
      %v3627 = vpop.f32.mrb[0].mxu0
      %3628 = vmatprep.mubr.bf16.mxu0 0
      %3629 = vmatmul.mubr.bf16.gmra.mrb[0].mxu0 %v3450
      %v3630 = vpop.f32.mrb[0].mxu0
      %v3631 = vadd.f32 %v3566, %v3630
      %v3632 = vpop.f32.mrb[0].mxu0
      %v3633 = vpop.f32.mrb[0].mxu0
      %v3634 = vadd.f32 %v3569, %v3633
      %v3635 = vpop.f32.mrb[0].mxu0
      %3636 = vmatprep.mubr.bf16.mxu0 0
      %3637 = vmatmul.mubr.bf16.gmra.mrb[0].mxu0 %v3453
      %v3638 = vpop.f32.mrb[0].mxu0
      %v3639 = vadd.f32 %v3574, %v3638
      %v3640 = vpop.f32.mrb[0].mxu0
      %v3641 = vpop.f32.mrb[0].mxu0
      %v3642 = vadd.f32 %v3577, %v3641
      %v3643 = vpop.f32.mrb[0].mxu0
      %3644 = vmatprep.mubr.bf16.mxu0 0
      %3645 = vmatmul.mubr.bf16.gmra.mrb[0].mxu0 %v3456
      %v3646 = vpop.f32.mrb[0].mxu0
      %v3647 = vadd.f32 %v3582, %v3646
      %v3648 = vpop.f32.mrb[0].mxu0
      %v3649 = vpop.f32.mrb[0].mxu0
      %v3650 = vadd.f32 %v3585, %v3649
      %v3651 = vpop.f32.mrb[0].mxu0
      %3652 = vdwg.mxu0
      %v3653 = vadd.f32 %v3623, %v2065
      %v3654 = vadd.f32 %v3626, %v2066
      %v3655 = vadd.f32 %v3631, %v2067
      %v3656 = vadd.f32 %v3634, %v2068
      %v3657 = vadd.f32 %v3639, %v2069
      %v3658 = vadd.f32 %v3642, %v2070
      %v3659 = vadd.f32 %v3647, %v2071
      %v3660 = vadd.f32 %v3650, %v2072
      %v3661 = vmax.f32 %v3653, 0.0
      %v3662 = vmax.f32 %v3654, 0.0
      %v3663 = vmax.f32 %v3655, 0.0
      %v3664 = vmax.f32 %v3656, 0.0
      %v3665 = vmax.f32 %v3657, 0.0
      %v3666 = vmax.f32 %v3658, 0.0
      %v3667 = vmax.f32 %v3659, 0.0
      %v3668 = vmax.f32 %v3660, 0.0
      %v3669 = vpack.c.bf16 %v3662, %v3661
      %v3670 = vpack.c.bf16 %v3664, %v3663
      %v3671 = vpack.c.bf16 %v3666, %v3665
      %v3672 = vpack.c.bf16 %v3668, %v3667
      %v3677 = vunpack.c.l.b16 %v3669
      %v3678 = vunpack.c.h.b16 %v3669
      %v3679 = vunpack.c.l.b16 %v3670
      %v3680 = vunpack.c.h.b16 %v3670
      %v3681 = vunpack.c.l.b16 %v3671
      %v3682 = vunpack.c.h.b16 %v3671
      %v3683 = vunpack.c.l.b16 %v3672
      %v3684 = vunpack.c.h.b16 %v3672
      %v3685 = vpack.c.b16 %v3677, %v3677
      %v3686 = vpack.c.b16 %v3678, %v3678
      %v3687 = vpack.c.b16 %v3679, %v3679
      %v3688 = vpack.c.b16 %v3680, %v3680
      %v3689 = vpack.c.b16 %v3681, %v3681
      %v3690 = vpack.c.b16 %v3682, %v3682
      %v3691 = vpack.c.b16 %v3683, %v3683
      %v3692 = vpack.c.b16 %v3684, %v3684
      %vm3701 = vcmask 519168
      %3702 = vst.msk [vmem:[%s332] sm:$0xf] %vm3701, %v3685
      %3703 = vst.msk [vmem:[%s332 + $0x4] sm:$0xf] %vm3701, %v3686
      %3704 = vst.msk [vmem:[%s332 + $0x8] sm:$0xf] %vm3701, %v3687
      %3705 = vst.msk [vmem:[%s332 + $0xc] sm:$0xf] %vm3701, %v3688
      %3706 = vst.msk [vmem:[%s332 + $0x10] sm:$0xf] %vm3701, %v3689
      %3707 = vst.msk [vmem:[%s332 + $0x14] sm:$0xf] %vm3701, %v3690
      %3708 = vst.msk [vmem:[%s332 + $0x18] sm:$0xf] %vm3701, %v3691
      %3709 = vst.msk [vmem:[%s332 + $0x1c] sm:$0xf] %vm3701, %v3692
      %p3710 = scmp.lt.s32.totalorder %s20, 1
      %s3711 = scalar_select %p3710, %s20, 1
      %s3712 = smul.addr %s3711, 8
      %s3713 = smul.addr %s3712, 4
      %s3714 = scalar_lea.vmem %s9, %s3713
      // Predicated region
      $region57: #{encoder_forward.4} parent=55 // pred_check
        %p3715 = pneg %p232
      $region58: #{encoder_forward.4} parent=55 // pred_check_branch
        %3717 = sbr.rel (%p3715) target = $region60
      $region59: #{encoder_forward.4} parent=55 // pred_region
        _
      $region60: #{encoder_forward.4} parent=55 // pred_fallthru
        _
    $region56: #{encoder_forward.4} parent=5 // pred_fallthru
      _
    %p3718 = scmp.le.s32.totalorder 2, %s15
    // Predicated region
    $region61: #{encoder_forward.4} parent=5 // pred_check
      %p3719 = pneg %p3718
    $region62: #{encoder_forward.4} parent=5 // pred_check_branch
      %3721 = sbr.rel (%p3719) target = $region64
    $region63: #{encoder_forward.4} parent=5 // pred_region
      %s3722 = ssub.s32 %s15, 2
      // Predicated region
      $region65: #{encoder_forward.4} parent=63 // pred_check
        %p3723 = pneg %p238
      $region66: #{encoder_forward.4} parent=63 // pred_check_branch
        %3725 = sbr.rel (%p3723) target = $region68
      $region67: #{encoder_forward.4} parent=63 // pred_region
        %p3726 = scmp.lt.s32.totalorder %s21, 1
        %s3727 = scalar_select %p3726, %s21, 1
        %s3728 = smul.addr %s3727, 8
        %s3729 = smul.addr %s3728, 4
        %s3730 = scalar_lea.vmem %s9, %s3729
      $region68: #{encoder_forward.4} parent=63 // pred_fallthru
        _
    $region64: #{encoder_forward.4} parent=5 // pred_fallthru
      _
  $region6: #{encoder_forward.4} parent=0 // loop_footer
    %s19 = sadd.s32 1, %s15
  $region7: #{encoder_forward.4} parent=0 // loop_footer_branch
    %14 = sbr.rel target = $region3
  $region8: #{encoder_forward.4} parent=0 // loop_exit
    _

// kernel: encoder_forward.5
$region0: #{encoder_forward.5}
  #allocation0 [shape = 'u32[]', space=smem, size = 0x4, offset = 0x4, fixed_abs, tag = 'smem constant byte address 0x4 - core index']
  #allocation1 [shape = 'u32[144,128]{1,0:T(1,128)}', space=vmem, size = 0x12000, scoped, tag = 'internal scratch']
  #allocation2 [shape = 'f32[32,128]{1,0:T(8,128)}', space=vmem, size = 0x4000, scoped, tag = 'scratch operand']
  #allocation3 [shape = 'bf16[16,1152]{1,0:T(16,128)(2,1)}', space=vmem, size = 0x9000, scoped, tag = 'scratch operand']
  %s0 = inlined_call_operand.vmem [shape: bf16[2,16,576], index: 0, kind: input, shape index: {}]
  %s1 = inlined_call_operand.vmem [shape: bf16[2,16,64], index: 1, kind: input, shape index: {}]
  %s2 = inlined_call_operand.vmem [shape: bf16[576,128], index: 2, kind: input, shape index: {}]
  %s3 = inlined_call_operand.vmem [shape: f32[1,128], index: 3, kind: input, shape index: {}]
  %s4 = inlined_call_operand.vmem [shape: bf16[1152,128], index: 4, kind: input, shape index: {}]
  %s5 = inlined_call_operand.vmem [shape: f32[1,128], index: 5, kind: input, shape index: {}]
  %s6 = inlined_call_operand.vmem [shape: bf16[64,128], index: 6, kind: input, shape index: {}]
  %s7 = inlined_call_operand.vmem [shape: f32[1,128], index: 7, kind: input, shape index: {}]
  %s8 = inlined_call_operand.vmem [shape: bf16[1152,128], index: 8, kind: input, shape index: {}]
  %s9 = inlined_call_operand.vmem [shape: f32[1,128], index: 9, kind: input, shape index: {}]
  %s10 = inlined_call_operand.vmem [shape: bf16[1152,128], index: 10, kind: input, shape index: {}]
  %s11 = inlined_call_operand.vmem [shape: f32[1,128], index: 11, kind: input, shape index: {}]
  %s12 = inlined_call_operand.vmem [shape: bf16[2,16,128], index: 12, kind: output, shape index: {}]
  %s13 = sld [smem:[#allocation0]]
  $region81: #{encoder_forward.5} parent=0
    _
  %s15 = ssub.s32 1, %s13
  %s16 = scalar_select 0, %s15, %s13
  loop: start=0, step=1, limit=4
  $region2: #{encoder_forward.5} parent=0 // loop_pre_header
    _
  $region3: #{encoder_forward.5} parent=0 // loop_header
    %s18 = sphi 0, %s22
    %p19 = scmp.ge.s32.totalorder %s18, 4
    %s28 = sphi 0, %s30
    %s31 = sphi 0, %s28
    %s32 = sphi 0, %s31
    %s48 = sphi 0, %s32
    %s54 = sphi 0, %s56
    %s57 = sphi 0, %s54
    %s58 = sphi 0, %s57
    %s74 = sphi 0, %s58
    %s78 = sphi 0, %s78
    %s80 = sphi 0, %s78
    %s81 = sphi 0, %s80
    %s95 = sphi 0, %s81
    %s99 = sphi 0, %s99
    %s101 = sphi 0, %s99
    %s102 = sphi 0, %s101
    %s116 = sphi 0, %s102
    %s120 = sphi 0, %s120
    %s122 = sphi 0, %s120
    %s123 = sphi 0, %s122
    %s137 = sphi 0, %s123
    %s141 = sphi 0, %s141
    %s143 = sphi 0, %s141
    %s144 = sphi 0, %s143
    %s158 = sphi 0, %s144
    %s162 = sphi 0, %s162
    %s164 = sphi 0, %s162
    %s165 = sphi 0, %s164
    %s179 = sphi 0, %s165
    %s183 = sphi 0, %s183
    %s185 = sphi 0, %s183
    %s186 = sphi 0, %s185
    %s200 = sphi 0, %s186
    %s204 = sphi 0, %s204
    %s206 = sphi 0, %s204
    %s207 = sphi 0, %s206
    %s221 = sphi 0, %s207
    %s225 = sphi 0, %s225
    %s227 = sphi 0, %s225
    %s228 = sphi 0, %s227
    %s242 = sphi 0, %s228
    %s246 = sphi 0, %s246
    %s248 = sphi 0, %s246
    %s249 = sphi 0, %s248
    %s263 = sphi 0, %s249
    %s267 = sphi 0, %s267
    %s269 = sphi 0, %s267
    %s270 = sphi 0, %s269
    %s284 = sphi 0, %s270
    %s290 = sphi 0, %s292
    %s293 = sphi 0, %s290
    %s294 = sphi 0, %s293
    %s310 = sphi 0, %s294
  $region4: #{encoder_forward.5} parent=0 // loop_header_branch
    %21 = sbr.rel (%p19) target = $region8
  $region5: #{encoder_forward.5} parent=0 // loop_body
    %s23 = ssub.s32 %s18, 1
    %s24 = ssub.s32 %s18, 2
    %s25 = sadd.s32 %s18, 1
    %s26 = ssub.s32 %s18, %s25
    %p27 = scmp.eq.s32.totalorder %s26, 0
    %s29 = sadd.s32 %s28, 1
    %s30 = scalar_select %p27, %s28, %s29
    %p33 = pneg %p27
    %p34 = scmp.eq.s32.totalorder %s18, 1
    %p35 = por %p33, %p34
    %p36 = scmp.ne.s32.totalorder %s28, %s31
    %p37 = scmp.eq.s32.totalorder %s18, 0
    %p38 = por %p36, %p37
    %p39 = scmp.ne.s32.totalorder %s28, %s31
    %p40 = scmp.eq.s32.totalorder %s23, 1
    %p41 = por %p39, %p40
    %p42 = scmp.ne.s32.totalorder %s31, %s32
    %p43 = scmp.eq.s32.totalorder %s23, 0
    %p44 = por %p42, %p43
    %p45 = scmp.ne.s32.totalorder %s31, %s32
    %p46 = scmp.eq.s32.totalorder %s24, 1
    %p47 = por %p45, %p46
    %p49 = scmp.ne.s32.totalorder %s32, %s48
    %p50 = scmp.eq.s32.totalorder %s24, 0
    %p51 = por %p49, %p50
    %s52 = ssub.s32 %s18, %s25
    %p53 = scmp.eq.s32.totalorder %s52, 0
    %s55 = sadd.s32 %s54, 1
    %s56 = scalar_select %p53, %s54, %s55
    %p59 = pneg %p53
    %p60 = scmp.eq.s32.totalorder %s18, 1
    %p61 = por %p59, %p60
    %p62 = scmp.ne.s32.totalorder %s54, %s57
    %p63 = scmp.eq.s32.totalorder %s18, 0
    %p64 = por %p62, %p63
    %p65 = scmp.ne.s32.totalorder %s54, %s57
    %p66 = scmp.eq.s32.totalorder %s23, 1
    %p67 = por %p65, %p66
    %p68 = scmp.ne.s32.totalorder %s57, %s58
    %p69 = scmp.eq.s32.totalorder %s23, 0
    %p70 = por %p68, %p69
    %p71 = scmp.ne.s32.totalorder %s57, %s58
    %p72 = scmp.eq.s32.totalorder %s24, 1
    %p73 = por %p71, %p72
    %p75 = scmp.ne.s32.totalorder %s58, %s74
    %p76 = scmp.eq.s32.totalorder %s24, 0
    %p77 = por %p75, %p76
    %s79 = sadd.s32 %s78, 1
    %p82 = scmp.eq.s32.totalorder %s18, 1
    %p83 = scmp.ne.s32.totalorder %s78, %s80
    %p84 = scmp.eq.s32.totalorder %s18, 0
    %p85 = por %p83, %p84
    %p86 = scmp.ne.s32.totalorder %s78, %s80
    %p87 = scmp.eq.s32.totalorder %s23, 1
    %p88 = por %p86, %p87
    %p89 = scmp.ne.s32.totalorder %s80, %s81
    %p90 = scmp.eq.s32.totalorder %s23, 0
    %p91 = por %p89, %p90
    %p92 = scmp.ne.s32.totalorder %s80, %s81
    %p93 = scmp.eq.s32.totalorder %s24, 1
    %p94 = por %p92, %p93
    %p96 = scmp.ne.s32.totalorder %s81, %s95
    %p97 = scmp.eq.s32.totalorder %s24, 0
    %p98 = por %p96, %p97
    %s100 = sadd.s32 %s99, 1
    %p103 = scmp.eq.s32.totalorder %s18, 1
    %p104 = scmp.ne.s32.totalorder %s99, %s101
    %p105 = scmp.eq.s32.totalorder %s18, 0
    %p106 = por %p104, %p105
    %p107 = scmp.ne.s32.totalorder %s99, %s101
    %p108 = scmp.eq.s32.totalorder %s23, 1
    %p109 = por %p107, %p108
    %p110 = scmp.ne.s32.totalorder %s101, %s102
    %p111 = scmp.eq.s32.totalorder %s23, 0
    %p112 = por %p110, %p111
    %p113 = scmp.ne.s32.totalorder %s101, %s102
    %p114 = scmp.eq.s32.totalorder %s24, 1
    %p115 = por %p113, %p114
    %p117 = scmp.ne.s32.totalorder %s102, %s116
    %p118 = scmp.eq.s32.totalorder %s24, 0
    %p119 = por %p117, %p118
    %s121 = sadd.s32 %s120, 1
    %p124 = scmp.eq.s32.totalorder %s18, 1
    %p125 = scmp.ne.s32.totalorder %s120, %s122
    %p126 = scmp.eq.s32.totalorder %s18, 0
    %p127 = por %p125, %p126
    %p128 = scmp.ne.s32.totalorder %s120, %s122
    %p129 = scmp.eq.s32.totalorder %s23, 1
    %p130 = por %p128, %p129
    %p131 = scmp.ne.s32.totalorder %s122, %s123
    %p132 = scmp.eq.s32.totalorder %s23, 0
    %p133 = por %p131, %p132
    %p134 = scmp.ne.s32.totalorder %s122, %s123
    %p135 = scmp.eq.s32.totalorder %s24, 1
    %p136 = por %p134, %p135
    %p138 = scmp.ne.s32.totalorder %s123, %s137
    %p139 = scmp.eq.s32.totalorder %s24, 0
    %p140 = por %p138, %p139
    %s142 = sadd.s32 %s141, 1
    %p145 = scmp.eq.s32.totalorder %s18, 1
    %p146 = scmp.ne.s32.totalorder %s141, %s143
    %p147 = scmp.eq.s32.totalorder %s18, 0
    %p148 = por %p146, %p147
    %p149 = scmp.ne.s32.totalorder %s141, %s143
    %p150 = scmp.eq.s32.totalorder %s23, 1
    %p151 = por %p149, %p150
    %p152 = scmp.ne.s32.totalorder %s143, %s144
    %p153 = scmp.eq.s32.totalorder %s23, 0
    %p154 = por %p152, %p153
    %p155 = scmp.ne.s32.totalorder %s143, %s144
    %p156 = scmp.eq.s32.totalorder %s24, 1
    %p157 = por %p155, %p156
    %p159 = scmp.ne.s32.totalorder %s144, %s158
    %p160 = scmp.eq.s32.totalorder %s24, 0
    %p161 = por %p159, %p160
    %s163 = sadd.s32 %s162, 1
    %p166 = scmp.eq.s32.totalorder %s18, 1
    %p167 = scmp.ne.s32.totalorder %s162, %s164
    %p168 = scmp.eq.s32.totalorder %s18, 0
    %p169 = por %p167, %p168
    %p170 = scmp.ne.s32.totalorder %s162, %s164
    %p171 = scmp.eq.s32.totalorder %s23, 1
    %p172 = por %p170, %p171
    %p173 = scmp.ne.s32.totalorder %s164, %s165
    %p174 = scmp.eq.s32.totalorder %s23, 0
    %p175 = por %p173, %p174
    %p176 = scmp.ne.s32.totalorder %s164, %s165
    %p177 = scmp.eq.s32.totalorder %s24, 1
    %p178 = por %p176, %p177
    %p180 = scmp.ne.s32.totalorder %s165, %s179
    %p181 = scmp.eq.s32.totalorder %s24, 0
    %p182 = por %p180, %p181
    %s184 = sadd.s32 %s183, 1
    %p187 = scmp.eq.s32.totalorder %s18, 1
    %p188 = scmp.ne.s32.totalorder %s183, %s185
    %p189 = scmp.eq.s32.totalorder %s18, 0
    %p190 = por %p188, %p189
    %p191 = scmp.ne.s32.totalorder %s183, %s185
    %p192 = scmp.eq.s32.totalorder %s23, 1
    %p193 = por %p191, %p192
    %p194 = scmp.ne.s32.totalorder %s185, %s186
    %p195 = scmp.eq.s32.totalorder %s23, 0
    %p196 = por %p194, %p195
    %p197 = scmp.ne.s32.totalorder %s185, %s186
    %p198 = scmp.eq.s32.totalorder %s24, 1
    %p199 = por %p197, %p198
    %p201 = scmp.ne.s32.totalorder %s186, %s200
    %p202 = scmp.eq.s32.totalorder %s24, 0
    %p203 = por %p201, %p202
    %s205 = sadd.s32 %s204, 1
    %p208 = scmp.eq.s32.totalorder %s18, 1
    %p209 = scmp.ne.s32.totalorder %s204, %s206
    %p210 = scmp.eq.s32.totalorder %s18, 0
    %p211 = por %p209, %p210
    %p212 = scmp.ne.s32.totalorder %s204, %s206
    %p213 = scmp.eq.s32.totalorder %s23, 1
    %p214 = por %p212, %p213
    %p215 = scmp.ne.s32.totalorder %s206, %s207
    %p216 = scmp.eq.s32.totalorder %s23, 0
    %p217 = por %p215, %p216
    %p218 = scmp.ne.s32.totalorder %s206, %s207
    %p219 = scmp.eq.s32.totalorder %s24, 1
    %p220 = por %p218, %p219
    %p222 = scmp.ne.s32.totalorder %s207, %s221
    %p223 = scmp.eq.s32.totalorder %s24, 0
    %p224 = por %p222, %p223
    %s226 = sadd.s32 %s225, 1
    %p229 = scmp.eq.s32.totalorder %s18, 1
    %p230 = scmp.ne.s32.totalorder %s225, %s227
    %p231 = scmp.eq.s32.totalorder %s18, 0
    %p232 = por %p230, %p231
    %p233 = scmp.ne.s32.totalorder %s225, %s227
    %p234 = scmp.eq.s32.totalorder %s23, 1
    %p235 = por %p233, %p234
    %p236 = scmp.ne.s32.totalorder %s227, %s228
    %p237 = scmp.eq.s32.totalorder %s23, 0
    %p238 = por %p236, %p237
    %p239 = scmp.ne.s32.totalorder %s227, %s228
    %p240 = scmp.eq.s32.totalorder %s24, 1
    %p241 = por %p239, %p240
    %p243 = scmp.ne.s32.totalorder %s228, %s242
    %p244 = scmp.eq.s32.totalorder %s24, 0
    %p245 = por %p243, %p244
    %s247 = sadd.s32 %s246, 1
    %p250 = scmp.eq.s32.totalorder %s18, 1
    %p251 = scmp.ne.s32.totalorder %s246, %s248
    %p252 = scmp.eq.s32.totalorder %s18, 0
    %p253 = por %p251, %p252
    %p254 = scmp.ne.s32.totalorder %s246, %s248
    %p255 = scmp.eq.s32.totalorder %s23, 1
    %p256 = por %p254, %p255
    %p257 = scmp.ne.s32.totalorder %s248, %s249
    %p258 = scmp.eq.s32.totalorder %s23, 0
    %p259 = por %p257, %p258
    %p260 = scmp.ne.s32.totalorder %s248, %s249
    %p261 = scmp.eq.s32.totalorder %s24, 1
    %p262 = por %p260, %p261
    %p264 = scmp.ne.s32.totalorder %s249, %s263
    %p265 = scmp.eq.s32.totalorder %s24, 0
    %p266 = por %p264, %p265
    %s268 = sadd.s32 %s267, 1
    %p271 = scmp.eq.s32.totalorder %s18, 1
    %p272 = scmp.ne.s32.totalorder %s267, %s269
    %p273 = scmp.eq.s32.totalorder %s18, 0
    %p274 = por %p272, %p273
    %p275 = scmp.ne.s32.totalorder %s267, %s269
    %p276 = scmp.eq.s32.totalorder %s23, 1
    %p277 = por %p275, %p276
    %p278 = scmp.ne.s32.totalorder %s269, %s270
    %p279 = scmp.eq.s32.totalorder %s23, 0
    %p280 = por %p278, %p279
    %p281 = scmp.ne.s32.totalorder %s269, %s270
    %p282 = scmp.eq.s32.totalorder %s24, 1
    %p283 = por %p281, %p282
    %p285 = scmp.ne.s32.totalorder %s270, %s284
    %p286 = scmp.eq.s32.totalorder %s24, 0
    %p287 = por %p285, %p286
    %s288 = ssub.s32 %s18, %s25
    %p289 = scmp.eq.s32.totalorder %s288, 0
    %s291 = sadd.s32 %s290, 1
    %s292 = scalar_select %p289, %s290, %s291
    %p295 = pneg %p289
    %p296 = scmp.eq.s32.totalorder %s18, 1
    %p297 = por %p295, %p296
    %p298 = scmp.ne.s32.totalorder %s290, %s293
    %p299 = scmp.eq.s32.totalorder %s18, 0
    %p300 = por %p298, %p299
    %p301 = scmp.ne.s32.totalorder %s290, %s293
    %p302 = scmp.eq.s32.totalorder %s23, 1
    %p303 = por %p301, %p302
    %p304 = scmp.ne.s32.totalorder %s293, %s294
    %p305 = scmp.eq.s32.totalorder %s23, 0
    %p306 = por %p304, %p305
    %p307 = scmp.ne.s32.totalorder %s293, %s294
    %p308 = scmp.eq.s32.totalorder %s24, 1
    %p309 = por %p307, %p308
    %p311 = scmp.ne.s32.totalorder %s294, %s310
    %p312 = scmp.eq.s32.totalorder %s24, 0
    %p313 = por %p311, %p312
    %p314 = scmp.le.s32.totalorder 1, %s18
    %p315 = scmp.lt.s32.totalorder %s18, 3
    %p316 = pnand %p314, %p315
    %p317 = pneg %p316
    // Predicated region
    $region9: #{encoder_forward.5} parent=5 // pred_check
      _
    $region10: #{encoder_forward.5} parent=5 // pred_check_branch
      %319 = sbr.rel (%p316) target = $region12
    $region11: #{encoder_forward.5} parent=5 // pred_region
      %s320 = ssub.s32 %s18, 1
      // Predicated region
      $region13: #{encoder_forward.5} parent=11 // pred_check
        %p321 = pneg %p91
      $region14: #{encoder_forward.5} parent=11 // pred_check_branch
        %323 = sbr.rel (%p321) target = $region16
      $region15: #{encoder_forward.5} parent=11 // pred_region
        _
      $region16: #{encoder_forward.5} parent=11 // pred_fallthru
        _
      // Predicated region
      $region17: #{encoder_forward.5} parent=11 // pred_check
        %p324 = pneg %p112
      $region18: #{encoder_forward.5} parent=11 // pred_check_branch
        %326 = sbr.rel (%p324) target = $region20
      $region19: #{encoder_forward.5} parent=11 // pred_region
        _
      $region20: #{encoder_forward.5} parent=11 // pred_fallthru
        _
      // Predicated region
      $region21: #{encoder_forward.5} parent=11 // pred_check
        %p327 = pneg %p133
      $region22: #{encoder_forward.5} parent=11 // pred_check_branch
        %329 = sbr.rel (%p327) target = $region24
      $region23: #{encoder_forward.5} parent=11 // pred_region
        _
      $region24: #{encoder_forward.5} parent=11 // pred_fallthru
        _
      // Predicated region
      $region25: #{encoder_forward.5} parent=11 // pred_check
        %p330 = pneg %p154
      $region26: #{encoder_forward.5} parent=11 // pred_check_branch
        %332 = sbr.rel (%p330) target = $region28
      $region27: #{encoder_forward.5} parent=11 // pred_region
        _
      $region28: #{encoder_forward.5} parent=11 // pred_fallthru
        _
      // Predicated region
      $region29: #{encoder_forward.5} parent=11 // pred_check
        %p333 = pneg %p175
      $region30: #{encoder_forward.5} parent=11 // pred_check_branch
        %335 = sbr.rel (%p333) target = $region32
      $region31: #{encoder_forward.5} parent=11 // pred_region
        _
      $region32: #{encoder_forward.5} parent=11 // pred_fallthru
        _
      // Predicated region
      $region33: #{encoder_forward.5} parent=11 // pred_check
        %p336 = pneg %p196
      $region34: #{encoder_forward.5} parent=11 // pred_check_branch
        %338 = sbr.rel (%p336) target = $region36
      $region35: #{encoder_forward.5} parent=11 // pred_region
        _
      $region36: #{encoder_forward.5} parent=11 // pred_fallthru
        _
      // Predicated region
      $region37: #{encoder_forward.5} parent=11 // pred_check
        %p339 = pneg %p217
      $region38: #{encoder_forward.5} parent=11 // pred_check_branch
        %341 = sbr.rel (%p339) target = $region40
      $region39: #{encoder_forward.5} parent=11 // pred_region
        _
      $region40: #{encoder_forward.5} parent=11 // pred_fallthru
        _
      // Predicated region
      $region41: #{encoder_forward.5} parent=11 // pred_check
        %p342 = pneg %p238
      $region42: #{encoder_forward.5} parent=11 // pred_check_branch
        %344 = sbr.rel (%p342) target = $region44
      $region43: #{encoder_forward.5} parent=11 // pred_region
        _
      $region44: #{encoder_forward.5} parent=11 // pred_fallthru
        _
      // Predicated region
      $region45: #{encoder_forward.5} parent=11 // pred_check
        %p345 = pneg %p259
      $region46: #{encoder_forward.5} parent=11 // pred_check_branch
        %347 = sbr.rel (%p345) target = $region48
      $region47: #{encoder_forward.5} parent=11 // pred_region
        _
      $region48: #{encoder_forward.5} parent=11 // pred_fallthru
        _
      // Predicated region
      $region49: #{encoder_forward.5} parent=11 // pred_check
        %p348 = pneg %p280
      $region50: #{encoder_forward.5} parent=11 // pred_check_branch
        %350 = sbr.rel (%p348) target = $region52
      $region51: #{encoder_forward.5} parent=11 // pred_region
        _
      $region52: #{encoder_forward.5} parent=11 // pred_fallthru
        _
    $region12: #{encoder_forward.5} parent=5 // pred_fallthru
      _
    %p351 = scmp.lt.s32.totalorder %s18, 2
    // Predicated region
    $region53: #{encoder_forward.5} parent=5 // pred_check
      %p352 = pneg %p351
    $region54: #{encoder_forward.5} parent=5 // pred_check_branch
      %354 = sbr.rel (%p352) target = $region56
    $region55: #{encoder_forward.5} parent=5 // pred_region
      // Predicated region
      $region57: #{encoder_forward.5} parent=55 // pred_check
        %p355 = pneg %p38
      $region58: #{encoder_forward.5} parent=55 // pred_check_branch
        %357 = sbr.rel (%p355) target = $region60
      $region59: #{encoder_forward.5} parent=55 // pred_region
        %p358 = scmp.lt.s32.totalorder %s18, 1
        %s359 = scalar_select %p358, %s18, 1
        %s360 = smul.addr %s359, 10
        %s361 = smul.addr %s360, 4
        %s362 = scalar_lea.vmem %s0, %s361
      $region60: #{encoder_forward.5} parent=55 // pred_fallthru
        _
      // Predicated region
      $region61: #{encoder_forward.5} parent=55 // pred_check
        %p363 = pneg %p64
      $region62: #{encoder_forward.5} parent=55 // pred_check_branch
        %365 = sbr.rel (%p363) target = $region64
      $region63: #{encoder_forward.5} parent=55 // pred_region
        %p366 = scmp.lt.s32.totalorder %s18, 1
        %s367 = scalar_select %p366, %s18, 1
        %s368 = smul.addr %s367, 2
        %s369 = smul.addr %s368, 4
        %s370 = scalar_lea.vmem %s1, %s369
      $region64: #{encoder_forward.5} parent=55 // pred_fallthru
        _
    $region56: #{encoder_forward.5} parent=5 // pred_fallthru
      _
    %p371 = scmp.le.s32.totalorder 1, %s18
    %p372 = scmp.lt.s32.totalorder %s18, 3
    %p373 = pnand %p371, %p372
    %p374 = pneg %p373
    // Predicated region
    $region65: #{encoder_forward.5} parent=5 // pred_check
      _
    $region66: #{encoder_forward.5} parent=5 // pred_check_branch
      %376 = sbr.rel (%p373) target = $region68
    $region67: #{encoder_forward.5} parent=5 // pred_region
      %s377 = ssub.s32 %s18, 1
      %p378 = scmp.lt.s32.totalorder %s23, 1
      %s379 = scalar_select %p378, %s23, 1
      %s380 = smul.addr %s379, 10
      %s381 = smul.addr %s380, 4
      %s382 = scalar_lea.vmem %s0, %s381
      %p383 = pneg %p44
      %p384 = pneg %p41
      %p385 = scmp.lt.s32.totalorder %s23, 1
      %s386 = scalar_select %p385, %s23, 1
      %s387 = smul.addr %s386, 2
      %s388 = smul.addr %s387, 4
      %s389 = scalar_lea.vmem %s1, %s388
      %p390 = pneg %p70
      %p391 = pneg %p67
      %p392 = pneg %p91
      %p393 = pneg %p88
      %p394 = pneg %p112
      %p395 = pneg %p109
      %p396 = pneg %p133
      %p397 = pneg %p130
      %p398 = pneg %p154
      %p399 = pneg %p151
      %p400 = pneg %p175
      %p401 = pneg %p172
      %p402 = pneg %p196
      %p403 = pneg %p193
      %p404 = pneg %p217
      %p405 = pneg %p214
      %p406 = pneg %p238
      %p407 = pneg %p235
      %p408 = pneg %p259
      %p409 = pneg %p256
      %p410 = pneg %p280
      %p411 = pneg %p277
      %p412 = pneg %p306
      %p413 = pneg %p303
      %p414 = scmp.lt.s32.totalorder %s23, 1
      %s415 = scalar_select %p414, %s23, 1
      %s416 = smul.addr %s415, 2
      %s417 = smul.addr %s416, 4
      %s418 = scalar_lea.vmem %s12, %s417
      %p419 = scmp.lt.s32.totalorder %s23, 1
      %s420 = scalar_select %p419, %s23, 1
      %s421 = smul.addr %s420, 10
      %s422 = smul.addr %s421, 4
      %s423 = scalar_lea.vmem %s0, %s422
      %p424 = scmp.lt.s32.totalorder %s23, 1
      %s425 = scalar_select %p424, %s23, 1
      %s426 = smul.addr %s425, 2
      %s427 = smul.addr %s426, 4
      %s428 = scalar_lea.vmem %s1, %s427
      %p429 = scmp.lt.s32.totalorder %s23, 1
      %s430 = scalar_select %p429, %s23, 1
      %s431 = smul.addr %s430, 2
      %s432 = smul.addr %s431, 4
      %s433 = scalar_lea.vmem %s12, %s432
      %v435 = vlaneseq
      %v436 = vshrl.u32 %v435, 7
      %v437 = vadd.s32 %v436, 8
      %vm438 = vcmp.lt.s32.totalorder %v436, 0
      %v439 = vsub.s32 0, %v436
      %v440 = vsel %vm438, %v439, %v436
      %v441 = vshrl.u32 %v440, 2
      %v442 = vand.u32 %v440, 3
      %v443 = vsub.s32 0, %v442
      %v444 = vsel %vm438, %v443, %v442
      %vm445 = vcmp.lt.s32.totalorder %v437, 0
      %v446 = vsub.s32 0, %v437
      %v447 = vsel %vm445, %v446, %v437
      %v448 = vshrl.u32 %v447, 2
      %v449 = vand.u32 %v447, 3
      %v450 = vsub.s32 0, %v449
      %v451 = vsel %vm445, %v450, %v449
      %vm452 = vcmp.ne.s32.totalorder %v444, 0
      %vm453 = vcmp.ne.s32.totalorder %v451, 0
      %vm454 = vcmp.lt.s32.totalorder %v444, 0
      %vm455 = vcmp.lt.s32.totalorder %v451, 0
      %vm456 = vmand %vm454, %vm452
      %vm457 = vmand %vm455, %vm453
      %v458 = vadd.s32 %v444, 4
      %v459 = vadd.s32 %v451, 4
      %v460 = vsel %vm456, %v458, %v444
      %v461 = vsel %vm457, %v459, %v451
      %vm462 = vcmp.ne.s32.totalorder %v460, 0
      %vm463 = vcmp.ne.s32.totalorder %v461, 0
      %vm464 = vcmp.ne.s32.totalorder %v460, 3
      %vm465 = vcmp.ne.s32.totalorder %v461, 3
      %466 = vst [vmem:[#allocation2] sm:$0xff] 0.0
      %467 = vst [vmem:[#allocation2 + $0x18] sm:$0xff] 0.0
      %v468 = vld [vmem:[%s423] sm:$0xff]
      %v469 = vld [vmem:[%s423 + $0x8] sm:$0xff]
      %v470 = vld [vmem:[%s423 + $0x10] sm:$0xf]
      %v471 = vld [vmem:[%s423 + $0x14] sm:$0xff]
      %v472 = vld [vmem:[%s423 + $0x1c] sm:$0xff]
      %v473 = vld [vmem:[%s423 + $0x24] sm:$0xf]
      %v474 = vld [vmem:[%s2] sm:$0xf]
      %v475 = vld [vmem:[%s2 + $0x4] sm:$0xf]
      %v476 = vld [vmem:[%s2 + $0x8] sm:$0xf]
      %v477 = vld [vmem:[%s2 + $0xc] sm:$0xf]
      %v478 = vld [vmem:[%s2 + $0x10] sm:$0xf]
      %v479 = vld [vmem:[%s2 + $0x14] sm:$0xf]
      %v480 = vld [vmem:[%s2 + $0x18] sm:$0xf]
      %v481 = vld [vmem:[%s2 + $0x1c] sm:$0xf]
      %v482 = vld [vmem:[%s2 + $0x20] sm:$0xf]
      %v483 = vld [vmem:[%s2 + $0x24] sm:$0xf]
      %v484 = vld [vmem:[%s2 + $0x28] sm:$0xf]
      %v485 = vld [vmem:[%s2 + $0x2c] sm:$0xf]
      %v486 = vld [vmem:[%s2 + $0x30] sm:$0xf]
      %v487 = vld [vmem:[%s2 + $0x34] sm:$0xf]
      %v488 = vld [vmem:[%s2 + $0x38] sm:$0xf]
      %v489 = vld [vmem:[%s2 + $0x3c] sm:$0xf]
      %v490 = vld [vmem:[%s2 + $0x40] sm:$0xf]
      %v491 = vld [vmem:[%s2 + $0x44] sm:$0xf]
      %v492 = vld [vmem:[%s2 + $0x48] sm:$0xf]
      %v493 = vld [vmem:[%s2 + $0x4c] sm:$0xf]
      %v494 = vld [vmem:[%s2 + $0x50] sm:$0xf]
      %v495 = vld [vmem:[%s2 + $0x54] sm:$0xf]
      %v496 = vld [vmem:[%s2 + $0x58] sm:$0xf]
      %v497 = vld [vmem:[%s2 + $0x5c] sm:$0xf]
      %v498 = vld [vmem:[%s2 + $0x60] sm:$0xf]
      %v499 = vld [vmem:[%s2 + $0x64] sm:$0xf]
      %v500 = vld [vmem:[%s2 + $0x68] sm:$0xf]
      %v501 = vld [vmem:[%s2 + $0x6c] sm:$0xf]
      %v502 = vld [vmem:[%s2 + $0x70] sm:$0xf]
      %v503 = vld [vmem:[%s2 + $0x74] sm:$0xf]
      %v504 = vld [vmem:[%s2 + $0x78] sm:$0xf]
      %v505 = vld [vmem:[%s2 + $0x7c] sm:$0xf]
      %v506 = vld [vmem:[%s2 + $0x80] sm:$0xf]
      %v507 = vld [vmem:[%s2 + $0x84] sm:$0xf]
      %v508 = vld [vmem:[%s2 + $0x88] sm:$0xf]
      %v509 = vld [vmem:[%s2 + $0x8c] sm:$0xf]
      %v510 = vld [vmem:[%s2 + $0x90] sm:$0xf]
      %v511 = vld [vmem:[%s2 + $0x94] sm:$0xf]
      %v512 = vld [vmem:[%s2 + $0x98] sm:$0xf]
      %v513 = vld [vmem:[%s2 + $0x9c] sm:$0xf]
      %v514 = vld [vmem:[%s2 + $0xa0] sm:$0xf]
      %v515 = vld [vmem:[%s2 + $0xa4] sm:$0xf]
      %v516 = vld [vmem:[%s2 + $0xa8] sm:$0xf]
      %v517 = vld [vmem:[%s2 + $0xac] sm:$0xf]
      %v518 = vld [vmem:[%s2 + $0xb0] sm:$0xf]
      %v519 = vld [vmem:[%s2 + $0xb4] sm:$0xf]
      %v520 = vld [vmem:[%s2 + $0xb8] sm:$0xf]
      %v521 = vld [vmem:[%s2 + $0xbc] sm:$0xf]
      %v522 = vld [vmem:[%s2 + $0xc0] sm:$0xf]
      %v523 = vld [vmem:[%s2 + $0xc4] sm:$0xf]
      %v524 = vld [vmem:[%s2 + $0xc8] sm:$0xf]
      %v525 = vld [vmem:[%s2 + $0xcc] sm:$0xf]
      %v526 = vld [vmem:[%s2 + $0xd0] sm:$0xf]
      %v527 = vld [vmem:[%s2 + $0xd4] sm:$0xf]
      %v528 = vld [vmem:[%s2 + $0xd8] sm:$0xf]
      %v529 = vld [vmem:[%s2 + $0xdc] sm:$0xf]
      %v530 = vld [vmem:[%s2 + $0xe0] sm:$0xf]
      %v531 = vld [vmem:[%s2 + $0xe4] sm:$0xf]
      %v532 = vld [vmem:[%s2 + $0xe8] sm:$0xf]
      %v533 = vld [vmem:[%s2 + $0xec] sm:$0xf]
      %v534 = vld [vmem:[%s2 + $0xf0] sm:$0xf]
      %v535 = vld [vmem:[%s2 + $0xf4] sm:$0xf]
      %v536 = vld [vmem:[%s2 + $0xf8] sm:$0xf]
      %v537 = vld [vmem:[%s2 + $0xfc] sm:$0xf]
      %v538 = vld [vmem:[%s2 + $0x100] sm:$0xf]
      %v539 = vld [vmem:[%s2 + $0x104] sm:$0xf]
      %v540 = vld [vmem:[%s2 + $0x108] sm:$0xf]
      %v541 = vld [vmem:[%s2 + $0x10c] sm:$0xf]
      %v542 = vld [vmem:[%s2 + $0x110] sm:$0xf]
      %v543 = vld [vmem:[%s2 + $0x114] sm:$0xf]
      %v544 = vld [vmem:[%s2 + $0x118] sm:$0xf]
      %v545 = vld [vmem:[%s2 + $0x11c] sm:$0xf]
      %v546 = vld [vmem:[%s3] sm:$0x1]
      %v548 = vlaneseq
      %v549 = vshrl.u32 %v548, 7
      %v550 = vsub.s32 0, %v549
      %v551 = vrot.slane %v546, %v550
      %v559 = vunpack.c.l.b16 %v468
      %v560 = vunpack.c.h.b16 %v468
      %v561 = vunpack.c.l.b16 %v469
      %v562 = vunpack.c.h.b16 %v469
      %v563 = vunpack.c.l.b16 %v470
      %v564 = vunpack.c.l.b16 %v471
      %v565 = vunpack.c.h.b16 %v471
      %v566 = vunpack.c.l.b16 %v472
      %v567 = vunpack.c.h.b16 %v472
      %v568 = vunpack.c.l.b16 %v473
      %v569 = vpack.c.b16 %v564, %v559
      %v570 = vpack.c.b16 %v565, %v560
      %v571 = vpack.c.b16 %v566, %v561
      %v572 = vpack.c.b16 %v567, %v562
      %v573 = vpack.c.b16 %v568, %v563
      %v650 = vunpack.c.l.b16 %v474
      %v651 = vunpack.c.l.b16 %v475
      %v652 = vunpack.c.l.b16 %v476
      %v653 = vunpack.c.l.b16 %v477
      %v654 = vunpack.c.l.b16 %v478
      %v655 = vunpack.c.l.b16 %v479
      %v656 = vunpack.c.l.b16 %v480
      %v657 = vunpack.c.l.b16 %v481
      %v658 = vunpack.c.l.b16 %v482
      %v659 = vunpack.c.l.b16 %v483
      %v660 = vunpack.c.l.b16 %v484
      %v661 = vunpack.c.l.b16 %v485
      %v662 = vunpack.c.l.b16 %v486
      %v663 = vunpack.c.l.b16 %v487
      %v664 = vunpack.c.l.b16 %v488
      %v665 = vunpack.c.l.b16 %v489
      %v666 = vunpack.c.l.b16 %v490
      %v667 = vunpack.c.l.b16 %v491
      %v668 = vunpack.c.l.b16 %v492
      %v669 = vunpack.c.l.b16 %v493
      %v670 = vunpack.c.l.b16 %v494
      %v671 = vunpack.c.l.b16 %v495
      %v672 = vunpack.c.l.b16 %v496
      %v673 = vunpack.c.l.b16 %v497
      %v674 = vunpack.c.l.b16 %v498
      %v675 = vunpack.c.l.b16 %v499
      %v676 = vunpack.c.l.b16 %v500
      %v677 = vunpack.c.l.b16 %v501
      %v678 = vunpack.c.l.b16 %v502
      %v679 = vunpack.c.l.b16 %v503
      %v680 = vunpack.c.l.b16 %v504
      %v681 = vunpack.c.l.b16 %v505
      %v682 = vunpack.c.l.b16 %v506
      %v683 = vunpack.c.l.b16 %v507
      %v684 = vunpack.c.l.b16 %v508
      %v685 = vunpack.c.l.b16 %v509
      %v686 = vunpack.c.l.b16 %v510
      %v687 = vunpack.c.l.b16 %v511
      %v688 = vunpack.c.l.b16 %v512
      %v689 = vunpack.c.l.b16 %v513
      %v690 = vunpack.c.l.b16 %v514
      %v691 = vunpack.c.l.b16 %v515
      %v692 = vunpack.c.l.b16 %v516
      %v693 = vunpack.c.l.b16 %v517
      %v694 = vunpack.c.l.b16 %v518
      %v695 = vunpack.c.l.b16 %v519
      %v696 = vunpack.c.l.b16 %v520
      %v697 = vunpack.c.l.b16 %v521
      %v698 = vunpack.c.l.b16 %v522
      %v699 = vunpack.c.l.b16 %v523
      %v700 = vunpack.c.l.b16 %v524
      %v701 = vunpack.c.l.b16 %v525
      %v702 = vunpack.c.l.b16 %v526
      %v703 = vunpack.c.l.b16 %v527
      %v704 = vunpack.c.l.b16 %v528
      %v705 = vunpack.c.l.b16 %v529
      %v706 = vunpack.c.l.b16 %v530
      %v707 = vunpack.c.l.b16 %v531
      %v708 = vunpack.c.l.b16 %v532
      %v709 = vunpack.c.l.b16 %v533
      %v710 = vunpack.c.l.b16 %v534
      %v711 = vunpack.c.l.b16 %v535
      %v712 = vunpack.c.l.b16 %v536
      %v713 = vunpack.c.l.b16 %v537
      %v714 = vunpack.c.l.b16 %v538
      %v715 = vunpack.c.l.b16 %v539
      %v716 = vunpack.c.l.b16 %v540
      %v717 = vunpack.c.l.b16 %v541
      %v718 = vunpack.c.l.b16 %v542
      %v719 = vunpack.c.l.b16 %v543
      %v720 = vunpack.c.l.b16 %v544
      %v721 = vunpack.c.l.b16 %v545
      %v722 = vpack.c.b16 %v651, %v650
      %v723 = vpack.c.b16 %v653, %v652
      %v724 = vpack.c.b16 %v655, %v654
      %v725 = vpack.c.b16 %v657, %v656
      %v726 = vpack.c.b16 %v659, %v658
      %v727 = vpack.c.b16 %v661, %v660
      %v728 = vpack.c.b16 %v663, %v662
      %v729 = vpack.c.b16 %v665, %v664
      %v730 = vpack.c.b16 %v667, %v666
      %v731 = vpack.c.b16 %v669, %v668
      %v732 = vpack.c.b16 %v671, %v670
      %v733 = vpack.c.b16 %v673, %v672
      %v734 = vpack.c.b16 %v675, %v674
      %v735 = vpack.c.b16 %v677, %v676
      %v736 = vpack.c.b16 %v679, %v678
      %v737 = vpack.c.b16 %v681, %v680
      %v738 = vpack.c.b16 %v683, %v682
      %v739 = vpack.c.b16 %v685, %v684
      %v740 = vpack.c.b16 %v687, %v686
      %v741 = vpack.c.b16 %v689, %v688
      %v742 = vpack.c.b16 %v691, %v690
      %v743 = vpack.c.b16 %v693, %v692
      %v744 = vpack.c.b16 %v695, %v694
      %v745 = vpack.c.b16 %v697, %v696
      %v746 = vpack.c.b16 %v699, %v698
      %v747 = vpack.c.b16 %v701, %v700
      %v748 = vpack.c.b16 %v703, %v702
      %v749 = vpack.c.b16 %v705, %v704
      %v750 = vpack.c.b16 %v707, %v706
      %v751 = vpack.c.b16 %v709, %v708
      %v752 = vpack.c.b16 %v711, %v710
      %v753 = vpack.c.b16 %v713, %v712
      %v754 = vpack.c.b16 %v715, %v714
      %v755 = vpack.c.b16 %v717, %v716
      %v756 = vpack.c.b16 %v719, %v718
      %v757 = vpack.c.b16 %v721, %v720
      %vm794 = vcmask 523264
      %v796 = vsel %vm794, %v573, 0
      %798 = vmatprep.subr.bf16.mxu0 0
      %799 = vmatpush1.bf16.msra.mxu0 %v722
      %800 = vmatprep.subr.bf16.mxu0 0
      %801 = vmatpush1.bf16.msra.mxu0 %v723
      %802 = vmatprep.subr.bf16.mxu0 0
      %803 = vmatpush1.bf16.msra.mxu0 %v724
      %804 = vmatprep.subr.bf16.mxu0 0
      %805 = vmatpush1.bf16.msra.mxu0 %v725
      %806 = vmatprep.subr.bf16.mxu0 0
      %807 = vmatpush1.bf16.msra.mxu0 %v726
      %808 = vmatprep.subr.bf16.mxu0 0
      %809 = vmatpush1.bf16.msra.mxu0 %v727
      %810 = vmatprep.subr.bf16.mxu0 0
      %811 = vmatpush1.bf16.msra.mxu0 %v728
      %812 = vmatprep.subr.bf16.mxu0 0
      %813 = vmatpush1.bf16.msra.mxu0 %v729
      %814 = vmatprep.subr.bf16.mxu0 0
      %815 = vmatpush1.bf16.msra.mxu0 %v730
      %816 = vmatprep.subr.bf16.mxu0 0
      %817 = vmatpush1.bf16.msra.mxu0 %v731
      %818 = vmatprep.subr.bf16.mxu0 0
      %819 = vmatpush1.bf16.msra.mxu0 %v732
      %820 = vmatprep.subr.bf16.mxu0 0
      %821 = vmatpush1.bf16.msra.mxu0 %v733
      %822 = vmatprep.subr.bf16.mxu0 0
      %823 = vmatpush1.bf16.msra.mxu0 %v734
      %824 = vmatprep.subr.bf16.mxu0 0
      %825 = vmatpush1.bf16.msra.mxu0 %v735
      %826 = vmatprep.subr.bf16.mxu0 0
      %827 = vmatpush1.bf16.msra.mxu0 %v736
      %828 = vmatprep.subr.bf16.mxu0 0
      %829 = vmatpush1.bf16.msra.mxu0 %v737
      %830 = vmatprep.mubr.bf16.mxu0 %v570
      %831 = vmatmul.mubr.bf16.gmra.mrb[0].mxu0 %v569
      %v832 = vpop.f32.mrb[0].mxu0
      %v833 = vadd.f32 %v551, %v832
      %v834 = vpop.f32.mrb[0].mxu0
      %v835 = vpop.f32.mrb[0].mxu0
      %v836 = vadd.f32 %v551, %v835
      %v837 = vpop.f32.mrb[0].mxu0
      %838 = vdwg.mxu0
      %839 = vmatprep.subr.bf16.mxu0 0
      %840 = vmatpush1.bf16.msra.mxu0 %v738
      %841 = vmatprep.subr.bf16.mxu0 0
      %842 = vmatpush1.bf16.msra.mxu0 %v739
      %843 = vmatprep.subr.bf16.mxu0 0
      %844 = vmatpush1.bf16.msra.mxu0 %v740
      %845 = vmatprep.subr.bf16.mxu0 0
      %846 = vmatpush1.bf16.msra.mxu0 %v741
      %847 = vmatprep.subr.bf16.mxu0 0
      %848 = vmatpush1.bf16.msra.mxu0 %v742
      %849 = vmatprep.subr.bf16.mxu0 0
      %850 = vmatpush1.bf16.msra.mxu0 %v743
      %851 = vmatprep.subr.bf16.mxu0 0
      %852 = vmatpush1.bf16.msra.mxu0 %v744
      %853 = vmatprep.subr.bf16.mxu0 0
      %854 = vmatpush1.bf16.msra.mxu0 %v745
      %855 = vmatprep.subr.bf16.mxu0 0
      %856 = vmatpush1.bf16.msra.mxu0 %v746
      %857 = vmatprep.subr.bf16.mxu0 0
      %858 = vmatpush1.bf16.msra.mxu0 %v747
      %859 = vmatprep.subr.bf16.mxu0 0
      %860 = vmatpush1.bf16.msra.mxu0 %v748
      %861 = vmatprep.subr.bf16.mxu0 0
      %862 = vmatpush1.bf16.msra.mxu0 %v749
      %863 = vmatprep.subr.bf16.mxu0 0
      %864 = vmatpush1.bf16.msra.mxu0 %v750
      %865 = vmatprep.subr.bf16.mxu0 0
      %866 = vmatpush1.bf16.msra.mxu0 %v751
      %867 = vmatprep.subr.bf16.mxu0 0
      %868 = vmatpush1.bf16.msra.mxu0 %v752
      %869 = vmatprep.subr.bf16.mxu0 0
      %870 = vmatpush1.bf16.msra.mxu0 %v753
      %871 = vmatprep.mubr.bf16.mxu0 %v572
      %872 = vmatmul.mubr.bf16.gmra.mrb[0].mxu0 %v571
      %v873 = vpop.f32.mrb[0].mxu0
      %v874 = vadd.f32 %v833, %v873
      %v875 = vpop.f32.mrb[0].mxu0
      %v876 = vpop.f32.mrb[0].mxu0
      %v877 = vadd.f32 %v836, %v876
      %v878 = vpop.f32.mrb[0].mxu0
      %879 = vdwg.mxu0
      %880 = vmatprep.subr.bf16.mxu0 0
      %881 = vmatpush1.bf16.msra.mxu0 %v754
      %882 = vmatprep.subr.bf16.mxu0 0
      %883 = vmatpush1.bf16.msra.mxu0 %v755
      %884 = vmatprep.subr.bf16.mxu0 0
      %885 = vmatpush1.bf16.msra.mxu0 %v756
      %886 = vmatprep.subr.bf16.mxu0 0
      %887 = vmatpush1.bf16.msra.mxu0 %v757
      %888 = vmatprep.subr.bf16.mxu0 0
      %889 = vmatpush1.bf16.msra.mxu0 0
      %890 = vmatprep.subr.bf16.mxu0 0
      %891 = vmatpush1.bf16.msra.mxu0 0
      %892 = vmatprep.subr.bf16.mxu0 0
      %893 = vmatpush1.bf16.msra.mxu0 0
      %894 = vmatprep.subr.bf16.mxu0 0
      %895 = vmatpush1.bf16.msra.mxu0 0
      %896 = vmatprep.subr.bf16.mxu0 0
      %897 = vmatpush1.bf16.msra.mxu0 0
      %898 = vmatprep.subr.bf16.mxu0 0
      %899 = vmatpush1.bf16.msra.mxu0 0
      %900 = vmatprep.subr.bf16.mxu0 0
      %901 = vmatpush1.bf16.msra.mxu0 0
      %902 = vmatprep.subr.bf16.mxu0 0
      %903 = vmatpush1.bf16.msra.mxu0 0
      %904 = vmatprep.subr.bf16.mxu0 0
      %905 = vmatpush1.bf16.msra.mxu0 0
      %906 = vmatprep.subr.bf16.mxu0 0
      %907 = vmatpush1.bf16.msra.mxu0 0
      %908 = vmatprep.subr.bf16.mxu0 0
      %909 = vmatpush1.bf16.msra.mxu0 0
      %910 = vmatprep.subr.bf16.mxu0 0
      %911 = vmatpush1.bf16.msra.mxu0 0
      %912 = vmatprep.mubr.bf16.mxu0 0
      %913 = vmatmul.mubr.bf16.gmra.mrb[0].mxu0 %v796
      %v914 = vpop.f32.mrb[0].mxu0
      %v915 = vadd.f32 %v874, %v914
      %v916 = vpop.f32.mrb[0].mxu0
      %v917 = vpop.f32.mrb[0].mxu0
      %v918 = vadd.f32 %v877, %v917
      %v919 = vpop.f32.mrb[0].mxu0
      %920 = vdwg.mxu0
      %v921 = vmax.f32 %v915, 0.0
      %v922 = vmax.f32 %v918, 0.0
      %v923 = vld [vmem:[%s428] sm:$0xf]
      %v924 = vld [vmem:[%s428 + $0x4] sm:$0xf]
      %v925 = vld [vmem:[%s6] sm:$0xf]
      %v926 = vld [vmem:[%s6 + $0x4] sm:$0xf]
      %v927 = vld [vmem:[%s6 + $0x8] sm:$0xf]
      %v928 = vld [vmem:[%s6 + $0xc] sm:$0xf]
      %v929 = vld [vmem:[%s6 + $0x10] sm:$0xf]
      %v930 = vld [vmem:[%s6 + $0x14] sm:$0xf]
      %v931 = vld [vmem:[%s6 + $0x18] sm:$0xf]
      %v932 = vld [vmem:[%s6 + $0x1c] sm:$0xf]
      %v933 = vld [vmem:[%s7] sm:$0x1]
      %v935 = vlaneseq
      %v936 = vshrl.u32 %v935, 7
      %v937 = vsub.s32 0, %v936
      %v938 = vrot.slane %v933, %v937
      %v942 = vunpack.c.l.b16 %v923
      %v943 = vunpack.c.l.b16 %v924
      %v944 = vpack.c.b16 %v943, %v942
      %v953 = vunpack.c.l.b16 %v925
      %v954 = vunpack.c.l.b16 %v926
      %v955 = vunpack.c.l.b16 %v927
      %v956 = vunpack.c.l.b16 %v928
      %v957 = vunpack.c.l.b16 %v929
      %v958 = vunpack.c.l.b16 %v930
      %v959 = vunpack.c.l.b16 %v931
      %v960 = vunpack.c.l.b16 %v932
      %v961 = vpack.c.b16 %v954, %v953
      %v962 = vpack.c.b16 %v956, %v955
      %v963 = vpack.c.b16 %v958, %v957
      %v964 = vpack.c.b16 %v960, %v959
      %v970 = vsel %vm794, %v944, 0
      %972 = vmatprep.subr.bf16.mxu0 0
      %973 = vmatpush1.bf16.msra.mxu0 %v961
      %974 = vmatprep.subr.bf16.mxu0 0
      %975 = vmatpush1.bf16.msra.mxu0 %v962
      %976 = vmatprep.subr.bf16.mxu0 0
      %977 = vmatpush1.bf16.msra.mxu0 %v963
      %978 = vmatprep.subr.bf16.mxu0 0
      %979 = vmatpush1.bf16.msra.mxu0 %v964
      %980 = vmatprep.subr.bf16.mxu0 0
      %981 = vmatpush1.bf16.msra.mxu0 0
      %982 = vmatprep.subr.bf16.mxu0 0
      %983 = vmatpush1.bf16.msra.mxu0 0
      %984 = vmatprep.subr.bf16.mxu0 0
      %985 = vmatpush1.bf16.msra.mxu0 0
      %986 = vmatprep.subr.bf16.mxu0 0
      %987 = vmatpush1.bf16.msra.mxu0 0
      %988 = vmatprep.subr.bf16.mxu0 0
      %989 = vmatpush1.bf16.msra.mxu0 0
      %990 = vmatprep.subr.bf16.mxu0 0
      %991 = vmatpush1.bf16.msra.mxu0 0
      %992 = vmatprep.subr.bf16.mxu0 0
      %993 = vmatpush1.bf16.msra.mxu0 0
      %994 = vmatprep.subr.bf16.mxu0 0
      %995 = vmatpush1.bf16.msra.mxu0 0
      %996 = vmatprep.subr.bf16.mxu0 0
      %997 = vmatpush1.bf16.msra.mxu0 0
      %998 = vmatprep.subr.bf16.mxu0 0
      %999 = vmatpush1.bf16.msra.mxu0 0
      %1000 = vmatprep.subr.bf16.mxu0 0
      %1001 = vmatpush1.bf16.msra.mxu0 0
      %1002 = vmatprep.subr.bf16.mxu0 0
      %1003 = vmatpush1.bf16.msra.mxu0 0
      %1004 = vmatprep.mubr.bf16.mxu0 0
      %1005 = vmatmul.mubr.bf16.gmra.mrb[0].mxu0 %v970
      %v1006 = vpop.f32.mrb[0].mxu0
      %v1007 = vadd.f32 %v938, %v1006
      %v1008 = vpop.f32.mrb[0].mxu0
      %v1009 = vpop.f32.mrb[0].mxu0
      %v1010 = vadd.f32 %v938, %v1009
      %v1011 = vpop.f32.mrb[0].mxu0
      %1012 = vdwg.mxu0
      %1013 = vst [vmem:[#allocation2 + $0x8] sm:$0xff] %v921
      %1014 = vst [vmem:[#allocation2 + $0x10] sm:$0xff] %v922
      %v1015 = vld [vmem:[#allocation2 + $0x3] sm:$0xff]
      %v1016 = vld [vmem:[#allocation2 + $0xb] sm:$0xff]
      %v1017 = vsel %vm462, %v1015, 0.0
      %v1018 = vsel %vm463, %v1016, 0.0
      %v1019 = vpack.c.bf16 %v1018, %v1017
      %1020 = vst [vmem:[#allocation3] sm:$0xff] %v1019
      %v1021 = vld [vmem:[#allocation2 + $0x4] sm:$0xff]
      %v1022 = vld [vmem:[#allocation2 + $0xc] sm:$0xff]
      %v1023 = vpack.c.bf16 %v1022, %v1021
      %1024 = vst [vmem:[#allocation3 + $0x8] sm:$0xff] %v1023
      %v1025 = vld [vmem:[#allocation2 + $0x5] sm:$0xff]
      %v1026 = vld [vmem:[#allocation2 + $0xd] sm:$0xff]
      %v1027 = vsel %vm464, %v1025, 0.0
      %v1028 = vsel %vm465, %v1026, 0.0
      %v1029 = vpack.c.bf16 %v1028, %v1027
      %1030 = vst [vmem:[#allocation3 + $0x10] sm:$0xff] %v1029
      %v1031 = vld [vmem:[#allocation2 + $0x7] sm:$0xff]
      %v1032 = vld [vmem:[#allocation2 + $0xf] sm:$0xff]
      %v1033 = vsel %vm462, %v1031, 0.0
      %v1034 = vsel %vm463, %v1032, 0.0
      %v1035 = vpack.c.bf16 %v1034, %v1033
      %1036 = vst [vmem:[#allocation3 + $0x18] sm:$0xff] %v1035
      %v1037 = vld [vmem:[#allocation2 + $0x8] sm:$0xff]
      %v1038 = vld [vmem:[#allocation2 + $0x10] sm:$0xff]
      %v1039 = vpack.c.bf16 %v1038, %v1037
      %1040 = vst [vmem:[#allocation3 + $0x20] sm:$0xff] %v1039
      %v1041 = vld [vmem:[#allocation2 + $0x9] sm:$0xff]
      %v1042 = vld [vmem:[#allocation2 + $0x11] sm:$0xff]
      %v1043 = vsel %vm464, %v1041, 0.0
      %v1044 = vsel %vm465, %v1042, 0.0
      %v1045 = vpack.c.bf16 %v1044, %v1043
      %1046 = vst [vmem:[#allocation3 + $0x28] sm:$0xff] %v1045
      %v1047 = vld [vmem:[#allocation2 + $0xb] sm:$0xff]
      %v1048 = vld [vmem:[#allocation2 + $0x13] sm:$0xff]
      %v1049 = vsel %vm462, %v1047, 0.0
      %v1050 = vsel %vm463, %v1048, 0.0
      %v1051 = vpack.c.bf16 %v1050, %v1049
      %1052 = vst [vmem:[#allocation3 + $0x30] sm:$0xff] %v1051
      %v1053 = vld [vmem:[#allocation2 + $0xc] sm:$0xff]
      %v1054 = vld [vmem:[#allocation2 + $0x14] sm:$0xff]
      %v1055 = vpack.c.bf16 %v1054, %v1053
      %1056 = vst [vmem:[#allocation3 + $0x38] sm:$0xff] %v1055
      %v1057 = vld [vmem:[#allocation2 + $0xd] sm:$0xff]
      %v1058 = vld [vmem:[#allocation2 + $0x15] sm:$0xff]
      %v1059 = vsel %vm464, %v1057, 0.0
      %v1060 = vsel %vm465, %v1058, 0.0
      %v1061 = vpack.c.bf16 %v1060, %v1059
      %1062 = vst [vmem:[#allocation3 + $0x40] sm:$0xff] %v1061
      %v1063 = vld [vmem:[#allocation3] sm:$0xff]
      %v1064 = vld [vmem:[#allocation3 + $0x8] sm:$0xff]
      %v1065 = vld [vmem:[#allocation3 + $0x10] sm:$0xff]
      %v1066 = vld [vmem:[#allocation3 + $0x18] sm:$0xff]
      %v1067 = vld [vmem:[#allocation3 + $0x20] sm:$0xff]
      %v1068 = vld [vmem:[#allocation3 + $0x28] sm:$0xff]
      %v1069 = vld [vmem:[#allocation3 + $0x30] sm:$0xff]
      %v1070 = vld [vmem:[#allocation3 + $0x38] sm:$0xff]
      %v1071 = vld [vmem:[#allocation3 + $0x40] sm:$0xff]
      %v1072 = vld [vmem:[%s4] sm:$0xf]
      %v1073 = vld [vmem:[%s4 + $0x4] sm:$0xf]
      %v1074 = vld [vmem:[%s4 + $0x8] sm:$0xf]
      %v1075 = vld [vmem:[%s4 + $0xc] sm:$0xf]
      %v1076 = vld [vmem:[%s4 + $0x10] sm:$0xf]
      %v1077 = vld [vmem:[%s4 + $0x14] sm:$0xf]
      %v1078 = vld [vmem:[%s4 + $0x18] sm:$0xf]
      %v1079 = vld [vmem:[%s4 + $0x1c] sm:$0xf]
      %v1080 = vld [vmem:[%s4 + $0x20] sm:$0xf]
      %v1081 = vld [vmem:[%s4 + $0x24] sm:$0xf]
      %v1082 = vld [vmem:[%s4 + $0x28] sm:$0xf]
      %v1083 = vld [vmem:[%s4 + $0x2c] sm:$0xf]
      %v1084 = vld [vmem:[%s4 + $0x30] sm:$0xf]
      %v1085 = vld [vmem:[%s4 + $0x34] sm:$0xf]
      %v1086 = vld [vmem:[%s4 + $0x38] sm:$0xf]
      %v1087 = vld [vmem:[%s4 + $0x3c] sm:$0xf]
      %v1088 = vld [vmem:[%s4 + $0x40] sm:$0xf]
      %v1089 = vld [vmem:[%s4 + $0x44] sm:$0xf]
      %v1090 = vld [vmem:[%s4 + $0x48] sm:$0xf]
      %v1091 = vld [vmem:[%s4 + $0x4c] sm:$0xf]
      %v1092 = vld [vmem:[%s4 + $0x50] sm:$0xf]
      %v1093 = vld [vmem:[%s4 + $0x54] sm:$0xf]
      %v1094 = vld [vmem:[%s4 + $0x58] sm:$0xf]
      %v1095 = vld [vmem:[%s4 + $0x5c] sm:$0xf]
      %v1096 = vld [vmem:[%s4 + $0x60] sm:$0xf]
      %v1097 = vld [vmem:[%s4 + $0x64] sm:$0xf]
      %v1098 = vld [vmem:[%s4 + $0x68] sm:$0xf]
      %v1099 = vld [vmem:[%s4 + $0x6c] sm:$0xf]
      %v1100 = vld [vmem:[%s4 + $0x70] sm:$0xf]
      %v1101 = vld [vmem:[%s4 + $0x74] sm:$0xf]
      %v1102 = vld [vmem:[%s4 + $0x78] sm:$0xf]
      %v1103 = vld [vmem:[%s4 + $0x7c] sm:$0xf]
      %v1104 = vld [vmem:[%s4 + $0x80] sm:$0xf]
      %v1105 = vld [vmem:[%s4 + $0x84] sm:$0xf]
      %v1106 = vld [vmem:[%s4 + $0x88] sm:$0xf]
      %v1107 = vld [vmem:[%s4 + $0x8c] sm:$0xf]
      %v1108 = vld [vmem:[%s4 + $0x90] sm:$0xf]
      %v1109 = vld [vmem:[%s4 + $0x94] sm:$0xf]
      %v1110 = vld [vmem:[%s4 + $0x98] sm:$0xf]
      %v1111 = vld [vmem:[%s4 + $0x9c] sm:$0xf]
      %v1112 = vld [vmem:[%s4 + $0xa0] sm:$0xf]
      %v1113 = vld [vmem:[%s4 + $0xa4] sm:$0xf]
      %v1114 = vld [vmem:[%s4 + $0xa8] sm:$0xf]
      %v1115 = vld [vmem:[%s4 + $0xac] sm:$0xf]
      %v1116 = vld [vmem:[%s4 + $0xb0] sm:$0xf]
      %v1117 = vld [vmem:[%s4 + $0xb4] sm:$0xf]
      %v1118 = vld [vmem:[%s4 + $0xb8] sm:$0xf]
      %v1119 = vld [vmem:[%s4 + $0xbc] sm:$0xf]
      %v1120 = vld [vmem:[%s4 + $0xc0] sm:$0xf]
      %v1121 = vld [vmem:[%s4 + $0xc4] sm:$0xf]
      %v1122 = vld [vmem:[%s4 + $0xc8] sm:$0xf]
      %v1123 = vld [vmem:[%s4 + $0xcc] sm:$0xf]
      %v1124 = vld [vmem:[%s4 + $0xd0] sm:$0xf]
      %v1125 = vld [vmem:[%s4 + $0xd4] sm:$0xf]
      %v1126 = vld [vmem:[%s4 + $0xd8] sm:$0xf]
      %v1127 = vld [vmem:[%s4 + $0xdc] sm:$0xf]
      %v1128 = vld [vmem:[%s4 + $0xe0] sm:$0xf]
      %v1129 = vld [vmem:[%s4 + $0xe4] sm:$0xf]
      %v1130 = vld [vmem:[%s4 + $0xe8] sm:$0xf]
      %v1131 = vld [vmem:[%s4 + $0xec] sm:$0xf]
      %v1132 = vld [vmem:[%s4 + $0xf0] sm:$0xf]
      %v1133 = vld [vmem:[%s4 + $0xf4] sm:$0xf]
      %v1134 = vld [vmem:[%s4 + $0xf8] sm:$0xf]
      %v1135 = vld [vmem:[%s4 + $0xfc] sm:$0xf]
      %v1136 = vld [vmem:[%s4 + $0x100] sm:$0xf]
      %v1137 = vld [vmem:[%s4 + $0x104] sm:$0xf]
      %v1138 = vld [vmem:[%s4 + $0x108] sm:$0xf]
      %v1139 = vld [vmem:[%s4 + $0x10c] sm:$0xf]
      %v1140 = vld [vmem:[%s4 + $0x110] sm:$0xf]
      %v1141 = vld [vmem:[%s4 + $0x114] sm:$0xf]
      %v1142 = vld [vmem:[%s4 + $0x118] sm:$0xf]
      %v1143 = vld [vmem:[%s4 + $0x11c] sm:$0xf]
      %v1144 = vld [vmem:[%s4 + $0x120] sm:$0xf]
      %v1145 = vld [vmem:[%s4 + $0x124] sm:$0xf]
      %v1146 = vld [vmem:[%s4 + $0x128] sm:$0xf]
      %v1147 = vld [vmem:[%s4 + $0x12c] sm:$0xf]
      %v1148 = vld [vmem:[%s4 + $0x130] sm:$0xf]
      %v1149 = vld [vmem:[%s4 + $0x134] sm:$0xf]
      %v1150 = vld [vmem:[%s4 + $0x138] sm:$0xf]
      %v1151 = vld [vmem:[%s4 + $0x13c] sm:$0xf]
      %v1152 = vld [vmem:[%s4 + $0x140] sm:$0xf]
      %v1153 = vld [vmem:[%s4 + $0x144] sm:$0xf]
      %v1154 = vld [vmem:[%s4 + $0x148] sm:$0xf]
      %v1155 = vld [vmem:[%s4 + $0x14c] sm:$0xf]
      %v1156 = vld [vmem:[%s4 + $0x150] sm:$0xf]
      %v1157 = vld [vmem:[%s4 + $0x154] sm:$0xf]
      %v1158 = vld [vmem:[%s4 + $0x158] sm:$0xf]
      %v1159 = vld [vmem:[%s4 + $0x15c] sm:$0xf]
      %v1160 = vld [vmem:[%s4 + $0x160] sm:$0xf]
      %v1161 = vld [vmem:[%s4 + $0x164] sm:$0xf]
      %v1162 = vld [vmem:[%s4 + $0x168] sm:$0xf]
      %v1163 = vld [vmem:[%s4 + $0x16c] sm:$0xf]
      %v1164 = vld [vmem:[%s4 + $0x170] sm:$0xf]
      %v1165 = vld [vmem:[%s4 + $0x174] sm:$0xf]
      %v1166 = vld [vmem:[%s4 + $0x178] sm:$0xf]
      %v1167 = vld [vmem:[%s4 + $0x17c] sm:$0xf]
      %v1168 = vld [vmem:[%s4 + $0x180] sm:$0xf]
      %v1169 = vld [vmem:[%s4 + $0x184] sm:$0xf]
      %v1170 = vld [vmem:[%s4 + $0x188] sm:$0xf]
      %v1171 = vld [vmem:[%s4 + $0x18c] sm:$0xf]
      %v1172 = vld [vmem:[%s4 + $0x190] sm:$0xf]
      %v1173 = vld [vmem:[%s4 + $0x194] sm:$0xf]
      %v1174 = vld [vmem:[%s4 + $0x198] sm:$0xf]
      %v1175 = vld [vmem:[%s4 + $0x19c] sm:$0xf]
      %v1176 = vld [vmem:[%s4 + $0x1a0] sm:$0xf]
      %v1177 = vld [vmem:[%s4 + $0x1a4] sm:$0xf]
      %v1178 = vld [vmem:[%s4 + $0x1a8] sm:$0xf]
      %v1179 = vld [vmem:[%s4 + $0x1ac] sm:$0xf]
      %v1180 = vld [vmem:[%s4 + $0x1b0] sm:$0xf]
      %v1181 = vld [vmem:[%s4 + $0x1b4] sm:$0xf]
      %v1182 = vld [vmem:[%s4 + $0x1b8] sm:$0xf]
      %v1183 = vld [vmem:[%s4 + $0x1bc] sm:$0xf]
      %v1184 = vld [vmem:[%s4 + $0x1c0] sm:$0xf]
      %v1185 = vld [vmem:[%s4 + $0x1c4] sm:$0xf]
      %v1186 = vld [vmem:[%s4 + $0x1c8] sm:$0xf]
      %v1187 = vld [vmem:[%s4 + $0x1cc] sm:$0xf]
      %v1188 = vld [vmem:[%s4 + $0x1d0] sm:$0xf]
      %v1189 = vld [vmem:[%s4 + $0x1d4] sm:$0xf]
      %v1190 = vld [vmem:[%s4 + $0x1d8] sm:$0xf]
      %v1191 = vld [vmem:[%s4 + $0x1dc] sm:$0xf]
      %v1192 = vld [vmem:[%s4 + $0x1e0] sm:$0xf]
      %v1193 = vld [vmem:[%s4 + $0x1e4] sm:$0xf]
      %v1194 = vld [vmem:[%s4 + $0x1e8] sm:$0xf]
      %v1195 = vld [vmem:[%s4 + $0x1ec] sm:$0xf]
      %v1196 = vld [vmem:[%s4 + $0x1f0] sm:$0xf]
      %v1197 = vld [vmem:[%s4 + $0x1f4] sm:$0xf]
      %v1198 = vld [vmem:[%s4 + $0x1f8] sm:$0xf]
      %v1199 = vld [vmem:[%s4 + $0x1fc] sm:$0xf]
      %v1200 = vld [vmem:[%s4 + $0x200] sm:$0xf]
      %v1201 = vld [vmem:[%s4 + $0x204] sm:$0xf]
      %v1202 = vld [vmem:[%s4 + $0x208] sm:$0xf]
      %v1203 = vld [vmem:[%s4 + $0x20c] sm:$0xf]
      %v1204 = vld [vmem:[%s4 + $0x210] sm:$0xf]
      %v1205 = vld [vmem:[%s4 + $0x214] sm:$0xf]
      %v1206 = vld [vmem:[%s4 + $0x218] sm:$0xf]
      %v1207 = vld [vmem:[%s4 + $0x21c] sm:$0xf]
      %v1208 = vld [vmem:[%s4 + $0x220] sm:$0xf]
      %v1209 = vld [vmem:[%s4 + $0x224] sm:$0xf]
      %v1210 = vld [vmem:[%s4 + $0x228] sm:$0xf]
      %v1211 = vld [vmem:[%s4 + $0x22c] sm:$0xf]
      %v1212 = vld [vmem:[%s4 + $0x230] sm:$0xf]
      %v1213 = vld [vmem:[%s4 + $0x234] sm:$0xf]
      %v1214 = vld [vmem:[%s4 + $0x238] sm:$0xf]
      %v1215 = vld [vmem:[%s4 + $0x23c] sm:$0xf]
      %v1216 = vld [vmem:[%s5] sm:$0x1]
      %v1218 = vlaneseq
      %v1219 = vshrl.u32 %v1218, 7
      %v1220 = vsub.s32 0, %v1219
      %v1221 = vrot.slane %v1216, %v1220
      %v1367 = vunpack.c.l.b16 %v1072
      %v1368 = vunpack.c.l.b16 %v1073
      %v1369 = vunpack.c.l.b16 %v1074
      %v1370 = vunpack.c.l.b16 %v1075
      %v1371 = vunpack.c.l.b16 %v1076
      %v1372 = vunpack.c.l.b16 %v1077
      %v1373 = vunpack.c.l.b16 %v1078
      %v1374 = vunpack.c.l.b16 %v1079
      %v1375 = vunpack.c.l.b16 %v1080
      %v1376 = vunpack.c.l.b16 %v1081
      %v1377 = vunpack.c.l.b16 %v1082
      %v1378 = vunpack.c.l.b16 %v1083
      %v1379 = vunpack.c.l.b16 %v1084
      %v1380 = vunpack.c.l.b16 %v1085
      %v1381 = vunpack.c.l.b16 %v1086
      %v1382 = vunpack.c.l.b16 %v1087
      %v1383 = vunpack.c.l.b16 %v1088
      %v1384 = vunpack.c.l.b16 %v1089
      %v1385 = vunpack.c.l.b16 %v1090
      %v1386 = vunpack.c.l.b16 %v1091
      %v1387 = vunpack.c.l.b16 %v1092
      %v1388 = vunpack.c.l.b16 %v1093
      %v1389 = vunpack.c.l.b16 %v1094
      %v1390 = vunpack.c.l.b16 %v1095
      %v1391 = vunpack.c.l.b16 %v1096
      %v1392 = vunpack.c.l.b16 %v1097
      %v1393 = vunpack.c.l.b16 %v1098
      %v1394 = vunpack.c.l.b16 %v1099
      %v1395 = vunpack.c.l.b16 %v1100
      %v1396 = vunpack.c.l.b16 %v1101
      %v1397 = vunpack.c.l.b16 %v1102
      %v1398 = vunpack.c.l.b16 %v1103
      %v1399 = vunpack.c.l.b16 %v1104
      %v1400 = vunpack.c.l.b16 %v1105
      %v1401 = vunpack.c.l.b16 %v1106
      %v1402 = vunpack.c.l.b16 %v1107
      %v1403 = vunpack.c.l.b16 %v1108
      %v1404 = vunpack.c.l.b16 %v1109
      %v1405 = vunpack.c.l.b16 %v1110
      %v1406 = vunpack.c.l.b16 %v1111
      %v1407 = vunpack.c.l.b16 %v1112
      %v1408 = vunpack.c.l.b16 %v1113
      %v1409 = vunpack.c.l.b16 %v1114
      %v1410 = vunpack.c.l.b16 %v1115
      %v1411 = vunpack.c.l.b16 %v1116
      %v1412 = vunpack.c.l.b16 %v1117
      %v1413 = vunpack.c.l.b16 %v1118
      %v1414 = vunpack.c.l.b16 %v1119
      %v1415 = vunpack.c.l.b16 %v1120
      %v1416 = vunpack.c.l.b16 %v1121
      %v1417 = vunpack.c.l.b16 %v1122
      %v1418 = vunpack.c.l.b16 %v1123
      %v1419 = vunpack.c.l.b16 %v1124
      %v1420 = vunpack.c.l.b16 %v1125
      %v1421 = vunpack.c.l.b16 %v1126
      %v1422 = vunpack.c.l.b16 %v1127
      %v1423 = vunpack.c.l.b16 %v1128
      %v1424 = vunpack.c.l.b16 %v1129
      %v1425 = vunpack.c.l.b16 %v1130
      %v1426 = vunpack.c.l.b16 %v1131
      %v1427 = vunpack.c.l.b16 %v1132
      %v1428 = vunpack.c.l.b16 %v1133
      %v1429 = vunpack.c.l.b16 %v1134
      %v1430 = vunpack.c.l.b16 %v1135
      %v1431 = vunpack.c.l.b16 %v1136
      %v1432 = vunpack.c.l.b16 %v1137
      %v1433 = vunpack.c.l.b16 %v1138
      %v1434 = vunpack.c.l.b16 %v1139
      %v1435 = vunpack.c.l.b16 %v1140
      %v1436 = vunpack.c.l.b16 %v1141
      %v1437 = vunpack.c.l.b16 %v1142
      %v1438 = vunpack.c.l.b16 %v1143
      %v1439 = vunpack.c.l.b16 %v1144
      %v1440 = vunpack.c.l.b16 %v1145
      %v1441 = vunpack.c.l.b16 %v1146
      %v1442 = vunpack.c.l.b16 %v1147
      %v1443 = vunpack.c.l.b16 %v1148
      %v1444 = vunpack.c.l.b16 %v1149
      %v1445 = vunpack.c.l.b16 %v1150
      %v1446 = vunpack.c.l.b16 %v1151
      %v1447 = vunpack.c.l.b16 %v1152
      %v1448 = vunpack.c.l.b16 %v1153
      %v1449 = vunpack.c.l.b16 %v1154
      %v1450 = vunpack.c.l.b16 %v1155
      %v1451 = vunpack.c.l.b16 %v1156
      %v1452 = vunpack.c.l.b16 %v1157
      %v1453 = vunpack.c.l.b16 %v1158
      %v1454 = vunpack.c.l.b16 %v1159
      %v1455 = vunpack.c.l.b16 %v1160
      %v1456 = vunpack.c.l.b16 %v1161
      %v1457 = vunpack.c.l.b16 %v1162
      %v1458 = vunpack.c.l.b16 %v1163
      %v1459 = vunpack.c.l.b16 %v1164
      %v1460 = vunpack.c.l.b16 %v1165
      %v1461 = vunpack.c.l.b16 %v1166
      %v1462 = vunpack.c.l.b16 %v1167
      %v1463 = vunpack.c.l.b16 %v1168
      %v1464 = vunpack.c.l.b16 %v1169
      %v1465 = vunpack.c.l.b16 %v1170
      %v1466 = vunpack.c.l.b16 %v1171
      %v1467 = vunpack.c.l.b16 %v1172
      %v1468 = vunpack.c.l.b16 %v1173
      %v1469 = vunpack.c.l.b16 %v1174
      %v1470 = vunpack.c.l.b16 %v1175
      %v1471 = vunpack.c.l.b16 %v1176
      %v1472 = vunpack.c.l.b16 %v1177
      %v1473 = vunpack.c.l.b16 %v1178
      %v1474 = vunpack.c.l.b16 %v1179
      %v1475 = vunpack.c.l.b16 %v1180
      %v1476 = vunpack.c.l.b16 %v1181
      %v1477 = vunpack.c.l.b16 %v1182
      %v1478 = vunpack.c.l.b16 %v1183
      %v1479 = vunpack.c.l.b16 %v1184
      %v1480 = vunpack.c.l.b16 %v1185
      %v1481 = vunpack.c.l.b16 %v1186
      %v1482 = vunpack.c.l.b16 %v1187
      %v1483 = vunpack.c.l.b16 %v1188
      %v1484 = vunpack.c.l.b16 %v1189
      %v1485 = vunpack.c.l.b16 %v1190
      %v1486 = vunpack.c.l.b16 %v1191
      %v1487 = vunpack.c.l.b16 %v1192
      %v1488 = vunpack.c.l.b16 %v1193
      %v1489 = vunpack.c.l.b16 %v1194
      %v1490 = vunpack.c.l.b16 %v1195
      %v1491 = vunpack.c.l.b16 %v1196
      %v1492 = vunpack.c.l.b16 %v1197
      %v1493 = vunpack.c.l.b16 %v1198
      %v1494 = vunpack.c.l.b16 %v1199
      %v1495 = vunpack.c.l.b16 %v1200
      %v1496 = vunpack.c.l.b16 %v1201
      %v1497 = vunpack.c.l.b16 %v1202
      %v1498 = vunpack.c.l.b16 %v1203
      %v1499 = vunpack.c.l.b16 %v1204
      %v1500 = vunpack.c.l.b16 %v1205
      %v1501 = vunpack.c.l.b16 %v1206
      %v1502 = vunpack.c.l.b16 %v1207
      %v1503 = vunpack.c.l.b16 %v1208
      %v1504 = vunpack.c.l.b16 %v1209
      %v1505 = vunpack.c.l.b16 %v1210
      %v1506 = vunpack.c.l.b16 %v1211
      %v1507 = vunpack.c.l.b16 %v1212
      %v1508 = vunpack.c.l.b16 %v1213
      %v1509 = vunpack.c.l.b16 %v1214
      %v1510 = vunpack.c.l.b16 %v1215
      %v1511 = vpack.c.b16 %v1368, %v1367
      %v1512 = vpack.c.b16 %v1370, %v1369
      %v1513 = vpack.c.b16 %v1372, %v1371
      %v1514 = vpack.c.b16 %v1374, %v1373
      %v1515 = vpack.c.b16 %v1376, %v1375
      %v1516 = vpack.c.b16 %v1378, %v1377
      %v1517 = vpack.c.b16 %v1380, %v1379
      %v1518 = vpack.c.b16 %v1382, %v1381
      %v1519 = vpack.c.b16 %v1384, %v1383
      %v1520 = vpack.c.b16 %v1386, %v1385
      %v1521 = vpack.c.b16 %v1388, %v1387
      %v1522 = vpack.c.b16 %v1390, %v1389
      %v1523 = vpack.c.b16 %v1392, %v1391
      %v1524 = vpack.c.b16 %v1394, %v1393
      %v1525 = vpack.c.b16 %v1396, %v1395
      %v1526 = vpack.c.b16 %v1398, %v1397
      %v1527 = vpack.c.b16 %v1400, %v1399
      %v1528 = vpack.c.b16 %v1402, %v1401
      %v1529 = vpack.c.b16 %v1404, %v1403
      %v1530 = vpack.c.b16 %v1406, %v1405
      %v1531 = vpack.c.b16 %v1408, %v1407
      %v1532 = vpack.c.b16 %v1410, %v1409
      %v1533 = vpack.c.b16 %v1412, %v1411
      %v1534 = vpack.c.b16 %v1414, %v1413
      %v1535 = vpack.c.b16 %v1416, %v1415
      %v1536 = vpack.c.b16 %v1418, %v1417
      %v1537 = vpack.c.b16 %v1420, %v1419
      %v1538 = vpack.c.b16 %v1422, %v1421
      %v1539 = vpack.c.b16 %v1424, %v1423
      %v1540 = vpack.c.b16 %v1426, %v1425
      %v1541 = vpack.c.b16 %v1428, %v1427
      %v1542 = vpack.c.b16 %v1430, %v1429
      %v1543 = vpack.c.b16 %v1432, %v1431
      %v1544 = vpack.c.b16 %v1434, %v1433
      %v1545 = vpack.c.b16 %v1436, %v1435
      %v1546 = vpack.c.b16 %v1438, %v1437
      %v1547 = vpack.c.b16 %v1440, %v1439
      %v1548 = vpack.c.b16 %v1442, %v1441
      %v1549 = vpack.c.b16 %v1444, %v1443
      %v1550 = vpack.c.b16 %v1446, %v1445
      %v1551 = vpack.c.b16 %v1448, %v1447
      %v1552 = vpack.c.b16 %v1450, %v1449
      %v1553 = vpack.c.b16 %v1452, %v1451
      %v1554 = vpack.c.b16 %v1454, %v1453
      %v1555 = vpack.c.b16 %v1456, %v1455
      %v1556 = vpack.c.b16 %v1458, %v1457
      %v1557 = vpack.c.b16 %v1460, %v1459
      %v1558 = vpack.c.b16 %v1462, %v1461
      %v1559 = vpack.c.b16 %v1464, %v1463
      %v1560 = vpack.c.b16 %v1466, %v1465
      %v1561 = vpack.c.b16 %v1468, %v1467
      %v1562 = vpack.c.b16 %v1470, %v1469
      %v1563 = vpack.c.b16 %v1472, %v1471
      %v1564 = vpack.c.b16 %v1474, %v1473
      %v1565 = vpack.c.b16 %v1476, %v1475
      %v1566 = vpack.c.b16 %v1478, %v1477
      %v1567 = vpack.c.b16 %v1480, %v1479
      %v1568 = vpack.c.b16 %v1482, %v1481
      %v1569 = vpack.c.b16 %v1484, %v1483
      %v1570 = vpack.c.b16 %v1486, %v1485
      %v1571 = vpack.c.b16 %v1488, %v1487
      %v1572 = vpack.c.b16 %v1490, %v1489
      %v1573 = vpack.c.b16 %v1492, %v1491
      %v1574 = vpack.c.b16 %v1494, %v1493
      %v1575 = vpack.c.b16 %v1496, %v1495
      %v1576 = vpack.c.b16 %v1498, %v1497
      %v1577 = vpack.c.b16 %v1500, %v1499
      %v1578 = vpack.c.b16 %v1502, %v1501
      %v1579 = vpack.c.b16 %v1504, %v1503
      %v1580 = vpack.c.b16 %v1506, %v1505
      %v1581 = vpack.c.b16 %v1508, %v1507
      %v1582 = vpack.c.b16 %v1510, %v1509
      %1655 = vmatprep.subr.bf16.mxu0 0
      %1656 = vmatpush1.bf16.msra.mxu0 %v1511
      %1657 = vmatprep.subr.bf16.mxu0 0
      %1658 = vmatpush1.bf16.msra.mxu0 %v1512
      %1659 = vmatprep.subr.bf16.mxu0 0
      %1660 = vmatpush1.bf16.msra.mxu0 %v1513
      %1661 = vmatprep.subr.bf16.mxu0 0
      %1662 = vmatpush1.bf16.msra.mxu0 %v1514
      %1663 = vmatprep.subr.bf16.mxu0 0
      %1664 = vmatpush1.bf16.msra.mxu0 %v1515
      %1665 = vmatprep.subr.bf16.mxu0 0
      %1666 = vmatpush1.bf16.msra.mxu0 %v1516
      %1667 = vmatprep.subr.bf16.mxu0 0
      %1668 = vmatpush1.bf16.msra.mxu0 %v1517
      %1669 = vmatprep.subr.bf16.mxu0 0
      %1670 = vmatpush1.bf16.msra.mxu0 %v1518
      %1671 = vmatprep.subr.bf16.mxu0 0
      %1672 = vmatpush1.bf16.msra.mxu0 %v1519
      %1673 = vmatprep.subr.bf16.mxu0 0
      %1674 = vmatpush1.bf16.msra.mxu0 %v1520
      %1675 = vmatprep.subr.bf16.mxu0 0
      %1676 = vmatpush1.bf16.msra.mxu0 %v1521
      %1677 = vmatprep.subr.bf16.mxu0 0
      %1678 = vmatpush1.bf16.msra.mxu0 %v1522
      %1679 = vmatprep.subr.bf16.mxu0 0
      %1680 = vmatpush1.bf16.msra.mxu0 %v1523
      %1681 = vmatprep.subr.bf16.mxu0 0
      %1682 = vmatpush1.bf16.msra.mxu0 %v1524
      %1683 = vmatprep.subr.bf16.mxu0 0
      %1684 = vmatpush1.bf16.msra.mxu0 %v1525
      %1685 = vmatprep.subr.bf16.mxu0 0
      %1686 = vmatpush1.bf16.msra.mxu0 %v1526
      %1687 = vmatprep.mubr.bf16.mxu0 %v1064
      %1688 = vmatmul.mubr.bf16.gmra.mrb[0].mxu0 %v1063
      %v1689 = vpop.f32.mrb[0].mxu0
      %v1690 = vadd.f32 %v1221, %v1689
      %v1691 = vpop.f32.mrb[0].mxu0
      %v1692 = vpop.f32.mrb[0].mxu0
      %v1693 = vadd.f32 %v1221, %v1692
      %v1694 = vpop.f32.mrb[0].mxu0
      %1695 = vdwg.mxu0
      %1696 = vmatprep.subr.bf16.mxu0 0
      %1697 = vmatpush1.bf16.msra.mxu0 %v1527
      %1698 = vmatprep.subr.bf16.mxu0 0
      %1699 = vmatpush1.bf16.msra.mxu0 %v1528
      %1700 = vmatprep.subr.bf16.mxu0 0
      %1701 = vmatpush1.bf16.msra.mxu0 %v1529
      %1702 = vmatprep.subr.bf16.mxu0 0
      %1703 = vmatpush1.bf16.msra.mxu0 %v1530
      %1704 = vmatprep.subr.bf16.mxu0 0
      %1705 = vmatpush1.bf16.msra.mxu0 %v1531
      %1706 = vmatprep.subr.bf16.mxu0 0
      %1707 = vmatpush1.bf16.msra.mxu0 %v1532
      %1708 = vmatprep.subr.bf16.mxu0 0
      %1709 = vmatpush1.bf16.msra.mxu0 %v1533
      %1710 = vmatprep.subr.bf16.mxu0 0
      %1711 = vmatpush1.bf16.msra.mxu0 %v1534
      %1712 = vmatprep.subr.bf16.mxu0 0
      %1713 = vmatpush1.bf16.msra.mxu0 %v1535
      %1714 = vmatprep.subr.bf16.mxu0 0
      %1715 = vmatpush1.bf16.msra.mxu0 %v1536
      %1716 = vmatprep.subr.bf16.mxu0 0
      %1717 = vmatpush1.bf16.msra.mxu0 %v1537
      %1718 = vmatprep.subr.bf16.mxu0 0
      %1719 = vmatpush1.bf16.msra.mxu0 %v1538
      %1720 = vmatprep.subr.bf16.mxu0 0
      %1721 = vmatpush1.bf16.msra.mxu0 %v1539
      %1722 = vmatprep.subr.bf16.mxu0 0
      %1723 = vmatpush1.bf16.msra.mxu0 %v1540
      %1724 = vmatprep.subr.bf16.mxu0 0
      %1725 = vmatpush1.bf16.msra.mxu0 %v1541
      %1726 = vmatprep.subr.bf16.mxu0 0
      %1727 = vmatpush1.bf16.msra.mxu0 %v1542
      %1728 = vmatprep.mubr.bf16.mxu0 %v1066
      %1729 = vmatmul.mubr.bf16.gmra.mrb[0].mxu0 %v1065
      %v1730 = vpop.f32.mrb[0].mxu0
      %v1731 = vadd.f32 %v1690, %v1730
      %v1732 = vpop.f32.mrb[0].mxu0
      %v1733 = vpop.f32.mrb[0].mxu0
      %v1734 = vadd.f32 %v1693, %v1733
      %v1735 = vpop.f32.mrb[0].mxu0
      %1736 = vdwg.mxu0
      %1737 = vmatprep.subr.bf16.mxu0 0
      %1738 = vmatpush1.bf16.msra.mxu0 %v1543
      %1739 = vmatprep.subr.bf16.mxu0 0
      %1740 = vmatpush1.bf16.msra.mxu0 %v1544
      %1741 = vmatprep.subr.bf16.mxu0 0
      %1742 = vmatpush1.bf16.msra.mxu0 %v1545
      %1743 = vmatprep.subr.bf16.mxu0 0
      %1744 = vmatpush1.bf16.msra.mxu0 %v1546
      %1745 = vmatprep.subr.bf16.mxu0 0
      %1746 = vmatpush1.bf16.msra.mxu0 %v1547
      %1747 = vmatprep.subr.bf16.mxu0 0
      %1748 = vmatpush1.bf16.msra.mxu0 %v1548
      %1749 = vmatprep.subr.bf16.mxu0 0
      %1750 = vmatpush1.bf16.msra.mxu0 %v1549
      %1751 = vmatprep.subr.bf16.mxu0 0
      %1752 = vmatpush1.bf16.msra.mxu0 %v1550
      %1753 = vmatprep.subr.bf16.mxu0 0
      %1754 = vmatpush1.bf16.msra.mxu0 %v1551
      %1755 = vmatprep.subr.bf16.mxu0 0
      %1756 = vmatpush1.bf16.msra.mxu0 %v1552
      %1757 = vmatprep.subr.bf16.mxu0 0
      %1758 = vmatpush1.bf16.msra.mxu0 %v1553
      %1759 = vmatprep.subr.bf16.mxu0 0
      %1760 = vmatpush1.bf16.msra.mxu0 %v1554
      %1761 = vmatprep.subr.bf16.mxu0 0
      %1762 = vmatpush1.bf16.msra.mxu0 %v1555
      %1763 = vmatprep.subr.bf16.mxu0 0
      %1764 = vmatpush1.bf16.msra.mxu0 %v1556
      %1765 = vmatprep.subr.bf16.mxu0 0
      %1766 = vmatpush1.bf16.msra.mxu0 %v1557
      %1767 = vmatprep.subr.bf16.mxu0 0
      %1768 = vmatpush1.bf16.msra.mxu0 %v1558
      %1769 = vmatprep.mubr.bf16.mxu0 %v1068
      %1770 = vmatmul.mubr.bf16.gmra.mrb[0].mxu0 %v1067
      %v1771 = vpop.f32.mrb[0].mxu0
      %v1772 = vadd.f32 %v1731, %v1771
      %v1773 = vpop.f32.mrb[0].mxu0
      %v1774 = vpop.f32.mrb[0].mxu0
      %v1775 = vadd.f32 %v1734, %v1774
      %v1776 = vpop.f32.mrb[0].mxu0
      %1777 = vdwg.mxu0
      %1778 = vmatprep.subr.bf16.mxu0 0
      %1779 = vmatpush1.bf16.msra.mxu0 %v1559
      %1780 = vmatprep.subr.bf16.mxu0 0
      %1781 = vmatpush1.bf16.msra.mxu0 %v1560
      %1782 = vmatprep.subr.bf16.mxu0 0
      %1783 = vmatpush1.bf16.msra.mxu0 %v1561
      %1784 = vmatprep.subr.bf16.mxu0 0
      %1785 = vmatpush1.bf16.msra.mxu0 %v1562
      %1786 = vmatprep.subr.bf16.mxu0 0
      %1787 = vmatpush1.bf16.msra.mxu0 %v1563
      %1788 = vmatprep.subr.bf16.mxu0 0
      %1789 = vmatpush1.bf16.msra.mxu0 %v1564
      %1790 = vmatprep.subr.bf16.mxu0 0
      %1791 = vmatpush1.bf16.msra.mxu0 %v1565
      %1792 = vmatprep.subr.bf16.mxu0 0
      %1793 = vmatpush1.bf16.msra.mxu0 %v1566
      %1794 = vmatprep.subr.bf16.mxu0 0
      %1795 = vmatpush1.bf16.msra.mxu0 %v1567
      %1796 = vmatprep.subr.bf16.mxu0 0
      %1797 = vmatpush1.bf16.msra.mxu0 %v1568
      %1798 = vmatprep.subr.bf16.mxu0 0
      %1799 = vmatpush1.bf16.msra.mxu0 %v1569
      %1800 = vmatprep.subr.bf16.mxu0 0
      %1801 = vmatpush1.bf16.msra.mxu0 %v1570
      %1802 = vmatprep.subr.bf16.mxu0 0
      %1803 = vmatpush1.bf16.msra.mxu0 %v1571
      %1804 = vmatprep.subr.bf16.mxu0 0
      %1805 = vmatpush1.bf16.msra.mxu0 %v1572
      %1806 = vmatprep.subr.bf16.mxu0 0
      %1807 = vmatpush1.bf16.msra.mxu0 %v1573
      %1808 = vmatprep.subr.bf16.mxu0 0
      %1809 = vmatpush1.bf16.msra.mxu0 %v1574
      %1810 = vmatprep.mubr.bf16.mxu0 %v1070
      %1811 = vmatmul.mubr.bf16.gmra.mrb[0].mxu0 %v1069
      %v1812 = vpop.f32.mrb[0].mxu0
      %v1813 = vadd.f32 %v1772, %v1812
      %v1814 = vpop.f32.mrb[0].mxu0
      %v1815 = vpop.f32.mrb[0].mxu0
      %v1816 = vadd.f32 %v1775, %v1815
      %v1817 = vpop.f32.mrb[0].mxu0
      %1818 = vdwg.mxu0
      %1819 = vmatprep.subr.bf16.mxu0 0
      %1820 = vmatpush1.bf16.msra.mxu0 %v1575
      %1821 = vmatprep.subr.bf16.mxu0 0
      %1822 = vmatpush1.bf16.msra.mxu0 %v1576
      %1823 = vmatprep.subr.bf16.mxu0 0
      %1824 = vmatpush1.bf16.msra.mxu0 %v1577
      %1825 = vmatprep.subr.bf16.mxu0 0
      %1826 = vmatpush1.bf16.msra.mxu0 %v1578
      %1827 = vmatprep.subr.bf16.mxu0 0
      %1828 = vmatpush1.bf16.msra.mxu0 %v1579
      %1829 = vmatprep.subr.bf16.mxu0 0
      %1830 = vmatpush1.bf16.msra.mxu0 %v1580
      %1831 = vmatprep.subr.bf16.mxu0 0
      %1832 = vmatpush1.bf16.msra.mxu0 %v1581
      %1833 = vmatprep.subr.bf16.mxu0 0
      %1834 = vmatpush1.bf16.msra.mxu0 %v1582
      %1835 = vmatprep.subr.bf16.mxu0 0
      %1836 = vmatpush1.bf16.msra.mxu0 0
      %1837 = vmatprep.subr.bf16.mxu0 0
      %1838 = vmatpush1.bf16.msra.mxu0 0
      %1839 = vmatprep.subr.bf16.mxu0 0
      %1840 = vmatpush1.bf16.msra.mxu0 0
      %1841 = vmatprep.subr.bf16.mxu0 0
      %1842 = vmatpush1.bf16.msra.mxu0 0
      %1843 = vmatprep.subr.bf16.mxu0 0
      %1844 = vmatpush1.bf16.msra.mxu0 0
      %1845 = vmatprep.subr.bf16.mxu0 0
      %1846 = vmatpush1.bf16.msra.mxu0 0
      %1847 = vmatprep.subr.bf16.mxu0 0
      %1848 = vmatpush1.bf16.msra.mxu0 0
      %1849 = vmatprep.subr.bf16.mxu0 0
      %1850 = vmatpush1.bf16.msra.mxu0 0
      %1851 = vmatprep.mubr.bf16.mxu0 0
      %1852 = vmatmul.mubr.bf16.gmra.mrb[0].mxu0 %v1071
      %v1853 = vpop.f32.mrb[0].mxu0
      %v1854 = vadd.f32 %v1813, %v1853
      %v1855 = vpop.f32.mrb[0].mxu0
      %v1856 = vpop.f32.mrb[0].mxu0
      %v1857 = vadd.f32 %v1816, %v1856
      %v1858 = vpop.f32.mrb[0].mxu0
      %1859 = vdwg.mxu0
      %v1860 = vadd.f32 %v1854, %v1007
      %v1861 = vadd.f32 %v1857, %v1010
      %v1862 = vmax.f32 %v1860, 0.0
      %v1863 = vmax.f32 %v1861, 0.0
      %1864 = vst [vmem:[#allocation2 + $0x8] sm:$0xff] %v1862
      %1865 = vst [vmem:[#allocation2 + $0x10] sm:$0xff] %v1863
      %v1866 = vld [vmem:[#allocation2 + $0x3] sm:$0xff]
      %v1867 = vld [vmem:[#allocation2 + $0xb] sm:$0xff]
      %v1868 = vsel %vm462, %v1866, 0.0
      %v1869 = vsel %vm463, %v1867, 0.0
      %v1870 = vpack.c.bf16 %v1869, %v1868
      %1871 = vst [vmem:[#allocation3] sm:$0xff] %v1870
      %v1872 = vld [vmem:[#allocation2 + $0x4] sm:$0xff]
      %v1873 = vld [vmem:[#allocation2 + $0xc] sm:$0xff]
      %v1874 = vpack.c.bf16 %v1873, %v1872
      %1875 = vst [vmem:[#allocation3 + $0x8] sm:$0xff] %v1874
      %v1876 = vld [vmem:[#allocation2 + $0x5] sm:$0xff]
      %v1877 = vld [vmem:[#allocation2 + $0xd] sm:$0xff]
      %v1878 = vsel %vm464, %v1876, 0.0
      %v1879 = vsel %vm465, %v1877, 0.0
      %v1880 = vpack.c.bf16 %v1879, %v1878
      %1881 = vst [vmem:[#allocation3 + $0x10] sm:$0xff] %v1880
      %v1882 = vld [vmem:[#allocation2 + $0x7] sm:$0xff]
      %v1883 = vld [vmem:[#allocation2 + $0xf] sm:$0xff]
      %v1884 = vsel %vm462, %v1882, 0.0
      %v1885 = vsel %vm463, %v1883, 0.0
      %v1886 = vpack.c.bf16 %v1885, %v1884
      %1887 = vst [vmem:[#allocation3 + $0x18] sm:$0xff] %v1886
      %v1888 = vld [vmem:[#allocation2 + $0x8] sm:$0xff]
      %v1889 = vld [vmem:[#allocation2 + $0x10] sm:$0xff]
      %v1890 = vpack.c.bf16 %v1889, %v1888
      %1891 = vst [vmem:[#allocation3 + $0x20] sm:$0xff] %v1890
      %v1892 = vld [vmem:[#allocation2 + $0x9] sm:$0xff]
      %v1893 = vld [vmem:[#allocation2 + $0x11] sm:$0xff]
      %v1894 = vsel %vm464, %v1892, 0.0
      %v1895 = vsel %vm465, %v1893, 0.0
      %v1896 = vpack.c.bf16 %v1895, %v1894
      %1897 = vst [vmem:[#allocation3 + $0x28] sm:$0xff] %v1896
      %v1898 = vld [vmem:[#allocation2 + $0xb] sm:$0xff]
      %v1899 = vld [vmem:[#allocation2 + $0x13] sm:$0xff]
      %v1900 = vsel %vm462, %v1898, 0.0
      %v1901 = vsel %vm463, %v1899, 0.0
      %v1902 = vpack.c.bf16 %v1901, %v1900
      %1903 = vst [vmem:[#allocation3 + $0x30] sm:$0xff] %v1902
      %v1904 = vld [vmem:[#allocation2 + $0xc] sm:$0xff]
      %v1905 = vld [vmem:[#allocation2 + $0x14] sm:$0xff]
      %v1906 = vpack.c.bf16 %v1905, %v1904
      %1907 = vst [vmem:[#allocation3 + $0x38] sm:$0xff] %v1906
      %v1908 = vld [vmem:[#allocation2 + $0xd] sm:$0xff]
      %v1909 = vld [vmem:[#allocation2 + $0x15] sm:$0xff]
      %v1910 = vsel %vm464, %v1908, 0.0
      %v1911 = vsel %vm465, %v1909, 0.0
      %v1912 = vpack.c.bf16 %v1911, %v1910
      %1913 = vst [vmem:[#allocation3 + $0x40] sm:$0xff] %v1912
      %v1914 = vld [vmem:[#allocation3] sm:$0xff]
      %v1915 = vld [vmem:[#allocation3 + $0x8] sm:$0xff]
      %v1916 = vld [vmem:[#allocation3 + $0x10] sm:$0xff]
      %v1917 = vld [vmem:[#allocation3 + $0x18] sm:$0xff]
      %v1918 = vld [vmem:[#allocation3 + $0x20] sm:$0xff]
      %v1919 = vld [vmem:[#allocation3 + $0x28] sm:$0xff]
      %v1920 = vld [vmem:[#allocation3 + $0x30] sm:$0xff]
      %v1921 = vld [vmem:[#allocation3 + $0x38] sm:$0xff]
      %v1922 = vld [vmem:[#allocation3 + $0x40] sm:$0xff]
      %v1923 = vld [vmem:[%s8] sm:$0xf]
      %v1924 = vld [vmem:[%s8 + $0x4] sm:$0xf]
      %v1925 = vld [vmem:[%s8 + $0x8] sm:$0xf]
      %v1926 = vld [vmem:[%s8 + $0xc] sm:$0xf]
      %v1927 = vld [vmem:[%s8 + $0x10] sm:$0xf]
      %v1928 = vld [vmem:[%s8 + $0x14] sm:$0xf]
      %v1929 = vld [vmem:[%s8 + $0x18] sm:$0xf]
      %v1930 = vld [vmem:[%s8 + $0x1c] sm:$0xf]
      %v1931 = vld [vmem:[%s8 + $0x20] sm:$0xf]
      %v1932 = vld [vmem:[%s8 + $0x24] sm:$0xf]
      %v1933 = vld [vmem:[%s8 + $0x28] sm:$0xf]
      %v1934 = vld [vmem:[%s8 + $0x2c] sm:$0xf]
      %v1935 = vld [vmem:[%s8 + $0x30] sm:$0xf]
      %v1936 = vld [vmem:[%s8 + $0x34] sm:$0xf]
      %v1937 = vld [vmem:[%s8 + $0x38] sm:$0xf]
      %v1938 = vld [vmem:[%s8 + $0x3c] sm:$0xf]
      %v1939 = vld [vmem:[%s8 + $0x40] sm:$0xf]
      %v1940 = vld [vmem:[%s8 + $0x44] sm:$0xf]
      %v1941 = vld [vmem:[%s8 + $0x48] sm:$0xf]
      %v1942 = vld [vmem:[%s8 + $0x4c] sm:$0xf]
      %v1943 = vld [vmem:[%s8 + $0x50] sm:$0xf]
      %v1944 = vld [vmem:[%s8 + $0x54] sm:$0xf]
      %v1945 = vld [vmem:[%s8 + $0x58] sm:$0xf]
      %v1946 = vld [vmem:[%s8 + $0x5c] sm:$0xf]
      %v1947 = vld [vmem:[%s8 + $0x60] sm:$0xf]
      %v1948 = vld [vmem:[%s8 + $0x64] sm:$0xf]
      %v1949 = vld [vmem:[%s8 + $0x68] sm:$0xf]
      %v1950 = vld [vmem:[%s8 + $0x6c] sm:$0xf]
      %v1951 = vld [vmem:[%s8 + $0x70] sm:$0xf]
      %v1952 = vld [vmem:[%s8 + $0x74] sm:$0xf]
      %v1953 = vld [vmem:[%s8 + $0x78] sm:$0xf]
      %v1954 = vld [vmem:[%s8 + $0x7c] sm:$0xf]
      %v1955 = vld [vmem:[%s8 + $0x80] sm:$0xf]
      %v1956 = vld [vmem:[%s8 + $0x84] sm:$0xf]
      %v1957 = vld [vmem:[%s8 + $0x88] sm:$0xf]
      %v1958 = vld [vmem:[%s8 + $0x8c] sm:$0xf]
      %v1959 = vld [vmem:[%s8 + $0x90] sm:$0xf]
      %v1960 = vld [vmem:[%s8 + $0x94] sm:$0xf]
      %v1961 = vld [vmem:[%s8 + $0x98] sm:$0xf]
      %v1962 = vld [vmem:[%s8 + $0x9c] sm:$0xf]
      %v1963 = vld [vmem:[%s8 + $0xa0] sm:$0xf]
      %v1964 = vld [vmem:[%s8 + $0xa4] sm:$0xf]
      %v1965 = vld [vmem:[%s8 + $0xa8] sm:$0xf]
      %v1966 = vld [vmem:[%s8 + $0xac] sm:$0xf]
      %v1967 = vld [vmem:[%s8 + $0xb0] sm:$0xf]
      %v1968 = vld [vmem:[%s8 + $0xb4] sm:$0xf]
      %v1969 = vld [vmem:[%s8 + $0xb8] sm:$0xf]
      %v1970 = vld [vmem:[%s8 + $0xbc] sm:$0xf]
      %v1971 = vld [vmem:[%s8 + $0xc0] sm:$0xf]
      %v1972 = vld [vmem:[%s8 + $0xc4] sm:$0xf]
      %v1973 = vld [vmem:[%s8 + $0xc8] sm:$0xf]
      %v1974 = vld [vmem:[%s8 + $0xcc] sm:$0xf]
      %v1975 = vld [vmem:[%s8 + $0xd0] sm:$0xf]
      %v1976 = vld [vmem:[%s8 + $0xd4] sm:$0xf]
      %v1977 = vld [vmem:[%s8 + $0xd8] sm:$0xf]
      %v1978 = vld [vmem:[%s8 + $0xdc] sm:$0xf]
      %v1979 = vld [vmem:[%s8 + $0xe0] sm:$0xf]
      %v1980 = vld [vmem:[%s8 + $0xe4] sm:$0xf]
      %v1981 = vld [vmem:[%s8 + $0xe8] sm:$0xf]
      %v1982 = vld [vmem:[%s8 + $0xec] sm:$0xf]
      %v1983 = vld [vmem:[%s8 + $0xf0] sm:$0xf]
      %v1984 = vld [vmem:[%s8 + $0xf4] sm:$0xf]
      %v1985 = vld [vmem:[%s8 + $0xf8] sm:$0xf]
      %v1986 = vld [vmem:[%s8 + $0xfc] sm:$0xf]
      %v1987 = vld [vmem:[%s8 + $0x100] sm:$0xf]
      %v1988 = vld [vmem:[%s8 + $0x104] sm:$0xf]
      %v1989 = vld [vmem:[%s8 + $0x108] sm:$0xf]
      %v1990 = vld [vmem:[%s8 + $0x10c] sm:$0xf]
      %v1991 = vld [vmem:[%s8 + $0x110] sm:$0xf]
      %v1992 = vld [vmem:[%s8 + $0x114] sm:$0xf]
      %v1993 = vld [vmem:[%s8 + $0x118] sm:$0xf]
      %v1994 = vld [vmem:[%s8 + $0x11c] sm:$0xf]
      %v1995 = vld [vmem:[%s8 + $0x120] sm:$0xf]
      %v1996 = vld [vmem:[%s8 + $0x124] sm:$0xf]
      %v1997 = vld [vmem:[%s8 + $0x128] sm:$0xf]
      %v1998 = vld [vmem:[%s8 + $0x12c] sm:$0xf]
      %v1999 = vld [vmem:[%s8 + $0x130] sm:$0xf]
      %v2000 = vld [vmem:[%s8 + $0x134] sm:$0xf]
      %v2001 = vld [vmem:[%s8 + $0x138] sm:$0xf]
      %v2002 = vld [vmem:[%s8 + $0x13c] sm:$0xf]
      %v2003 = vld [vmem:[%s8 + $0x140] sm:$0xf]
      %v2004 = vld [vmem:[%s8 + $0x144] sm:$0xf]
      %v2005 = vld [vmem:[%s8 + $0x148] sm:$0xf]
      %v2006 = vld [vmem:[%s8 + $0x14c] sm:$0xf]
      %v2007 = vld [vmem:[%s8 + $0x150] sm:$0xf]
      %v2008 = vld [vmem:[%s8 + $0x154] sm:$0xf]
      %v2009 = vld [vmem:[%s8 + $0x158] sm:$0xf]
      %v2010 = vld [vmem:[%s8 + $0x15c] sm:$0xf]
      %v2011 = vld [vmem:[%s8 + $0x160] sm:$0xf]
      %v2012 = vld [vmem:[%s8 + $0x164] sm:$0xf]
      %v2013 = vld [vmem:[%s8 + $0x168] sm:$0xf]
      %v2014 = vld [vmem:[%s8 + $0x16c] sm:$0xf]
      %v2015 = vld [vmem:[%s8 + $0x170] sm:$0xf]
      %v2016 = vld [vmem:[%s8 + $0x174] sm:$0xf]
      %v2017 = vld [vmem:[%s8 + $0x178] sm:$0xf]
      %v2018 = vld [vmem:[%s8 + $0x17c] sm:$0xf]
      %v2019 = vld [vmem:[%s8 + $0x180] sm:$0xf]
      %v2020 = vld [vmem:[%s8 + $0x184] sm:$0xf]
      %v2021 = vld [vmem:[%s8 + $0x188] sm:$0xf]
      %v2022 = vld [vmem:[%s8 + $0x18c] sm:$0xf]
      %v2023 = vld [vmem:[%s8 + $0x190] sm:$0xf]
      %v2024 = vld [vmem:[%s8 + $0x194] sm:$0xf]
      %v2025 = vld [vmem:[%s8 + $0x198] sm:$0xf]
      %v2026 = vld [vmem:[%s8 + $0x19c] sm:$0xf]
      %v2027 = vld [vmem:[%s8 + $0x1a0] sm:$0xf]
      %v2028 = vld [vmem:[%s8 + $0x1a4] sm:$0xf]
      %v2029 = vld [vmem:[%s8 + $0x1a8] sm:$0xf]
      %v2030 = vld [vmem:[%s8 + $0x1ac] sm:$0xf]
      %v2031 = vld [vmem:[%s8 + $0x1b0] sm:$0xf]
      %v2032 = vld [vmem:[%s8 + $0x1b4] sm:$0xf]
      %v2033 = vld [vmem:[%s8 + $0x1b8] sm:$0xf]
      %v2034 = vld [vmem:[%s8 + $0x1bc] sm:$0xf]
      %v2035 = vld [vmem:[%s8 + $0x1c0] sm:$0xf]
      %v2036 = vld [vmem:[%s8 + $0x1c4] sm:$0xf]
      %v2037 = vld [vmem:[%s8 + $0x1c8] sm:$0xf]
      %v2038 = vld [vmem:[%s8 + $0x1cc] sm:$0xf]
      %v2039 = vld [vmem:[%s8 + $0x1d0] sm:$0xf]
      %v2040 = vld [vmem:[%s8 + $0x1d4] sm:$0xf]
      %v2041 = vld [vmem:[%s8 + $0x1d8] sm:$0xf]
      %v2042 = vld [vmem:[%s8 + $0x1dc] sm:$0xf]
      %v2043 = vld [vmem:[%s8 + $0x1e0] sm:$0xf]
      %v2044 = vld [vmem:[%s8 + $0x1e4] sm:$0xf]
      %v2045 = vld [vmem:[%s8 + $0x1e8] sm:$0xf]
      %v2046 = vld [vmem:[%s8 + $0x1ec] sm:$0xf]
      %v2047 = vld [vmem:[%s8 + $0x1f0] sm:$0xf]
      %v2048 = vld [vmem:[%s8 + $0x1f4] sm:$0xf]
      %v2049 = vld [vmem:[%s8 + $0x1f8] sm:$0xf]
      %v2050 = vld [vmem:[%s8 + $0x1fc] sm:$0xf]
      %v2051 = vld [vmem:[%s8 + $0x200] sm:$0xf]
      %v2052 = vld [vmem:[%s8 + $0x204] sm:$0xf]
      %v2053 = vld [vmem:[%s8 + $0x208] sm:$0xf]
      %v2054 = vld [vmem:[%s8 + $0x20c] sm:$0xf]
      %v2055 = vld [vmem:[%s8 + $0x210] sm:$0xf]
      %v2056 = vld [vmem:[%s8 + $0x214] sm:$0xf]
      %v2057 = vld [vmem:[%s8 + $0x218] sm:$0xf]
      %v2058 = vld [vmem:[%s8 + $0x21c] sm:$0xf]
      %v2059 = vld [vmem:[%s8 + $0x220] sm:$0xf]
      %v2060 = vld [vmem:[%s8 + $0x224] sm:$0xf]
      %v2061 = vld [vmem:[%s8 + $0x228] sm:$0xf]
      %v2062 = vld [vmem:[%s8 + $0x22c] sm:$0xf]
      %v2063 = vld [vmem:[%s8 + $0x230] sm:$0xf]
      %v2064 = vld [vmem:[%s8 + $0x234] sm:$0xf]
      %v2065 = vld [vmem:[%s8 + $0x238] sm:$0xf]
      %v2066 = vld [vmem:[%s8 + $0x23c] sm:$0xf]
      %v2067 = vld [vmem:[%s9] sm:$0x1]
      %v2069 = vlaneseq
      %v2070 = vshrl.u32 %v2069, 7
      %v2071 = vsub.s32 0, %v2070
      %v2072 = vrot.slane %v2067, %v2071
      %v2218 = vunpack.c.l.b16 %v1923
      %v2219 = vunpack.c.l.b16 %v1924
      %v2220 = vunpack.c.l.b16 %v1925
      %v2221 = vunpack.c.l.b16 %v1926
      %v2222 = vunpack.c.l.b16 %v1927
      %v2223 = vunpack.c.l.b16 %v1928
      %v2224 = vunpack.c.l.b16 %v1929
      %v2225 = vunpack.c.l.b16 %v1930
      %v2226 = vunpack.c.l.b16 %v1931
      %v2227 = vunpack.c.l.b16 %v1932
      %v2228 = vunpack.c.l.b16 %v1933
      %v2229 = vunpack.c.l.b16 %v1934
      %v2230 = vunpack.c.l.b16 %v1935
      %v2231 = vunpack.c.l.b16 %v1936
      %v2232 = vunpack.c.l.b16 %v1937
      %v2233 = vunpack.c.l.b16 %v1938
      %v2234 = vunpack.c.l.b16 %v1939
      %v2235 = vunpack.c.l.b16 %v1940
      %v2236 = vunpack.c.l.b16 %v1941
      %v2237 = vunpack.c.l.b16 %v1942
      %v2238 = vunpack.c.l.b16 %v1943
      %v2239 = vunpack.c.l.b16 %v1944
      %v2240 = vunpack.c.l.b16 %v1945
      %v2241 = vunpack.c.l.b16 %v1946
      %v2242 = vunpack.c.l.b16 %v1947
      %v2243 = vunpack.c.l.b16 %v1948
      %v2244 = vunpack.c.l.b16 %v1949
      %v2245 = vunpack.c.l.b16 %v1950
      %v2246 = vunpack.c.l.b16 %v1951
      %v2247 = vunpack.c.l.b16 %v1952
      %v2248 = vunpack.c.l.b16 %v1953
      %v2249 = vunpack.c.l.b16 %v1954
      %v2250 = vunpack.c.l.b16 %v1955
      %v2251 = vunpack.c.l.b16 %v1956
      %v2252 = vunpack.c.l.b16 %v1957
      %v2253 = vunpack.c.l.b16 %v1958
      %v2254 = vunpack.c.l.b16 %v1959
      %v2255 = vunpack.c.l.b16 %v1960
      %v2256 = vunpack.c.l.b16 %v1961
      %v2257 = vunpack.c.l.b16 %v1962
      %v2258 = vunpack.c.l.b16 %v1963
      %v2259 = vunpack.c.l.b16 %v1964
      %v2260 = vunpack.c.l.b16 %v1965
      %v2261 = vunpack.c.l.b16 %v1966
      %v2262 = vunpack.c.l.b16 %v1967
      %v2263 = vunpack.c.l.b16 %v1968
      %v2264 = vunpack.c.l.b16 %v1969
      %v2265 = vunpack.c.l.b16 %v1970
      %v2266 = vunpack.c.l.b16 %v1971
      %v2267 = vunpack.c.l.b16 %v1972
      %v2268 = vunpack.c.l.b16 %v1973
      %v2269 = vunpack.c.l.b16 %v1974
      %v2270 = vunpack.c.l.b16 %v1975
      %v2271 = vunpack.c.l.b16 %v1976
      %v2272 = vunpack.c.l.b16 %v1977
      %v2273 = vunpack.c.l.b16 %v1978
      %v2274 = vunpack.c.l.b16 %v1979
      %v2275 = vunpack.c.l.b16 %v1980
      %v2276 = vunpack.c.l.b16 %v1981
      %v2277 = vunpack.c.l.b16 %v1982
      %v2278 = vunpack.c.l.b16 %v1983
      %v2279 = vunpack.c.l.b16 %v1984
      %v2280 = vunpack.c.l.b16 %v1985
      %v2281 = vunpack.c.l.b16 %v1986
      %v2282 = vunpack.c.l.b16 %v1987
      %v2283 = vunpack.c.l.b16 %v1988
      %v2284 = vunpack.c.l.b16 %v1989
      %v2285 = vunpack.c.l.b16 %v1990
      %v2286 = vunpack.c.l.b16 %v1991
      %v2287 = vunpack.c.l.b16 %v1992
      %v2288 = vunpack.c.l.b16 %v1993
      %v2289 = vunpack.c.l.b16 %v1994
      %v2290 = vunpack.c.l.b16 %v1995
      %v2291 = vunpack.c.l.b16 %v1996
      %v2292 = vunpack.c.l.b16 %v1997
      %v2293 = vunpack.c.l.b16 %v1998
      %v2294 = vunpack.c.l.b16 %v1999
      %v2295 = vunpack.c.l.b16 %v2000
      %v2296 = vunpack.c.l.b16 %v2001
      %v2297 = vunpack.c.l.b16 %v2002
      %v2298 = vunpack.c.l.b16 %v2003
      %v2299 = vunpack.c.l.b16 %v2004
      %v2300 = vunpack.c.l.b16 %v2005
      %v2301 = vunpack.c.l.b16 %v2006
      %v2302 = vunpack.c.l.b16 %v2007
      %v2303 = vunpack.c.l.b16 %v2008
      %v2304 = vunpack.c.l.b16 %v2009
      %v2305 = vunpack.c.l.b16 %v2010
      %v2306 = vunpack.c.l.b16 %v2011
      %v2307 = vunpack.c.l.b16 %v2012
      %v2308 = vunpack.c.l.b16 %v2013
      %v2309 = vunpack.c.l.b16 %v2014
      %v2310 = vunpack.c.l.b16 %v2015
      %v2311 = vunpack.c.l.b16 %v2016
      %v2312 = vunpack.c.l.b16 %v2017
      %v2313 = vunpack.c.l.b16 %v2018
      %v2314 = vunpack.c.l.b16 %v2019
      %v2315 = vunpack.c.l.b16 %v2020
      %v2316 = vunpack.c.l.b16 %v2021
      %v2317 = vunpack.c.l.b16 %v2022
      %v2318 = vunpack.c.l.b16 %v2023
      %v2319 = vunpack.c.l.b16 %v2024
      %v2320 = vunpack.c.l.b16 %v2025
      %v2321 = vunpack.c.l.b16 %v2026
      %v2322 = vunpack.c.l.b16 %v2027
      %v2323 = vunpack.c.l.b16 %v2028
      %v2324 = vunpack.c.l.b16 %v2029
      %v2325 = vunpack.c.l.b16 %v2030
      %v2326 = vunpack.c.l.b16 %v2031
      %v2327 = vunpack.c.l.b16 %v2032
      %v2328 = vunpack.c.l.b16 %v2033
      %v2329 = vunpack.c.l.b16 %v2034
      %v2330 = vunpack.c.l.b16 %v2035
      %v2331 = vunpack.c.l.b16 %v2036
      %v2332 = vunpack.c.l.b16 %v2037
      %v2333 = vunpack.c.l.b16 %v2038
      %v2334 = vunpack.c.l.b16 %v2039
      %v2335 = vunpack.c.l.b16 %v2040
      %v2336 = vunpack.c.l.b16 %v2041
      %v2337 = vunpack.c.l.b16 %v2042
      %v2338 = vunpack.c.l.b16 %v2043
      %v2339 = vunpack.c.l.b16 %v2044
      %v2340 = vunpack.c.l.b16 %v2045
      %v2341 = vunpack.c.l.b16 %v2046
      %v2342 = vunpack.c.l.b16 %v2047
      %v2343 = vunpack.c.l.b16 %v2048
      %v2344 = vunpack.c.l.b16 %v2049
      %v2345 = vunpack.c.l.b16 %v2050
      %v2346 = vunpack.c.l.b16 %v2051
      %v2347 = vunpack.c.l.b16 %v2052
      %v2348 = vunpack.c.l.b16 %v2053
      %v2349 = vunpack.c.l.b16 %v2054
      %v2350 = vunpack.c.l.b16 %v2055
      %v2351 = vunpack.c.l.b16 %v2056
      %v2352 = vunpack.c.l.b16 %v2057
      %v2353 = vunpack.c.l.b16 %v2058
      %v2354 = vunpack.c.l.b16 %v2059
      %v2355 = vunpack.c.l.b16 %v2060
      %v2356 = vunpack.c.l.b16 %v2061
      %v2357 = vunpack.c.l.b16 %v2062
      %v2358 = vunpack.c.l.b16 %v2063
      %v2359 = vunpack.c.l.b16 %v2064
      %v2360 = vunpack.c.l.b16 %v2065
      %v2361 = vunpack.c.l.b16 %v2066
      %v2362 = vpack.c.b16 %v2219, %v2218
      %v2363 = vpack.c.b16 %v2221, %v2220
      %v2364 = vpack.c.b16 %v2223, %v2222
      %v2365 = vpack.c.b16 %v2225, %v2224
      %v2366 = vpack.c.b16 %v2227, %v2226
      %v2367 = vpack.c.b16 %v2229, %v2228
      %v2368 = vpack.c.b16 %v2231, %v2230
      %v2369 = vpack.c.b16 %v2233, %v2232
      %v2370 = vpack.c.b16 %v2235, %v2234
      %v2371 = vpack.c.b16 %v2237, %v2236
      %v2372 = vpack.c.b16 %v2239, %v2238
      %v2373 = vpack.c.b16 %v2241, %v2240
      %v2374 = vpack.c.b16 %v2243, %v2242
      %v2375 = vpack.c.b16 %v2245, %v2244
      %v2376 = vpack.c.b16 %v2247, %v2246
      %v2377 = vpack.c.b16 %v2249, %v2248
      %v2378 = vpack.c.b16 %v2251, %v2250
      %v2379 = vpack.c.b16 %v2253, %v2252
      %v2380 = vpack.c.b16 %v2255, %v2254
      %v2381 = vpack.c.b16 %v2257, %v2256
      %v2382 = vpack.c.b16 %v2259, %v2258
      %v2383 = vpack.c.b16 %v2261, %v2260
      %v2384 = vpack.c.b16 %v2263, %v2262
      %v2385 = vpack.c.b16 %v2265, %v2264
      %v2386 = vpack.c.b16 %v2267, %v2266
      %v2387 = vpack.c.b16 %v2269, %v2268
      %v2388 = vpack.c.b16 %v2271, %v2270
      %v2389 = vpack.c.b16 %v2273, %v2272
      %v2390 = vpack.c.b16 %v2275, %v2274
      %v2391 = vpack.c.b16 %v2277, %v2276
      %v2392 = vpack.c.b16 %v2279, %v2278
      %v2393 = vpack.c.b16 %v2281, %v2280
      %v2394 = vpack.c.b16 %v2283, %v2282
      %v2395 = vpack.c.b16 %v2285, %v2284
      %v2396 = vpack.c.b16 %v2287, %v2286
      %v2397 = vpack.c.b16 %v2289, %v2288
      %v2398 = vpack.c.b16 %v2291, %v2290
      %v2399 = vpack.c.b16 %v2293, %v2292
      %v2400 = vpack.c.b16 %v2295, %v2294
      %v2401 = vpack.c.b16 %v2297, %v2296
      %v2402 = vpack.c.b16 %v2299, %v2298
      %v2403 = vpack.c.b16 %v2301, %v2300
      %v2404 = vpack.c.b16 %v2303, %v2302
      %v2405 = vpack.c.b16 %v2305, %v2304
      %v2406 = vpack.c.b16 %v2307, %v2306
      %v2407 = vpack.c.b16 %v2309, %v2308
      %v2408 = vpack.c.b16 %v2311, %v2310
      %v2409 = vpack.c.b16 %v2313, %v2312
      %v2410 = vpack.c.b16 %v2315, %v2314
      %v2411 = vpack.c.b16 %v2317, %v2316
      %v2412 = vpack.c.b16 %v2319, %v2318
      %v2413 = vpack.c.b16 %v2321, %v2320
      %v2414 = vpack.c.b16 %v2323, %v2322
      %v2415 = vpack.c.b16 %v2325, %v2324
      %v2416 = vpack.c.b16 %v2327, %v2326
      %v2417 = vpack.c.b16 %v2329, %v2328
      %v2418 = vpack.c.b16 %v2331, %v2330
      %v2419 = vpack.c.b16 %v2333, %v2332
      %v2420 = vpack.c.b16 %v2335, %v2334
      %v2421 = vpack.c.b16 %v2337, %v2336
      %v2422 = vpack.c.b16 %v2339, %v2338
      %v2423 = vpack.c.b16 %v2341, %v2340
      %v2424 = vpack.c.b16 %v2343, %v2342
      %v2425 = vpack.c.b16 %v2345, %v2344
      %v2426 = vpack.c.b16 %v2347, %v2346
      %v2427 = vpack.c.b16 %v2349, %v2348
      %v2428 = vpack.c.b16 %v2351, %v2350
      %v2429 = vpack.c.b16 %v2353, %v2352
      %v2430 = vpack.c.b16 %v2355, %v2354
      %v2431 = vpack.c.b16 %v2357, %v2356
      %v2432 = vpack.c.b16 %v2359, %v2358
      %v2433 = vpack.c.b16 %v2361, %v2360
      %2506 = vmatprep.subr.bf16.mxu0 0
      %2507 = vmatpush1.bf16.msra.mxu0 %v2362
      %2508 = vmatprep.subr.bf16.mxu0 0
      %2509 = vmatpush1.bf16.msra.mxu0 %v2363
      %2510 = vmatprep.subr.bf16.mxu0 0
      %2511 = vmatpush1.bf16.msra.mxu0 %v2364
      %2512 = vmatprep.subr.bf16.mxu0 0
      %2513 = vmatpush1.bf16.msra.mxu0 %v2365
      %2514 = vmatprep.subr.bf16.mxu0 0
      %2515 = vmatpush1.bf16.msra.mxu0 %v2366
      %2516 = vmatprep.subr.bf16.mxu0 0
      %2517 = vmatpush1.bf16.msra.mxu0 %v2367
      %2518 = vmatprep.subr.bf16.mxu0 0
      %2519 = vmatpush1.bf16.msra.mxu0 %v2368
      %2520 = vmatprep.subr.bf16.mxu0 0
      %2521 = vmatpush1.bf16.msra.mxu0 %v2369
      %2522 = vmatprep.subr.bf16.mxu0 0
      %2523 = vmatpush1.bf16.msra.mxu0 %v2370
      %2524 = vmatprep.subr.bf16.mxu0 0
      %2525 = vmatpush1.bf16.msra.mxu0 %v2371
      %2526 = vmatprep.subr.bf16.mxu0 0
      %2527 = vmatpush1.bf16.msra.mxu0 %v2372
      %2528 = vmatprep.subr.bf16.mxu0 0
      %2529 = vmatpush1.bf16.msra.mxu0 %v2373
      %2530 = vmatprep.subr.bf16.mxu0 0
      %2531 = vmatpush1.bf16.msra.mxu0 %v2374
      %2532 = vmatprep.subr.bf16.mxu0 0
      %2533 = vmatpush1.bf16.msra.mxu0 %v2375
      %2534 = vmatprep.subr.bf16.mxu0 0
      %2535 = vmatpush1.bf16.msra.mxu0 %v2376
      %2536 = vmatprep.subr.bf16.mxu0 0
      %2537 = vmatpush1.bf16.msra.mxu0 %v2377
      %2538 = vmatprep.mubr.bf16.mxu0 %v1915
      %2539 = vmatmul.mubr.bf16.gmra.mrb[0].mxu0 %v1914
      %v2540 = vpop.f32.mrb[0].mxu0
      %v2541 = vadd.f32 %v2072, %v2540
      %v2542 = vpop.f32.mrb[0].mxu0
      %v2543 = vpop.f32.mrb[0].mxu0
      %v2544 = vadd.f32 %v2072, %v2543
      %v2545 = vpop.f32.mrb[0].mxu0
      %2546 = vdwg.mxu0
      %2547 = vmatprep.subr.bf16.mxu0 0
      %2548 = vmatpush1.bf16.msra.mxu0 %v2378
      %2549 = vmatprep.subr.bf16.mxu0 0
      %2550 = vmatpush1.bf16.msra.mxu0 %v2379
      %2551 = vmatprep.subr.bf16.mxu0 0
      %2552 = vmatpush1.bf16.msra.mxu0 %v2380
      %2553 = vmatprep.subr.bf16.mxu0 0
      %2554 = vmatpush1.bf16.msra.mxu0 %v2381
      %2555 = vmatprep.subr.bf16.mxu0 0
      %2556 = vmatpush1.bf16.msra.mxu0 %v2382
      %2557 = vmatprep.subr.bf16.mxu0 0
      %2558 = vmatpush1.bf16.msra.mxu0 %v2383
      %2559 = vmatprep.subr.bf16.mxu0 0
      %2560 = vmatpush1.bf16.msra.mxu0 %v2384
      %2561 = vmatprep.subr.bf16.mxu0 0
      %2562 = vmatpush1.bf16.msra.mxu0 %v2385
      %2563 = vmatprep.subr.bf16.mxu0 0
      %2564 = vmatpush1.bf16.msra.mxu0 %v2386
      %2565 = vmatprep.subr.bf16.mxu0 0
      %2566 = vmatpush1.bf16.msra.mxu0 %v2387
      %2567 = vmatprep.subr.bf16.mxu0 0
      %2568 = vmatpush1.bf16.msra.mxu0 %v2388
      %2569 = vmatprep.subr.bf16.mxu0 0
      %2570 = vmatpush1.bf16.msra.mxu0 %v2389
      %2571 = vmatprep.subr.bf16.mxu0 0
      %2572 = vmatpush1.bf16.msra.mxu0 %v2390
      %2573 = vmatprep.subr.bf16.mxu0 0
      %2574 = vmatpush1.bf16.msra.mxu0 %v2391
      %2575 = vmatprep.subr.bf16.mxu0 0
      %2576 = vmatpush1.bf16.msra.mxu0 %v2392
      %2577 = vmatprep.subr.bf16.mxu0 0
      %2578 = vmatpush1.bf16.msra.mxu0 %v2393
      %2579 = vmatprep.mubr.bf16.mxu0 %v1917
      %2580 = vmatmul.mubr.bf16.gmra.mrb[0].mxu0 %v1916
      %v2581 = vpop.f32.mrb[0].mxu0
      %v2582 = vadd.f32 %v2541, %v2581
      %v2583 = vpop.f32.mrb[0].mxu0
      %v2584 = vpop.f32.mrb[0].mxu0
      %v2585 = vadd.f32 %v2544, %v2584
      %v2586 = vpop.f32.mrb[0].mxu0
      %2587 = vdwg.mxu0
      %2588 = vmatprep.subr.bf16.mxu0 0
      %2589 = vmatpush1.bf16.msra.mxu0 %v2394
      %2590 = vmatprep.subr.bf16.mxu0 0
      %2591 = vmatpush1.bf16.msra.mxu0 %v2395
      %2592 = vmatprep.subr.bf16.mxu0 0
      %2593 = vmatpush1.bf16.msra.mxu0 %v2396
      %2594 = vmatprep.subr.bf16.mxu0 0
      %2595 = vmatpush1.bf16.msra.mxu0 %v2397
      %2596 = vmatprep.subr.bf16.mxu0 0
      %2597 = vmatpush1.bf16.msra.mxu0 %v2398
      %2598 = vmatprep.subr.bf16.mxu0 0
      %2599 = vmatpush1.bf16.msra.mxu0 %v2399
      %2600 = vmatprep.subr.bf16.mxu0 0
      %2601 = vmatpush1.bf16.msra.mxu0 %v2400
      %2602 = vmatprep.subr.bf16.mxu0 0
      %2603 = vmatpush1.bf16.msra.mxu0 %v2401
      %2604 = vmatprep.subr.bf16.mxu0 0
      %2605 = vmatpush1.bf16.msra.mxu0 %v2402
      %2606 = vmatprep.subr.bf16.mxu0 0
      %2607 = vmatpush1.bf16.msra.mxu0 %v2403
      %2608 = vmatprep.subr.bf16.mxu0 0
      %2609 = vmatpush1.bf16.msra.mxu0 %v2404
      %2610 = vmatprep.subr.bf16.mxu0 0
      %2611 = vmatpush1.bf16.msra.mxu0 %v2405
      %2612 = vmatprep.subr.bf16.mxu0 0
      %2613 = vmatpush1.bf16.msra.mxu0 %v2406
      %2614 = vmatprep.subr.bf16.mxu0 0
      %2615 = vmatpush1.bf16.msra.mxu0 %v2407
      %2616 = vmatprep.subr.bf16.mxu0 0
      %2617 = vmatpush1.bf16.msra.mxu0 %v2408
      %2618 = vmatprep.subr.bf16.mxu0 0
      %2619 = vmatpush1.bf16.msra.mxu0 %v2409
      %2620 = vmatprep.mubr.bf16.mxu0 %v1919
      %2621 = vmatmul.mubr.bf16.gmra.mrb[0].mxu0 %v1918
      %v2622 = vpop.f32.mrb[0].mxu0
      %v2623 = vadd.f32 %v2582, %v2622
      %v2624 = vpop.f32.mrb[0].mxu0
      %v2625 = vpop.f32.mrb[0].mxu0
      %v2626 = vadd.f32 %v2585, %v2625
      %v2627 = vpop.f32.mrb[0].mxu0
      %2628 = vdwg.mxu0
      %2629 = vmatprep.subr.bf16.mxu0 0
      %2630 = vmatpush1.bf16.msra.mxu0 %v2410
      %2631 = vmatprep.subr.bf16.mxu0 0
      %2632 = vmatpush1.bf16.msra.mxu0 %v2411
      %2633 = vmatprep.subr.bf16.mxu0 0
      %2634 = vmatpush1.bf16.msra.mxu0 %v2412
      %2635 = vmatprep.subr.bf16.mxu0 0
      %2636 = vmatpush1.bf16.msra.mxu0 %v2413
      %2637 = vmatprep.subr.bf16.mxu0 0
      %2638 = vmatpush1.bf16.msra.mxu0 %v2414
      %2639 = vmatprep.subr.bf16.mxu0 0
      %2640 = vmatpush1.bf16.msra.mxu0 %v2415
      %2641 = vmatprep.subr.bf16.mxu0 0
      %2642 = vmatpush1.bf16.msra.mxu0 %v2416
      %2643 = vmatprep.subr.bf16.mxu0 0
      %2644 = vmatpush1.bf16.msra.mxu0 %v2417
      %2645 = vmatprep.subr.bf16.mxu0 0
      %2646 = vmatpush1.bf16.msra.mxu0 %v2418
      %2647 = vmatprep.subr.bf16.mxu0 0
      %2648 = vmatpush1.bf16.msra.mxu0 %v2419
      %2649 = vmatprep.subr.bf16.mxu0 0
      %2650 = vmatpush1.bf16.msra.mxu0 %v2420
      %2651 = vmatprep.subr.bf16.mxu0 0
      %2652 = vmatpush1.bf16.msra.mxu0 %v2421
      %2653 = vmatprep.subr.bf16.mxu0 0
      %2654 = vmatpush1.bf16.msra.mxu0 %v2422
      %2655 = vmatprep.subr.bf16.mxu0 0
      %2656 = vmatpush1.bf16.msra.mxu0 %v2423
      %2657 = vmatprep.subr.bf16.mxu0 0
      %2658 = vmatpush1.bf16.msra.mxu0 %v2424
      %2659 = vmatprep.subr.bf16.mxu0 0
      %2660 = vmatpush1.bf16.msra.mxu0 %v2425
      %2661 = vmatprep.mubr.bf16.mxu0 %v1921
      %2662 = vmatmul.mubr.bf16.gmra.mrb[0].mxu0 %v1920
      %v2663 = vpop.f32.mrb[0].mxu0
      %v2664 = vadd.f32 %v2623, %v2663
      %v2665 = vpop.f32.mrb[0].mxu0
      %v2666 = vpop.f32.mrb[0].mxu0
      %v2667 = vadd.f32 %v2626, %v2666
      %v2668 = vpop.f32.mrb[0].mxu0
      %2669 = vdwg.mxu0
      %2670 = vmatprep.subr.bf16.mxu0 0
      %2671 = vmatpush1.bf16.msra.mxu0 %v2426
      %2672 = vmatprep.subr.bf16.mxu0 0
      %2673 = vmatpush1.bf16.msra.mxu0 %v2427
      %2674 = vmatprep.subr.bf16.mxu0 0
      %2675 = vmatpush1.bf16.msra.mxu0 %v2428
      %2676 = vmatprep.subr.bf16.mxu0 0
      %2677 = vmatpush1.bf16.msra.mxu0 %v2429
      %2678 = vmatprep.subr.bf16.mxu0 0
      %2679 = vmatpush1.bf16.msra.mxu0 %v2430
      %2680 = vmatprep.subr.bf16.mxu0 0
      %2681 = vmatpush1.bf16.msra.mxu0 %v2431
      %2682 = vmatprep.subr.bf16.mxu0 0
      %2683 = vmatpush1.bf16.msra.mxu0 %v2432
      %2684 = vmatprep.subr.bf16.mxu0 0
      %2685 = vmatpush1.bf16.msra.mxu0 %v2433
      %2686 = vmatprep.subr.bf16.mxu0 0
      %2687 = vmatpush1.bf16.msra.mxu0 0
      %2688 = vmatprep.subr.bf16.mxu0 0
      %2689 = vmatpush1.bf16.msra.mxu0 0
      %2690 = vmatprep.subr.bf16.mxu0 0
      %2691 = vmatpush1.bf16.msra.mxu0 0
      %2692 = vmatprep.subr.bf16.mxu0 0
      %2693 = vmatpush1.bf16.msra.mxu0 0
      %2694 = vmatprep.subr.bf16.mxu0 0
      %2695 = vmatpush1.bf16.msra.mxu0 0
      %2696 = vmatprep.subr.bf16.mxu0 0
      %2697 = vmatpush1.bf16.msra.mxu0 0
      %2698 = vmatprep.subr.bf16.mxu0 0
      %2699 = vmatpush1.bf16.msra.mxu0 0
      %2700 = vmatprep.subr.bf16.mxu0 0
      %2701 = vmatpush1.bf16.msra.mxu0 0
      %2702 = vmatprep.mubr.bf16.mxu0 0
      %2703 = vmatmul.mubr.bf16.gmra.mrb[0].mxu0 %v1922
      %v2704 = vpop.f32.mrb[0].mxu0
      %v2705 = vadd.f32 %v2664, %v2704
      %v2706 = vpop.f32.mrb[0].mxu0
      %v2707 = vpop.f32.mrb[0].mxu0
      %v2708 = vadd.f32 %v2667, %v2707
      %v2709 = vpop.f32.mrb[0].mxu0
      %2710 = vdwg.mxu0
      %v2711 = vmax.f32 %v2705, 0.0
      %v2712 = vmax.f32 %v2708, 0.0
      %2713 = vst [vmem:[#allocation2 + $0x8] sm:$0xff] %v2711
      %2714 = vst [vmem:[#allocation2 + $0x10] sm:$0xff] %v2712
      %v2715 = vld [vmem:[#allocation2 + $0x3] sm:$0xff]
      %v2716 = vld [vmem:[#allocation2 + $0xb] sm:$0xff]
      %v2717 = vsel %vm462, %v2715, 0.0
      %v2718 = vsel %vm463, %v2716, 0.0
      %v2719 = vpack.c.bf16 %v2718, %v2717
      %2720 = vst [vmem:[#allocation3] sm:$0xff] %v2719
      %v2721 = vld [vmem:[#allocation2 + $0x4] sm:$0xff]
      %v2722 = vld [vmem:[#allocation2 + $0xc] sm:$0xff]
      %v2723 = vpack.c.bf16 %v2722, %v2721
      %2724 = vst [vmem:[#allocation3 + $0x8] sm:$0xff] %v2723
      %v2725 = vld [vmem:[#allocation2 + $0x5] sm:$0xff]
      %v2726 = vld [vmem:[#allocation2 + $0xd] sm:$0xff]
      %v2727 = vsel %vm464, %v2725, 0.0
      %v2728 = vsel %vm465, %v2726, 0.0
      %v2729 = vpack.c.bf16 %v2728, %v2727
      %2730 = vst [vmem:[#allocation3 + $0x10] sm:$0xff] %v2729
      %v2731 = vld [vmem:[#allocation2 + $0x7] sm:$0xff]
      %v2732 = vld [vmem:[#allocation2 + $0xf] sm:$0xff]
      %v2733 = vsel %vm462, %v2731, 0.0
      %v2734 = vsel %vm463, %v2732, 0.0
      %v2735 = vpack.c.bf16 %v2734, %v2733
      %2736 = vst [vmem:[#allocation3 + $0x18] sm:$0xff] %v2735
      %v2737 = vld [vmem:[#allocation2 + $0x8] sm:$0xff]
      %v2738 = vld [vmem:[#allocation2 + $0x10] sm:$0xff]
      %v2739 = vpack.c.bf16 %v2738, %v2737
      %2740 = vst [vmem:[#allocation3 + $0x20] sm:$0xff] %v2739
      %v2741 = vld [vmem:[#allocation2 + $0x9] sm:$0xff]
      %v2742 = vld [vmem:[#allocation2 + $0x11] sm:$0xff]
      %v2743 = vsel %vm464, %v2741, 0.0
      %v2744 = vsel %vm465, %v2742, 0.0
      %v2745 = vpack.c.bf16 %v2744, %v2743
      %2746 = vst [vmem:[#allocation3 + $0x28] sm:$0xff] %v2745
      %v2747 = vld [vmem:[#allocation2 + $0xb] sm:$0xff]
      %v2748 = vld [vmem:[#allocation2 + $0x13] sm:$0xff]
      %v2749 = vsel %vm462, %v2747, 0.0
      %v2750 = vsel %vm463, %v2748, 0.0
      %v2751 = vpack.c.bf16 %v2750, %v2749
      %2752 = vst [vmem:[#allocation3 + $0x30] sm:$0xff] %v2751
      %v2753 = vld [vmem:[#allocation2 + $0xc] sm:$0xff]
      %v2754 = vld [vmem:[#allocation2 + $0x14] sm:$0xff]
      %v2755 = vpack.c.bf16 %v2754, %v2753
      %2756 = vst [vmem:[#allocation3 + $0x38] sm:$0xff] %v2755
      %v2757 = vld [vmem:[#allocation2 + $0xd] sm:$0xff]
      %v2758 = vld [vmem:[#allocation2 + $0x15] sm:$0xff]
      %v2759 = vsel %vm464, %v2757, 0.0
      %v2760 = vsel %vm465, %v2758, 0.0
      %v2761 = vpack.c.bf16 %v2760, %v2759
      %2762 = vst [vmem:[#allocation3 + $0x40] sm:$0xff] %v2761
      %v2763 = vld [vmem:[#allocation3] sm:$0xff]
      %v2764 = vld [vmem:[#allocation3 + $0x8] sm:$0xff]
      %v2765 = vld [vmem:[#allocation3 + $0x10] sm:$0xff]
      %v2766 = vld [vmem:[#allocation3 + $0x18] sm:$0xff]
      %v2767 = vld [vmem:[#allocation3 + $0x20] sm:$0xff]
      %v2768 = vld [vmem:[#allocation3 + $0x28] sm:$0xff]
      %v2769 = vld [vmem:[#allocation3 + $0x30] sm:$0xff]
      %v2770 = vld [vmem:[#allocation3 + $0x38] sm:$0xff]
      %v2771 = vld [vmem:[#allocation3 + $0x40] sm:$0xff]
      %v2772 = vld [vmem:[%s10] sm:$0xf]
      %v2773 = vld [vmem:[%s10 + $0x4] sm:$0xf]
      %v2774 = vld [vmem:[%s10 + $0x8] sm:$0xf]
      %v2775 = vld [vmem:[%s10 + $0xc] sm:$0xf]
      %v2776 = vld [vmem:[%s10 + $0x10] sm:$0xf]
      %v2777 = vld [vmem:[%s10 + $0x14] sm:$0xf]
      %v2778 = vld [vmem:[%s10 + $0x18] sm:$0xf]
      %v2779 = vld [vmem:[%s10 + $0x1c] sm:$0xf]
      %v2780 = vld [vmem:[%s10 + $0x20] sm:$0xf]
      %v2781 = vld [vmem:[%s10 + $0x24] sm:$0xf]
      %v2782 = vld [vmem:[%s10 + $0x28] sm:$0xf]
      %v2783 = vld [vmem:[%s10 + $0x2c] sm:$0xf]
      %v2784 = vld [vmem:[%s10 + $0x30] sm:$0xf]
      %v2785 = vld [vmem:[%s10 + $0x34] sm:$0xf]
      %v2786 = vld [vmem:[%s10 + $0x38] sm:$0xf]
      %v2787 = vld [vmem:[%s10 + $0x3c] sm:$0xf]
      %v2788 = vld [vmem:[%s10 + $0x40] sm:$0xf]
      %v2789 = vld [vmem:[%s10 + $0x44] sm:$0xf]
      %v2790 = vld [vmem:[%s10 + $0x48] sm:$0xf]
      %v2791 = vld [vmem:[%s10 + $0x4c] sm:$0xf]
      %v2792 = vld [vmem:[%s10 + $0x50] sm:$0xf]
      %v2793 = vld [vmem:[%s10 + $0x54] sm:$0xf]
      %v2794 = vld [vmem:[%s10 + $0x58] sm:$0xf]
      %v2795 = vld [vmem:[%s10 + $0x5c] sm:$0xf]
      %v2796 = vld [vmem:[%s10 + $0x60] sm:$0xf]
      %v2797 = vld [vmem:[%s10 + $0x64] sm:$0xf]
      %v2798 = vld [vmem:[%s10 + $0x68] sm:$0xf]
      %v2799 = vld [vmem:[%s10 + $0x6c] sm:$0xf]
      %v2800 = vld [vmem:[%s10 + $0x70] sm:$0xf]
      %v2801 = vld [vmem:[%s10 + $0x74] sm:$0xf]
      %v2802 = vld [vmem:[%s10 + $0x78] sm:$0xf]
      %v2803 = vld [vmem:[%s10 + $0x7c] sm:$0xf]
      %v2804 = vld [vmem:[%s10 + $0x80] sm:$0xf]
      %v2805 = vld [vmem:[%s10 + $0x84] sm:$0xf]
      %v2806 = vld [vmem:[%s10 + $0x88] sm:$0xf]
      %v2807 = vld [vmem:[%s10 + $0x8c] sm:$0xf]
      %v2808 = vld [vmem:[%s10 + $0x90] sm:$0xf]
      %v2809 = vld [vmem:[%s10 + $0x94] sm:$0xf]
      %v2810 = vld [vmem:[%s10 + $0x98] sm:$0xf]
      %v2811 = vld [vmem:[%s10 + $0x9c] sm:$0xf]
      %v2812 = vld [vmem:[%s10 + $0xa0] sm:$0xf]
      %v2813 = vld [vmem:[%s10 + $0xa4] sm:$0xf]
      %v2814 = vld [vmem:[%s10 + $0xa8] sm:$0xf]
      %v2815 = vld [vmem:[%s10 + $0xac] sm:$0xf]
      %v2816 = vld [vmem:[%s10 + $0xb0] sm:$0xf]
      %v2817 = vld [vmem:[%s10 + $0xb4] sm:$0xf]
      %v2818 = vld [vmem:[%s10 + $0xb8] sm:$0xf]
      %v2819 = vld [vmem:[%s10 + $0xbc] sm:$0xf]
      %v2820 = vld [vmem:[%s10 + $0xc0] sm:$0xf]
      %v2821 = vld [vmem:[%s10 + $0xc4] sm:$0xf]
      %v2822 = vld [vmem:[%s10 + $0xc8] sm:$0xf]
      %v2823 = vld [vmem:[%s10 + $0xcc] sm:$0xf]
      %v2824 = vld [vmem:[%s10 + $0xd0] sm:$0xf]
      %v2825 = vld [vmem:[%s10 + $0xd4] sm:$0xf]
      %v2826 = vld [vmem:[%s10 + $0xd8] sm:$0xf]
      %v2827 = vld [vmem:[%s10 + $0xdc] sm:$0xf]
      %v2828 = vld [vmem:[%s10 + $0xe0] sm:$0xf]
      %v2829 = vld [vmem:[%s10 + $0xe4] sm:$0xf]
      %v2830 = vld [vmem:[%s10 + $0xe8] sm:$0xf]
      %v2831 = vld [vmem:[%s10 + $0xec] sm:$0xf]
      %v2832 = vld [vmem:[%s10 + $0xf0] sm:$0xf]
      %v2833 = vld [vmem:[%s10 + $0xf4] sm:$0xf]
      %v2834 = vld [vmem:[%s10 + $0xf8] sm:$0xf]
      %v2835 = vld [vmem:[%s10 + $0xfc] sm:$0xf]
      %v2836 = vld [vmem:[%s10 + $0x100] sm:$0xf]
      %v2837 = vld [vmem:[%s10 + $0x104] sm:$0xf]
      %v2838 = vld [vmem:[%s10 + $0x108] sm:$0xf]
      %v2839 = vld [vmem:[%s10 + $0x10c] sm:$0xf]
      %v2840 = vld [vmem:[%s10 + $0x110] sm:$0xf]
      %v2841 = vld [vmem:[%s10 + $0x114] sm:$0xf]
      %v2842 = vld [vmem:[%s10 + $0x118] sm:$0xf]
      %v2843 = vld [vmem:[%s10 + $0x11c] sm:$0xf]
      %v2844 = vld [vmem:[%s10 + $0x120] sm:$0xf]
      %v2845 = vld [vmem:[%s10 + $0x124] sm:$0xf]
      %v2846 = vld [vmem:[%s10 + $0x128] sm:$0xf]
      %v2847 = vld [vmem:[%s10 + $0x12c] sm:$0xf]
      %v2848 = vld [vmem:[%s10 + $0x130] sm:$0xf]
      %v2849 = vld [vmem:[%s10 + $0x134] sm:$0xf]
      %v2850 = vld [vmem:[%s10 + $0x138] sm:$0xf]
      %v2851 = vld [vmem:[%s10 + $0x13c] sm:$0xf]
      %v2852 = vld [vmem:[%s10 + $0x140] sm:$0xf]
      %v2853 = vld [vmem:[%s10 + $0x144] sm:$0xf]
      %v2854 = vld [vmem:[%s10 + $0x148] sm:$0xf]
      %v2855 = vld [vmem:[%s10 + $0x14c] sm:$0xf]
      %v2856 = vld [vmem:[%s10 + $0x150] sm:$0xf]
      %v2857 = vld [vmem:[%s10 + $0x154] sm:$0xf]
      %v2858 = vld [vmem:[%s10 + $0x158] sm:$0xf]
      %v2859 = vld [vmem:[%s10 + $0x15c] sm:$0xf]
      %v2860 = vld [vmem:[%s10 + $0x160] sm:$0xf]
      %v2861 = vld [vmem:[%s10 + $0x164] sm:$0xf]
      %v2862 = vld [vmem:[%s10 + $0x168] sm:$0xf]
      %v2863 = vld [vmem:[%s10 + $0x16c] sm:$0xf]
      %v2864 = vld [vmem:[%s10 + $0x170] sm:$0xf]
      %v2865 = vld [vmem:[%s10 + $0x174] sm:$0xf]
      %v2866 = vld [vmem:[%s10 + $0x178] sm:$0xf]
      %v2867 = vld [vmem:[%s10 + $0x17c] sm:$0xf]
      %v2868 = vld [vmem:[%s10 + $0x180] sm:$0xf]
      %v2869 = vld [vmem:[%s10 + $0x184] sm:$0xf]
      %v2870 = vld [vmem:[%s10 + $0x188] sm:$0xf]
      %v2871 = vld [vmem:[%s10 + $0x18c] sm:$0xf]
      %v2872 = vld [vmem:[%s10 + $0x190] sm:$0xf]
      %v2873 = vld [vmem:[%s10 + $0x194] sm:$0xf]
      %v2874 = vld [vmem:[%s10 + $0x198] sm:$0xf]
      %v2875 = vld [vmem:[%s10 + $0x19c] sm:$0xf]
      %v2876 = vld [vmem:[%s10 + $0x1a0] sm:$0xf]
      %v2877 = vld [vmem:[%s10 + $0x1a4] sm:$0xf]
      %v2878 = vld [vmem:[%s10 + $0x1a8] sm:$0xf]
      %v2879 = vld [vmem:[%s10 + $0x1ac] sm:$0xf]
      %v2880 = vld [vmem:[%s10 + $0x1b0] sm:$0xf]
      %v2881 = vld [vmem:[%s10 + $0x1b4] sm:$0xf]
      %v2882 = vld [vmem:[%s10 + $0x1b8] sm:$0xf]
      %v2883 = vld [vmem:[%s10 + $0x1bc] sm:$0xf]
      %v2884 = vld [vmem:[%s10 + $0x1c0] sm:$0xf]
      %v2885 = vld [vmem:[%s10 + $0x1c4] sm:$0xf]
      %v2886 = vld [vmem:[%s10 + $0x1c8] sm:$0xf]
      %v2887 = vld [vmem:[%s10 + $0x1cc] sm:$0xf]
      %v2888 = vld [vmem:[%s10 + $0x1d0] sm:$0xf]
      %v2889 = vld [vmem:[%s10 + $0x1d4] sm:$0xf]
      %v2890 = vld [vmem:[%s10 + $0x1d8] sm:$0xf]
      %v2891 = vld [vmem:[%s10 + $0x1dc] sm:$0xf]
      %v2892 = vld [vmem:[%s10 + $0x1e0] sm:$0xf]
      %v2893 = vld [vmem:[%s10 + $0x1e4] sm:$0xf]
      %v2894 = vld [vmem:[%s10 + $0x1e8] sm:$0xf]
      %v2895 = vld [vmem:[%s10 + $0x1ec] sm:$0xf]
      %v2896 = vld [vmem:[%s10 + $0x1f0] sm:$0xf]
      %v2897 = vld [vmem:[%s10 + $0x1f4] sm:$0xf]
      %v2898 = vld [vmem:[%s10 + $0x1f8] sm:$0xf]
      %v2899 = vld [vmem:[%s10 + $0x1fc] sm:$0xf]
      %v2900 = vld [vmem:[%s10 + $0x200] sm:$0xf]
      %v2901 = vld [vmem:[%s10 + $0x204] sm:$0xf]
      %v2902 = vld [vmem:[%s10 + $0x208] sm:$0xf]
      %v2903 = vld [vmem:[%s10 + $0x20c] sm:$0xf]
      %v2904 = vld [vmem:[%s10 + $0x210] sm:$0xf]
      %v2905 = vld [vmem:[%s10 + $0x214] sm:$0xf]
      %v2906 = vld [vmem:[%s10 + $0x218] sm:$0xf]
      %v2907 = vld [vmem:[%s10 + $0x21c] sm:$0xf]
      %v2908 = vld [vmem:[%s10 + $0x220] sm:$0xf]
      %v2909 = vld [vmem:[%s10 + $0x224] sm:$0xf]
      %v2910 = vld [vmem:[%s10 + $0x228] sm:$0xf]
      %v2911 = vld [vmem:[%s10 + $0x22c] sm:$0xf]
      %v2912 = vld [vmem:[%s10 + $0x230] sm:$0xf]
      %v2913 = vld [vmem:[%s10 + $0x234] sm:$0xf]
      %v2914 = vld [vmem:[%s10 + $0x238] sm:$0xf]
      %v2915 = vld [vmem:[%s10 + $0x23c] sm:$0xf]
      %v2916 = vld [vmem:[%s11] sm:$0x1]
      %v2918 = vlaneseq
      %v2919 = vshrl.u32 %v2918, 7
      %v2920 = vsub.s32 0, %v2919
      %v2921 = vrot.slane %v2916, %v2920
      %v3067 = vunpack.c.l.b16 %v2772
      %v3068 = vunpack.c.l.b16 %v2773
      %v3069 = vunpack.c.l.b16 %v2774
      %v3070 = vunpack.c.l.b16 %v2775
      %v3071 = vunpack.c.l.b16 %v2776
      %v3072 = vunpack.c.l.b16 %v2777
      %v3073 = vunpack.c.l.b16 %v2778
      %v3074 = vunpack.c.l.b16 %v2779
      %v3075 = vunpack.c.l.b16 %v2780
      %v3076 = vunpack.c.l.b16 %v2781
      %v3077 = vunpack.c.l.b16 %v2782
      %v3078 = vunpack.c.l.b16 %v2783
      %v3079 = vunpack.c.l.b16 %v2784
      %v3080 = vunpack.c.l.b16 %v2785
      %v3081 = vunpack.c.l.b16 %v2786
      %v3082 = vunpack.c.l.b16 %v2787
      %v3083 = vunpack.c.l.b16 %v2788
      %v3084 = vunpack.c.l.b16 %v2789
      %v3085 = vunpack.c.l.b16 %v2790
      %v3086 = vunpack.c.l.b16 %v2791
      %v3087 = vunpack.c.l.b16 %v2792
      %v3088 = vunpack.c.l.b16 %v2793
      %v3089 = vunpack.c.l.b16 %v2794
      %v3090 = vunpack.c.l.b16 %v2795
      %v3091 = vunpack.c.l.b16 %v2796
      %v3092 = vunpack.c.l.b16 %v2797
      %v3093 = vunpack.c.l.b16 %v2798
      %v3094 = vunpack.c.l.b16 %v2799
      %v3095 = vunpack.c.l.b16 %v2800
      %v3096 = vunpack.c.l.b16 %v2801
      %v3097 = vunpack.c.l.b16 %v2802
      %v3098 = vunpack.c.l.b16 %v2803
      %v3099 = vunpack.c.l.b16 %v2804
      %v3100 = vunpack.c.l.b16 %v2805
      %v3101 = vunpack.c.l.b16 %v2806
      %v3102 = vunpack.c.l.b16 %v2807
      %v3103 = vunpack.c.l.b16 %v2808
      %v3104 = vunpack.c.l.b16 %v2809
      %v3105 = vunpack.c.l.b16 %v2810
      %v3106 = vunpack.c.l.b16 %v2811
      %v3107 = vunpack.c.l.b16 %v2812
      %v3108 = vunpack.c.l.b16 %v2813
      %v3109 = vunpack.c.l.b16 %v2814
      %v3110 = vunpack.c.l.b16 %v2815
      %v3111 = vunpack.c.l.b16 %v2816
      %v3112 = vunpack.c.l.b16 %v2817
      %v3113 = vunpack.c.l.b16 %v2818
      %v3114 = vunpack.c.l.b16 %v2819
      %v3115 = vunpack.c.l.b16 %v2820
      %v3116 = vunpack.c.l.b16 %v2821
      %v3117 = vunpack.c.l.b16 %v2822
      %v3118 = vunpack.c.l.b16 %v2823
      %v3119 = vunpack.c.l.b16 %v2824
      %v3120 = vunpack.c.l.b16 %v2825
      %v3121 = vunpack.c.l.b16 %v2826
      %v3122 = vunpack.c.l.b16 %v2827
      %v3123 = vunpack.c.l.b16 %v2828
      %v3124 = vunpack.c.l.b16 %v2829
      %v3125 = vunpack.c.l.b16 %v2830
      %v3126 = vunpack.c.l.b16 %v2831
      %v3127 = vunpack.c.l.b16 %v2832
      %v3128 = vunpack.c.l.b16 %v2833
      %v3129 = vunpack.c.l.b16 %v2834
      %v3130 = vunpack.c.l.b16 %v2835
      %v3131 = vunpack.c.l.b16 %v2836
      %v3132 = vunpack.c.l.b16 %v2837
      %v3133 = vunpack.c.l.b16 %v2838
      %v3134 = vunpack.c.l.b16 %v2839
      %v3135 = vunpack.c.l.b16 %v2840
      %v3136 = vunpack.c.l.b16 %v2841
      %v3137 = vunpack.c.l.b16 %v2842
      %v3138 = vunpack.c.l.b16 %v2843
      %v3139 = vunpack.c.l.b16 %v2844
      %v3140 = vunpack.c.l.b16 %v2845
      %v3141 = vunpack.c.l.b16 %v2846
      %v3142 = vunpack.c.l.b16 %v2847
      %v3143 = vunpack.c.l.b16 %v2848
      %v3144 = vunpack.c.l.b16 %v2849
      %v3145 = vunpack.c.l.b16 %v2850
      %v3146 = vunpack.c.l.b16 %v2851
      %v3147 = vunpack.c.l.b16 %v2852
      %v3148 = vunpack.c.l.b16 %v2853
      %v3149 = vunpack.c.l.b16 %v2854
      %v3150 = vunpack.c.l.b16 %v2855
      %v3151 = vunpack.c.l.b16 %v2856
      %v3152 = vunpack.c.l.b16 %v2857
      %v3153 = vunpack.c.l.b16 %v2858
      %v3154 = vunpack.c.l.b16 %v2859
      %v3155 = vunpack.c.l.b16 %v2860
      %v3156 = vunpack.c.l.b16 %v2861
      %v3157 = vunpack.c.l.b16 %v2862
      %v3158 = vunpack.c.l.b16 %v2863
      %v3159 = vunpack.c.l.b16 %v2864
      %v3160 = vunpack.c.l.b16 %v2865
      %v3161 = vunpack.c.l.b16 %v2866
      %v3162 = vunpack.c.l.b16 %v2867
      %v3163 = vunpack.c.l.b16 %v2868
      %v3164 = vunpack.c.l.b16 %v2869
      %v3165 = vunpack.c.l.b16 %v2870
      %v3166 = vunpack.c.l.b16 %v2871
      %v3167 = vunpack.c.l.b16 %v2872
      %v3168 = vunpack.c.l.b16 %v2873
      %v3169 = vunpack.c.l.b16 %v2874
      %v3170 = vunpack.c.l.b16 %v2875
      %v3171 = vunpack.c.l.b16 %v2876
      %v3172 = vunpack.c.l.b16 %v2877
      %v3173 = vunpack.c.l.b16 %v2878
      %v3174 = vunpack.c.l.b16 %v2879
      %v3175 = vunpack.c.l.b16 %v2880
      %v3176 = vunpack.c.l.b16 %v2881
      %v3177 = vunpack.c.l.b16 %v2882
      %v3178 = vunpack.c.l.b16 %v2883
      %v3179 = vunpack.c.l.b16 %v2884
      %v3180 = vunpack.c.l.b16 %v2885
      %v3181 = vunpack.c.l.b16 %v2886
      %v3182 = vunpack.c.l.b16 %v2887
      %v3183 = vunpack.c.l.b16 %v2888
      %v3184 = vunpack.c.l.b16 %v2889
      %v3185 = vunpack.c.l.b16 %v2890
      %v3186 = vunpack.c.l.b16 %v2891
      %v3187 = vunpack.c.l.b16 %v2892
      %v3188 = vunpack.c.l.b16 %v2893
      %v3189 = vunpack.c.l.b16 %v2894
      %v3190 = vunpack.c.l.b16 %v2895
      %v3191 = vunpack.c.l.b16 %v2896
      %v3192 = vunpack.c.l.b16 %v2897
      %v3193 = vunpack.c.l.b16 %v2898
      %v3194 = vunpack.c.l.b16 %v2899
      %v3195 = vunpack.c.l.b16 %v2900
      %v3196 = vunpack.c.l.b16 %v2901
      %v3197 = vunpack.c.l.b16 %v2902
      %v3198 = vunpack.c.l.b16 %v2903
      %v3199 = vunpack.c.l.b16 %v2904
      %v3200 = vunpack.c.l.b16 %v2905
      %v3201 = vunpack.c.l.b16 %v2906
      %v3202 = vunpack.c.l.b16 %v2907
      %v3203 = vunpack.c.l.b16 %v2908
      %v3204 = vunpack.c.l.b16 %v2909
      %v3205 = vunpack.c.l.b16 %v2910
      %v3206 = vunpack.c.l.b16 %v2911
      %v3207 = vunpack.c.l.b16 %v2912
      %v3208 = vunpack.c.l.b16 %v2913
      %v3209 = vunpack.c.l.b16 %v2914
      %v3210 = vunpack.c.l.b16 %v2915
      %v3211 = vpack.c.b16 %v3068, %v3067
      %v3212 = vpack.c.b16 %v3070, %v3069
      %v3213 = vpack.c.b16 %v3072, %v3071
      %v3214 = vpack.c.b16 %v3074, %v3073
      %v3215 = vpack.c.b16 %v3076, %v3075
      %v3216 = vpack.c.b16 %v3078, %v3077
      %v3217 = vpack.c.b16 %v3080, %v3079
      %v3218 = vpack.c.b16 %v3082, %v3081
      %v3219 = vpack.c.b16 %v3084, %v3083
      %v3220 = vpack.c.b16 %v3086, %v3085
      %v3221 = vpack.c.b16 %v3088, %v3087
      %v3222 = vpack.c.b16 %v3090, %v3089
      %v3223 = vpack.c.b16 %v3092, %v3091
      %v3224 = vpack.c.b16 %v3094, %v3093
      %v3225 = vpack.c.b16 %v3096, %v3095
      %v3226 = vpack.c.b16 %v3098, %v3097
      %v3227 = vpack.c.b16 %v3100, %v3099
      %v3228 = vpack.c.b16 %v3102, %v3101
      %v3229 = vpack.c.b16 %v3104, %v3103
      %v3230 = vpack.c.b16 %v3106, %v3105
      %v3231 = vpack.c.b16 %v3108, %v3107
      %v3232 = vpack.c.b16 %v3110, %v3109
      %v3233 = vpack.c.b16 %v3112, %v3111
      %v3234 = vpack.c.b16 %v3114, %v3113
      %v3235 = vpack.c.b16 %v3116, %v3115
      %v3236 = vpack.c.b16 %v3118, %v3117
      %v3237 = vpack.c.b16 %v3120, %v3119
      %v3238 = vpack.c.b16 %v3122, %v3121
      %v3239 = vpack.c.b16 %v3124, %v3123
      %v3240 = vpack.c.b16 %v3126, %v3125
      %v3241 = vpack.c.b16 %v3128, %v3127
      %v3242 = vpack.c.b16 %v3130, %v3129
      %v3243 = vpack.c.b16 %v3132, %v3131
      %v3244 = vpack.c.b16 %v3134, %v3133
      %v3245 = vpack.c.b16 %v3136, %v3135
      %v3246 = vpack.c.b16 %v3138, %v3137
      %v3247 = vpack.c.b16 %v3140, %v3139
      %v3248 = vpack.c.b16 %v3142, %v3141
      %v3249 = vpack.c.b16 %v3144, %v3143
      %v3250 = vpack.c.b16 %v3146, %v3145
      %v3251 = vpack.c.b16 %v3148, %v3147
      %v3252 = vpack.c.b16 %v3150, %v3149
      %v3253 = vpack.c.b16 %v3152, %v3151
      %v3254 = vpack.c.b16 %v3154, %v3153
      %v3255 = vpack.c.b16 %v3156, %v3155
      %v3256 = vpack.c.b16 %v3158, %v3157
      %v3257 = vpack.c.b16 %v3160, %v3159
      %v3258 = vpack.c.b16 %v3162, %v3161
      %v3259 = vpack.c.b16 %v3164, %v3163
      %v3260 = vpack.c.b16 %v3166, %v3165
      %v3261 = vpack.c.b16 %v3168, %v3167
      %v3262 = vpack.c.b16 %v3170, %v3169
      %v3263 = vpack.c.b16 %v3172, %v3171
      %v3264 = vpack.c.b16 %v3174, %v3173
      %v3265 = vpack.c.b16 %v3176, %v3175
      %v3266 = vpack.c.b16 %v3178, %v3177
      %v3267 = vpack.c.b16 %v3180, %v3179
      %v3268 = vpack.c.b16 %v3182, %v3181
      %v3269 = vpack.c.b16 %v3184, %v3183
      %v3270 = vpack.c.b16 %v3186, %v3185
      %v3271 = vpack.c.b16 %v3188, %v3187
      %v3272 = vpack.c.b16 %v3190, %v3189
      %v3273 = vpack.c.b16 %v3192, %v3191
      %v3274 = vpack.c.b16 %v3194, %v3193
      %v3275 = vpack.c.b16 %v3196, %v3195
      %v3276 = vpack.c.b16 %v3198, %v3197
      %v3277 = vpack.c.b16 %v3200, %v3199
      %v3278 = vpack.c.b16 %v3202, %v3201
      %v3279 = vpack.c.b16 %v3204, %v3203
      %v3280 = vpack.c.b16 %v3206, %v3205
      %v3281 = vpack.c.b16 %v3208, %v3207
      %v3282 = vpack.c.b16 %v3210, %v3209
      %3355 = vmatprep.subr.bf16.mxu0 0
      %3356 = vmatpush1.bf16.msra.mxu0 %v3211
      %3357 = vmatprep.subr.bf16.mxu0 0
      %3358 = vmatpush1.bf16.msra.mxu0 %v3212
      %3359 = vmatprep.subr.bf16.mxu0 0
      %3360 = vmatpush1.bf16.msra.mxu0 %v3213
      %3361 = vmatprep.subr.bf16.mxu0 0
      %3362 = vmatpush1.bf16.msra.mxu0 %v3214
      %3363 = vmatprep.subr.bf16.mxu0 0
      %3364 = vmatpush1.bf16.msra.mxu0 %v3215
      %3365 = vmatprep.subr.bf16.mxu0 0
      %3366 = vmatpush1.bf16.msra.mxu0 %v3216
      %3367 = vmatprep.subr.bf16.mxu0 0
      %3368 = vmatpush1.bf16.msra.mxu0 %v3217
      %3369 = vmatprep.subr.bf16.mxu0 0
      %3370 = vmatpush1.bf16.msra.mxu0 %v3218
      %3371 = vmatprep.subr.bf16.mxu0 0
      %3372 = vmatpush1.bf16.msra.mxu0 %v3219
      %3373 = vmatprep.subr.bf16.mxu0 0
      %3374 = vmatpush1.bf16.msra.mxu0 %v3220
      %3375 = vmatprep.subr.bf16.mxu0 0
      %3376 = vmatpush1.bf16.msra.mxu0 %v3221
      %3377 = vmatprep.subr.bf16.mxu0 0
      %3378 = vmatpush1.bf16.msra.mxu0 %v3222
      %3379 = vmatprep.subr.bf16.mxu0 0
      %3380 = vmatpush1.bf16.msra.mxu0 %v3223
      %3381 = vmatprep.subr.bf16.mxu0 0
      %3382 = vmatpush1.bf16.msra.mxu0 %v3224
      %3383 = vmatprep.subr.bf16.mxu0 0
      %3384 = vmatpush1.bf16.msra.mxu0 %v3225
      %3385 = vmatprep.subr.bf16.mxu0 0
      %3386 = vmatpush1.bf16.msra.mxu0 %v3226
      %3387 = vmatprep.mubr.bf16.mxu0 %v2764
      %3388 = vmatmul.mubr.bf16.gmra.mrb[0].mxu0 %v2763
      %v3389 = vpop.f32.mrb[0].mxu0
      %v3390 = vadd.f32 %v2921, %v3389
      %v3391 = vpop.f32.mrb[0].mxu0
      %v3392 = vpop.f32.mrb[0].mxu0
      %v3393 = vadd.f32 %v2921, %v3392
      %v3394 = vpop.f32.mrb[0].mxu0
      %3395 = vdwg.mxu0
      %3396 = vmatprep.subr.bf16.mxu0 0
      %3397 = vmatpush1.bf16.msra.mxu0 %v3227
      %3398 = vmatprep.subr.bf16.mxu0 0
      %3399 = vmatpush1.bf16.msra.mxu0 %v3228
      %3400 = vmatprep.subr.bf16.mxu0 0
      %3401 = vmatpush1.bf16.msra.mxu0 %v3229
      %3402 = vmatprep.subr.bf16.mxu0 0
      %3403 = vmatpush1.bf16.msra.mxu0 %v3230
      %3404 = vmatprep.subr.bf16.mxu0 0
      %3405 = vmatpush1.bf16.msra.mxu0 %v3231
      %3406 = vmatprep.subr.bf16.mxu0 0
      %3407 = vmatpush1.bf16.msra.mxu0 %v3232
      %3408 = vmatprep.subr.bf16.mxu0 0
      %3409 = vmatpush1.bf16.msra.mxu0 %v3233
      %3410 = vmatprep.subr.bf16.mxu0 0
      %3411 = vmatpush1.bf16.msra.mxu0 %v3234
      %3412 = vmatprep.subr.bf16.mxu0 0
      %3413 = vmatpush1.bf16.msra.mxu0 %v3235
      %3414 = vmatprep.subr.bf16.mxu0 0
      %3415 = vmatpush1.bf16.msra.mxu0 %v3236
      %3416 = vmatprep.subr.bf16.mxu0 0
      %3417 = vmatpush1.bf16.msra.mxu0 %v3237
      %3418 = vmatprep.subr.bf16.mxu0 0
      %3419 = vmatpush1.bf16.msra.mxu0 %v3238
      %3420 = vmatprep.subr.bf16.mxu0 0
      %3421 = vmatpush1.bf16.msra.mxu0 %v3239
      %3422 = vmatprep.subr.bf16.mxu0 0
      %3423 = vmatpush1.bf16.msra.mxu0 %v3240
      %3424 = vmatprep.subr.bf16.mxu0 0
      %3425 = vmatpush1.bf16.msra.mxu0 %v3241
      %3426 = vmatprep.subr.bf16.mxu0 0
      %3427 = vmatpush1.bf16.msra.mxu0 %v3242
      %3428 = vmatprep.mubr.bf16.mxu0 %v2766
      %3429 = vmatmul.mubr.bf16.gmra.mrb[0].mxu0 %v2765
      %v3430 = vpop.f32.mrb[0].mxu0
      %v3431 = vadd.f32 %v3390, %v3430
      %v3432 = vpop.f32.mrb[0].mxu0
      %v3433 = vpop.f32.mrb[0].mxu0
      %v3434 = vadd.f32 %v3393, %v3433
      %v3435 = vpop.f32.mrb[0].mxu0
      %3436 = vdwg.mxu0
      %3437 = vmatprep.subr.bf16.mxu0 0
      %3438 = vmatpush1.bf16.msra.mxu0 %v3243
      %3439 = vmatprep.subr.bf16.mxu0 0
      %3440 = vmatpush1.bf16.msra.mxu0 %v3244
      %3441 = vmatprep.subr.bf16.mxu0 0
      %3442 = vmatpush1.bf16.msra.mxu0 %v3245
      %3443 = vmatprep.subr.bf16.mxu0 0
      %3444 = vmatpush1.bf16.msra.mxu0 %v3246
      %3445 = vmatprep.subr.bf16.mxu0 0
      %3446 = vmatpush1.bf16.msra.mxu0 %v3247
      %3447 = vmatprep.subr.bf16.mxu0 0
      %3448 = vmatpush1.bf16.msra.mxu0 %v3248
      %3449 = vmatprep.subr.bf16.mxu0 0
      %3450 = vmatpush1.bf16.msra.mxu0 %v3249
      %3451 = vmatprep.subr.bf16.mxu0 0
      %3452 = vmatpush1.bf16.msra.mxu0 %v3250
      %3453 = vmatprep.subr.bf16.mxu0 0
      %3454 = vmatpush1.bf16.msra.mxu0 %v3251
      %3455 = vmatprep.subr.bf16.mxu0 0
      %3456 = vmatpush1.bf16.msra.mxu0 %v3252
      %3457 = vmatprep.subr.bf16.mxu0 0
      %3458 = vmatpush1.bf16.msra.mxu0 %v3253
      %3459 = vmatprep.subr.bf16.mxu0 0
      %3460 = vmatpush1.bf16.msra.mxu0 %v3254
      %3461 = vmatprep.subr.bf16.mxu0 0
      %3462 = vmatpush1.bf16.msra.mxu0 %v3255
      %3463 = vmatprep.subr.bf16.mxu0 0
      %3464 = vmatpush1.bf16.msra.mxu0 %v3256
      %3465 = vmatprep.subr.bf16.mxu0 0
      %3466 = vmatpush1.bf16.msra.mxu0 %v3257
      %3467 = vmatprep.subr.bf16.mxu0 0
      %3468 = vmatpush1.bf16.msra.mxu0 %v3258
      %3469 = vmatprep.mubr.bf16.mxu0 %v2768
      %3470 = vmatmul.mubr.bf16.gmra.mrb[0].mxu0 %v2767
      %v3471 = vpop.f32.mrb[0].mxu0
      %v3472 = vadd.f32 %v3431, %v3471
      %v3473 = vpop.f32.mrb[0].mxu0
      %v3474 = vpop.f32.mrb[0].mxu0
      %v3475 = vadd.f32 %v3434, %v3474
      %v3476 = vpop.f32.mrb[0].mxu0
      %3477 = vdwg.mxu0
      %3478 = vmatprep.subr.bf16.mxu0 0
      %3479 = vmatpush1.bf16.msra.mxu0 %v3259
      %3480 = vmatprep.subr.bf16.mxu0 0
      %3481 = vmatpush1.bf16.msra.mxu0 %v3260
      %3482 = vmatprep.subr.bf16.mxu0 0
      %3483 = vmatpush1.bf16.msra.mxu0 %v3261
      %3484 = vmatprep.subr.bf16.mxu0 0
      %3485 = vmatpush1.bf16.msra.mxu0 %v3262
      %3486 = vmatprep.subr.bf16.mxu0 0
      %3487 = vmatpush1.bf16.msra.mxu0 %v3263
      %3488 = vmatprep.subr.bf16.mxu0 0
      %3489 = vmatpush1.bf16.msra.mxu0 %v3264
      %3490 = vmatprep.subr.bf16.mxu0 0
      %3491 = vmatpush1.bf16.msra.mxu0 %v3265
      %3492 = vmatprep.subr.bf16.mxu0 0
      %3493 = vmatpush1.bf16.msra.mxu0 %v3266
      %3494 = vmatprep.subr.bf16.mxu0 0
      %3495 = vmatpush1.bf16.msra.mxu0 %v3267
      %3496 = vmatprep.subr.bf16.mxu0 0
      %3497 = vmatpush1.bf16.msra.mxu0 %v3268
      %3498 = vmatprep.subr.bf16.mxu0 0
      %3499 = vmatpush1.bf16.msra.mxu0 %v3269
      %3500 = vmatprep.subr.bf16.mxu0 0
      %3501 = vmatpush1.bf16.msra.mxu0 %v3270
      %3502 = vmatprep.subr.bf16.mxu0 0
      %3503 = vmatpush1.bf16.msra.mxu0 %v3271
      %3504 = vmatprep.subr.bf16.mxu0 0
      %3505 = vmatpush1.bf16.msra.mxu0 %v3272
      %3506 = vmatprep.subr.bf16.mxu0 0
      %3507 = vmatpush1.bf16.msra.mxu0 %v3273
      %3508 = vmatprep.subr.bf16.mxu0 0
      %3509 = vmatpush1.bf16.msra.mxu0 %v3274
      %3510 = vmatprep.mubr.bf16.mxu0 %v2770
      %3511 = vmatmul.mubr.bf16.gmra.mrb[0].mxu0 %v2769
      %v3512 = vpop.f32.mrb[0].mxu0
      %v3513 = vadd.f32 %v3472, %v3512
      %v3514 = vpop.f32.mrb[0].mxu0
      %v3515 = vpop.f32.mrb[0].mxu0
      %v3516 = vadd.f32 %v3475, %v3515
      %v3517 = vpop.f32.mrb[0].mxu0
      %3518 = vdwg.mxu0
      %3519 = vmatprep.subr.bf16.mxu0 0
      %3520 = vmatpush1.bf16.msra.mxu0 %v3275
      %3521 = vmatprep.subr.bf16.mxu0 0
      %3522 = vmatpush1.bf16.msra.mxu0 %v3276
      %3523 = vmatprep.subr.bf16.mxu0 0
      %3524 = vmatpush1.bf16.msra.mxu0 %v3277
      %3525 = vmatprep.subr.bf16.mxu0 0
      %3526 = vmatpush1.bf16.msra.mxu0 %v3278
      %3527 = vmatprep.subr.bf16.mxu0 0
      %3528 = vmatpush1.bf16.msra.mxu0 %v3279
      %3529 = vmatprep.subr.bf16.mxu0 0
      %3530 = vmatpush1.bf16.msra.mxu0 %v3280
      %3531 = vmatprep.subr.bf16.mxu0 0
      %3532 = vmatpush1.bf16.msra.mxu0 %v3281
      %3533 = vmatprep.subr.bf16.mxu0 0
      %3534 = vmatpush1.bf16.msra.mxu0 %v3282
      %3535 = vmatprep.subr.bf16.mxu0 0
      %3536 = vmatpush1.bf16.msra.mxu0 0
      %3537 = vmatprep.subr.bf16.mxu0 0
      %3538 = vmatpush1.bf16.msra.mxu0 0
      %3539 = vmatprep.subr.bf16.mxu0 0
      %3540 = vmatpush1.bf16.msra.mxu0 0
      %3541 = vmatprep.subr.bf16.mxu0 0
      %3542 = vmatpush1.bf16.msra.mxu0 0
      %3543 = vmatprep.subr.bf16.mxu0 0
      %3544 = vmatpush1.bf16.msra.mxu0 0
      %3545 = vmatprep.subr.bf16.mxu0 0
      %3546 = vmatpush1.bf16.msra.mxu0 0
      %3547 = vmatprep.subr.bf16.mxu0 0
      %3548 = vmatpush1.bf16.msra.mxu0 0
      %3549 = vmatprep.subr.bf16.mxu0 0
      %3550 = vmatpush1.bf16.msra.mxu0 0
      %3551 = vmatprep.mubr.bf16.mxu0 0
      %3552 = vmatmul.mubr.bf16.gmra.mrb[0].mxu0 %v2771
      %v3553 = vpop.f32.mrb[0].mxu0
      %v3554 = vadd.f32 %v3513, %v3553
      %v3555 = vpop.f32.mrb[0].mxu0
      %v3556 = vpop.f32.mrb[0].mxu0
      %v3557 = vadd.f32 %v3516, %v3556
      %v3558 = vpop.f32.mrb[0].mxu0
      %3559 = vdwg.mxu0
      %v3560 = vadd.f32 %v3554, %v1862
      %v3561 = vadd.f32 %v3557, %v1863
      %v3562 = vmax.f32 %v3560, 0.0
      %v3563 = vmax.f32 %v3561, 0.0
      %v3564 = vpack.c.bf16 %v3563, %v3562
      %v3566 = vunpack.c.l.b16 %v3564
      %v3567 = vunpack.c.h.b16 %v3564
      %v3568 = vpack.c.b16 %v3566, %v3566
      %v3569 = vpack.c.b16 %v3567, %v3567
      %3572 = vst [vmem:[%s433] sm:$0xf] %v3568
      %3573 = vst [vmem:[%s433 + $0x4] sm:$0xf] %v3569
      %p3574 = scmp.lt.s32.totalorder %s23, 1
      %s3575 = scalar_select %p3574, %s23, 1
      %s3576 = smul.addr %s3575, 2
      %s3577 = smul.addr %s3576, 4
      %s3578 = scalar_lea.vmem %s12, %s3577
      // Predicated region
      $region69: #{encoder_forward.5} parent=67 // pred_check
        %p3579 = pneg %p303
      $region70: #{encoder_forward.5} parent=67 // pred_check_branch
        %3581 = sbr.rel (%p3579) target = $region72
      $region71: #{encoder_forward.5} parent=67 // pred_region
        _
      $region72: #{encoder_forward.5} parent=67 // pred_fallthru
        _
    $region68: #{encoder_forward.5} parent=5 // pred_fallthru
      _
    %p3582 = scmp.le.s32.totalorder 2, %s18
    // Predicated region
    $region73: #{encoder_forward.5} parent=5 // pred_check
      %p3583 = pneg %p3582
    $region74: #{encoder_forward.5} parent=5 // pred_check_branch
      %3585 = sbr.rel (%p3583) target = $region76
    $region75: #{encoder_forward.5} parent=5 // pred_region
      %s3586 = ssub.s32 %s18, 2
      // Predicated region
      $region77: #{encoder_forward.5} parent=75 // pred_check
        %p3587 = pneg %p309
      $region78: #{encoder_forward.5} parent=75 // pred_check_branch
        %3589 = sbr.rel (%p3587) target = $region80
      $region79: #{encoder_forward.5} parent=75 // pred_region
        %p3590 = scmp.lt.s32.totalorder %s24, 1
        %s3591 = scalar_select %p3590, %s24, 1
        %s3592 = smul.addr %s3591, 2
        %s3593 = smul.addr %s3592, 4
        %s3594 = scalar_lea.vmem %s12, %s3593
      $region80: #{encoder_forward.5} parent=75 // pred_fallthru
        _
    $region76: #{encoder_forward.5} parent=5 // pred_fallthru
      _
  $region6: #{encoder_forward.5} parent=0 // loop_footer
    %s22 = sadd.s32 1, %s18
  $region7: #{encoder_forward.5} parent=0 // loop_footer_branch
    %17 = sbr.rel target = $region3
  $region8: #{encoder_forward.5} parent=0 // loop_exit
    _

</llo_original>
